<compile_context>
chip_gen: v5e
topology: v5e:2x2
jax: 0.10.0
libtpu: 0.0.40
codegen_flags: <defaults>
</compile_context>

<pallas_src>
import functools

import jax
import jax.numpy as jnp
from jax.experimental import pallas as pl
from jax.experimental.pallas import tpu as pltpu


# ----------------------------- Fused MHA kernel -------------------------------
def _mha_fused_kernel(x_ref, wq_ref, wkv_ref, wpT_ref, bp_ref, o_ref,
                      q_s, kv_s, cat_s, *, num_heads, head_size):
    # x_ref  : (1, T, C)   bf16   full sequence for this batch element
    # wq_ref : (C, H*D)    bf16   fused Q weights, 1/sqrt(D) pre-folded
    # wkv_ref: (C, 2*H*D)  bf16   fused [K | V] weights
    # wpT_ref: (H*D, C)    bf16   pre-transposed output projection weight
    # bp_ref : (1, C)      f32    output projection bias
    # o_ref  : (1, Tq, C)
    # q_s    : (Tq, H*D)   bf16 scratch   Q for this query tile
    # kv_s   : (T, 2*H*D)  bf16 scratch   K/V for the whole sequence (persistent)
    # cat_s  : (Tq, H*D)   bf16 scratch   concatenated per-head outputs
    H, D = num_heads, head_size
    HD = H * D
    Tq = o_ref.shape[1]
    T = x_ref.shape[1]
    qi = pl.program_id(1)

    # K/V projection for the whole sequence, computed once per batch element.
    # The qi axis is "arbitrary", so kv_s persists and query tiles > 0 reuse it.
    @pl.when(qi == 0)
    def _():
        kv = jnp.dot(x_ref[0], wkv_ref[...], preferred_element_type=jnp.float32)
        kv_s[...] = kv.astype(jnp.bfloat16)                           # (T, 2*HD)

    # Q projection for this query tile only (scale already folded into wq).
    q_start = pl.multiple_of(qi * Tq, Tq)
    xq = x_ref[0, pl.ds(q_start, Tq), :]                              # (Tq, C) bf16
    q_s[...] = jnp.dot(xq, wq_ref[...],
                       preferred_element_type=jnp.float32).astype(jnp.bfloat16)

    # Causal mask for this query tile, built once and shared by all heads.
    row = q_start + jax.lax.broadcasted_iota(jnp.int32, (Tq, T), 0)
    col = jax.lax.broadcasted_iota(jnp.int32, (Tq, T), 1)
    causal = col <= row

    # Per-head attention; head outputs land in the bf16 cat scratch so the output
    # projection is a single K=HD matmul after the loop (no per-head f32 accumulator).
    for h in range(H):
        qh = q_s[:, h * D:(h + 1) * D]                                # (Tq, D) bf16
        kh = kv_s[:, h * D:(h + 1) * D]                               # (T,  D) bf16
        vh = kv_s[:, HD + h * D:HD + (h + 1) * D]                     # (T,  D) bf16

        # scores = qh @ kh^T : contract dim 1 with dim 1 (no explicit transpose).
        s = jax.lax.dot_general(qh, kh, (((1,), (1,)), ((), ())),
                                preferred_element_type=jnp.float32)   # (Tq, T) f32
        # -inf matches F.softmax semantics; the causal diagonal guarantees at least
        # one unmasked key per row, so there are no all--inf rows / NaNs.
        s = jnp.where(causal, s, -jnp.inf)

        # Softmax in f32.
        m = jnp.max(s, axis=-1, keepdims=True)
        p = jnp.exp(s - m)
        denom = jnp.sum(p, axis=-1, keepdims=True)
        p = p * pl.reciprocal(denom, approx=True)

        out_h = jnp.dot(p.astype(jnp.bfloat16), vh,
                        preferred_element_type=jnp.float32)           # (Tq, D) f32
        cat_s[:, h * D:(h + 1) * D] = out_h.astype(jnp.bfloat16)

    # Single fused output projection (K = HD) + bias; lane-dense C-wide output.
    out = jnp.dot(cat_s[...], wpT_ref[...], preferred_element_type=jnp.float32)
    o_ref[0] = (out + bp_ref[...]).astype(o_ref.dtype)


# ----------------------------- Wrapper ----------------------------------------
def multi_head_attention(x, wq, wk, wv, w_proj, b_proj, *, q_tile=128):
    """
    x:        (B, T, C)  float32
    wq/wk/wv: (H, C, D)  per-head projection weights (x @ w == PyTorch Linear, no bias)
    w_proj:   (C, H*D)   PyTorch Linear weight layout (out_features, in_features)
    b_proj:   (C,)
    returns:  (B, T, C)  in x.dtype
    """
    B, T, C = x.shape
    H, _, D = wq.shape
    HD = H * D
    out_dtype = x.dtype
    Tq = min(q_tile, T)
    assert T % Tq == 0, "T must be a multiple of the query tile"
    n_q = T // Tq

    # One-time host-side weight prep:
    #  * fuse per-head weights into lane-dense matrices, fuse K and V together,
    #  * fold the 1/sqrt(D) score scale into wq (exact: power of two),
    #  * pre-transpose the proj weight (avoids in-kernel transpose),
    #  * cast MXU operands (and x) to bf16.
    scale = jnp.float32(D) ** -0.5   # k.shape[-1] ** -0.5 in the reference module
    wq_f = (jnp.transpose(wq, (1, 0, 2)).reshape(C, HD) * scale).astype(jnp.bfloat16)
    wk_f = jnp.transpose(wk, (1, 0, 2)).reshape(C, HD)
    wv_f = jnp.transpose(wv, (1, 0, 2)).reshape(C, HD)
    wkv_f = jnp.concatenate([wk_f, wv_f], axis=1).astype(jnp.bfloat16)   # (C, 2*HD)
    wpT = w_proj.T.astype(jnp.bfloat16)                                  # (HD, C)
    bp = b_proj.reshape(1, C).astype(jnp.float32)
    x_bf = x.astype(jnp.bfloat16)

    kernel = functools.partial(_mha_fused_kernel, num_heads=H, head_size=D)

    return pl.pallas_call(
        kernel,
        out_shape=jax.ShapeDtypeStruct((B, T, C), out_dtype),
        grid_spec=pltpu.PrefetchScalarGridSpec(
            num_scalar_prefetch=0,
            grid=(B, n_q),
            in_specs=[
                pl.BlockSpec((1, T, C), lambda b, qi: (b, 0, 0)),    # full-seq x (bf16)
                pl.BlockSpec((C, HD), lambda b, qi: (0, 0)),         # wq (scaled)
                pl.BlockSpec((C, 2 * HD), lambda b, qi: (0, 0)),     # [wk | wv]
                pl.BlockSpec((HD, C), lambda b, qi: (0, 0)),         # w_proj^T
                pl.BlockSpec((1, C), lambda b, qi: (0, 0)),          # b_proj
            ],
            out_specs=pl.BlockSpec((1, Tq, C), lambda b, qi: (b, qi, 0)),
            scratch_shapes=[
                pltpu.VMEM((Tq, HD), jnp.bfloat16),       # q tile
                pltpu.VMEM((T, 2 * HD), jnp.bfloat16),    # K/V, persistent over qi
                pltpu.VMEM((Tq, HD), jnp.bfloat16),       # concatenated head outputs
            ],
        ),
        # Batch axis parallel (megacore / v7x dual-TC friendly); qi must be
        # "arbitrary" because the K/V scratch carries state across query tiles.
        compiler_params=pltpu.CompilerParams(
            dimension_semantics=("parallel", "arbitrary")),
    )(x_bf, wq_f, wkv_f, wpT, bp)


# ----------------------------- Pure-JAX reference ------------------------------
def _reference(x, wq, wk, wv, w_proj, b_proj):
    B, T, C = x.shape
    H, _, D = wq.shape
    q = jnp.einsum('btc,hcd->bhtd', x, wq)
    k = jnp.einsum('btc,hcd->bhtd', x, wk)
    v = jnp.einsum('btc,hcd->bhtd', x, wv)
    s = jnp.einsum('bhqd,bhkd->bhqk', q, k) * (D ** -0.5)
    mask = jnp.tril(jnp.ones((T, T), dtype=bool))
    s = jnp.where(mask, s, -jnp.inf)
    p = jax.nn.softmax(s, axis=-1)
    o = jnp.einsum('bhqk,bhkd->bhqd', p, v)
    cat = jnp.transpose(o, (0, 2, 1, 3)).reshape(B, T, H * D)
    return cat @ w_proj.T + b_proj


if __name__ == "__main__":
    # Shapes matching the reference module: n_embed = 384, block_size = 256.
    B = 2
    T = 256                       # == block_size
    num_heads, head_size = 6, 64
    n_embed = num_heads * head_size   # 384

    key = jax.random.PRNGKey(0)
    kx, kq, kk, kv, kp, kb = jax.random.split(key, 6)

    x = jax.random.normal(kx, (B, T, n_embed), dtype=jnp.float32)
    scale = 1.0 / (n_embed ** 0.5)
    wq = jax.random.normal(kq, (num_heads, n_embed, head_size), jnp.float32) * scale
    wk = jax.random.normal(kk, (num_heads, n_embed, head_size), jnp.float32) * scale
    wv = jax.random.normal(kv, (num_heads, n_embed, head_size), jnp.float32) * scale
    w_proj = jax.random.normal(kp, (n_embed, num_heads * head_size), jnp.float32) * scale
    b_proj = jax.random.normal(kb, (n_embed,), jnp.float32) * 0.01

    out = jax.jit(multi_head_attention)(x, wq, wk, wv, w_proj, b_proj)
    jax.block_until_ready(out)

    ref = _reference(x, wq, wk, wv, w_proj, b_proj)
    err_max = float(jnp.max(jnp.abs(out - ref)))
    err_mean = float(jnp.mean(jnp.abs(out - ref)))

    assert out.shape == (B, T, n_embed)
    assert bool(jnp.all(jnp.isfinite(out)))
    # bf16 activations/weights/attention-probs vs an all-f32 reference: allow a
    # bf16-appropriate bound (much tighter than the previous 2e-1).
    assert err_max < 5e-2, f"max abs error vs f32 reference too large: {err_max}"
    assert err_mean < 5e-3, f"mean abs error vs f32 reference too large: {err_mean}"
    print("KERNEL_OK")
</pallas_src>

<mosaic_0001>
module attributes {stable_mosaic.version = 11 : i64} {
  func.func @_mha_fused_kernel(%arg0: i32, %arg1: i32, %arg2: memref<1x256x384xbf16, #tpu.memory_space<vmem>>, %arg3: memref<384x384xbf16, #tpu.memory_space<vmem>>, %arg4: memref<384x768xbf16, #tpu.memory_space<vmem>>, %arg5: memref<384x384xbf16, #tpu.memory_space<vmem>>, %arg6: memref<1x384xf32, #tpu.memory_space<vmem>>, %arg7: memref<1x128x384xf32, #tpu.memory_space<vmem>>, %arg8: memref<128x384xbf16, #tpu.memory_space<vmem>>, %arg9: memref<256x768xbf16, #tpu.memory_space<vmem>>, %arg10: memref<128x384xbf16, #tpu.memory_space<vmem>>) attributes {dimension_semantics = [#tpu.dimension_semantics<parallel>, #tpu.dimension_semantics<arbitrary>], iteration_bounds = array<i64: 2, 2>, scalar_prefetch = 0 : i64, scratch_operands = 3 : i64, tpu.core_type = #tpu.core_type<tc>, window_params = [{transform_indices = @transform_0, window_bounds = array<i64: 1, 256, 384>}, {pipeline_mode = #tpu.pipeline_mode<synchronous>, transform_indices = @transform_1, window_bounds = array<i64: 384, 384>}, {pipeline_mode = #tpu.pipeline_mode<synchronous>, transform_indices = @transform_2, window_bounds = array<i64: 384, 768>}, {pipeline_mode = #tpu.pipeline_mode<synchronous>, transform_indices = @transform_3, window_bounds = array<i64: 384, 384>}, {pipeline_mode = #tpu.pipeline_mode<synchronous>, transform_indices = @transform_4, window_bounds = array<i64: 1, 384>}, {transform_indices = @transform_5, window_bounds = array<i64: 1, 128, 384>}]} {
    %c0_i32 = arith.constant 0 : i32
    %0 = arith.cmpi eq, %arg1, %c0_i32 : i32
    %1 = arith.extui %0 : i1 to i32
    %c0_i32_0 = arith.constant 0 : i32
    %2 = arith.cmpi ne, %1, %c0_i32_0 : i32
    scf.if %2 {
      %c0_83 = arith.constant 0 : index
      %c0_84 = arith.constant 0 : index
      %c0_85 = arith.constant 0 : index
      %146 = vector.load %arg2[%c0_83, %c0_84, %c0_85] : memref<1x256x384xbf16, #tpu.memory_space<vmem>>, vector<1x256x384xbf16>
      %147 = vector.shape_cast %146 : vector<1x256x384xbf16> to vector<256x384xbf16>
      %c0_86 = arith.constant 0 : index
      %c0_87 = arith.constant 0 : index
      %148 = vector.load %arg4[%c0_86, %c0_87] : memref<384x768xbf16, #tpu.memory_space<vmem>>, vector<384x768xbf16>
      %cst_88 = arith.constant dense<0.000000e+00> : vector<256x768xf32>
      %149 = tpu.matmul %147, %148, %cst_88 {dimension_numbers = #tpu.dot_dimension_numbers<[1], [0], [0], [1], [0, 0, 1, 1], [], []>} : vector<256x384xbf16>, vector<384x768xbf16>, vector<256x768xf32> -> vector<256x768xf32>
      %150 = arith.truncf %149 : vector<256x768xf32> to vector<256x768xbf16>
      %c0_89 = arith.constant 0 : index
      %c0_90 = arith.constant 0 : index
      %151 = vector.load %arg9[%c0_89, %c0_90] : memref<256x768xbf16, #tpu.memory_space<vmem>>, vector<256x768xbf16>
      tpu.vector_store %arg9[%c0_89, %c0_90], %150 {strides = array<i32>} : memref<256x768xbf16, #tpu.memory_space<vmem>>, vector<256x768xbf16>,
    } else {
    }
    %c128_i32 = arith.constant 128 : i32
    %3 = arith.muli %arg1, %c128_i32 : i32
    %4 = tpu.assume_multiple %3, 128 : i32
    %c0 = arith.constant 0 : index
    %5 = arith.index_cast %4 : i32 to index
    %c0_1 = arith.constant 0 : index
    %6 = vector.load %arg2[%c0, %5, %c0_1] : memref<1x256x384xbf16, #tpu.memory_space<vmem>>, vector<1x128x384xbf16>
    %7 = vector.shape_cast %6 : vector<1x128x384xbf16> to vector<128x384xbf16>
    %c0_2 = arith.constant 0 : index
    %c0_3 = arith.constant 0 : index
    %8 = vector.load %arg3[%c0_2, %c0_3] : memref<384x384xbf16, #tpu.memory_space<vmem>>, vector<384x384xbf16>
    %cst = arith.constant dense<0.000000e+00> : vector<128x384xf32>
    %9 = tpu.matmul %7, %8, %cst {dimension_numbers = #tpu.dot_dimension_numbers<[1], [0], [0], [1], [0, 0, 1, 1], [], []>} : vector<128x384xbf16>, vector<384x384xbf16>, vector<128x384xf32> -> vector<128x384xf32>
    %10 = arith.truncf %9 : vector<128x384xf32> to vector<128x384xbf16>
    %c0_4 = arith.constant 0 : index
    %c0_5 = arith.constant 0 : index
    %11 = vector.load %arg8[%c0_4, %c0_5] : memref<128x384xbf16, #tpu.memory_space<vmem>>, vector<128x384xbf16>
    tpu.vector_store %arg8[%c0_4, %c0_5], %10 {strides = array<i32>} : memref<128x384xbf16, #tpu.memory_space<vmem>>, vector<128x384xbf16>,
    %12 = tpu.iota {dimensions = array<i32: 0>} : vector<128x256xi32>
    %13 = vector.broadcast %4 : i32 to vector<128x256xi32>
    %14 = arith.addi %13, %12 : vector<128x256xi32>
    %15 = tpu.iota {dimensions = array<i32: 1>} : vector<128x256xi32>
    %16 = arith.cmpi sle, %15, %14 : vector<128x256xi32>
    %c0_6 = arith.constant 0 : index
    %c0_7 = arith.constant 0 : index
    %17 = vector.load %arg8[%c0_6, %c0_7] : memref<128x384xbf16, #tpu.memory_space<vmem>>, vector<128x64xbf16>
    %c0_8 = arith.constant 0 : index
    %c0_9 = arith.constant 0 : index
    %18 = vector.load %arg9[%c0_8, %c0_9] : memref<256x768xbf16, #tpu.memory_space<vmem>>, vector<256x64xbf16>
    %c0_10 = arith.constant 0 : index
    %c384 = arith.constant 384 : index
    %19 = vector.load %arg9[%c0_10, %c384] : memref<256x768xbf16, #tpu.memory_space<vmem>>, vector<256x64xbf16>
    %cst_11 = arith.constant dense<0.000000e+00> : vector<128x256xf32>
    %20 = tpu.matmul %17, %18, %cst_11 {dimension_numbers = #tpu.dot_dimension_numbers<[1], [1], [0], [0], [0, 0, 1, 0], [], []>} : vector<128x64xbf16>, vector<256x64xbf16>, vector<128x256xf32> -> vector<128x256xf32>
    %cst_12 = arith.constant 0xFF800000 : f32
    %21 = vector.broadcast %cst_12 : f32 to vector<128x256xf32>
    %22 = arith.select %16, %20, %21 : vector<128x256xi1>, vector<128x256xf32>
    %cst_13 = arith.constant dense<0xFF800000> : vector<128xf32>
    %23 = vector.multi_reduction <maximumf>, %22, %cst_13 [1] : vector<128x256xf32> to vector<128xf32>
    %24 = vector.shape_cast %23 : vector<128xf32> to vector<128x1xf32>
    %25 = vector.broadcast %24 : vector<128x1xf32> to vector<128x256xf32>
    %26 = arith.subf %22, %25 : vector<128x256xf32>
    %27 = math.exp %26 : vector<128x256xf32>
    %cst_14 = arith.constant dense<0.000000e+00> : vector<128xf32>
    %28 = vector.multi_reduction <add>, %27, %cst_14 [1] : vector<128x256xf32> to vector<128xf32>
    %29 = vector.shape_cast %28 : vector<128xf32> to vector<128x1xf32>
    %30 = tpu.reciprocal %29 {approx = true} : vector<128x1xf32> -> vector<128x1xf32>
    %31 = vector.broadcast %30 : vector<128x1xf32> to vector<128x256xf32>
    %32 = arith.mulf %27, %31 : vector<128x256xf32>
    %33 = arith.truncf %32 : vector<128x256xf32> to vector<128x256xbf16>
    %cst_15 = arith.constant dense<0.000000e+00> : vector<128x64xf32>
    %34 = tpu.matmul %33, %19, %cst_15 {dimension_numbers = #tpu.dot_dimension_numbers<[1], [0], [0], [1], [0, 0, 1, 1], [], []>} : vector<128x256xbf16>, vector<256x64xbf16>, vector<128x64xf32> -> vector<128x64xf32>
    %35 = arith.truncf %34 : vector<128x64xf32> to vector<128x64xbf16>
    %c0_16 = arith.constant 0 : index
    %c0_17 = arith.constant 0 : index
    %36 = vector.load %arg10[%c0_16, %c0_17] : memref<128x384xbf16, #tpu.memory_space<vmem>>, vector<128x64xbf16>
    tpu.vector_store %arg10[%c0_16, %c0_17], %35 {strides = array<i32>} : memref<128x384xbf16, #tpu.memory_space<vmem>>, vector<128x64xbf16>,
    %c0_18 = arith.constant 0 : index
    %c64 = arith.constant 64 : index
    %37 = vector.load %arg8[%c0_18, %c64] : memref<128x384xbf16, #tpu.memory_space<vmem>>, vector<128x64xbf16>
    %c0_19 = arith.constant 0 : index
    %c64_20 = arith.constant 64 : index
    %38 = vector.load %arg9[%c0_19, %c64_20] : memref<256x768xbf16, #tpu.memory_space<vmem>>, vector<256x64xbf16>
    %c0_21 = arith.constant 0 : index
    %c448 = arith.constant 448 : index
    %39 = vector.load %arg9[%c0_21, %c448] : memref<256x768xbf16, #tpu.memory_space<vmem>>, vector<256x64xbf16>
    %cst_22 = arith.constant dense<0.000000e+00> : vector<128x256xf32>
    %40 = tpu.matmul %37, %38, %cst_22 {dimension_numbers = #tpu.dot_dimension_numbers<[1], [1], [0], [0], [0, 0, 1, 0], [], []>} : vector<128x64xbf16>, vector<256x64xbf16>, vector<128x256xf32> -> vector<128x256xf32>
    %cst_23 = arith.constant 0xFF800000 : f32
    %41 = vector.broadcast %cst_23 : f32 to vector<128x256xf32>
    %42 = arith.select %16, %40, %41 : vector<128x256xi1>, vector<128x256xf32>
    %cst_24 = arith.constant dense<0xFF800000> : vector<128xf32>
    %43 = vector.multi_reduction <maximumf>, %42, %cst_24 [1] : vector<128x256xf32> to vector<128xf32>
    %44 = vector.shape_cast %43 : vector<128xf32> to vector<128x1xf32>
    %45 = vector.broadcast %44 : vector<128x1xf32> to vector<128x256xf32>
    %46 = arith.subf %42, %45 : vector<128x256xf32>
    %47 = math.exp %46 : vector<128x256xf32>
    %cst_25 = arith.constant dense<0.000000e+00> : vector<128xf32>
    %48 = vector.multi_reduction <add>, %47, %cst_25 [1] : vector<128x256xf32> to vector<128xf32>
    %49 = vector.shape_cast %48 : vector<128xf32> to vector<128x1xf32>
    %50 = tpu.reciprocal %49 {approx = true} : vector<128x1xf32> -> vector<128x1xf32>
    %51 = vector.broadcast %50 : vector<128x1xf32> to vector<128x256xf32>
    %52 = arith.mulf %47, %51 : vector<128x256xf32>
    %53 = arith.truncf %52 : vector<128x256xf32> to vector<128x256xbf16>
    %cst_26 = arith.constant dense<0.000000e+00> : vector<128x64xf32>
    %54 = tpu.matmul %53, %39, %cst_26 {dimension_numbers = #tpu.dot_dimension_numbers<[1], [0], [0], [1], [0, 0, 1, 1], [], []>} : vector<128x256xbf16>, vector<256x64xbf16>, vector<128x64xf32> -> vector<128x64xf32>
    %55 = arith.truncf %54 : vector<128x64xf32> to vector<128x64xbf16>
    %c0_27 = arith.constant 0 : index
    %c64_28 = arith.constant 64 : index
    %56 = vector.load %arg10[%c0_27, %c64_28] : memref<128x384xbf16, #tpu.memory_space<vmem>>, vector<128x64xbf16>
    tpu.vector_store %arg10[%c0_27, %c64_28], %55 {strides = array<i32>} : memref<128x384xbf16, #tpu.memory_space<vmem>>, vector<128x64xbf16>,
    %c0_29 = arith.constant 0 : index
    %c128 = arith.constant 128 : index
    %57 = vector.load %arg8[%c0_29, %c128] : memref<128x384xbf16, #tpu.memory_space<vmem>>, vector<128x64xbf16>
    %c0_30 = arith.constant 0 : index
    %c128_31 = arith.constant 128 : index
    %58 = vector.load %arg9[%c0_30, %c128_31] : memref<256x768xbf16, #tpu.memory_space<vmem>>, vector<256x64xbf16>
    %c0_32 = arith.constant 0 : index
    %c512 = arith.constant 512 : index
    %59 = vector.load %arg9[%c0_32, %c512] : memref<256x768xbf16, #tpu.memory_space<vmem>>, vector<256x64xbf16>
    %cst_33 = arith.constant dense<0.000000e+00> : vector<128x256xf32>
    %60 = tpu.matmul %57, %58, %cst_33 {dimension_numbers = #tpu.dot_dimension_numbers<[1], [1], [0], [0], [0, 0, 1, 0], [], []>} : vector<128x64xbf16>, vector<256x64xbf16>, vector<128x256xf32> -> vector<128x256xf32>
    %cst_34 = arith.constant 0xFF800000 : f32
    %61 = vector.broadcast %cst_34 : f32 to vector<128x256xf32>
    %62 = arith.select %16, %60, %61 : vector<128x256xi1>, vector<128x256xf32>
    %cst_35 = arith.constant dense<0xFF800000> : vector<128xf32>
    %63 = vector.multi_reduction <maximumf>, %62, %cst_35 [1] : vector<128x256xf32> to vector<128xf32>
    %64 = vector.shape_cast %63 : vector<128xf32> to vector<128x1xf32>
    %65 = vector.broadcast %64 : vector<128x1xf32> to vector<128x256xf32>
    %66 = arith.subf %62, %65 : vector<128x256xf32>
    %67 = math.exp %66 : vector<128x256xf32>
    %cst_36 = arith.constant dense<0.000000e+00> : vector<128xf32>
    %68 = vector.multi_reduction <add>, %67, %cst_36 [1] : vector<128x256xf32> to vector<128xf32>
    %69 = vector.shape_cast %68 : vector<128xf32> to vector<128x1xf32>
    %70 = tpu.reciprocal %69 {approx = true} : vector<128x1xf32> -> vector<128x1xf32>
    %71 = vector.broadcast %70 : vector<128x1xf32> to vector<128x256xf32>
    %72 = arith.mulf %67, %71 : vector<128x256xf32>
    %73 = arith.truncf %72 : vector<128x256xf32> to vector<128x256xbf16>
    %cst_37 = arith.constant dense<0.000000e+00> : vector<128x64xf32>
    %74 = tpu.matmul %73, %59, %cst_37 {dimension_numbers = #tpu.dot_dimension_numbers<[1], [0], [0], [1], [0, 0, 1, 1], [], []>} : vector<128x256xbf16>, vector<256x64xbf16>, vector<128x64xf32> -> vector<128x64xf32>
    %75 = arith.truncf %74 : vector<128x64xf32> to vector<128x64xbf16>
    %c0_38 = arith.constant 0 : index
    %c128_39 = arith.constant 128 : index
    %76 = vector.load %arg10[%c0_38, %c128_39] : memref<128x384xbf16, #tpu.memory_space<vmem>>, vector<128x64xbf16>
    tpu.vector_store %arg10[%c0_38, %c128_39], %75 {strides = array<i32>} : memref<128x384xbf16, #tpu.memory_space<vmem>>, vector<128x64xbf16>,
    %c0_40 = arith.constant 0 : index
    %c192 = arith.constant 192 : index
    %77 = vector.load %arg8[%c0_40, %c192] : memref<128x384xbf16, #tpu.memory_space<vmem>>, vector<128x64xbf16>
    %c0_41 = arith.constant 0 : index
    %c192_42 = arith.constant 192 : index
    %78 = vector.load %arg9[%c0_41, %c192_42] : memref<256x768xbf16, #tpu.memory_space<vmem>>, vector<256x64xbf16>
    %c0_43 = arith.constant 0 : index
    %c576 = arith.constant 576 : index
    %79 = vector.load %arg9[%c0_43, %c576] : memref<256x768xbf16, #tpu.memory_space<vmem>>, vector<256x64xbf16>
    %cst_44 = arith.constant dense<0.000000e+00> : vector<128x256xf32>
    %80 = tpu.matmul %77, %78, %cst_44 {dimension_numbers = #tpu.dot_dimension_numbers<[1], [1], [0], [0], [0, 0, 1, 0], [], []>} : vector<128x64xbf16>, vector<256x64xbf16>, vector<128x256xf32> -> vector<128x256xf32>
    %cst_45 = arith.constant 0xFF800000 : f32
    %81 = vector.broadcast %cst_45 : f32 to vector<128x256xf32>
    %82 = arith.select %16, %80, %81 : vector<128x256xi1>, vector<128x256xf32>
    %cst_46 = arith.constant dense<0xFF800000> : vector<128xf32>
    %83 = vector.multi_reduction <maximumf>, %82, %cst_46 [1] : vector<128x256xf32> to vector<128xf32>
    %84 = vector.shape_cast %83 : vector<128xf32> to vector<128x1xf32>
    %85 = vector.broadcast %84 : vector<128x1xf32> to vector<128x256xf32>
    %86 = arith.subf %82, %85 : vector<128x256xf32>
    %87 = math.exp %86 : vector<128x256xf32>
    %cst_47 = arith.constant dense<0.000000e+00> : vector<128xf32>
    %88 = vector.multi_reduction <add>, %87, %cst_47 [1] : vector<128x256xf32> to vector<128xf32>
    %89 = vector.shape_cast %88 : vector<128xf32> to vector<128x1xf32>
    %90 = tpu.reciprocal %89 {approx = true} : vector<128x1xf32> -> vector<128x1xf32>
    %91 = vector.broadcast %90 : vector<128x1xf32> to vector<128x256xf32>
    %92 = arith.mulf %87, %91 : vector<128x256xf32>
    %93 = arith.truncf %92 : vector<128x256xf32> to vector<128x256xbf16>
    %cst_48 = arith.constant dense<0.000000e+00> : vector<128x64xf32>
    %94 = tpu.matmul %93, %79, %cst_48 {dimension_numbers = #tpu.dot_dimension_numbers<[1], [0], [0], [1], [0, 0, 1, 1], [], []>} : vector<128x256xbf16>, vector<256x64xbf16>, vector<128x64xf32> -> vector<128x64xf32>
    %95 = arith.truncf %94 : vector<128x64xf32> to vector<128x64xbf16>
    %c0_49 = arith.constant 0 : index
    %c192_50 = arith.constant 192 : index
    %96 = vector.load %arg10[%c0_49, %c192_50] : memref<128x384xbf16, #tpu.memory_space<vmem>>, vector<128x64xbf16>
    tpu.vector_store %arg10[%c0_49, %c192_50], %95 {strides = array<i32>} : memref<128x384xbf16, #tpu.memory_space<vmem>>, vector<128x64xbf16>,
    %c0_51 = arith.constant 0 : index
    %c256 = arith.constant 256 : index
    %97 = vector.load %arg8[%c0_51, %c256] : memref<128x384xbf16, #tpu.memory_space<vmem>>, vector<128x64xbf16>
    %c0_52 = arith.constant 0 : index
    %c256_53 = arith.constant 256 : index
    %98 = vector.load %arg9[%c0_52, %c256_53] : memref<256x768xbf16, #tpu.memory_space<vmem>>, vector<256x64xbf16>
    %c0_54 = arith.constant 0 : index
    %c640 = arith.constant 640 : index
    %99 = vector.load %arg9[%c0_54, %c640] : memref<256x768xbf16, #tpu.memory_space<vmem>>, vector<256x64xbf16>
    %cst_55 = arith.constant dense<0.000000e+00> : vector<128x256xf32>
    %100 = tpu.matmul %97, %98, %cst_55 {dimension_numbers = #tpu.dot_dimension_numbers<[1], [1], [0], [0], [0, 0, 1, 0], [], []>} : vector<128x64xbf16>, vector<256x64xbf16>, vector<128x256xf32> -> vector<128x256xf32>
    %cst_56 = arith.constant 0xFF800000 : f32
    %101 = vector.broadcast %cst_56 : f32 to vector<128x256xf32>
    %102 = arith.select %16, %100, %101 : vector<128x256xi1>, vector<128x256xf32>
    %cst_57 = arith.constant dense<0xFF800000> : vector<128xf32>
    %103 = vector.multi_reduction <maximumf>, %102, %cst_57 [1] : vector<128x256xf32> to vector<128xf32>
    %104 = vector.shape_cast %103 : vector<128xf32> to vector<128x1xf32>
    %105 = vector.broadcast %104 : vector<128x1xf32> to vector<128x256xf32>
    %106 = arith.subf %102, %105 : vector<128x256xf32>
    %107 = math.exp %106 : vector<128x256xf32>
    %cst_58 = arith.constant dense<0.000000e+00> : vector<128xf32>
    %108 = vector.multi_reduction <add>, %107, %cst_58 [1] : vector<128x256xf32> to vector<128xf32>
    %109 = vector.shape_cast %108 : vector<128xf32> to vector<128x1xf32>
    %110 = tpu.reciprocal %109 {approx = true} : vector<128x1xf32> -> vector<128x1xf32>
    %111 = vector.broadcast %110 : vector<128x1xf32> to vector<128x256xf32>
    %112 = arith.mulf %107, %111 : vector<128x256xf32>
    %113 = arith.truncf %112 : vector<128x256xf32> to vector<128x256xbf16>
    %cst_59 = arith.constant dense<0.000000e+00> : vector<128x64xf32>
    %114 = tpu.matmul %113, %99, %cst_59 {dimension_numbers = #tpu.dot_dimension_numbers<[1], [0], [0], [1], [0, 0, 1, 1], [], []>} : vector<128x256xbf16>, vector<256x64xbf16>, vector<128x64xf32> -> vector<128x64xf32>
    %115 = arith.truncf %114 : vector<128x64xf32> to vector<128x64xbf16>
    %c0_60 = arith.constant 0 : index
    %c256_61 = arith.constant 256 : index
    %116 = vector.load %arg10[%c0_60, %c256_61] : memref<128x384xbf16, #tpu.memory_space<vmem>>, vector<128x64xbf16>
    tpu.vector_store %arg10[%c0_60, %c256_61], %115 {strides = array<i32>} : memref<128x384xbf16, #tpu.memory_space<vmem>>, vector<128x64xbf16>,
    %c0_62 = arith.constant 0 : index
    %c320 = arith.constant 320 : index
    %117 = vector.load %arg8[%c0_62, %c320] : memref<128x384xbf16, #tpu.memory_space<vmem>>, vector<128x64xbf16>
    %c0_63 = arith.constant 0 : index
    %c320_64 = arith.constant 320 : index
    %118 = vector.load %arg9[%c0_63, %c320_64] : memref<256x768xbf16, #tpu.memory_space<vmem>>, vector<256x64xbf16>
    %c0_65 = arith.constant 0 : index
    %c704 = arith.constant 704 : index
    %119 = vector.load %arg9[%c0_65, %c704] : memref<256x768xbf16, #tpu.memory_space<vmem>>, vector<256x64xbf16>
    %cst_66 = arith.constant dense<0.000000e+00> : vector<128x256xf32>
    %120 = tpu.matmul %117, %118, %cst_66 {dimension_numbers = #tpu.dot_dimension_numbers<[1], [1], [0], [0], [0, 0, 1, 0], [], []>} : vector<128x64xbf16>, vector<256x64xbf16>, vector<128x256xf32> -> vector<128x256xf32>
    %cst_67 = arith.constant 0xFF800000 : f32
    %121 = vector.broadcast %cst_67 : f32 to vector<128x256xf32>
    %122 = arith.select %16, %120, %121 : vector<128x256xi1>, vector<128x256xf32>
    %cst_68 = arith.constant dense<0xFF800000> : vector<128xf32>
    %123 = vector.multi_reduction <maximumf>, %122, %cst_68 [1] : vector<128x256xf32> to vector<128xf32>
    %124 = vector.shape_cast %123 : vector<128xf32> to vector<128x1xf32>
    %125 = vector.broadcast %124 : vector<128x1xf32> to vector<128x256xf32>
    %126 = arith.subf %122, %125 : vector<128x256xf32>
    %127 = math.exp %126 : vector<128x256xf32>
    %cst_69 = arith.constant dense<0.000000e+00> : vector<128xf32>
    %128 = vector.multi_reduction <add>, %127, %cst_69 [1] : vector<128x256xf32> to vector<128xf32>
    %129 = vector.shape_cast %128 : vector<128xf32> to vector<128x1xf32>
    %130 = tpu.reciprocal %129 {approx = true} : vector<128x1xf32> -> vector<128x1xf32>
    %131 = vector.broadcast %130 : vector<128x1xf32> to vector<128x256xf32>
    %132 = arith.mulf %127, %131 : vector<128x256xf32>
    %133 = arith.truncf %132 : vector<128x256xf32> to vector<128x256xbf16>
    %cst_70 = arith.constant dense<0.000000e+00> : vector<128x64xf32>
    %134 = tpu.matmul %133, %119, %cst_70 {dimension_numbers = #tpu.dot_dimension_numbers<[1], [0], [0], [1], [0, 0, 1, 1], [], []>} : vector<128x256xbf16>, vector<256x64xbf16>, vector<128x64xf32> -> vector<128x64xf32>
    %135 = arith.truncf %134 : vector<128x64xf32> to vector<128x64xbf16>
    %c0_71 = arith.constant 0 : index
    %c320_72 = arith.constant 320 : index
    %136 = vector.load %arg10[%c0_71, %c320_72] : memref<128x384xbf16, #tpu.memory_space<vmem>>, vector<128x64xbf16>
    tpu.vector_store %arg10[%c0_71, %c320_72], %135 {strides = array<i32>} : memref<128x384xbf16, #tpu.memory_space<vmem>>, vector<128x64xbf16>,
    %c0_73 = arith.constant 0 : index
    %c0_74 = arith.constant 0 : index
    %137 = vector.load %arg10[%c0_73, %c0_74] : memref<128x384xbf16, #tpu.memory_space<vmem>>, vector<128x384xbf16>
    %c0_75 = arith.constant 0 : index
    %c0_76 = arith.constant 0 : index
    %138 = vector.load %arg5[%c0_75, %c0_76] : memref<384x384xbf16, #tpu.memory_space<vmem>>, vector<384x384xbf16>
    %cst_77 = arith.constant dense<0.000000e+00> : vector<128x384xf32>
    %139 = tpu.matmul %137, %138, %cst_77 {dimension_numbers = #tpu.dot_dimension_numbers<[1], [0], [0], [1], [0, 0, 1, 1], [], []>} : vector<128x384xbf16>, vector<384x384xbf16>, vector<128x384xf32> -> vector<128x384xf32>
    %c0_78 = arith.constant 0 : index
    %c0_79 = arith.constant 0 : index
    %140 = vector.load %arg6[%c0_78, %c0_79] : memref<1x384xf32, #tpu.memory_space<vmem>>, vector<1x384xf32>
    %141 = vector.broadcast %140 : vector<1x384xf32> to vector<128x384xf32>
    %142 = arith.addf %139, %141 : vector<128x384xf32>
    %c0_80 = arith.constant 0 : index
    %c0_81 = arith.constant 0 : index
    %c0_82 = arith.constant 0 : index
    %143 = vector.load %arg7[%c0_80, %c0_81, %c0_82] : memref<1x128x384xf32, #tpu.memory_space<vmem>>, vector<1x128x384xf32>
    %144 = vector.shape_cast %143 : vector<1x128x384xf32> to vector<128x384xf32>
    %145 = vector.shape_cast %142 : vector<128x384xf32> to vector<1x128x384xf32>
    tpu.vector_store %arg7[%c0_80, %c0_81, %c0_82], %145 {strides = array<i32>} : memref<1x128x384xf32, #tpu.memory_space<vmem>>, vector<1x128x384xf32>,
    return
  }
  func.func @transform_0(%arg0: i32, %arg1: i32) -> (i32, i32, i32) {
    %c0_i32 = arith.constant 0 : i32
    %c0_i32_0 = arith.constant 0 : i32
    %c0_i32_1 = arith.constant 0 : i32
    return %arg0, %c0_i32, %c0_i32_0 : i32, i32, i32
  }
  func.func @transform_1(%arg0: i32, %arg1: i32) -> (i32, i32) {
    %c0_i32 = arith.constant 0 : i32
    %c0_i32_0 = arith.constant 0 : i32
    %c0_i32_1 = arith.constant 0 : i32
    return %c0_i32, %c0_i32_0 : i32, i32
  }
  func.func @transform_2(%arg0: i32, %arg1: i32) -> (i32, i32) {
    %c0_i32 = arith.constant 0 : i32
    %c0_i32_0 = arith.constant 0 : i32
    %c0_i32_1 = arith.constant 0 : i32
    return %c0_i32, %c0_i32_0 : i32, i32
  }
  func.func @transform_3(%arg0: i32, %arg1: i32) -> (i32, i32) {
    %c0_i32 = arith.constant 0 : i32
    %c0_i32_0 = arith.constant 0 : i32
    %c0_i32_1 = arith.constant 0 : i32
    return %c0_i32, %c0_i32_0 : i32, i32
  }
  func.func @transform_4(%arg0: i32, %arg1: i32) -> (i32, i32) {
    %c0_i32 = arith.constant 0 : i32
    %c0_i32_0 = arith.constant 0 : i32
    %c0_i32_1 = arith.constant 0 : i32
    return %c0_i32, %c0_i32_0 : i32, i32
  }
  func.func @transform_5(%arg0: i32, %arg1: i32) -> (i32, i32, i32) {
    %c0_i32 = arith.constant 0 : i32
    %c0_i32_0 = arith.constant 0 : i32
    return %arg0, %arg1, %c0_i32 : i32, i32, i32
  }
}

</mosaic_0001>

<llo_original>
// kernel: multi_head_attention.1
$region0: #{multi_head_attention.1}
  #allocation0 [shape = 'u32[]', space=smem, size = 0x4, offset = 0x4, fixed_abs, tag = 'smem constant byte address 0x4 - core index']
  #allocation1 [shape = 'u32[72,128]{1,0:T(1,128)}', space=vmem, size = 0x9000, scoped, tag = 'internal scratch']
  #allocation2 [shape = 'bf16[128,384]{1,0:T(8,128)(2,1)}', space=vmem, size = 0x18000, scoped, tag = 'scratch operand']
  #allocation3 [shape = 'bf16[256,768]{1,0:T(8,128)(2,1)}', space=vmem, size = 0x60000, scoped, tag = 'scratch operand']
  #allocation4 [shape = 'bf16[128,384]{1,0:T(8,128)(2,1)}', space=vmem, size = 0x18000, scoped, tag = 'scratch operand']
  %s0 = inlined_call_operand.vmem [shape: bf16[2,256,384], index: 0, kind: input, shape index: {}]
  %s1 = inlined_call_operand.vmem [shape: bf16[384,384], index: 1, kind: input, shape index: {}]
  %s2 = inlined_call_operand.vmem [shape: bf16[384,768], index: 2, kind: input, shape index: {}]
  %s3 = inlined_call_operand.vmem [shape: bf16[384,384], index: 3, kind: input, shape index: {}]
  %s4 = inlined_call_operand.vmem [shape: f32[1,384], index: 4, kind: input, shape index: {}]
  %s5 = inlined_call_operand.hbm [shape: f32[2,256,384], index: 5, kind: output, shape index: {}]
  %s6 = sld [smem:[#allocation0]]
  $region57: #{multi_head_attention.1} parent=0
    _
  %s8 = ssub.s32 1, %s6
  %s9 = scalar_select 0, %s8, %s6
  $region1: #{multi_head_attention.1} parent=0
    #allocation5 [shape = 'u8[393216]{0}', space=vmem, size = 0x60000, scoped, tag = 'output window, operand 0']
    #allocation6 [shape = 's32[2]{0}', space=sflag, size = 0x8, scoped, tag = 'scoped memory for multi_head_attention.1']
    %10 = vsyncpa [#allocation6], 0
    %s11 = scalar_lea.sflag [#allocation6], 1
    %12 = vsyncpa %s11, 0
    loop: start=0, step=1, limit=6
    $region2: #{multi_head_attention.1} parent=1 // loop_pre_header
      _
    $region3: #{multi_head_attention.1} parent=1 // loop_header
      %s14 = sphi 0, %s18
      %p15 = scmp.ge.s32.totalorder %s14, 6
      %s21 = sphi 0, %s33
      %s22 = sphi 0, %s29
      %s23 = sphi 0, %s21
      %s24 = sphi 0, %s22
      %s25 = sphi 0, %s23
      %s26 = sphi 0, %s24
      %s36 = sphi 0, %s38
      %s39 = sphi 0, %s36
      %s40 = sphi 0, %s39
      %s56 = sphi 0, %s40
      %s60 = sphi 0, %s60
      %s62 = sphi 0, %s60
      %s63 = sphi 0, %s62
      %s77 = sphi 0, %s63
      %s81 = sphi 0, %s81
      %s83 = sphi 0, %s81
      %s84 = sphi 0, %s83
      %s98 = sphi 0, %s84
      %s102 = sphi 0, %s102
      %s104 = sphi 0, %s102
      %s105 = sphi 0, %s104
      %s119 = sphi 0, %s105
      %s123 = sphi 0, %s123
      %s125 = sphi 0, %s123
      %s126 = sphi 0, %s125
      %s140 = sphi 0, %s126
      %s148 = sphi 0, %s150
      %s151 = sphi 0, %s148
      %s152 = sphi 0, %s151
      %s168 = sphi 0, %s152
    $region4: #{multi_head_attention.1} parent=1 // loop_header_branch
      %17 = sbr.rel (%p15) target = $region8
    $region5: #{multi_head_attention.1} parent=1 // loop_body
      %s19 = ssub.s32 %s14, 1
      %s20 = ssub.s32 %s14, 2
      %s27 = sadd.s32 1, %s22
      %p28 = scmp.ge.s32.totalorder %s27, 2
      %s29 = scalar_select %p28, 0, %s27
      %s30 = sadd.s32 1, %s21
      %s31 = scalar_select %p28, %s30, %s21
      %p32 = scmp.ge.s32.totalorder %s31, 2
      %s33 = scalar_select %p32, 0, %s31
      %s34 = ssub.s32 %s21, %s33
      %p35 = scmp.eq.s32.totalorder %s34, 0
      %s37 = sadd.s32 %s36, 1
      %s38 = scalar_select %p35, %s36, %s37
      %p41 = pneg %p35
      %p42 = scmp.eq.s32.totalorder %s14, 3
      %p43 = por %p41, %p42
      %p44 = scmp.ne.s32.totalorder %s36, %s39
      %p45 = scmp.eq.s32.totalorder %s14, 0
      %p46 = por %p44, %p45
      %p47 = scmp.ne.s32.totalorder %s36, %s39
      %p48 = scmp.eq.s32.totalorder %s19, 3
      %p49 = por %p47, %p48
      %p50 = scmp.ne.s32.totalorder %s39, %s40
      %p51 = scmp.eq.s32.totalorder %s19, 0
      %p52 = por %p50, %p51
      %p53 = scmp.ne.s32.totalorder %s39, %s40
      %p54 = scmp.eq.s32.totalorder %s20, 3
      %p55 = por %p53, %p54
      %p57 = scmp.ne.s32.totalorder %s40, %s56
      %p58 = scmp.eq.s32.totalorder %s20, 0
      %p59 = por %p57, %p58
      %s61 = sadd.s32 %s60, 1
      %p64 = scmp.eq.s32.totalorder %s14, 3
      %p65 = scmp.ne.s32.totalorder %s60, %s62
      %p66 = scmp.eq.s32.totalorder %s14, 0
      %p67 = por %p65, %p66
      %p68 = scmp.ne.s32.totalorder %s60, %s62
      %p69 = scmp.eq.s32.totalorder %s19, 3
      %p70 = por %p68, %p69
      %p71 = scmp.ne.s32.totalorder %s62, %s63
      %p72 = scmp.eq.s32.totalorder %s19, 0
      %p73 = por %p71, %p72
      %p74 = scmp.ne.s32.totalorder %s62, %s63
      %p75 = scmp.eq.s32.totalorder %s20, 3
      %p76 = por %p74, %p75
      %p78 = scmp.ne.s32.totalorder %s63, %s77
      %p79 = scmp.eq.s32.totalorder %s20, 0
      %p80 = por %p78, %p79
      %s82 = sadd.s32 %s81, 1
      %p85 = scmp.eq.s32.totalorder %s14, 3
      %p86 = scmp.ne.s32.totalorder %s81, %s83
      %p87 = scmp.eq.s32.totalorder %s14, 0
      %p88 = por %p86, %p87
      %p89 = scmp.ne.s32.totalorder %s81, %s83
      %p90 = scmp.eq.s32.totalorder %s19, 3
      %p91 = por %p89, %p90
      %p92 = scmp.ne.s32.totalorder %s83, %s84
      %p93 = scmp.eq.s32.totalorder %s19, 0
      %p94 = por %p92, %p93
      %p95 = scmp.ne.s32.totalorder %s83, %s84
      %p96 = scmp.eq.s32.totalorder %s20, 3
      %p97 = por %p95, %p96
      %p99 = scmp.ne.s32.totalorder %s84, %s98
      %p100 = scmp.eq.s32.totalorder %s20, 0
      %p101 = por %p99, %p100
      %s103 = sadd.s32 %s102, 1
      %p106 = scmp.eq.s32.totalorder %s14, 3
      %p107 = scmp.ne.s32.totalorder %s102, %s104
      %p108 = scmp.eq.s32.totalorder %s14, 0
      %p109 = por %p107, %p108
      %p110 = scmp.ne.s32.totalorder %s102, %s104
      %p111 = scmp.eq.s32.totalorder %s19, 3
      %p112 = por %p110, %p111
      %p113 = scmp.ne.s32.totalorder %s104, %s105
      %p114 = scmp.eq.s32.totalorder %s19, 0
      %p115 = por %p113, %p114
      %p116 = scmp.ne.s32.totalorder %s104, %s105
      %p117 = scmp.eq.s32.totalorder %s20, 3
      %p118 = por %p116, %p117
      %p120 = scmp.ne.s32.totalorder %s105, %s119
      %p121 = scmp.eq.s32.totalorder %s20, 0
      %p122 = por %p120, %p121
      %s124 = sadd.s32 %s123, 1
      %p127 = scmp.eq.s32.totalorder %s14, 3
      %p128 = scmp.ne.s32.totalorder %s123, %s125
      %p129 = scmp.eq.s32.totalorder %s14, 0
      %p130 = por %p128, %p129
      %p131 = scmp.ne.s32.totalorder %s123, %s125
      %p132 = scmp.eq.s32.totalorder %s19, 3
      %p133 = por %p131, %p132
      %p134 = scmp.ne.s32.totalorder %s125, %s126
      %p135 = scmp.eq.s32.totalorder %s19, 0
      %p136 = por %p134, %p135
      %p137 = scmp.ne.s32.totalorder %s125, %s126
      %p138 = scmp.eq.s32.totalorder %s20, 3
      %p139 = por %p137, %p138
      %p141 = scmp.ne.s32.totalorder %s126, %s140
      %p142 = scmp.eq.s32.totalorder %s20, 0
      %p143 = por %p141, %p142
      %s144 = ssub.s32 %s21, %s33
      %s145 = ssub.s32 %s22, %s29
      %s146 = sor.u32 %s144, %s145
      %p147 = scmp.eq.s32.totalorder %s146, 0
      %s149 = sadd.s32 %s148, 1
      %s150 = scalar_select %p147, %s148, %s149
      %p153 = pneg %p147
      %p154 = scmp.eq.s32.totalorder %s14, 3
      %p155 = por %p153, %p154
      %p156 = scmp.ne.s32.totalorder %s148, %s151
      %p157 = scmp.eq.s32.totalorder %s14, 0
      %p158 = por %p156, %p157
      %p159 = scmp.ne.s32.totalorder %s148, %s151
      %p160 = scmp.eq.s32.totalorder %s19, 3
      %p161 = por %p159, %p160
      %p162 = scmp.ne.s32.totalorder %s151, %s152
      %p163 = scmp.eq.s32.totalorder %s19, 0
      %p164 = por %p162, %p163
      %p165 = scmp.ne.s32.totalorder %s151, %s152
      %p166 = scmp.eq.s32.totalorder %s20, 3
      %p167 = por %p165, %p166
      %p169 = scmp.ne.s32.totalorder %s152, %s168
      %p170 = scmp.eq.s32.totalorder %s20, 0
      %p171 = por %p169, %p170
      %p172 = scmp.le.s32.totalorder 1, %s14
      %p173 = scmp.lt.s32.totalorder %s14, 5
      %p174 = pnand %p172, %p173
      %p175 = pneg %p174
      // Predicated region
      $region9: #{multi_head_attention.1} parent=5 // pred_check
        _
      $region10: #{multi_head_attention.1} parent=5 // pred_check_branch
        %177 = sbr.rel (%p174) target = $region12
      $region11: #{multi_head_attention.1} parent=5 // pred_region
        %s178 = ssub.s32 %s14, 1
        // Predicated region
        $region13: #{multi_head_attention.1} parent=11 // pred_check
          %p179 = pneg %p73
        $region14: #{multi_head_attention.1} parent=11 // pred_check_branch
          %181 = sbr.rel (%p179) target = $region16
        $region15: #{multi_head_attention.1} parent=11 // pred_region
          _
        $region16: #{multi_head_attention.1} parent=11 // pred_fallthru
          _
        // Predicated region
        $region17: #{multi_head_attention.1} parent=11 // pred_check
          %p182 = pneg %p94
        $region18: #{multi_head_attention.1} parent=11 // pred_check_branch
          %184 = sbr.rel (%p182) target = $region20
        $region19: #{multi_head_attention.1} parent=11 // pred_region
          _
        $region20: #{multi_head_attention.1} parent=11 // pred_fallthru
          _
        // Predicated region
        $region21: #{multi_head_attention.1} parent=11 // pred_check
          %p185 = pneg %p115
        $region22: #{multi_head_attention.1} parent=11 // pred_check_branch
          %187 = sbr.rel (%p185) target = $region24
        $region23: #{multi_head_attention.1} parent=11 // pred_region
          _
        $region24: #{multi_head_attention.1} parent=11 // pred_fallthru
          _
        // Predicated region
        $region25: #{multi_head_attention.1} parent=11 // pred_check
          %p188 = pneg %p136
        $region26: #{multi_head_attention.1} parent=11 // pred_check_branch
          %190 = sbr.rel (%p188) target = $region28
        $region27: #{multi_head_attention.1} parent=11 // pred_region
          _
        $region28: #{multi_head_attention.1} parent=11 // pred_fallthru
          _
      $region12: #{multi_head_attention.1} parent=5 // pred_fallthru
        _
      %p191 = scmp.lt.s32.totalorder %s14, 4
      // Predicated region
      $region29: #{multi_head_attention.1} parent=5 // pred_check
        %p192 = pneg %p191
      $region30: #{multi_head_attention.1} parent=5 // pred_check_branch
        %194 = sbr.rel (%p192) target = $region32
      $region31: #{multi_head_attention.1} parent=5 // pred_region
        // Predicated region
        $region33: #{multi_head_attention.1} parent=31 // pred_check
          %p195 = pneg %p46
        $region34: #{multi_head_attention.1} parent=31 // pred_check_branch
          %197 = sbr.rel (%p195) target = $region36
        $region35: #{multi_head_attention.1} parent=31 // pred_region
          %p198 = scmp.lt.s32.totalorder %s21, 1
          %s199 = scalar_select %p198, %s21, 1
          %s200 = smul.addr %s199, 96
          %s201 = smul.addr %s200, 4
          %s202 = scalar_lea.vmem %s0, %s201
        $region36: #{multi_head_attention.1} parent=31 // pred_fallthru
          _
      $region32: #{multi_head_attention.1} parent=5 // pred_fallthru
        _
      %p203 = scmp.le.s32.totalorder 1, %s14
      %p204 = scmp.lt.s32.totalorder %s14, 5
      %p205 = pnand %p203, %p204
      %p206 = pneg %p205
      // Predicated region
      $region37: #{multi_head_attention.1} parent=5 // pred_check
        _
      $region38: #{multi_head_attention.1} parent=5 // pred_check_branch
        %208 = sbr.rel (%p205) target = $region40
      $region39: #{multi_head_attention.1} parent=5 // pred_region
        %s209 = ssub.s32 %s14, 1
        %p210 = scmp.lt.s32.totalorder %s23, 1
        %s211 = scalar_select %p210, %s23, 1
        %s212 = smul.addr %s211, 96
        %s213 = smul.addr %s212, 4
        %s214 = scalar_lea.vmem %s0, %s213
        %p215 = pneg %p52
        %p216 = pneg %p49
        %p217 = pneg %p73
        %p218 = pneg %p70
        %p219 = pneg %p94
        %p220 = pneg %p91
        %p221 = pneg %p115
        %p222 = pneg %p112
        %p223 = pneg %p136
        %p224 = pneg %p133
        %p225 = pneg %p164
        %p226 = pneg %p161
        %s227 = sand.u32 %s151, 1
        %s228 = scalar_lea.sflag [#allocation6], %s227
        %s229 = sand.u32 %s151, 1
        %s230 = smul.addr %s229, 384
        %s231 = scalar_lea.vmem [#allocation5], %s230
        %p232 = scmp.lt.s32.totalorder %s23, 1
        %s233 = scalar_select %p232, %s23, 1
        %s234 = smul.addr %s233, 96
        %s235 = smul.addr %s234, 4
        %s236 = scalar_lea.vmem %s0, %s235
        %s237 = smul.u32 16, %s24
        %p238 = scmp.eq.s32.totalorder %s24, 0
        // Predicated region
        $region41: #{multi_head_attention.1} parent=39 // pred_check
          %p239 = pneg %p238
        $region42: #{multi_head_attention.1} parent=39 // pred_check_branch
          %241 = sbr.rel (%p239) target = $region44
        $region43: #{multi_head_attention.1} parent=39 // pred_region
          %v242 = vld [vmem:[%s236] sm:$0xff]
          %v243 = vld [vmem:[%s236 + $0x8] sm:$0xf]
          %v244 = vld [vmem:[%s236 + $0xc] sm:$0xff]
          %v245 = vld [vmem:[%s236 + $0x14] sm:$0xf]
          %v246 = vld [vmem:[%s236 + $0x18] sm:$0xff]
          %v247 = vld [vmem:[%s236 + $0x20] sm:$0xf]
          %v248 = vld [vmem:[%s236 + $0x24] sm:$0xff]
          %v249 = vld [vmem:[%s236 + $0x2c] sm:$0xf]
          %v250 = vld [vmem:[%s236 + $0x30] sm:$0xff]
          %v251 = vld [vmem:[%s236 + $0x38] sm:$0xf]
          %v252 = vld [vmem:[%s236 + $0x3c] sm:$0xff]
          %v253 = vld [vmem:[%s236 + $0x44] sm:$0xf]
          %v254 = vld [vmem:[%s236 + $0x48] sm:$0xff]
          %v255 = vld [vmem:[%s236 + $0x50] sm:$0xf]
          %v256 = vld [vmem:[%s236 + $0x54] sm:$0xff]
          %v257 = vld [vmem:[%s236 + $0x5c] sm:$0xf]
          %v258 = vld [vmem:[%s236 + $0x60] sm:$0xff]
          %v259 = vld [vmem:[%s236 + $0x68] sm:$0xf]
          %v260 = vld [vmem:[%s236 + $0x6c] sm:$0xff]
          %v261 = vld [vmem:[%s236 + $0x74] sm:$0xf]
          %v262 = vld [vmem:[%s236 + $0x78] sm:$0xff]
          %v263 = vld [vmem:[%s236 + $0x80] sm:$0xf]
          %v264 = vld [vmem:[%s236 + $0x84] sm:$0xff]
          %v265 = vld [vmem:[%s236 + $0x8c] sm:$0xf]
          %v266 = vld [vmem:[%s236 + $0x90] sm:$0xff]
          %v267 = vld [vmem:[%s236 + $0x98] sm:$0xf]
          %v268 = vld [vmem:[%s236 + $0x9c] sm:$0xff]
          %v269 = vld [vmem:[%s236 + $0xa4] sm:$0xf]
          %v270 = vld [vmem:[%s236 + $0xa8] sm:$0xff]
          %v271 = vld [vmem:[%s236 + $0xb0] sm:$0xf]
          %v272 = vld [vmem:[%s236 + $0xb4] sm:$0xff]
          %v273 = vld [vmem:[%s236 + $0xbc] sm:$0xf]
          %v274 = vld [vmem:[%s236 + $0xc0] sm:$0xff]
          %v275 = vld [vmem:[%s236 + $0xc8] sm:$0xf]
          %v276 = vld [vmem:[%s236 + $0xcc] sm:$0xff]
          %v277 = vld [vmem:[%s236 + $0xd4] sm:$0xf]
          %v278 = vld [vmem:[%s236 + $0xd8] sm:$0xff]
          %v279 = vld [vmem:[%s236 + $0xe0] sm:$0xf]
          %v280 = vld [vmem:[%s236 + $0xe4] sm:$0xff]
          %v281 = vld [vmem:[%s236 + $0xec] sm:$0xf]
          %v282 = vld [vmem:[%s236 + $0xf0] sm:$0xff]
          %v283 = vld [vmem:[%s236 + $0xf8] sm:$0xf]
          %v284 = vld [vmem:[%s236 + $0xfc] sm:$0xff]
          %v285 = vld [vmem:[%s236 + $0x104] sm:$0xf]
          %v286 = vld [vmem:[%s236 + $0x108] sm:$0xff]
          %v287 = vld [vmem:[%s236 + $0x110] sm:$0xf]
          %v288 = vld [vmem:[%s236 + $0x114] sm:$0xff]
          %v289 = vld [vmem:[%s236 + $0x11c] sm:$0xf]
          %v290 = vld [vmem:[%s236 + $0x120] sm:$0xff]
          %v291 = vld [vmem:[%s236 + $0x128] sm:$0xf]
          %v292 = vld [vmem:[%s236 + $0x12c] sm:$0xff]
          %v293 = vld [vmem:[%s236 + $0x134] sm:$0xf]
          %v294 = vld [vmem:[%s236 + $0x138] sm:$0xff]
          %v295 = vld [vmem:[%s236 + $0x140] sm:$0xf]
          %v296 = vld [vmem:[%s236 + $0x144] sm:$0xff]
          %v297 = vld [vmem:[%s236 + $0x14c] sm:$0xf]
          %v298 = vld [vmem:[%s236 + $0x150] sm:$0xff]
          %v299 = vld [vmem:[%s236 + $0x158] sm:$0xf]
          %v300 = vld [vmem:[%s236 + $0x15c] sm:$0xff]
          %v301 = vld [vmem:[%s236 + $0x164] sm:$0xf]
          %v302 = vld [vmem:[%s236 + $0x168] sm:$0xff]
          %v303 = vld [vmem:[%s236 + $0x170] sm:$0xf]
          %v304 = vld [vmem:[%s236 + $0x174] sm:$0xff]
          %v305 = vld [vmem:[%s236 + $0x17c] sm:$0xf]
          %v306 = vld [vmem:[%s2] sm:$0xff]
          %v307 = vld [vmem:[%s2 + $0x8] sm:$0xff]
          %v308 = vld [vmem:[%s2 + $0x10] sm:$0xff]
          %v309 = vld [vmem:[%s2 + $0x18] sm:$0xff]
          %v310 = vld [vmem:[%s2 + $0x20] sm:$0xff]
          %v311 = vld [vmem:[%s2 + $0x28] sm:$0xff]
          %v312 = vld [vmem:[%s2 + $0x30] sm:$0xff]
          %v313 = vld [vmem:[%s2 + $0x38] sm:$0xff]
          %v314 = vld [vmem:[%s2 + $0x40] sm:$0xff]
          %v315 = vld [vmem:[%s2 + $0x48] sm:$0xff]
          %v316 = vld [vmem:[%s2 + $0x50] sm:$0xff]
          %v317 = vld [vmem:[%s2 + $0x58] sm:$0xff]
          %v318 = vld [vmem:[%s2 + $0x60] sm:$0xff]
          %v319 = vld [vmem:[%s2 + $0x68] sm:$0xff]
          %v320 = vld [vmem:[%s2 + $0x70] sm:$0xff]
          %v321 = vld [vmem:[%s2 + $0x78] sm:$0xff]
          %v322 = vld [vmem:[%s2 + $0x80] sm:$0xff]
          %v323 = vld [vmem:[%s2 + $0x88] sm:$0xff]
          %v324 = vld [vmem:[%s2 + $0x90] sm:$0xff]
          %v325 = vld [vmem:[%s2 + $0x98] sm:$0xff]
          %v326 = vld [vmem:[%s2 + $0xa0] sm:$0xff]
          %v327 = vld [vmem:[%s2 + $0xa8] sm:$0xff]
          %v328 = vld [vmem:[%s2 + $0xb0] sm:$0xff]
          %v329 = vld [vmem:[%s2 + $0xb8] sm:$0xff]
          %v330 = vld [vmem:[%s2 + $0xc0] sm:$0xff]
          %v331 = vld [vmem:[%s2 + $0xc8] sm:$0xff]
          %v332 = vld [vmem:[%s2 + $0xd0] sm:$0xff]
          %v333 = vld [vmem:[%s2 + $0xd8] sm:$0xff]
          %v334 = vld [vmem:[%s2 + $0xe0] sm:$0xff]
          %v335 = vld [vmem:[%s2 + $0xe8] sm:$0xff]
          %v336 = vld [vmem:[%s2 + $0xf0] sm:$0xff]
          %v337 = vld [vmem:[%s2 + $0xf8] sm:$0xff]
          %v338 = vld [vmem:[%s2 + $0x100] sm:$0xff]
          %v339 = vld [vmem:[%s2 + $0x108] sm:$0xff]
          %v340 = vld [vmem:[%s2 + $0x110] sm:$0xff]
          %v341 = vld [vmem:[%s2 + $0x118] sm:$0xff]
          %v342 = vld [vmem:[%s2 + $0x120] sm:$0xff]
          %v343 = vld [vmem:[%s2 + $0x128] sm:$0xff]
          %v344 = vld [vmem:[%s2 + $0x130] sm:$0xff]
          %v345 = vld [vmem:[%s2 + $0x138] sm:$0xff]
          %v346 = vld [vmem:[%s2 + $0x140] sm:$0xff]
          %v347 = vld [vmem:[%s2 + $0x148] sm:$0xff]
          %v348 = vld [vmem:[%s2 + $0x150] sm:$0xff]
          %v349 = vld [vmem:[%s2 + $0x158] sm:$0xff]
          %v350 = vld [vmem:[%s2 + $0x160] sm:$0xff]
          %v351 = vld [vmem:[%s2 + $0x168] sm:$0xff]
          %v352 = vld [vmem:[%s2 + $0x170] sm:$0xff]
          %v353 = vld [vmem:[%s2 + $0x178] sm:$0xff]
          %v354 = vld [vmem:[%s2 + $0x180] sm:$0xff]
          %v355 = vld [vmem:[%s2 + $0x188] sm:$0xff]
          %v356 = vld [vmem:[%s2 + $0x190] sm:$0xff]
          %v357 = vld [vmem:[%s2 + $0x198] sm:$0xff]
          %v358 = vld [vmem:[%s2 + $0x1a0] sm:$0xff]
          %v359 = vld [vmem:[%s2 + $0x1a8] sm:$0xff]
          %v360 = vld [vmem:[%s2 + $0x1b0] sm:$0xff]
          %v361 = vld [vmem:[%s2 + $0x1b8] sm:$0xff]
          %v362 = vld [vmem:[%s2 + $0x1c0] sm:$0xff]
          %v363 = vld [vmem:[%s2 + $0x1c8] sm:$0xff]
          %v364 = vld [vmem:[%s2 + $0x1d0] sm:$0xff]
          %v365 = vld [vmem:[%s2 + $0x1d8] sm:$0xff]
          %v366 = vld [vmem:[%s2 + $0x1e0] sm:$0xff]
          %v367 = vld [vmem:[%s2 + $0x1e8] sm:$0xff]
          %v368 = vld [vmem:[%s2 + $0x1f0] sm:$0xff]
          %v369 = vld [vmem:[%s2 + $0x1f8] sm:$0xff]
          %v370 = vld [vmem:[%s2 + $0x200] sm:$0xff]
          %v371 = vld [vmem:[%s2 + $0x208] sm:$0xff]
          %v372 = vld [vmem:[%s2 + $0x210] sm:$0xff]
          %v373 = vld [vmem:[%s2 + $0x218] sm:$0xff]
          %v374 = vld [vmem:[%s2 + $0x220] sm:$0xff]
          %v375 = vld [vmem:[%s2 + $0x228] sm:$0xff]
          %v376 = vld [vmem:[%s2 + $0x230] sm:$0xff]
          %v377 = vld [vmem:[%s2 + $0x238] sm:$0xff]
          %v378 = vld [vmem:[%s2 + $0x240] sm:$0xff]
          %v379 = vld [vmem:[%s2 + $0x248] sm:$0xff]
          %v380 = vld [vmem:[%s2 + $0x250] sm:$0xff]
          %v381 = vld [vmem:[%s2 + $0x258] sm:$0xff]
          %v382 = vld [vmem:[%s2 + $0x260] sm:$0xff]
          %v383 = vld [vmem:[%s2 + $0x268] sm:$0xff]
          %v384 = vld [vmem:[%s2 + $0x270] sm:$0xff]
          %v385 = vld [vmem:[%s2 + $0x278] sm:$0xff]
          %v386 = vld [vmem:[%s2 + $0x280] sm:$0xff]
          %v387 = vld [vmem:[%s2 + $0x288] sm:$0xff]
          %v388 = vld [vmem:[%s2 + $0x290] sm:$0xff]
          %v389 = vld [vmem:[%s2 + $0x298] sm:$0xff]
          %v390 = vld [vmem:[%s2 + $0x2a0] sm:$0xff]
          %v391 = vld [vmem:[%s2 + $0x2a8] sm:$0xff]
          %v392 = vld [vmem:[%s2 + $0x2b0] sm:$0xff]
          %v393 = vld [vmem:[%s2 + $0x2b8] sm:$0xff]
          %v394 = vld [vmem:[%s2 + $0x2c0] sm:$0xff]
          %v395 = vld [vmem:[%s2 + $0x2c8] sm:$0xff]
          %v396 = vld [vmem:[%s2 + $0x2d0] sm:$0xff]
          %v397 = vld [vmem:[%s2 + $0x2d8] sm:$0xff]
          %v398 = vld [vmem:[%s2 + $0x2e0] sm:$0xff]
          %v399 = vld [vmem:[%s2 + $0x2e8] sm:$0xff]
          %v400 = vld [vmem:[%s2 + $0x2f0] sm:$0xff]
          %v401 = vld [vmem:[%s2 + $0x2f8] sm:$0xff]
          %v402 = vld [vmem:[%s2 + $0x300] sm:$0xff]
          %v403 = vld [vmem:[%s2 + $0x308] sm:$0xff]
          %v404 = vld [vmem:[%s2 + $0x310] sm:$0xff]
          %v405 = vld [vmem:[%s2 + $0x318] sm:$0xff]
          %v406 = vld [vmem:[%s2 + $0x320] sm:$0xff]
          %v407 = vld [vmem:[%s2 + $0x328] sm:$0xff]
          %v408 = vld [vmem:[%s2 + $0x330] sm:$0xff]
          %v409 = vld [vmem:[%s2 + $0x338] sm:$0xff]
          %v410 = vld [vmem:[%s2 + $0x340] sm:$0xff]
          %v411 = vld [vmem:[%s2 + $0x348] sm:$0xff]
          %v412 = vld [vmem:[%s2 + $0x350] sm:$0xff]
          %v413 = vld [vmem:[%s2 + $0x358] sm:$0xff]
          %v414 = vld [vmem:[%s2 + $0x360] sm:$0xff]
          %v415 = vld [vmem:[%s2 + $0x368] sm:$0xff]
          %v416 = vld [vmem:[%s2 + $0x370] sm:$0xff]
          %v417 = vld [vmem:[%s2 + $0x378] sm:$0xff]
          %v418 = vld [vmem:[%s2 + $0x380] sm:$0xff]
          %v419 = vld [vmem:[%s2 + $0x388] sm:$0xff]
          %v420 = vld [vmem:[%s2 + $0x390] sm:$0xff]
          %v421 = vld [vmem:[%s2 + $0x398] sm:$0xff]
          %v422 = vld [vmem:[%s2 + $0x3a0] sm:$0xff]
          %v423 = vld [vmem:[%s2 + $0x3a8] sm:$0xff]
          %v424 = vld [vmem:[%s2 + $0x3b0] sm:$0xff]
          %v425 = vld [vmem:[%s2 + $0x3b8] sm:$0xff]
          %v426 = vld [vmem:[%s2 + $0x3c0] sm:$0xff]
          %v427 = vld [vmem:[%s2 + $0x3c8] sm:$0xff]
          %v428 = vld [vmem:[%s2 + $0x3d0] sm:$0xff]
          %v429 = vld [vmem:[%s2 + $0x3d8] sm:$0xff]
          %v430 = vld [vmem:[%s2 + $0x3e0] sm:$0xff]
          %v431 = vld [vmem:[%s2 + $0x3e8] sm:$0xff]
          %v432 = vld [vmem:[%s2 + $0x3f0] sm:$0xff]
          %v433 = vld [vmem:[%s2 + $0x3f8] sm:$0xff]
          %v434 = vld [vmem:[%s2 + $0x400] sm:$0xff]
          %v435 = vld [vmem:[%s2 + $0x408] sm:$0xff]
          %v436 = vld [vmem:[%s2 + $0x410] sm:$0xff]
          %v437 = vld [vmem:[%s2 + $0x418] sm:$0xff]
          %v438 = vld [vmem:[%s2 + $0x420] sm:$0xff]
          %v439 = vld [vmem:[%s2 + $0x428] sm:$0xff]
          %v440 = vld [vmem:[%s2 + $0x430] sm:$0xff]
          %v441 = vld [vmem:[%s2 + $0x438] sm:$0xff]
          %v442 = vld [vmem:[%s2 + $0x440] sm:$0xff]
          %v443 = vld [vmem:[%s2 + $0x448] sm:$0xff]
          %v444 = vld [vmem:[%s2 + $0x450] sm:$0xff]
          %v445 = vld [vmem:[%s2 + $0x458] sm:$0xff]
          %v446 = vld [vmem:[%s2 + $0x460] sm:$0xff]
          %v447 = vld [vmem:[%s2 + $0x468] sm:$0xff]
          %v448 = vld [vmem:[%s2 + $0x470] sm:$0xff]
          %v449 = vld [vmem:[%s2 + $0x478] sm:$0xff]
          %v514 = vunpack.c.l.b16 %v242
          %v515 = vunpack.c.h.b16 %v242
          %v516 = vunpack.c.l.b16 %v243
          %v517 = vunpack.c.l.b16 %v244
          %v518 = vunpack.c.h.b16 %v244
          %v519 = vunpack.c.l.b16 %v245
          %v520 = vunpack.c.l.b16 %v246
          %v521 = vunpack.c.h.b16 %v246
          %v522 = vunpack.c.l.b16 %v247
          %v523 = vunpack.c.l.b16 %v248
          %v524 = vunpack.c.h.b16 %v248
          %v525 = vunpack.c.l.b16 %v249
          %v526 = vunpack.c.l.b16 %v250
          %v527 = vunpack.c.h.b16 %v250
          %v528 = vunpack.c.l.b16 %v251
          %v529 = vunpack.c.l.b16 %v252
          %v530 = vunpack.c.h.b16 %v252
          %v531 = vunpack.c.l.b16 %v253
          %v532 = vunpack.c.l.b16 %v254
          %v533 = vunpack.c.h.b16 %v254
          %v534 = vunpack.c.l.b16 %v255
          %v535 = vunpack.c.l.b16 %v256
          %v536 = vunpack.c.h.b16 %v256
          %v537 = vunpack.c.l.b16 %v257
          %v538 = vunpack.c.l.b16 %v258
          %v539 = vunpack.c.h.b16 %v258
          %v540 = vunpack.c.l.b16 %v259
          %v541 = vunpack.c.l.b16 %v260
          %v542 = vunpack.c.h.b16 %v260
          %v543 = vunpack.c.l.b16 %v261
          %v544 = vunpack.c.l.b16 %v262
          %v545 = vunpack.c.h.b16 %v262
          %v546 = vunpack.c.l.b16 %v263
          %v547 = vunpack.c.l.b16 %v264
          %v548 = vunpack.c.h.b16 %v264
          %v549 = vunpack.c.l.b16 %v265
          %v550 = vunpack.c.l.b16 %v266
          %v551 = vunpack.c.h.b16 %v266
          %v552 = vunpack.c.l.b16 %v267
          %v553 = vunpack.c.l.b16 %v268
          %v554 = vunpack.c.h.b16 %v268
          %v555 = vunpack.c.l.b16 %v269
          %v556 = vunpack.c.l.b16 %v270
          %v557 = vunpack.c.h.b16 %v270
          %v558 = vunpack.c.l.b16 %v271
          %v559 = vunpack.c.l.b16 %v272
          %v560 = vunpack.c.h.b16 %v272
          %v561 = vunpack.c.l.b16 %v273
          %v562 = vunpack.c.l.b16 %v274
          %v563 = vunpack.c.h.b16 %v274
          %v564 = vunpack.c.l.b16 %v275
          %v565 = vunpack.c.l.b16 %v276
          %v566 = vunpack.c.h.b16 %v276
          %v567 = vunpack.c.l.b16 %v277
          %v568 = vunpack.c.l.b16 %v278
          %v569 = vunpack.c.h.b16 %v278
          %v570 = vunpack.c.l.b16 %v279
          %v571 = vunpack.c.l.b16 %v280
          %v572 = vunpack.c.h.b16 %v280
          %v573 = vunpack.c.l.b16 %v281
          %v574 = vunpack.c.l.b16 %v282
          %v575 = vunpack.c.h.b16 %v282
          %v576 = vunpack.c.l.b16 %v283
          %v577 = vunpack.c.l.b16 %v284
          %v578 = vunpack.c.h.b16 %v284
          %v579 = vunpack.c.l.b16 %v285
          %v580 = vunpack.c.l.b16 %v286
          %v581 = vunpack.c.h.b16 %v286
          %v582 = vunpack.c.l.b16 %v287
          %v583 = vunpack.c.l.b16 %v288
          %v584 = vunpack.c.h.b16 %v288
          %v585 = vunpack.c.l.b16 %v289
          %v586 = vunpack.c.l.b16 %v290
          %v587 = vunpack.c.h.b16 %v290
          %v588 = vunpack.c.l.b16 %v291
          %v589 = vunpack.c.l.b16 %v292
          %v590 = vunpack.c.h.b16 %v292
          %v591 = vunpack.c.l.b16 %v293
          %v592 = vunpack.c.l.b16 %v294
          %v593 = vunpack.c.h.b16 %v294
          %v594 = vunpack.c.l.b16 %v295
          %v595 = vunpack.c.l.b16 %v296
          %v596 = vunpack.c.h.b16 %v296
          %v597 = vunpack.c.l.b16 %v297
          %v598 = vunpack.c.l.b16 %v298
          %v599 = vunpack.c.h.b16 %v298
          %v600 = vunpack.c.l.b16 %v299
          %v601 = vunpack.c.l.b16 %v300
          %v602 = vunpack.c.h.b16 %v300
          %v603 = vunpack.c.l.b16 %v301
          %v604 = vunpack.c.l.b16 %v302
          %v605 = vunpack.c.h.b16 %v302
          %v606 = vunpack.c.l.b16 %v303
          %v607 = vunpack.c.l.b16 %v304
          %v608 = vunpack.c.h.b16 %v304
          %v609 = vunpack.c.l.b16 %v305
          %v610 = vpack.c.b16 %v517, %v514
          %v611 = vpack.c.b16 %v518, %v515
          %v612 = vpack.c.b16 %v519, %v516
          %v613 = vpack.c.b16 %v523, %v520
          %v614 = vpack.c.b16 %v524, %v521
          %v615 = vpack.c.b16 %v525, %v522
          %v616 = vpack.c.b16 %v529, %v526
          %v617 = vpack.c.b16 %v530, %v527
          %v618 = vpack.c.b16 %v531, %v528
          %v619 = vpack.c.b16 %v535, %v532
          %v620 = vpack.c.b16 %v536, %v533
          %v621 = vpack.c.b16 %v537, %v534
          %v622 = vpack.c.b16 %v541, %v538
          %v623 = vpack.c.b16 %v542, %v539
          %v624 = vpack.c.b16 %v543, %v540
          %v625 = vpack.c.b16 %v547, %v544
          %v626 = vpack.c.b16 %v548, %v545
          %v627 = vpack.c.b16 %v549, %v546
          %v628 = vpack.c.b16 %v553, %v550
          %v629 = vpack.c.b16 %v554, %v551
          %v630 = vpack.c.b16 %v555, %v552
          %v631 = vpack.c.b16 %v559, %v556
          %v632 = vpack.c.b16 %v560, %v557
          %v633 = vpack.c.b16 %v561, %v558
          %v634 = vpack.c.b16 %v565, %v562
          %v635 = vpack.c.b16 %v566, %v563
          %v636 = vpack.c.b16 %v567, %v564
          %v637 = vpack.c.b16 %v571, %v568
          %v638 = vpack.c.b16 %v572, %v569
          %v639 = vpack.c.b16 %v573, %v570
          %v640 = vpack.c.b16 %v577, %v574
          %v641 = vpack.c.b16 %v578, %v575
          %v642 = vpack.c.b16 %v579, %v576
          %v643 = vpack.c.b16 %v583, %v580
          %v644 = vpack.c.b16 %v584, %v581
          %v645 = vpack.c.b16 %v585, %v582
          %v646 = vpack.c.b16 %v589, %v586
          %v647 = vpack.c.b16 %v590, %v587
          %v648 = vpack.c.b16 %v591, %v588
          %v649 = vpack.c.b16 %v595, %v592
          %v650 = vpack.c.b16 %v596, %v593
          %v651 = vpack.c.b16 %v597, %v594
          %v652 = vpack.c.b16 %v601, %v598
          %v653 = vpack.c.b16 %v602, %v599
          %v654 = vpack.c.b16 %v603, %v600
          %v655 = vpack.c.b16 %v607, %v604
          %v656 = vpack.c.b16 %v608, %v605
          %v657 = vpack.c.b16 %v609, %v606
          %v850 = vunpack.c.l.b16 %v306
          %v851 = vunpack.c.h.b16 %v306
          %v852 = vunpack.c.l.b16 %v307
          %v853 = vunpack.c.h.b16 %v307
          %v854 = vunpack.c.l.b16 %v308
          %v855 = vunpack.c.h.b16 %v308
          %v856 = vunpack.c.l.b16 %v309
          %v857 = vunpack.c.h.b16 %v309
          %v858 = vunpack.c.l.b16 %v310
          %v859 = vunpack.c.h.b16 %v310
          %v860 = vunpack.c.l.b16 %v311
          %v861 = vunpack.c.h.b16 %v311
          %v862 = vunpack.c.l.b16 %v312
          %v863 = vunpack.c.h.b16 %v312
          %v864 = vunpack.c.l.b16 %v313
          %v865 = vunpack.c.h.b16 %v313
          %v866 = vunpack.c.l.b16 %v314
          %v867 = vunpack.c.h.b16 %v314
          %v868 = vunpack.c.l.b16 %v315
          %v869 = vunpack.c.h.b16 %v315
          %v870 = vunpack.c.l.b16 %v316
          %v871 = vunpack.c.h.b16 %v316
          %v872 = vunpack.c.l.b16 %v317
          %v873 = vunpack.c.h.b16 %v317
          %v874 = vunpack.c.l.b16 %v318
          %v875 = vunpack.c.h.b16 %v318
          %v876 = vunpack.c.l.b16 %v319
          %v877 = vunpack.c.h.b16 %v319
          %v878 = vunpack.c.l.b16 %v320
          %v879 = vunpack.c.h.b16 %v320
          %v880 = vunpack.c.l.b16 %v321
          %v881 = vunpack.c.h.b16 %v321
          %v882 = vunpack.c.l.b16 %v322
          %v883 = vunpack.c.h.b16 %v322
          %v884 = vunpack.c.l.b16 %v323
          %v885 = vunpack.c.h.b16 %v323
          %v886 = vunpack.c.l.b16 %v324
          %v887 = vunpack.c.h.b16 %v324
          %v888 = vunpack.c.l.b16 %v325
          %v889 = vunpack.c.h.b16 %v325
          %v890 = vunpack.c.l.b16 %v326
          %v891 = vunpack.c.h.b16 %v326
          %v892 = vunpack.c.l.b16 %v327
          %v893 = vunpack.c.h.b16 %v327
          %v894 = vunpack.c.l.b16 %v328
          %v895 = vunpack.c.h.b16 %v328
          %v896 = vunpack.c.l.b16 %v329
          %v897 = vunpack.c.h.b16 %v329
          %v898 = vunpack.c.l.b16 %v330
          %v899 = vunpack.c.h.b16 %v330
          %v900 = vunpack.c.l.b16 %v331
          %v901 = vunpack.c.h.b16 %v331
          %v902 = vunpack.c.l.b16 %v332
          %v903 = vunpack.c.h.b16 %v332
          %v904 = vunpack.c.l.b16 %v333
          %v905 = vunpack.c.h.b16 %v333
          %v906 = vunpack.c.l.b16 %v334
          %v907 = vunpack.c.h.b16 %v334
          %v908 = vunpack.c.l.b16 %v335
          %v909 = vunpack.c.h.b16 %v335
          %v910 = vunpack.c.l.b16 %v336
          %v911 = vunpack.c.h.b16 %v336
          %v912 = vunpack.c.l.b16 %v337
          %v913 = vunpack.c.h.b16 %v337
          %v914 = vunpack.c.l.b16 %v338
          %v915 = vunpack.c.h.b16 %v338
          %v916 = vunpack.c.l.b16 %v339
          %v917 = vunpack.c.h.b16 %v339
          %v918 = vunpack.c.l.b16 %v340
          %v919 = vunpack.c.h.b16 %v340
          %v920 = vunpack.c.l.b16 %v341
          %v921 = vunpack.c.h.b16 %v341
          %v922 = vunpack.c.l.b16 %v342
          %v923 = vunpack.c.h.b16 %v342
          %v924 = vunpack.c.l.b16 %v343
          %v925 = vunpack.c.h.b16 %v343
          %v926 = vunpack.c.l.b16 %v344
          %v927 = vunpack.c.h.b16 %v344
          %v928 = vunpack.c.l.b16 %v345
          %v929 = vunpack.c.h.b16 %v345
          %v930 = vunpack.c.l.b16 %v346
          %v931 = vunpack.c.h.b16 %v346
          %v932 = vunpack.c.l.b16 %v347
          %v933 = vunpack.c.h.b16 %v347
          %v934 = vunpack.c.l.b16 %v348
          %v935 = vunpack.c.h.b16 %v348
          %v936 = vunpack.c.l.b16 %v349
          %v937 = vunpack.c.h.b16 %v349
          %v938 = vunpack.c.l.b16 %v350
          %v939 = vunpack.c.h.b16 %v350
          %v940 = vunpack.c.l.b16 %v351
          %v941 = vunpack.c.h.b16 %v351
          %v942 = vunpack.c.l.b16 %v352
          %v943 = vunpack.c.h.b16 %v352
          %v944 = vunpack.c.l.b16 %v353
          %v945 = vunpack.c.h.b16 %v353
          %v946 = vunpack.c.l.b16 %v354
          %v947 = vunpack.c.h.b16 %v354
          %v948 = vunpack.c.l.b16 %v355
          %v949 = vunpack.c.h.b16 %v355
          %v950 = vunpack.c.l.b16 %v356
          %v951 = vunpack.c.h.b16 %v356
          %v952 = vunpack.c.l.b16 %v357
          %v953 = vunpack.c.h.b16 %v357
          %v954 = vunpack.c.l.b16 %v358
          %v955 = vunpack.c.h.b16 %v358
          %v956 = vunpack.c.l.b16 %v359
          %v957 = vunpack.c.h.b16 %v359
          %v958 = vunpack.c.l.b16 %v360
          %v959 = vunpack.c.h.b16 %v360
          %v960 = vunpack.c.l.b16 %v361
          %v961 = vunpack.c.h.b16 %v361
          %v962 = vunpack.c.l.b16 %v362
          %v963 = vunpack.c.h.b16 %v362
          %v964 = vunpack.c.l.b16 %v363
          %v965 = vunpack.c.h.b16 %v363
          %v966 = vunpack.c.l.b16 %v364
          %v967 = vunpack.c.h.b16 %v364
          %v968 = vunpack.c.l.b16 %v365
          %v969 = vunpack.c.h.b16 %v365
          %v970 = vunpack.c.l.b16 %v366
          %v971 = vunpack.c.h.b16 %v366
          %v972 = vunpack.c.l.b16 %v367
          %v973 = vunpack.c.h.b16 %v367
          %v974 = vunpack.c.l.b16 %v368
          %v975 = vunpack.c.h.b16 %v368
          %v976 = vunpack.c.l.b16 %v369
          %v977 = vunpack.c.h.b16 %v369
          %v978 = vunpack.c.l.b16 %v370
          %v979 = vunpack.c.h.b16 %v370
          %v980 = vunpack.c.l.b16 %v371
          %v981 = vunpack.c.h.b16 %v371
          %v982 = vunpack.c.l.b16 %v372
          %v983 = vunpack.c.h.b16 %v372
          %v984 = vunpack.c.l.b16 %v373
          %v985 = vunpack.c.h.b16 %v373
          %v986 = vunpack.c.l.b16 %v374
          %v987 = vunpack.c.h.b16 %v374
          %v988 = vunpack.c.l.b16 %v375
          %v989 = vunpack.c.h.b16 %v375
          %v990 = vunpack.c.l.b16 %v376
          %v991 = vunpack.c.h.b16 %v376
          %v992 = vunpack.c.l.b16 %v377
          %v993 = vunpack.c.h.b16 %v377
          %v994 = vunpack.c.l.b16 %v378
          %v995 = vunpack.c.h.b16 %v378
          %v996 = vunpack.c.l.b16 %v379
          %v997 = vunpack.c.h.b16 %v379
          %v998 = vunpack.c.l.b16 %v380
          %v999 = vunpack.c.h.b16 %v380
          %v1000 = vunpack.c.l.b16 %v381
          %v1001 = vunpack.c.h.b16 %v381
          %v1002 = vunpack.c.l.b16 %v382
          %v1003 = vunpack.c.h.b16 %v382
          %v1004 = vunpack.c.l.b16 %v383
          %v1005 = vunpack.c.h.b16 %v383
          %v1006 = vunpack.c.l.b16 %v384
          %v1007 = vunpack.c.h.b16 %v384
          %v1008 = vunpack.c.l.b16 %v385
          %v1009 = vunpack.c.h.b16 %v385
          %v1010 = vunpack.c.l.b16 %v386
          %v1011 = vunpack.c.h.b16 %v386
          %v1012 = vunpack.c.l.b16 %v387
          %v1013 = vunpack.c.h.b16 %v387
          %v1014 = vunpack.c.l.b16 %v388
          %v1015 = vunpack.c.h.b16 %v388
          %v1016 = vunpack.c.l.b16 %v389
          %v1017 = vunpack.c.h.b16 %v389
          %v1018 = vunpack.c.l.b16 %v390
          %v1019 = vunpack.c.h.b16 %v390
          %v1020 = vunpack.c.l.b16 %v391
          %v1021 = vunpack.c.h.b16 %v391
          %v1022 = vunpack.c.l.b16 %v392
          %v1023 = vunpack.c.h.b16 %v392
          %v1024 = vunpack.c.l.b16 %v393
          %v1025 = vunpack.c.h.b16 %v393
          %v1026 = vunpack.c.l.b16 %v394
          %v1027 = vunpack.c.h.b16 %v394
          %v1028 = vunpack.c.l.b16 %v395
          %v1029 = vunpack.c.h.b16 %v395
          %v1030 = vunpack.c.l.b16 %v396
          %v1031 = vunpack.c.h.b16 %v396
          %v1032 = vunpack.c.l.b16 %v397
          %v1033 = vunpack.c.h.b16 %v397
          %v1034 = vunpack.c.l.b16 %v398
          %v1035 = vunpack.c.h.b16 %v398
          %v1036 = vunpack.c.l.b16 %v399
          %v1037 = vunpack.c.h.b16 %v399
          %v1038 = vunpack.c.l.b16 %v400
          %v1039 = vunpack.c.h.b16 %v400
          %v1040 = vunpack.c.l.b16 %v401
          %v1041 = vunpack.c.h.b16 %v401
          %v1042 = vunpack.c.l.b16 %v402
          %v1043 = vunpack.c.h.b16 %v402
          %v1044 = vunpack.c.l.b16 %v403
          %v1045 = vunpack.c.h.b16 %v403
          %v1046 = vunpack.c.l.b16 %v404
          %v1047 = vunpack.c.h.b16 %v404
          %v1048 = vunpack.c.l.b16 %v405
          %v1049 = vunpack.c.h.b16 %v405
          %v1050 = vunpack.c.l.b16 %v406
          %v1051 = vunpack.c.h.b16 %v406
          %v1052 = vunpack.c.l.b16 %v407
          %v1053 = vunpack.c.h.b16 %v407
          %v1054 = vunpack.c.l.b16 %v408
          %v1055 = vunpack.c.h.b16 %v408
          %v1056 = vunpack.c.l.b16 %v409
          %v1057 = vunpack.c.h.b16 %v409
          %v1058 = vunpack.c.l.b16 %v410
          %v1059 = vunpack.c.h.b16 %v410
          %v1060 = vunpack.c.l.b16 %v411
          %v1061 = vunpack.c.h.b16 %v411
          %v1062 = vunpack.c.l.b16 %v412
          %v1063 = vunpack.c.h.b16 %v412
          %v1064 = vunpack.c.l.b16 %v413
          %v1065 = vunpack.c.h.b16 %v413
          %v1066 = vunpack.c.l.b16 %v414
          %v1067 = vunpack.c.h.b16 %v414
          %v1068 = vunpack.c.l.b16 %v415
          %v1069 = vunpack.c.h.b16 %v415
          %v1070 = vunpack.c.l.b16 %v416
          %v1071 = vunpack.c.h.b16 %v416
          %v1072 = vunpack.c.l.b16 %v417
          %v1073 = vunpack.c.h.b16 %v417
          %v1074 = vunpack.c.l.b16 %v418
          %v1075 = vunpack.c.h.b16 %v418
          %v1076 = vunpack.c.l.b16 %v419
          %v1077 = vunpack.c.h.b16 %v419
          %v1078 = vunpack.c.l.b16 %v420
          %v1079 = vunpack.c.h.b16 %v420
          %v1080 = vunpack.c.l.b16 %v421
          %v1081 = vunpack.c.h.b16 %v421
          %v1082 = vunpack.c.l.b16 %v422
          %v1083 = vunpack.c.h.b16 %v422
          %v1084 = vunpack.c.l.b16 %v423
          %v1085 = vunpack.c.h.b16 %v423
          %v1086 = vunpack.c.l.b16 %v424
          %v1087 = vunpack.c.h.b16 %v424
          %v1088 = vunpack.c.l.b16 %v425
          %v1089 = vunpack.c.h.b16 %v425
          %v1090 = vunpack.c.l.b16 %v426
          %v1091 = vunpack.c.h.b16 %v426
          %v1092 = vunpack.c.l.b16 %v427
          %v1093 = vunpack.c.h.b16 %v427
          %v1094 = vunpack.c.l.b16 %v428
          %v1095 = vunpack.c.h.b16 %v428
          %v1096 = vunpack.c.l.b16 %v429
          %v1097 = vunpack.c.h.b16 %v429
          %v1098 = vunpack.c.l.b16 %v430
          %v1099 = vunpack.c.h.b16 %v430
          %v1100 = vunpack.c.l.b16 %v431
          %v1101 = vunpack.c.h.b16 %v431
          %v1102 = vunpack.c.l.b16 %v432
          %v1103 = vunpack.c.h.b16 %v432
          %v1104 = vunpack.c.l.b16 %v433
          %v1105 = vunpack.c.h.b16 %v433
          %v1106 = vunpack.c.l.b16 %v434
          %v1107 = vunpack.c.h.b16 %v434
          %v1108 = vunpack.c.l.b16 %v435
          %v1109 = vunpack.c.h.b16 %v435
          %v1110 = vunpack.c.l.b16 %v436
          %v1111 = vunpack.c.h.b16 %v436
          %v1112 = vunpack.c.l.b16 %v437
          %v1113 = vunpack.c.h.b16 %v437
          %v1114 = vunpack.c.l.b16 %v438
          %v1115 = vunpack.c.h.b16 %v438
          %v1116 = vunpack.c.l.b16 %v439
          %v1117 = vunpack.c.h.b16 %v439
          %v1118 = vunpack.c.l.b16 %v440
          %v1119 = vunpack.c.h.b16 %v440
          %v1120 = vunpack.c.l.b16 %v441
          %v1121 = vunpack.c.h.b16 %v441
          %v1122 = vunpack.c.l.b16 %v442
          %v1123 = vunpack.c.h.b16 %v442
          %v1124 = vunpack.c.l.b16 %v443
          %v1125 = vunpack.c.h.b16 %v443
          %v1126 = vunpack.c.l.b16 %v444
          %v1127 = vunpack.c.h.b16 %v444
          %v1128 = vunpack.c.l.b16 %v445
          %v1129 = vunpack.c.h.b16 %v445
          %v1130 = vunpack.c.l.b16 %v446
          %v1131 = vunpack.c.h.b16 %v446
          %v1132 = vunpack.c.l.b16 %v447
          %v1133 = vunpack.c.h.b16 %v447
          %v1134 = vunpack.c.l.b16 %v448
          %v1135 = vunpack.c.h.b16 %v448
          %v1136 = vunpack.c.l.b16 %v449
          %v1137 = vunpack.c.h.b16 %v449
          %v1138 = vpack.c.b16 %v856, %v850
          %v1139 = vpack.c.b16 %v857, %v851
          %v1140 = vpack.c.b16 %v858, %v852
          %v1141 = vpack.c.b16 %v859, %v853
          %v1142 = vpack.c.b16 %v860, %v854
          %v1143 = vpack.c.b16 %v861, %v855
          %v1144 = vpack.c.b16 %v868, %v862
          %v1145 = vpack.c.b16 %v869, %v863
          %v1146 = vpack.c.b16 %v870, %v864
          %v1147 = vpack.c.b16 %v871, %v865
          %v1148 = vpack.c.b16 %v872, %v866
          %v1149 = vpack.c.b16 %v873, %v867
          %v1150 = vpack.c.b16 %v880, %v874
          %v1151 = vpack.c.b16 %v881, %v875
          %v1152 = vpack.c.b16 %v882, %v876
          %v1153 = vpack.c.b16 %v883, %v877
          %v1154 = vpack.c.b16 %v884, %v878
          %v1155 = vpack.c.b16 %v885, %v879
          %v1156 = vpack.c.b16 %v892, %v886
          %v1157 = vpack.c.b16 %v893, %v887
          %v1158 = vpack.c.b16 %v894, %v888
          %v1159 = vpack.c.b16 %v895, %v889
          %v1160 = vpack.c.b16 %v896, %v890
          %v1161 = vpack.c.b16 %v897, %v891
          %v1162 = vpack.c.b16 %v904, %v898
          %v1163 = vpack.c.b16 %v905, %v899
          %v1164 = vpack.c.b16 %v906, %v900
          %v1165 = vpack.c.b16 %v907, %v901
          %v1166 = vpack.c.b16 %v908, %v902
          %v1167 = vpack.c.b16 %v909, %v903
          %v1168 = vpack.c.b16 %v916, %v910
          %v1169 = vpack.c.b16 %v917, %v911
          %v1170 = vpack.c.b16 %v918, %v912
          %v1171 = vpack.c.b16 %v919, %v913
          %v1172 = vpack.c.b16 %v920, %v914
          %v1173 = vpack.c.b16 %v921, %v915
          %v1174 = vpack.c.b16 %v928, %v922
          %v1175 = vpack.c.b16 %v929, %v923
          %v1176 = vpack.c.b16 %v930, %v924
          %v1177 = vpack.c.b16 %v931, %v925
          %v1178 = vpack.c.b16 %v932, %v926
          %v1179 = vpack.c.b16 %v933, %v927
          %v1180 = vpack.c.b16 %v940, %v934
          %v1181 = vpack.c.b16 %v941, %v935
          %v1182 = vpack.c.b16 %v942, %v936
          %v1183 = vpack.c.b16 %v943, %v937
          %v1184 = vpack.c.b16 %v944, %v938
          %v1185 = vpack.c.b16 %v945, %v939
          %v1186 = vpack.c.b16 %v952, %v946
          %v1187 = vpack.c.b16 %v953, %v947
          %v1188 = vpack.c.b16 %v954, %v948
          %v1189 = vpack.c.b16 %v955, %v949
          %v1190 = vpack.c.b16 %v956, %v950
          %v1191 = vpack.c.b16 %v957, %v951
          %v1192 = vpack.c.b16 %v964, %v958
          %v1193 = vpack.c.b16 %v965, %v959
          %v1194 = vpack.c.b16 %v966, %v960
          %v1195 = vpack.c.b16 %v967, %v961
          %v1196 = vpack.c.b16 %v968, %v962
          %v1197 = vpack.c.b16 %v969, %v963
          %v1198 = vpack.c.b16 %v976, %v970
          %v1199 = vpack.c.b16 %v977, %v971
          %v1200 = vpack.c.b16 %v978, %v972
          %v1201 = vpack.c.b16 %v979, %v973
          %v1202 = vpack.c.b16 %v980, %v974
          %v1203 = vpack.c.b16 %v981, %v975
          %v1204 = vpack.c.b16 %v988, %v982
          %v1205 = vpack.c.b16 %v989, %v983
          %v1206 = vpack.c.b16 %v990, %v984
          %v1207 = vpack.c.b16 %v991, %v985
          %v1208 = vpack.c.b16 %v992, %v986
          %v1209 = vpack.c.b16 %v993, %v987
          %v1210 = vpack.c.b16 %v1000, %v994
          %v1211 = vpack.c.b16 %v1001, %v995
          %v1212 = vpack.c.b16 %v1002, %v996
          %v1213 = vpack.c.b16 %v1003, %v997
          %v1214 = vpack.c.b16 %v1004, %v998
          %v1215 = vpack.c.b16 %v1005, %v999
          %v1216 = vpack.c.b16 %v1012, %v1006
          %v1217 = vpack.c.b16 %v1013, %v1007
          %v1218 = vpack.c.b16 %v1014, %v1008
          %v1219 = vpack.c.b16 %v1015, %v1009
          %v1220 = vpack.c.b16 %v1016, %v1010
          %v1221 = vpack.c.b16 %v1017, %v1011
          %v1222 = vpack.c.b16 %v1024, %v1018
          %v1223 = vpack.c.b16 %v1025, %v1019
          %v1224 = vpack.c.b16 %v1026, %v1020
          %v1225 = vpack.c.b16 %v1027, %v1021
          %v1226 = vpack.c.b16 %v1028, %v1022
          %v1227 = vpack.c.b16 %v1029, %v1023
          %v1228 = vpack.c.b16 %v1036, %v1030
          %v1229 = vpack.c.b16 %v1037, %v1031
          %v1230 = vpack.c.b16 %v1038, %v1032
          %v1231 = vpack.c.b16 %v1039, %v1033
          %v1232 = vpack.c.b16 %v1040, %v1034
          %v1233 = vpack.c.b16 %v1041, %v1035
          %v1234 = vpack.c.b16 %v1048, %v1042
          %v1235 = vpack.c.b16 %v1049, %v1043
          %v1236 = vpack.c.b16 %v1050, %v1044
          %v1237 = vpack.c.b16 %v1051, %v1045
          %v1238 = vpack.c.b16 %v1052, %v1046
          %v1239 = vpack.c.b16 %v1053, %v1047
          %v1240 = vpack.c.b16 %v1060, %v1054
          %v1241 = vpack.c.b16 %v1061, %v1055
          %v1242 = vpack.c.b16 %v1062, %v1056
          %v1243 = vpack.c.b16 %v1063, %v1057
          %v1244 = vpack.c.b16 %v1064, %v1058
          %v1245 = vpack.c.b16 %v1065, %v1059
          %v1246 = vpack.c.b16 %v1072, %v1066
          %v1247 = vpack.c.b16 %v1073, %v1067
          %v1248 = vpack.c.b16 %v1074, %v1068
          %v1249 = vpack.c.b16 %v1075, %v1069
          %v1250 = vpack.c.b16 %v1076, %v1070
          %v1251 = vpack.c.b16 %v1077, %v1071
          %v1252 = vpack.c.b16 %v1084, %v1078
          %v1253 = vpack.c.b16 %v1085, %v1079
          %v1254 = vpack.c.b16 %v1086, %v1080
          %v1255 = vpack.c.b16 %v1087, %v1081
          %v1256 = vpack.c.b16 %v1088, %v1082
          %v1257 = vpack.c.b16 %v1089, %v1083
          %v1258 = vpack.c.b16 %v1096, %v1090
          %v1259 = vpack.c.b16 %v1097, %v1091
          %v1260 = vpack.c.b16 %v1098, %v1092
          %v1261 = vpack.c.b16 %v1099, %v1093
          %v1262 = vpack.c.b16 %v1100, %v1094
          %v1263 = vpack.c.b16 %v1101, %v1095
          %v1264 = vpack.c.b16 %v1108, %v1102
          %v1265 = vpack.c.b16 %v1109, %v1103
          %v1266 = vpack.c.b16 %v1110, %v1104
          %v1267 = vpack.c.b16 %v1111, %v1105
          %v1268 = vpack.c.b16 %v1112, %v1106
          %v1269 = vpack.c.b16 %v1113, %v1107
          %v1270 = vpack.c.b16 %v1120, %v1114
          %v1271 = vpack.c.b16 %v1121, %v1115
          %v1272 = vpack.c.b16 %v1122, %v1116
          %v1273 = vpack.c.b16 %v1123, %v1117
          %v1274 = vpack.c.b16 %v1124, %v1118
          %v1275 = vpack.c.b16 %v1125, %v1119
          %v1276 = vpack.c.b16 %v1132, %v1126
          %v1277 = vpack.c.b16 %v1133, %v1127
          %v1278 = vpack.c.b16 %v1134, %v1128
          %v1279 = vpack.c.b16 %v1135, %v1129
          %v1280 = vpack.c.b16 %v1136, %v1130
          %v1281 = vpack.c.b16 %v1137, %v1131
          %1426 = vmatpush.bf16.msra.mxu0 %v1180
          %1427 = vmatpush.bf16.msra.mxu0 %v1174
          %1428 = vmatpush.bf16.msra.mxu0 %v1168
          %1429 = vmatpush.bf16.msra.mxu0 %v1162
          %1430 = vmatpush.bf16.msra.mxu0 %v1156
          %1431 = vmatpush.bf16.msra.mxu0 %v1150
          %1432 = vmatpush.bf16.msra.mxu0 %v1144
          %1433 = vmatpush.bf16.msra.mxu0 %v1138
          %1434 = vmatmul.bf16.gmra.mxu0 %v610
          %v1435 = vpop.f32.mrf.mxu0
          %v1436 = vadd.f32 0.0, %v1435
          %v1437 = vpop.f32.mrf.mxu0
          %v1438 = vadd.f32 0.0, %v1437
          %1439 = vmatmul.bf16.gmra.mxu0 %v613
          %v1440 = vpop.f32.mrf.mxu0
          %v1441 = vadd.f32 0.0, %v1440
          %v1442 = vpop.f32.mrf.mxu0
          %v1443 = vadd.f32 0.0, %v1442
          %1444 = vmatmul.bf16.gmra.mxu0 %v616
          %v1445 = vpop.f32.mrf.mxu0
          %v1446 = vadd.f32 0.0, %v1445
          %v1447 = vpop.f32.mrf.mxu0
          %v1448 = vadd.f32 0.0, %v1447
          %1449 = vmatmul.bf16.gmra.mxu0 %v619
          %v1450 = vpop.f32.mrf.mxu0
          %v1451 = vadd.f32 0.0, %v1450
          %v1452 = vpop.f32.mrf.mxu0
          %v1453 = vadd.f32 0.0, %v1452
          %1454 = vmatmul.bf16.gmra.mxu0 %v622
          %v1455 = vpop.f32.mrf.mxu0
          %v1456 = vadd.f32 0.0, %v1455
          %v1457 = vpop.f32.mrf.mxu0
          %v1458 = vadd.f32 0.0, %v1457
          %1459 = vmatmul.bf16.gmra.mxu0 %v625
          %v1460 = vpop.f32.mrf.mxu0
          %v1461 = vadd.f32 0.0, %v1460
          %v1462 = vpop.f32.mrf.mxu0
          %v1463 = vadd.f32 0.0, %v1462
          %1464 = vmatmul.bf16.gmra.mxu0 %v628
          %v1465 = vpop.f32.mrf.mxu0
          %v1466 = vadd.f32 0.0, %v1465
          %v1467 = vpop.f32.mrf.mxu0
          %v1468 = vadd.f32 0.0, %v1467
          %1469 = vmatmul.bf16.gmra.mxu0 %v631
          %v1470 = vpop.f32.mrf.mxu0
          %v1471 = vadd.f32 0.0, %v1470
          %v1472 = vpop.f32.mrf.mxu0
          %v1473 = vadd.f32 0.0, %v1472
          %1474 = vmatmul.bf16.gmra.mxu0 %v634
          %v1475 = vpop.f32.mrf.mxu0
          %v1476 = vadd.f32 0.0, %v1475
          %v1477 = vpop.f32.mrf.mxu0
          %v1478 = vadd.f32 0.0, %v1477
          %1479 = vmatmul.bf16.gmra.mxu0 %v637
          %v1480 = vpop.f32.mrf.mxu0
          %v1481 = vadd.f32 0.0, %v1480
          %v1482 = vpop.f32.mrf.mxu0
          %v1483 = vadd.f32 0.0, %v1482
          %1484 = vmatmul.bf16.gmra.mxu0 %v640
          %v1485 = vpop.f32.mrf.mxu0
          %v1486 = vadd.f32 0.0, %v1485
          %v1487 = vpop.f32.mrf.mxu0
          %v1488 = vadd.f32 0.0, %v1487
          %1489 = vmatmul.bf16.gmra.mxu0 %v643
          %v1490 = vpop.f32.mrf.mxu0
          %v1491 = vadd.f32 0.0, %v1490
          %v1492 = vpop.f32.mrf.mxu0
          %v1493 = vadd.f32 0.0, %v1492
          %1494 = vmatmul.bf16.gmra.mxu0 %v646
          %v1495 = vpop.f32.mrf.mxu0
          %v1496 = vadd.f32 0.0, %v1495
          %v1497 = vpop.f32.mrf.mxu0
          %v1498 = vadd.f32 0.0, %v1497
          %1499 = vmatmul.bf16.gmra.mxu0 %v649
          %v1500 = vpop.f32.mrf.mxu0
          %v1501 = vadd.f32 0.0, %v1500
          %v1502 = vpop.f32.mrf.mxu0
          %v1503 = vadd.f32 0.0, %v1502
          %1504 = vmatmul.bf16.gmra.mxu0 %v652
          %v1505 = vpop.f32.mrf.mxu0
          %v1506 = vadd.f32 0.0, %v1505
          %v1507 = vpop.f32.mrf.mxu0
          %v1508 = vadd.f32 0.0, %v1507
          %1509 = vmatmul.bf16.gmra.mxu0 %v655
          %v1510 = vpop.f32.mrf.mxu0
          %v1511 = vadd.f32 0.0, %v1510
          %v1512 = vpop.f32.mrf.mxu0
          %v1513 = vadd.f32 0.0, %v1512
          %1514 = vdwg.mxu0
          %1515 = vmatpush.bf16.msra.mxu0 %v1228
          %1516 = vmatpush.bf16.msra.mxu0 %v1222
          %1517 = vmatpush.bf16.msra.mxu0 %v1216
          %1518 = vmatpush.bf16.msra.mxu0 %v1210
          %1519 = vmatpush.bf16.msra.mxu0 %v1204
          %1520 = vmatpush.bf16.msra.mxu0 %v1198
          %1521 = vmatpush.bf16.msra.mxu0 %v1192
          %1522 = vmatpush.bf16.msra.mxu0 %v1186
          %1523 = vmatmul.bf16.gmra.mxu0 %v611
          %v1524 = vpop.f32.mrf.mxu0
          %v1525 = vadd.f32 %v1436, %v1524
          %v1526 = vpop.f32.mrf.mxu0
          %v1527 = vadd.f32 %v1438, %v1526
          %1528 = vmatmul.bf16.gmra.mxu0 %v614
          %v1529 = vpop.f32.mrf.mxu0
          %v1530 = vadd.f32 %v1441, %v1529
          %v1531 = vpop.f32.mrf.mxu0
          %v1532 = vadd.f32 %v1443, %v1531
          %1533 = vmatmul.bf16.gmra.mxu0 %v617
          %v1534 = vpop.f32.mrf.mxu0
          %v1535 = vadd.f32 %v1446, %v1534
          %v1536 = vpop.f32.mrf.mxu0
          %v1537 = vadd.f32 %v1448, %v1536
          %1538 = vmatmul.bf16.gmra.mxu0 %v620
          %v1539 = vpop.f32.mrf.mxu0
          %v1540 = vadd.f32 %v1451, %v1539
          %v1541 = vpop.f32.mrf.mxu0
          %v1542 = vadd.f32 %v1453, %v1541
          %1543 = vmatmul.bf16.gmra.mxu0 %v623
          %v1544 = vpop.f32.mrf.mxu0
          %v1545 = vadd.f32 %v1456, %v1544
          %v1546 = vpop.f32.mrf.mxu0
          %v1547 = vadd.f32 %v1458, %v1546
          %1548 = vmatmul.bf16.gmra.mxu0 %v626
          %v1549 = vpop.f32.mrf.mxu0
          %v1550 = vadd.f32 %v1461, %v1549
          %v1551 = vpop.f32.mrf.mxu0
          %v1552 = vadd.f32 %v1463, %v1551
          %1553 = vmatmul.bf16.gmra.mxu0 %v629
          %v1554 = vpop.f32.mrf.mxu0
          %v1555 = vadd.f32 %v1466, %v1554
          %v1556 = vpop.f32.mrf.mxu0
          %v1557 = vadd.f32 %v1468, %v1556
          %1558 = vmatmul.bf16.gmra.mxu0 %v632
          %v1559 = vpop.f32.mrf.mxu0
          %v1560 = vadd.f32 %v1471, %v1559
          %v1561 = vpop.f32.mrf.mxu0
          %v1562 = vadd.f32 %v1473, %v1561
          %1563 = vmatmul.bf16.gmra.mxu0 %v635
          %v1564 = vpop.f32.mrf.mxu0
          %v1565 = vadd.f32 %v1476, %v1564
          %v1566 = vpop.f32.mrf.mxu0
          %v1567 = vadd.f32 %v1478, %v1566
          %1568 = vmatmul.bf16.gmra.mxu0 %v638
          %v1569 = vpop.f32.mrf.mxu0
          %v1570 = vadd.f32 %v1481, %v1569
          %v1571 = vpop.f32.mrf.mxu0
          %v1572 = vadd.f32 %v1483, %v1571
          %1573 = vmatmul.bf16.gmra.mxu0 %v641
          %v1574 = vpop.f32.mrf.mxu0
          %v1575 = vadd.f32 %v1486, %v1574
          %v1576 = vpop.f32.mrf.mxu0
          %v1577 = vadd.f32 %v1488, %v1576
          %1578 = vmatmul.bf16.gmra.mxu0 %v644
          %v1579 = vpop.f32.mrf.mxu0
          %v1580 = vadd.f32 %v1491, %v1579
          %v1581 = vpop.f32.mrf.mxu0
          %v1582 = vadd.f32 %v1493, %v1581
          %1583 = vmatmul.bf16.gmra.mxu0 %v647
          %v1584 = vpop.f32.mrf.mxu0
          %v1585 = vadd.f32 %v1496, %v1584
          %v1586 = vpop.f32.mrf.mxu0
          %v1587 = vadd.f32 %v1498, %v1586
          %1588 = vmatmul.bf16.gmra.mxu0 %v650
          %v1589 = vpop.f32.mrf.mxu0
          %v1590 = vadd.f32 %v1501, %v1589
          %v1591 = vpop.f32.mrf.mxu0
          %v1592 = vadd.f32 %v1503, %v1591
          %1593 = vmatmul.bf16.gmra.mxu0 %v653
          %v1594 = vpop.f32.mrf.mxu0
          %v1595 = vadd.f32 %v1506, %v1594
          %v1596 = vpop.f32.mrf.mxu0
          %v1597 = vadd.f32 %v1508, %v1596
          %1598 = vmatmul.bf16.gmra.mxu0 %v656
          %v1599 = vpop.f32.mrf.mxu0
          %v1600 = vadd.f32 %v1511, %v1599
          %v1601 = vpop.f32.mrf.mxu0
          %v1602 = vadd.f32 %v1513, %v1601
          %1603 = vdwg.mxu0
          %1604 = vmatpush.bf16.msra.mxu0 %v1276
          %1605 = vmatpush.bf16.msra.mxu0 %v1270
          %1606 = vmatpush.bf16.msra.mxu0 %v1264
          %1607 = vmatpush.bf16.msra.mxu0 %v1258
          %1608 = vmatpush.bf16.msra.mxu0 %v1252
          %1609 = vmatpush.bf16.msra.mxu0 %v1246
          %1610 = vmatpush.bf16.msra.mxu0 %v1240
          %1611 = vmatpush.bf16.msra.mxu0 %v1234
          %1612 = vmatmul.bf16.gmra.mxu0 %v612
          %v1613 = vpop.f32.mrf.mxu0
          %v1614 = vadd.f32 %v1525, %v1613
          %v1615 = vpop.f32.mrf.mxu0
          %v1616 = vadd.f32 %v1527, %v1615
          %1617 = vmatmul.bf16.gmra.mxu0 %v615
          %v1618 = vpop.f32.mrf.mxu0
          %v1619 = vadd.f32 %v1530, %v1618
          %v1620 = vpop.f32.mrf.mxu0
          %v1621 = vadd.f32 %v1532, %v1620
          %1622 = vmatmul.bf16.gmra.mxu0 %v618
          %v1623 = vpop.f32.mrf.mxu0
          %v1624 = vadd.f32 %v1535, %v1623
          %v1625 = vpop.f32.mrf.mxu0
          %v1626 = vadd.f32 %v1537, %v1625
          %1627 = vmatmul.bf16.gmra.mxu0 %v621
          %v1628 = vpop.f32.mrf.mxu0
          %v1629 = vadd.f32 %v1540, %v1628
          %v1630 = vpop.f32.mrf.mxu0
          %v1631 = vadd.f32 %v1542, %v1630
          %1632 = vmatmul.bf16.gmra.mxu0 %v624
          %v1633 = vpop.f32.mrf.mxu0
          %v1634 = vadd.f32 %v1545, %v1633
          %v1635 = vpop.f32.mrf.mxu0
          %v1636 = vadd.f32 %v1547, %v1635
          %1637 = vmatmul.bf16.gmra.mxu0 %v627
          %v1638 = vpop.f32.mrf.mxu0
          %v1639 = vadd.f32 %v1550, %v1638
          %v1640 = vpop.f32.mrf.mxu0
          %v1641 = vadd.f32 %v1552, %v1640
          %1642 = vmatmul.bf16.gmra.mxu0 %v630
          %v1643 = vpop.f32.mrf.mxu0
          %v1644 = vadd.f32 %v1555, %v1643
          %v1645 = vpop.f32.mrf.mxu0
          %v1646 = vadd.f32 %v1557, %v1645
          %1647 = vmatmul.bf16.gmra.mxu0 %v633
          %v1648 = vpop.f32.mrf.mxu0
          %v1649 = vadd.f32 %v1560, %v1648
          %v1650 = vpop.f32.mrf.mxu0
          %v1651 = vadd.f32 %v1562, %v1650
          %1652 = vmatmul.bf16.gmra.mxu0 %v636
          %v1653 = vpop.f32.mrf.mxu0
          %v1654 = vadd.f32 %v1565, %v1653
          %v1655 = vpop.f32.mrf.mxu0
          %v1656 = vadd.f32 %v1567, %v1655
          %1657 = vmatmul.bf16.gmra.mxu0 %v639
          %v1658 = vpop.f32.mrf.mxu0
          %v1659 = vadd.f32 %v1570, %v1658
          %v1660 = vpop.f32.mrf.mxu0
          %v1661 = vadd.f32 %v1572, %v1660
          %1662 = vmatmul.bf16.gmra.mxu0 %v642
          %v1663 = vpop.f32.mrf.mxu0
          %v1664 = vadd.f32 %v1575, %v1663
          %v1665 = vpop.f32.mrf.mxu0
          %v1666 = vadd.f32 %v1577, %v1665
          %1667 = vmatmul.bf16.gmra.mxu0 %v645
          %v1668 = vpop.f32.mrf.mxu0
          %v1669 = vadd.f32 %v1580, %v1668
          %v1670 = vpop.f32.mrf.mxu0
          %v1671 = vadd.f32 %v1582, %v1670
          %1672 = vmatmul.bf16.gmra.mxu0 %v648
          %v1673 = vpop.f32.mrf.mxu0
          %v1674 = vadd.f32 %v1585, %v1673
          %v1675 = vpop.f32.mrf.mxu0
          %v1676 = vadd.f32 %v1587, %v1675
          %1677 = vmatmul.bf16.gmra.mxu0 %v651
          %v1678 = vpop.f32.mrf.mxu0
          %v1679 = vadd.f32 %v1590, %v1678
          %v1680 = vpop.f32.mrf.mxu0
          %v1681 = vadd.f32 %v1592, %v1680
          %1682 = vmatmul.bf16.gmra.mxu0 %v654
          %v1683 = vpop.f32.mrf.mxu0
          %v1684 = vadd.f32 %v1595, %v1683
          %v1685 = vpop.f32.mrf.mxu0
          %v1686 = vadd.f32 %v1597, %v1685
          %1687 = vmatmul.bf16.gmra.mxu0 %v657
          %v1688 = vpop.f32.mrf.mxu0
          %v1689 = vadd.f32 %v1600, %v1688
          %v1690 = vpop.f32.mrf.mxu0
          %v1691 = vadd.f32 %v1602, %v1690
          %1692 = vdwg.mxu0
          %1693 = vmatpush.bf16.msra.mxu0 %v1181
          %1694 = vmatpush.bf16.msra.mxu0 %v1175
          %1695 = vmatpush.bf16.msra.mxu0 %v1169
          %1696 = vmatpush.bf16.msra.mxu0 %v1163
          %1697 = vmatpush.bf16.msra.mxu0 %v1157
          %1698 = vmatpush.bf16.msra.mxu0 %v1151
          %1699 = vmatpush.bf16.msra.mxu0 %v1145
          %1700 = vmatpush.bf16.msra.mxu0 %v1139
          %1701 = vmatmul.bf16.gmra.mxu0 %v610
          %v1702 = vpop.f32.mrf.mxu0
          %v1703 = vadd.f32 0.0, %v1702
          %v1704 = vpop.f32.mrf.mxu0
          %v1705 = vadd.f32 0.0, %v1704
          %1706 = vmatmul.bf16.gmra.mxu0 %v613
          %v1707 = vpop.f32.mrf.mxu0
          %v1708 = vadd.f32 0.0, %v1707
          %v1709 = vpop.f32.mrf.mxu0
          %v1710 = vadd.f32 0.0, %v1709
          %1711 = vmatmul.bf16.gmra.mxu0 %v616
          %v1712 = vpop.f32.mrf.mxu0
          %v1713 = vadd.f32 0.0, %v1712
          %v1714 = vpop.f32.mrf.mxu0
          %v1715 = vadd.f32 0.0, %v1714
          %1716 = vmatmul.bf16.gmra.mxu0 %v619
          %v1717 = vpop.f32.mrf.mxu0
          %v1718 = vadd.f32 0.0, %v1717
          %v1719 = vpop.f32.mrf.mxu0
          %v1720 = vadd.f32 0.0, %v1719
          %1721 = vmatmul.bf16.gmra.mxu0 %v622
          %v1722 = vpop.f32.mrf.mxu0
          %v1723 = vadd.f32 0.0, %v1722
          %v1724 = vpop.f32.mrf.mxu0
          %v1725 = vadd.f32 0.0, %v1724
          %1726 = vmatmul.bf16.gmra.mxu0 %v625
          %v1727 = vpop.f32.mrf.mxu0
          %v1728 = vadd.f32 0.0, %v1727
          %v1729 = vpop.f32.mrf.mxu0
          %v1730 = vadd.f32 0.0, %v1729
          %1731 = vmatmul.bf16.gmra.mxu0 %v628
          %v1732 = vpop.f32.mrf.mxu0
          %v1733 = vadd.f32 0.0, %v1732
          %v1734 = vpop.f32.mrf.mxu0
          %v1735 = vadd.f32 0.0, %v1734
          %1736 = vmatmul.bf16.gmra.mxu0 %v631
          %v1737 = vpop.f32.mrf.mxu0
          %v1738 = vadd.f32 0.0, %v1737
          %v1739 = vpop.f32.mrf.mxu0
          %v1740 = vadd.f32 0.0, %v1739
          %1741 = vmatmul.bf16.gmra.mxu0 %v634
          %v1742 = vpop.f32.mrf.mxu0
          %v1743 = vadd.f32 0.0, %v1742
          %v1744 = vpop.f32.mrf.mxu0
          %v1745 = vadd.f32 0.0, %v1744
          %1746 = vmatmul.bf16.gmra.mxu0 %v637
          %v1747 = vpop.f32.mrf.mxu0
          %v1748 = vadd.f32 0.0, %v1747
          %v1749 = vpop.f32.mrf.mxu0
          %v1750 = vadd.f32 0.0, %v1749
          %1751 = vmatmul.bf16.gmra.mxu0 %v640
          %v1752 = vpop.f32.mrf.mxu0
          %v1753 = vadd.f32 0.0, %v1752
          %v1754 = vpop.f32.mrf.mxu0
          %v1755 = vadd.f32 0.0, %v1754
          %1756 = vmatmul.bf16.gmra.mxu0 %v643
          %v1757 = vpop.f32.mrf.mxu0
          %v1758 = vadd.f32 0.0, %v1757
          %v1759 = vpop.f32.mrf.mxu0
          %v1760 = vadd.f32 0.0, %v1759
          %1761 = vmatmul.bf16.gmra.mxu0 %v646
          %v1762 = vpop.f32.mrf.mxu0
          %v1763 = vadd.f32 0.0, %v1762
          %v1764 = vpop.f32.mrf.mxu0
          %v1765 = vadd.f32 0.0, %v1764
          %1766 = vmatmul.bf16.gmra.mxu0 %v649
          %v1767 = vpop.f32.mrf.mxu0
          %v1768 = vadd.f32 0.0, %v1767
          %v1769 = vpop.f32.mrf.mxu0
          %v1770 = vadd.f32 0.0, %v1769
          %1771 = vmatmul.bf16.gmra.mxu0 %v652
          %v1772 = vpop.f32.mrf.mxu0
          %v1773 = vadd.f32 0.0, %v1772
          %v1774 = vpop.f32.mrf.mxu0
          %v1775 = vadd.f32 0.0, %v1774
          %1776 = vmatmul.bf16.gmra.mxu0 %v655
          %v1777 = vpop.f32.mrf.mxu0
          %v1778 = vadd.f32 0.0, %v1777
          %v1779 = vpop.f32.mrf.mxu0
          %v1780 = vadd.f32 0.0, %v1779
          %1781 = vdwg.mxu0
          %1782 = vmatpush.bf16.msra.mxu0 %v1229
          %1783 = vmatpush.bf16.msra.mxu0 %v1223
          %1784 = vmatpush.bf16.msra.mxu0 %v1217
          %1785 = vmatpush.bf16.msra.mxu0 %v1211
          %1786 = vmatpush.bf16.msra.mxu0 %v1205
          %1787 = vmatpush.bf16.msra.mxu0 %v1199
          %1788 = vmatpush.bf16.msra.mxu0 %v1193
          %1789 = vmatpush.bf16.msra.mxu0 %v1187
          %1790 = vmatmul.bf16.gmra.mxu0 %v611
          %v1791 = vpop.f32.mrf.mxu0
          %v1792 = vadd.f32 %v1703, %v1791
          %v1793 = vpop.f32.mrf.mxu0
          %v1794 = vadd.f32 %v1705, %v1793
          %1795 = vmatmul.bf16.gmra.mxu0 %v614
          %v1796 = vpop.f32.mrf.mxu0
          %v1797 = vadd.f32 %v1708, %v1796
          %v1798 = vpop.f32.mrf.mxu0
          %v1799 = vadd.f32 %v1710, %v1798
          %1800 = vmatmul.bf16.gmra.mxu0 %v617
          %v1801 = vpop.f32.mrf.mxu0
          %v1802 = vadd.f32 %v1713, %v1801
          %v1803 = vpop.f32.mrf.mxu0
          %v1804 = vadd.f32 %v1715, %v1803
          %1805 = vmatmul.bf16.gmra.mxu0 %v620
          %v1806 = vpop.f32.mrf.mxu0
          %v1807 = vadd.f32 %v1718, %v1806
          %v1808 = vpop.f32.mrf.mxu0
          %v1809 = vadd.f32 %v1720, %v1808
          %1810 = vmatmul.bf16.gmra.mxu0 %v623
          %v1811 = vpop.f32.mrf.mxu0
          %v1812 = vadd.f32 %v1723, %v1811
          %v1813 = vpop.f32.mrf.mxu0
          %v1814 = vadd.f32 %v1725, %v1813
          %1815 = vmatmul.bf16.gmra.mxu0 %v626
          %v1816 = vpop.f32.mrf.mxu0
          %v1817 = vadd.f32 %v1728, %v1816
          %v1818 = vpop.f32.mrf.mxu0
          %v1819 = vadd.f32 %v1730, %v1818
          %1820 = vmatmul.bf16.gmra.mxu0 %v629
          %v1821 = vpop.f32.mrf.mxu0
          %v1822 = vadd.f32 %v1733, %v1821
          %v1823 = vpop.f32.mrf.mxu0
          %v1824 = vadd.f32 %v1735, %v1823
          %1825 = vmatmul.bf16.gmra.mxu0 %v632
          %v1826 = vpop.f32.mrf.mxu0
          %v1827 = vadd.f32 %v1738, %v1826
          %v1828 = vpop.f32.mrf.mxu0
          %v1829 = vadd.f32 %v1740, %v1828
          %1830 = vmatmul.bf16.gmra.mxu0 %v635
          %v1831 = vpop.f32.mrf.mxu0
          %v1832 = vadd.f32 %v1743, %v1831
          %v1833 = vpop.f32.mrf.mxu0
          %v1834 = vadd.f32 %v1745, %v1833
          %1835 = vmatmul.bf16.gmra.mxu0 %v638
          %v1836 = vpop.f32.mrf.mxu0
          %v1837 = vadd.f32 %v1748, %v1836
          %v1838 = vpop.f32.mrf.mxu0
          %v1839 = vadd.f32 %v1750, %v1838
          %1840 = vmatmul.bf16.gmra.mxu0 %v641
          %v1841 = vpop.f32.mrf.mxu0
          %v1842 = vadd.f32 %v1753, %v1841
          %v1843 = vpop.f32.mrf.mxu0
          %v1844 = vadd.f32 %v1755, %v1843
          %1845 = vmatmul.bf16.gmra.mxu0 %v644
          %v1846 = vpop.f32.mrf.mxu0
          %v1847 = vadd.f32 %v1758, %v1846
          %v1848 = vpop.f32.mrf.mxu0
          %v1849 = vadd.f32 %v1760, %v1848
          %1850 = vmatmul.bf16.gmra.mxu0 %v647
          %v1851 = vpop.f32.mrf.mxu0
          %v1852 = vadd.f32 %v1763, %v1851
          %v1853 = vpop.f32.mrf.mxu0
          %v1854 = vadd.f32 %v1765, %v1853
          %1855 = vmatmul.bf16.gmra.mxu0 %v650
          %v1856 = vpop.f32.mrf.mxu0
          %v1857 = vadd.f32 %v1768, %v1856
          %v1858 = vpop.f32.mrf.mxu0
          %v1859 = vadd.f32 %v1770, %v1858
          %1860 = vmatmul.bf16.gmra.mxu0 %v653
          %v1861 = vpop.f32.mrf.mxu0
          %v1862 = vadd.f32 %v1773, %v1861
          %v1863 = vpop.f32.mrf.mxu0
          %v1864 = vadd.f32 %v1775, %v1863
          %1865 = vmatmul.bf16.gmra.mxu0 %v656
          %v1866 = vpop.f32.mrf.mxu0
          %v1867 = vadd.f32 %v1778, %v1866
          %v1868 = vpop.f32.mrf.mxu0
          %v1869 = vadd.f32 %v1780, %v1868
          %1870 = vdwg.mxu0
          %1871 = vmatpush.bf16.msra.mxu0 %v1277
          %1872 = vmatpush.bf16.msra.mxu0 %v1271
          %1873 = vmatpush.bf16.msra.mxu0 %v1265
          %1874 = vmatpush.bf16.msra.mxu0 %v1259
          %1875 = vmatpush.bf16.msra.mxu0 %v1253
          %1876 = vmatpush.bf16.msra.mxu0 %v1247
          %1877 = vmatpush.bf16.msra.mxu0 %v1241
          %1878 = vmatpush.bf16.msra.mxu0 %v1235
          %1879 = vmatmul.bf16.gmra.mxu0 %v612
          %v1880 = vpop.f32.mrf.mxu0
          %v1881 = vadd.f32 %v1792, %v1880
          %v1882 = vpop.f32.mrf.mxu0
          %v1883 = vadd.f32 %v1794, %v1882
          %1884 = vmatmul.bf16.gmra.mxu0 %v615
          %v1885 = vpop.f32.mrf.mxu0
          %v1886 = vadd.f32 %v1797, %v1885
          %v1887 = vpop.f32.mrf.mxu0
          %v1888 = vadd.f32 %v1799, %v1887
          %1889 = vmatmul.bf16.gmra.mxu0 %v618
          %v1890 = vpop.f32.mrf.mxu0
          %v1891 = vadd.f32 %v1802, %v1890
          %v1892 = vpop.f32.mrf.mxu0
          %v1893 = vadd.f32 %v1804, %v1892
          %1894 = vmatmul.bf16.gmra.mxu0 %v621
          %v1895 = vpop.f32.mrf.mxu0
          %v1896 = vadd.f32 %v1807, %v1895
          %v1897 = vpop.f32.mrf.mxu0
          %v1898 = vadd.f32 %v1809, %v1897
          %1899 = vmatmul.bf16.gmra.mxu0 %v624
          %v1900 = vpop.f32.mrf.mxu0
          %v1901 = vadd.f32 %v1812, %v1900
          %v1902 = vpop.f32.mrf.mxu0
          %v1903 = vadd.f32 %v1814, %v1902
          %1904 = vmatmul.bf16.gmra.mxu0 %v627
          %v1905 = vpop.f32.mrf.mxu0
          %v1906 = vadd.f32 %v1817, %v1905
          %v1907 = vpop.f32.mrf.mxu0
          %v1908 = vadd.f32 %v1819, %v1907
          %1909 = vmatmul.bf16.gmra.mxu0 %v630
          %v1910 = vpop.f32.mrf.mxu0
          %v1911 = vadd.f32 %v1822, %v1910
          %v1912 = vpop.f32.mrf.mxu0
          %v1913 = vadd.f32 %v1824, %v1912
          %1914 = vmatmul.bf16.gmra.mxu0 %v633
          %v1915 = vpop.f32.mrf.mxu0
          %v1916 = vadd.f32 %v1827, %v1915
          %v1917 = vpop.f32.mrf.mxu0
          %v1918 = vadd.f32 %v1829, %v1917
          %1919 = vmatmul.bf16.gmra.mxu0 %v636
          %v1920 = vpop.f32.mrf.mxu0
          %v1921 = vadd.f32 %v1832, %v1920
          %v1922 = vpop.f32.mrf.mxu0
          %v1923 = vadd.f32 %v1834, %v1922
          %1924 = vmatmul.bf16.gmra.mxu0 %v639
          %v1925 = vpop.f32.mrf.mxu0
          %v1926 = vadd.f32 %v1837, %v1925
          %v1927 = vpop.f32.mrf.mxu0
          %v1928 = vadd.f32 %v1839, %v1927
          %1929 = vmatmul.bf16.gmra.mxu0 %v642
          %v1930 = vpop.f32.mrf.mxu0
          %v1931 = vadd.f32 %v1842, %v1930
          %v1932 = vpop.f32.mrf.mxu0
          %v1933 = vadd.f32 %v1844, %v1932
          %1934 = vmatmul.bf16.gmra.mxu0 %v645
          %v1935 = vpop.f32.mrf.mxu0
          %v1936 = vadd.f32 %v1847, %v1935
          %v1937 = vpop.f32.mrf.mxu0
          %v1938 = vadd.f32 %v1849, %v1937
          %1939 = vmatmul.bf16.gmra.mxu0 %v648
          %v1940 = vpop.f32.mrf.mxu0
          %v1941 = vadd.f32 %v1852, %v1940
          %v1942 = vpop.f32.mrf.mxu0
          %v1943 = vadd.f32 %v1854, %v1942
          %1944 = vmatmul.bf16.gmra.mxu0 %v651
          %v1945 = vpop.f32.mrf.mxu0
          %v1946 = vadd.f32 %v1857, %v1945
          %v1947 = vpop.f32.mrf.mxu0
          %v1948 = vadd.f32 %v1859, %v1947
          %1949 = vmatmul.bf16.gmra.mxu0 %v654
          %v1950 = vpop.f32.mrf.mxu0
          %v1951 = vadd.f32 %v1862, %v1950
          %v1952 = vpop.f32.mrf.mxu0
          %v1953 = vadd.f32 %v1864, %v1952
          %1954 = vmatmul.bf16.gmra.mxu0 %v657
          %v1955 = vpop.f32.mrf.mxu0
          %v1956 = vadd.f32 %v1867, %v1955
          %v1957 = vpop.f32.mrf.mxu0
          %v1958 = vadd.f32 %v1869, %v1957
          %1959 = vdwg.mxu0
          %1960 = vmatpush.bf16.msra.mxu0 %v1182
          %1961 = vmatpush.bf16.msra.mxu0 %v1176
          %1962 = vmatpush.bf16.msra.mxu0 %v1170
          %1963 = vmatpush.bf16.msra.mxu0 %v1164
          %1964 = vmatpush.bf16.msra.mxu0 %v1158
          %1965 = vmatpush.bf16.msra.mxu0 %v1152
          %1966 = vmatpush.bf16.msra.mxu0 %v1146
          %1967 = vmatpush.bf16.msra.mxu0 %v1140
          %1968 = vmatmul.bf16.gmra.mxu0 %v610
          %v1969 = vpop.f32.mrf.mxu0
          %v1970 = vadd.f32 0.0, %v1969
          %v1971 = vpop.f32.mrf.mxu0
          %v1972 = vadd.f32 0.0, %v1971
          %1973 = vmatmul.bf16.gmra.mxu0 %v613
          %v1974 = vpop.f32.mrf.mxu0
          %v1975 = vadd.f32 0.0, %v1974
          %v1976 = vpop.f32.mrf.mxu0
          %v1977 = vadd.f32 0.0, %v1976
          %1978 = vmatmul.bf16.gmra.mxu0 %v616
          %v1979 = vpop.f32.mrf.mxu0
          %v1980 = vadd.f32 0.0, %v1979
          %v1981 = vpop.f32.mrf.mxu0
          %v1982 = vadd.f32 0.0, %v1981
          %1983 = vmatmul.bf16.gmra.mxu0 %v619
          %v1984 = vpop.f32.mrf.mxu0
          %v1985 = vadd.f32 0.0, %v1984
          %v1986 = vpop.f32.mrf.mxu0
          %v1987 = vadd.f32 0.0, %v1986
          %1988 = vmatmul.bf16.gmra.mxu0 %v622
          %v1989 = vpop.f32.mrf.mxu0
          %v1990 = vadd.f32 0.0, %v1989
          %v1991 = vpop.f32.mrf.mxu0
          %v1992 = vadd.f32 0.0, %v1991
          %1993 = vmatmul.bf16.gmra.mxu0 %v625
          %v1994 = vpop.f32.mrf.mxu0
          %v1995 = vadd.f32 0.0, %v1994
          %v1996 = vpop.f32.mrf.mxu0
          %v1997 = vadd.f32 0.0, %v1996
          %1998 = vmatmul.bf16.gmra.mxu0 %v628
          %v1999 = vpop.f32.mrf.mxu0
          %v2000 = vadd.f32 0.0, %v1999
          %v2001 = vpop.f32.mrf.mxu0
          %v2002 = vadd.f32 0.0, %v2001
          %2003 = vmatmul.bf16.gmra.mxu0 %v631
          %v2004 = vpop.f32.mrf.mxu0
          %v2005 = vadd.f32 0.0, %v2004
          %v2006 = vpop.f32.mrf.mxu0
          %v2007 = vadd.f32 0.0, %v2006
          %2008 = vmatmul.bf16.gmra.mxu0 %v634
          %v2009 = vpop.f32.mrf.mxu0
          %v2010 = vadd.f32 0.0, %v2009
          %v2011 = vpop.f32.mrf.mxu0
          %v2012 = vadd.f32 0.0, %v2011
          %2013 = vmatmul.bf16.gmra.mxu0 %v637
          %v2014 = vpop.f32.mrf.mxu0
          %v2015 = vadd.f32 0.0, %v2014
          %v2016 = vpop.f32.mrf.mxu0
          %v2017 = vadd.f32 0.0, %v2016
          %2018 = vmatmul.bf16.gmra.mxu0 %v640
          %v2019 = vpop.f32.mrf.mxu0
          %v2020 = vadd.f32 0.0, %v2019
          %v2021 = vpop.f32.mrf.mxu0
          %v2022 = vadd.f32 0.0, %v2021
          %2023 = vmatmul.bf16.gmra.mxu0 %v643
          %v2024 = vpop.f32.mrf.mxu0
          %v2025 = vadd.f32 0.0, %v2024
          %v2026 = vpop.f32.mrf.mxu0
          %v2027 = vadd.f32 0.0, %v2026
          %2028 = vmatmul.bf16.gmra.mxu0 %v646
          %v2029 = vpop.f32.mrf.mxu0
          %v2030 = vadd.f32 0.0, %v2029
          %v2031 = vpop.f32.mrf.mxu0
          %v2032 = vadd.f32 0.0, %v2031
          %2033 = vmatmul.bf16.gmra.mxu0 %v649
          %v2034 = vpop.f32.mrf.mxu0
          %v2035 = vadd.f32 0.0, %v2034
          %v2036 = vpop.f32.mrf.mxu0
          %v2037 = vadd.f32 0.0, %v2036
          %2038 = vmatmul.bf16.gmra.mxu0 %v652
          %v2039 = vpop.f32.mrf.mxu0
          %v2040 = vadd.f32 0.0, %v2039
          %v2041 = vpop.f32.mrf.mxu0
          %v2042 = vadd.f32 0.0, %v2041
          %2043 = vmatmul.bf16.gmra.mxu0 %v655
          %v2044 = vpop.f32.mrf.mxu0
          %v2045 = vadd.f32 0.0, %v2044
          %v2046 = vpop.f32.mrf.mxu0
          %v2047 = vadd.f32 0.0, %v2046
          %2048 = vdwg.mxu0
          %2049 = vmatpush.bf16.msra.mxu0 %v1230
          %2050 = vmatpush.bf16.msra.mxu0 %v1224
          %2051 = vmatpush.bf16.msra.mxu0 %v1218
          %2052 = vmatpush.bf16.msra.mxu0 %v1212
          %2053 = vmatpush.bf16.msra.mxu0 %v1206
          %2054 = vmatpush.bf16.msra.mxu0 %v1200
          %2055 = vmatpush.bf16.msra.mxu0 %v1194
          %2056 = vmatpush.bf16.msra.mxu0 %v1188
          %2057 = vmatmul.bf16.gmra.mxu0 %v611
          %v2058 = vpop.f32.mrf.mxu0
          %v2059 = vadd.f32 %v1970, %v2058
          %v2060 = vpop.f32.mrf.mxu0
          %v2061 = vadd.f32 %v1972, %v2060
          %2062 = vmatmul.bf16.gmra.mxu0 %v614
          %v2063 = vpop.f32.mrf.mxu0
          %v2064 = vadd.f32 %v1975, %v2063
          %v2065 = vpop.f32.mrf.mxu0
          %v2066 = vadd.f32 %v1977, %v2065
          %2067 = vmatmul.bf16.gmra.mxu0 %v617
          %v2068 = vpop.f32.mrf.mxu0
          %v2069 = vadd.f32 %v1980, %v2068
          %v2070 = vpop.f32.mrf.mxu0
          %v2071 = vadd.f32 %v1982, %v2070
          %2072 = vmatmul.bf16.gmra.mxu0 %v620
          %v2073 = vpop.f32.mrf.mxu0
          %v2074 = vadd.f32 %v1985, %v2073
          %v2075 = vpop.f32.mrf.mxu0
          %v2076 = vadd.f32 %v1987, %v2075
          %2077 = vmatmul.bf16.gmra.mxu0 %v623
          %v2078 = vpop.f32.mrf.mxu0
          %v2079 = vadd.f32 %v1990, %v2078
          %v2080 = vpop.f32.mrf.mxu0
          %v2081 = vadd.f32 %v1992, %v2080
          %2082 = vmatmul.bf16.gmra.mxu0 %v626
          %v2083 = vpop.f32.mrf.mxu0
          %v2084 = vadd.f32 %v1995, %v2083
          %v2085 = vpop.f32.mrf.mxu0
          %v2086 = vadd.f32 %v1997, %v2085
          %2087 = vmatmul.bf16.gmra.mxu0 %v629
          %v2088 = vpop.f32.mrf.mxu0
          %v2089 = vadd.f32 %v2000, %v2088
          %v2090 = vpop.f32.mrf.mxu0
          %v2091 = vadd.f32 %v2002, %v2090
          %2092 = vmatmul.bf16.gmra.mxu0 %v632
          %v2093 = vpop.f32.mrf.mxu0
          %v2094 = vadd.f32 %v2005, %v2093
          %v2095 = vpop.f32.mrf.mxu0
          %v2096 = vadd.f32 %v2007, %v2095
          %2097 = vmatmul.bf16.gmra.mxu0 %v635
          %v2098 = vpop.f32.mrf.mxu0
          %v2099 = vadd.f32 %v2010, %v2098
          %v2100 = vpop.f32.mrf.mxu0
          %v2101 = vadd.f32 %v2012, %v2100
          %2102 = vmatmul.bf16.gmra.mxu0 %v638
          %v2103 = vpop.f32.mrf.mxu0
          %v2104 = vadd.f32 %v2015, %v2103
          %v2105 = vpop.f32.mrf.mxu0
          %v2106 = vadd.f32 %v2017, %v2105
          %2107 = vmatmul.bf16.gmra.mxu0 %v641
          %v2108 = vpop.f32.mrf.mxu0
          %v2109 = vadd.f32 %v2020, %v2108
          %v2110 = vpop.f32.mrf.mxu0
          %v2111 = vadd.f32 %v2022, %v2110
          %2112 = vmatmul.bf16.gmra.mxu0 %v644
          %v2113 = vpop.f32.mrf.mxu0
          %v2114 = vadd.f32 %v2025, %v2113
          %v2115 = vpop.f32.mrf.mxu0
          %v2116 = vadd.f32 %v2027, %v2115
          %2117 = vmatmul.bf16.gmra.mxu0 %v647
          %v2118 = vpop.f32.mrf.mxu0
          %v2119 = vadd.f32 %v2030, %v2118
          %v2120 = vpop.f32.mrf.mxu0
          %v2121 = vadd.f32 %v2032, %v2120
          %2122 = vmatmul.bf16.gmra.mxu0 %v650
          %v2123 = vpop.f32.mrf.mxu0
          %v2124 = vadd.f32 %v2035, %v2123
          %v2125 = vpop.f32.mrf.mxu0
          %v2126 = vadd.f32 %v2037, %v2125
          %2127 = vmatmul.bf16.gmra.mxu0 %v653
          %v2128 = vpop.f32.mrf.mxu0
          %v2129 = vadd.f32 %v2040, %v2128
          %v2130 = vpop.f32.mrf.mxu0
          %v2131 = vadd.f32 %v2042, %v2130
          %2132 = vmatmul.bf16.gmra.mxu0 %v656
          %v2133 = vpop.f32.mrf.mxu0
          %v2134 = vadd.f32 %v2045, %v2133
          %v2135 = vpop.f32.mrf.mxu0
          %v2136 = vadd.f32 %v2047, %v2135
          %2137 = vdwg.mxu0
          %2138 = vmatpush.bf16.msra.mxu0 %v1278
          %2139 = vmatpush.bf16.msra.mxu0 %v1272
          %2140 = vmatpush.bf16.msra.mxu0 %v1266
          %2141 = vmatpush.bf16.msra.mxu0 %v1260
          %2142 = vmatpush.bf16.msra.mxu0 %v1254
          %2143 = vmatpush.bf16.msra.mxu0 %v1248
          %2144 = vmatpush.bf16.msra.mxu0 %v1242
          %2145 = vmatpush.bf16.msra.mxu0 %v1236
          %2146 = vmatmul.bf16.gmra.mxu0 %v612
          %v2147 = vpop.f32.mrf.mxu0
          %v2148 = vadd.f32 %v2059, %v2147
          %v2149 = vpop.f32.mrf.mxu0
          %v2150 = vadd.f32 %v2061, %v2149
          %2151 = vmatmul.bf16.gmra.mxu0 %v615
          %v2152 = vpop.f32.mrf.mxu0
          %v2153 = vadd.f32 %v2064, %v2152
          %v2154 = vpop.f32.mrf.mxu0
          %v2155 = vadd.f32 %v2066, %v2154
          %2156 = vmatmul.bf16.gmra.mxu0 %v618
          %v2157 = vpop.f32.mrf.mxu0
          %v2158 = vadd.f32 %v2069, %v2157
          %v2159 = vpop.f32.mrf.mxu0
          %v2160 = vadd.f32 %v2071, %v2159
          %2161 = vmatmul.bf16.gmra.mxu0 %v621
          %v2162 = vpop.f32.mrf.mxu0
          %v2163 = vadd.f32 %v2074, %v2162
          %v2164 = vpop.f32.mrf.mxu0
          %v2165 = vadd.f32 %v2076, %v2164
          %2166 = vmatmul.bf16.gmra.mxu0 %v624
          %v2167 = vpop.f32.mrf.mxu0
          %v2168 = vadd.f32 %v2079, %v2167
          %v2169 = vpop.f32.mrf.mxu0
          %v2170 = vadd.f32 %v2081, %v2169
          %2171 = vmatmul.bf16.gmra.mxu0 %v627
          %v2172 = vpop.f32.mrf.mxu0
          %v2173 = vadd.f32 %v2084, %v2172
          %v2174 = vpop.f32.mrf.mxu0
          %v2175 = vadd.f32 %v2086, %v2174
          %2176 = vmatmul.bf16.gmra.mxu0 %v630
          %v2177 = vpop.f32.mrf.mxu0
          %v2178 = vadd.f32 %v2089, %v2177
          %v2179 = vpop.f32.mrf.mxu0
          %v2180 = vadd.f32 %v2091, %v2179
          %2181 = vmatmul.bf16.gmra.mxu0 %v633
          %v2182 = vpop.f32.mrf.mxu0
          %v2183 = vadd.f32 %v2094, %v2182
          %v2184 = vpop.f32.mrf.mxu0
          %v2185 = vadd.f32 %v2096, %v2184
          %2186 = vmatmul.bf16.gmra.mxu0 %v636
          %v2187 = vpop.f32.mrf.mxu0
          %v2188 = vadd.f32 %v2099, %v2187
          %v2189 = vpop.f32.mrf.mxu0
          %v2190 = vadd.f32 %v2101, %v2189
          %2191 = vmatmul.bf16.gmra.mxu0 %v639
          %v2192 = vpop.f32.mrf.mxu0
          %v2193 = vadd.f32 %v2104, %v2192
          %v2194 = vpop.f32.mrf.mxu0
          %v2195 = vadd.f32 %v2106, %v2194
          %2196 = vmatmul.bf16.gmra.mxu0 %v642
          %v2197 = vpop.f32.mrf.mxu0
          %v2198 = vadd.f32 %v2109, %v2197
          %v2199 = vpop.f32.mrf.mxu0
          %v2200 = vadd.f32 %v2111, %v2199
          %2201 = vmatmul.bf16.gmra.mxu0 %v645
          %v2202 = vpop.f32.mrf.mxu0
          %v2203 = vadd.f32 %v2114, %v2202
          %v2204 = vpop.f32.mrf.mxu0
          %v2205 = vadd.f32 %v2116, %v2204
          %2206 = vmatmul.bf16.gmra.mxu0 %v648
          %v2207 = vpop.f32.mrf.mxu0
          %v2208 = vadd.f32 %v2119, %v2207
          %v2209 = vpop.f32.mrf.mxu0
          %v2210 = vadd.f32 %v2121, %v2209
          %2211 = vmatmul.bf16.gmra.mxu0 %v651
          %v2212 = vpop.f32.mrf.mxu0
          %v2213 = vadd.f32 %v2124, %v2212
          %v2214 = vpop.f32.mrf.mxu0
          %v2215 = vadd.f32 %v2126, %v2214
          %2216 = vmatmul.bf16.gmra.mxu0 %v654
          %v2217 = vpop.f32.mrf.mxu0
          %v2218 = vadd.f32 %v2129, %v2217
          %v2219 = vpop.f32.mrf.mxu0
          %v2220 = vadd.f32 %v2131, %v2219
          %2221 = vmatmul.bf16.gmra.mxu0 %v657
          %v2222 = vpop.f32.mrf.mxu0
          %v2223 = vadd.f32 %v2134, %v2222
          %v2224 = vpop.f32.mrf.mxu0
          %v2225 = vadd.f32 %v2136, %v2224
          %2226 = vdwg.mxu0
          %2227 = vmatpush.bf16.msra.mxu0 %v1183
          %2228 = vmatpush.bf16.msra.mxu0 %v1177
          %2229 = vmatpush.bf16.msra.mxu0 %v1171
          %2230 = vmatpush.bf16.msra.mxu0 %v1165
          %2231 = vmatpush.bf16.msra.mxu0 %v1159
          %2232 = vmatpush.bf16.msra.mxu0 %v1153
          %2233 = vmatpush.bf16.msra.mxu0 %v1147
          %2234 = vmatpush.bf16.msra.mxu0 %v1141
          %2235 = vmatmul.bf16.gmra.mxu0 %v610
          %v2236 = vpop.f32.mrf.mxu0
          %v2237 = vadd.f32 0.0, %v2236
          %v2238 = vpop.f32.mrf.mxu0
          %v2239 = vadd.f32 0.0, %v2238
          %2240 = vmatmul.bf16.gmra.mxu0 %v613
          %v2241 = vpop.f32.mrf.mxu0
          %v2242 = vadd.f32 0.0, %v2241
          %v2243 = vpop.f32.mrf.mxu0
          %v2244 = vadd.f32 0.0, %v2243
          %2245 = vmatmul.bf16.gmra.mxu0 %v616
          %v2246 = vpop.f32.mrf.mxu0
          %v2247 = vadd.f32 0.0, %v2246
          %v2248 = vpop.f32.mrf.mxu0
          %v2249 = vadd.f32 0.0, %v2248
          %2250 = vmatmul.bf16.gmra.mxu0 %v619
          %v2251 = vpop.f32.mrf.mxu0
          %v2252 = vadd.f32 0.0, %v2251
          %v2253 = vpop.f32.mrf.mxu0
          %v2254 = vadd.f32 0.0, %v2253
          %2255 = vmatmul.bf16.gmra.mxu0 %v622
          %v2256 = vpop.f32.mrf.mxu0
          %v2257 = vadd.f32 0.0, %v2256
          %v2258 = vpop.f32.mrf.mxu0
          %v2259 = vadd.f32 0.0, %v2258
          %2260 = vmatmul.bf16.gmra.mxu0 %v625
          %v2261 = vpop.f32.mrf.mxu0
          %v2262 = vadd.f32 0.0, %v2261
          %v2263 = vpop.f32.mrf.mxu0
          %v2264 = vadd.f32 0.0, %v2263
          %2265 = vmatmul.bf16.gmra.mxu0 %v628
          %v2266 = vpop.f32.mrf.mxu0
          %v2267 = vadd.f32 0.0, %v2266
          %v2268 = vpop.f32.mrf.mxu0
          %v2269 = vadd.f32 0.0, %v2268
          %2270 = vmatmul.bf16.gmra.mxu0 %v631
          %v2271 = vpop.f32.mrf.mxu0
          %v2272 = vadd.f32 0.0, %v2271
          %v2273 = vpop.f32.mrf.mxu0
          %v2274 = vadd.f32 0.0, %v2273
          %2275 = vmatmul.bf16.gmra.mxu0 %v634
          %v2276 = vpop.f32.mrf.mxu0
          %v2277 = vadd.f32 0.0, %v2276
          %v2278 = vpop.f32.mrf.mxu0
          %v2279 = vadd.f32 0.0, %v2278
          %2280 = vmatmul.bf16.gmra.mxu0 %v637
          %v2281 = vpop.f32.mrf.mxu0
          %v2282 = vadd.f32 0.0, %v2281
          %v2283 = vpop.f32.mrf.mxu0
          %v2284 = vadd.f32 0.0, %v2283
          %2285 = vmatmul.bf16.gmra.mxu0 %v640
          %v2286 = vpop.f32.mrf.mxu0
          %v2287 = vadd.f32 0.0, %v2286
          %v2288 = vpop.f32.mrf.mxu0
          %v2289 = vadd.f32 0.0, %v2288
          %2290 = vmatmul.bf16.gmra.mxu0 %v643
          %v2291 = vpop.f32.mrf.mxu0
          %v2292 = vadd.f32 0.0, %v2291
          %v2293 = vpop.f32.mrf.mxu0
          %v2294 = vadd.f32 0.0, %v2293
          %2295 = vmatmul.bf16.gmra.mxu0 %v646
          %v2296 = vpop.f32.mrf.mxu0
          %v2297 = vadd.f32 0.0, %v2296
          %v2298 = vpop.f32.mrf.mxu0
          %v2299 = vadd.f32 0.0, %v2298
          %2300 = vmatmul.bf16.gmra.mxu0 %v649
          %v2301 = vpop.f32.mrf.mxu0
          %v2302 = vadd.f32 0.0, %v2301
          %v2303 = vpop.f32.mrf.mxu0
          %v2304 = vadd.f32 0.0, %v2303
          %2305 = vmatmul.bf16.gmra.mxu0 %v652
          %v2306 = vpop.f32.mrf.mxu0
          %v2307 = vadd.f32 0.0, %v2306
          %v2308 = vpop.f32.mrf.mxu0
          %v2309 = vadd.f32 0.0, %v2308
          %2310 = vmatmul.bf16.gmra.mxu0 %v655
          %v2311 = vpop.f32.mrf.mxu0
          %v2312 = vadd.f32 0.0, %v2311
          %v2313 = vpop.f32.mrf.mxu0
          %v2314 = vadd.f32 0.0, %v2313
          %2315 = vdwg.mxu0
          %2316 = vmatpush.bf16.msra.mxu0 %v1231
          %2317 = vmatpush.bf16.msra.mxu0 %v1225
          %2318 = vmatpush.bf16.msra.mxu0 %v1219
          %2319 = vmatpush.bf16.msra.mxu0 %v1213
          %2320 = vmatpush.bf16.msra.mxu0 %v1207
          %2321 = vmatpush.bf16.msra.mxu0 %v1201
          %2322 = vmatpush.bf16.msra.mxu0 %v1195
          %2323 = vmatpush.bf16.msra.mxu0 %v1189
          %2324 = vmatmul.bf16.gmra.mxu0 %v611
          %v2325 = vpop.f32.mrf.mxu0
          %v2326 = vadd.f32 %v2237, %v2325
          %v2327 = vpop.f32.mrf.mxu0
          %v2328 = vadd.f32 %v2239, %v2327
          %2329 = vmatmul.bf16.gmra.mxu0 %v614
          %v2330 = vpop.f32.mrf.mxu0
          %v2331 = vadd.f32 %v2242, %v2330
          %v2332 = vpop.f32.mrf.mxu0
          %v2333 = vadd.f32 %v2244, %v2332
          %2334 = vmatmul.bf16.gmra.mxu0 %v617
          %v2335 = vpop.f32.mrf.mxu0
          %v2336 = vadd.f32 %v2247, %v2335
          %v2337 = vpop.f32.mrf.mxu0
          %v2338 = vadd.f32 %v2249, %v2337
          %2339 = vmatmul.bf16.gmra.mxu0 %v620
          %v2340 = vpop.f32.mrf.mxu0
          %v2341 = vadd.f32 %v2252, %v2340
          %v2342 = vpop.f32.mrf.mxu0
          %v2343 = vadd.f32 %v2254, %v2342
          %2344 = vmatmul.bf16.gmra.mxu0 %v623
          %v2345 = vpop.f32.mrf.mxu0
          %v2346 = vadd.f32 %v2257, %v2345
          %v2347 = vpop.f32.mrf.mxu0
          %v2348 = vadd.f32 %v2259, %v2347
          %2349 = vmatmul.bf16.gmra.mxu0 %v626
          %v2350 = vpop.f32.mrf.mxu0
          %v2351 = vadd.f32 %v2262, %v2350
          %v2352 = vpop.f32.mrf.mxu0
          %v2353 = vadd.f32 %v2264, %v2352
          %2354 = vmatmul.bf16.gmra.mxu0 %v629
          %v2355 = vpop.f32.mrf.mxu0
          %v2356 = vadd.f32 %v2267, %v2355
          %v2357 = vpop.f32.mrf.mxu0
          %v2358 = vadd.f32 %v2269, %v2357
          %2359 = vmatmul.bf16.gmra.mxu0 %v632
          %v2360 = vpop.f32.mrf.mxu0
          %v2361 = vadd.f32 %v2272, %v2360
          %v2362 = vpop.f32.mrf.mxu0
          %v2363 = vadd.f32 %v2274, %v2362
          %2364 = vmatmul.bf16.gmra.mxu0 %v635
          %v2365 = vpop.f32.mrf.mxu0
          %v2366 = vadd.f32 %v2277, %v2365
          %v2367 = vpop.f32.mrf.mxu0
          %v2368 = vadd.f32 %v2279, %v2367
          %2369 = vmatmul.bf16.gmra.mxu0 %v638
          %v2370 = vpop.f32.mrf.mxu0
          %v2371 = vadd.f32 %v2282, %v2370
          %v2372 = vpop.f32.mrf.mxu0
          %v2373 = vadd.f32 %v2284, %v2372
          %2374 = vmatmul.bf16.gmra.mxu0 %v641
          %v2375 = vpop.f32.mrf.mxu0
          %v2376 = vadd.f32 %v2287, %v2375
          %v2377 = vpop.f32.mrf.mxu0
          %v2378 = vadd.f32 %v2289, %v2377
          %2379 = vmatmul.bf16.gmra.mxu0 %v644
          %v2380 = vpop.f32.mrf.mxu0
          %v2381 = vadd.f32 %v2292, %v2380
          %v2382 = vpop.f32.mrf.mxu0
          %v2383 = vadd.f32 %v2294, %v2382
          %2384 = vmatmul.bf16.gmra.mxu0 %v647
          %v2385 = vpop.f32.mrf.mxu0
          %v2386 = vadd.f32 %v2297, %v2385
          %v2387 = vpop.f32.mrf.mxu0
          %v2388 = vadd.f32 %v2299, %v2387
          %2389 = vmatmul.bf16.gmra.mxu0 %v650
          %v2390 = vpop.f32.mrf.mxu0
          %v2391 = vadd.f32 %v2302, %v2390
          %v2392 = vpop.f32.mrf.mxu0
          %v2393 = vadd.f32 %v2304, %v2392
          %2394 = vmatmul.bf16.gmra.mxu0 %v653
          %v2395 = vpop.f32.mrf.mxu0
          %v2396 = vadd.f32 %v2307, %v2395
          %v2397 = vpop.f32.mrf.mxu0
          %v2398 = vadd.f32 %v2309, %v2397
          %2399 = vmatmul.bf16.gmra.mxu0 %v656
          %v2400 = vpop.f32.mrf.mxu0
          %v2401 = vadd.f32 %v2312, %v2400
          %v2402 = vpop.f32.mrf.mxu0
          %v2403 = vadd.f32 %v2314, %v2402
          %2404 = vdwg.mxu0
          %2405 = vmatpush.bf16.msra.mxu0 %v1279
          %2406 = vmatpush.bf16.msra.mxu0 %v1273
          %2407 = vmatpush.bf16.msra.mxu0 %v1267
          %2408 = vmatpush.bf16.msra.mxu0 %v1261
          %2409 = vmatpush.bf16.msra.mxu0 %v1255
          %2410 = vmatpush.bf16.msra.mxu0 %v1249
          %2411 = vmatpush.bf16.msra.mxu0 %v1243
          %2412 = vmatpush.bf16.msra.mxu0 %v1237
          %2413 = vmatmul.bf16.gmra.mxu0 %v612
          %v2414 = vpop.f32.mrf.mxu0
          %v2415 = vadd.f32 %v2326, %v2414
          %v2416 = vpop.f32.mrf.mxu0
          %v2417 = vadd.f32 %v2328, %v2416
          %2418 = vmatmul.bf16.gmra.mxu0 %v615
          %v2419 = vpop.f32.mrf.mxu0
          %v2420 = vadd.f32 %v2331, %v2419
          %v2421 = vpop.f32.mrf.mxu0
          %v2422 = vadd.f32 %v2333, %v2421
          %2423 = vmatmul.bf16.gmra.mxu0 %v618
          %v2424 = vpop.f32.mrf.mxu0
          %v2425 = vadd.f32 %v2336, %v2424
          %v2426 = vpop.f32.mrf.mxu0
          %v2427 = vadd.f32 %v2338, %v2426
          %2428 = vmatmul.bf16.gmra.mxu0 %v621
          %v2429 = vpop.f32.mrf.mxu0
          %v2430 = vadd.f32 %v2341, %v2429
          %v2431 = vpop.f32.mrf.mxu0
          %v2432 = vadd.f32 %v2343, %v2431
          %2433 = vmatmul.bf16.gmra.mxu0 %v624
          %v2434 = vpop.f32.mrf.mxu0
          %v2435 = vadd.f32 %v2346, %v2434
          %v2436 = vpop.f32.mrf.mxu0
          %v2437 = vadd.f32 %v2348, %v2436
          %2438 = vmatmul.bf16.gmra.mxu0 %v627
          %v2439 = vpop.f32.mrf.mxu0
          %v2440 = vadd.f32 %v2351, %v2439
          %v2441 = vpop.f32.mrf.mxu0
          %v2442 = vadd.f32 %v2353, %v2441
          %2443 = vmatmul.bf16.gmra.mxu0 %v630
          %v2444 = vpop.f32.mrf.mxu0
          %v2445 = vadd.f32 %v2356, %v2444
          %v2446 = vpop.f32.mrf.mxu0
          %v2447 = vadd.f32 %v2358, %v2446
          %2448 = vmatmul.bf16.gmra.mxu0 %v633
          %v2449 = vpop.f32.mrf.mxu0
          %v2450 = vadd.f32 %v2361, %v2449
          %v2451 = vpop.f32.mrf.mxu0
          %v2452 = vadd.f32 %v2363, %v2451
          %2453 = vmatmul.bf16.gmra.mxu0 %v636
          %v2454 = vpop.f32.mrf.mxu0
          %v2455 = vadd.f32 %v2366, %v2454
          %v2456 = vpop.f32.mrf.mxu0
          %v2457 = vadd.f32 %v2368, %v2456
          %2458 = vmatmul.bf16.gmra.mxu0 %v639
          %v2459 = vpop.f32.mrf.mxu0
          %v2460 = vadd.f32 %v2371, %v2459
          %v2461 = vpop.f32.mrf.mxu0
          %v2462 = vadd.f32 %v2373, %v2461
          %2463 = vmatmul.bf16.gmra.mxu0 %v642
          %v2464 = vpop.f32.mrf.mxu0
          %v2465 = vadd.f32 %v2376, %v2464
          %v2466 = vpop.f32.mrf.mxu0
          %v2467 = vadd.f32 %v2378, %v2466
          %2468 = vmatmul.bf16.gmra.mxu0 %v645
          %v2469 = vpop.f32.mrf.mxu0
          %v2470 = vadd.f32 %v2381, %v2469
          %v2471 = vpop.f32.mrf.mxu0
          %v2472 = vadd.f32 %v2383, %v2471
          %2473 = vmatmul.bf16.gmra.mxu0 %v648
          %v2474 = vpop.f32.mrf.mxu0
          %v2475 = vadd.f32 %v2386, %v2474
          %v2476 = vpop.f32.mrf.mxu0
          %v2477 = vadd.f32 %v2388, %v2476
          %2478 = vmatmul.bf16.gmra.mxu0 %v651
          %v2479 = vpop.f32.mrf.mxu0
          %v2480 = vadd.f32 %v2391, %v2479
          %v2481 = vpop.f32.mrf.mxu0
          %v2482 = vadd.f32 %v2393, %v2481
          %2483 = vmatmul.bf16.gmra.mxu0 %v654
          %v2484 = vpop.f32.mrf.mxu0
          %v2485 = vadd.f32 %v2396, %v2484
          %v2486 = vpop.f32.mrf.mxu0
          %v2487 = vadd.f32 %v2398, %v2486
          %2488 = vmatmul.bf16.gmra.mxu0 %v657
          %v2489 = vpop.f32.mrf.mxu0
          %v2490 = vadd.f32 %v2401, %v2489
          %v2491 = vpop.f32.mrf.mxu0
          %v2492 = vadd.f32 %v2403, %v2491
          %2493 = vdwg.mxu0
          %2494 = vmatpush.bf16.msra.mxu0 %v1184
          %2495 = vmatpush.bf16.msra.mxu0 %v1178
          %2496 = vmatpush.bf16.msra.mxu0 %v1172
          %2497 = vmatpush.bf16.msra.mxu0 %v1166
          %2498 = vmatpush.bf16.msra.mxu0 %v1160
          %2499 = vmatpush.bf16.msra.mxu0 %v1154
          %2500 = vmatpush.bf16.msra.mxu0 %v1148
          %2501 = vmatpush.bf16.msra.mxu0 %v1142
          %2502 = vmatmul.bf16.gmra.mxu0 %v610
          %v2503 = vpop.f32.mrf.mxu0
          %v2504 = vadd.f32 0.0, %v2503
          %v2505 = vpop.f32.mrf.mxu0
          %v2506 = vadd.f32 0.0, %v2505
          %2507 = vmatmul.bf16.gmra.mxu0 %v613
          %v2508 = vpop.f32.mrf.mxu0
          %v2509 = vadd.f32 0.0, %v2508
          %v2510 = vpop.f32.mrf.mxu0
          %v2511 = vadd.f32 0.0, %v2510
          %2512 = vmatmul.bf16.gmra.mxu0 %v616
          %v2513 = vpop.f32.mrf.mxu0
          %v2514 = vadd.f32 0.0, %v2513
          %v2515 = vpop.f32.mrf.mxu0
          %v2516 = vadd.f32 0.0, %v2515
          %2517 = vmatmul.bf16.gmra.mxu0 %v619
          %v2518 = vpop.f32.mrf.mxu0
          %v2519 = vadd.f32 0.0, %v2518
          %v2520 = vpop.f32.mrf.mxu0
          %v2521 = vadd.f32 0.0, %v2520
          %2522 = vmatmul.bf16.gmra.mxu0 %v622
          %v2523 = vpop.f32.mrf.mxu0
          %v2524 = vadd.f32 0.0, %v2523
          %v2525 = vpop.f32.mrf.mxu0
          %v2526 = vadd.f32 0.0, %v2525
          %2527 = vmatmul.bf16.gmra.mxu0 %v625
          %v2528 = vpop.f32.mrf.mxu0
          %v2529 = vadd.f32 0.0, %v2528
          %v2530 = vpop.f32.mrf.mxu0
          %v2531 = vadd.f32 0.0, %v2530
          %2532 = vmatmul.bf16.gmra.mxu0 %v628
          %v2533 = vpop.f32.mrf.mxu0
          %v2534 = vadd.f32 0.0, %v2533
          %v2535 = vpop.f32.mrf.mxu0
          %v2536 = vadd.f32 0.0, %v2535
          %2537 = vmatmul.bf16.gmra.mxu0 %v631
          %v2538 = vpop.f32.mrf.mxu0
          %v2539 = vadd.f32 0.0, %v2538
          %v2540 = vpop.f32.mrf.mxu0
          %v2541 = vadd.f32 0.0, %v2540
          %2542 = vmatmul.bf16.gmra.mxu0 %v634
          %v2543 = vpop.f32.mrf.mxu0
          %v2544 = vadd.f32 0.0, %v2543
          %v2545 = vpop.f32.mrf.mxu0
          %v2546 = vadd.f32 0.0, %v2545
          %2547 = vmatmul.bf16.gmra.mxu0 %v637
          %v2548 = vpop.f32.mrf.mxu0
          %v2549 = vadd.f32 0.0, %v2548
          %v2550 = vpop.f32.mrf.mxu0
          %v2551 = vadd.f32 0.0, %v2550
          %2552 = vmatmul.bf16.gmra.mxu0 %v640
          %v2553 = vpop.f32.mrf.mxu0
          %v2554 = vadd.f32 0.0, %v2553
          %v2555 = vpop.f32.mrf.mxu0
          %v2556 = vadd.f32 0.0, %v2555
          %2557 = vmatmul.bf16.gmra.mxu0 %v643
          %v2558 = vpop.f32.mrf.mxu0
          %v2559 = vadd.f32 0.0, %v2558
          %v2560 = vpop.f32.mrf.mxu0
          %v2561 = vadd.f32 0.0, %v2560
          %2562 = vmatmul.bf16.gmra.mxu0 %v646
          %v2563 = vpop.f32.mrf.mxu0
          %v2564 = vadd.f32 0.0, %v2563
          %v2565 = vpop.f32.mrf.mxu0
          %v2566 = vadd.f32 0.0, %v2565
          %2567 = vmatmul.bf16.gmra.mxu0 %v649
          %v2568 = vpop.f32.mrf.mxu0
          %v2569 = vadd.f32 0.0, %v2568
          %v2570 = vpop.f32.mrf.mxu0
          %v2571 = vadd.f32 0.0, %v2570
          %2572 = vmatmul.bf16.gmra.mxu0 %v652
          %v2573 = vpop.f32.mrf.mxu0
          %v2574 = vadd.f32 0.0, %v2573
          %v2575 = vpop.f32.mrf.mxu0
          %v2576 = vadd.f32 0.0, %v2575
          %2577 = vmatmul.bf16.gmra.mxu0 %v655
          %v2578 = vpop.f32.mrf.mxu0
          %v2579 = vadd.f32 0.0, %v2578
          %v2580 = vpop.f32.mrf.mxu0
          %v2581 = vadd.f32 0.0, %v2580
          %2582 = vdwg.mxu0
          %2583 = vmatpush.bf16.msra.mxu0 %v1232
          %2584 = vmatpush.bf16.msra.mxu0 %v1226
          %2585 = vmatpush.bf16.msra.mxu0 %v1220
          %2586 = vmatpush.bf16.msra.mxu0 %v1214
          %2587 = vmatpush.bf16.msra.mxu0 %v1208
          %2588 = vmatpush.bf16.msra.mxu0 %v1202
          %2589 = vmatpush.bf16.msra.mxu0 %v1196
          %2590 = vmatpush.bf16.msra.mxu0 %v1190
          %2591 = vmatmul.bf16.gmra.mxu0 %v611
          %v2592 = vpop.f32.mrf.mxu0
          %v2593 = vadd.f32 %v2504, %v2592
          %v2594 = vpop.f32.mrf.mxu0
          %v2595 = vadd.f32 %v2506, %v2594
          %2596 = vmatmul.bf16.gmra.mxu0 %v614
          %v2597 = vpop.f32.mrf.mxu0
          %v2598 = vadd.f32 %v2509, %v2597
          %v2599 = vpop.f32.mrf.mxu0
          %v2600 = vadd.f32 %v2511, %v2599
          %2601 = vmatmul.bf16.gmra.mxu0 %v617
          %v2602 = vpop.f32.mrf.mxu0
          %v2603 = vadd.f32 %v2514, %v2602
          %v2604 = vpop.f32.mrf.mxu0
          %v2605 = vadd.f32 %v2516, %v2604
          %2606 = vmatmul.bf16.gmra.mxu0 %v620
          %v2607 = vpop.f32.mrf.mxu0
          %v2608 = vadd.f32 %v2519, %v2607
          %v2609 = vpop.f32.mrf.mxu0
          %v2610 = vadd.f32 %v2521, %v2609
          %2611 = vmatmul.bf16.gmra.mxu0 %v623
          %v2612 = vpop.f32.mrf.mxu0
          %v2613 = vadd.f32 %v2524, %v2612
          %v2614 = vpop.f32.mrf.mxu0
          %v2615 = vadd.f32 %v2526, %v2614
          %2616 = vmatmul.bf16.gmra.mxu0 %v626
          %v2617 = vpop.f32.mrf.mxu0
          %v2618 = vadd.f32 %v2529, %v2617
          %v2619 = vpop.f32.mrf.mxu0
          %v2620 = vadd.f32 %v2531, %v2619
          %2621 = vmatmul.bf16.gmra.mxu0 %v629
          %v2622 = vpop.f32.mrf.mxu0
          %v2623 = vadd.f32 %v2534, %v2622
          %v2624 = vpop.f32.mrf.mxu0
          %v2625 = vadd.f32 %v2536, %v2624
          %2626 = vmatmul.bf16.gmra.mxu0 %v632
          %v2627 = vpop.f32.mrf.mxu0
          %v2628 = vadd.f32 %v2539, %v2627
          %v2629 = vpop.f32.mrf.mxu0
          %v2630 = vadd.f32 %v2541, %v2629
          %2631 = vmatmul.bf16.gmra.mxu0 %v635
          %v2632 = vpop.f32.mrf.mxu0
          %v2633 = vadd.f32 %v2544, %v2632
          %v2634 = vpop.f32.mrf.mxu0
          %v2635 = vadd.f32 %v2546, %v2634
          %2636 = vmatmul.bf16.gmra.mxu0 %v638
          %v2637 = vpop.f32.mrf.mxu0
          %v2638 = vadd.f32 %v2549, %v2637
          %v2639 = vpop.f32.mrf.mxu0
          %v2640 = vadd.f32 %v2551, %v2639
          %2641 = vmatmul.bf16.gmra.mxu0 %v641
          %v2642 = vpop.f32.mrf.mxu0
          %v2643 = vadd.f32 %v2554, %v2642
          %v2644 = vpop.f32.mrf.mxu0
          %v2645 = vadd.f32 %v2556, %v2644
          %2646 = vmatmul.bf16.gmra.mxu0 %v644
          %v2647 = vpop.f32.mrf.mxu0
          %v2648 = vadd.f32 %v2559, %v2647
          %v2649 = vpop.f32.mrf.mxu0
          %v2650 = vadd.f32 %v2561, %v2649
          %2651 = vmatmul.bf16.gmra.mxu0 %v647
          %v2652 = vpop.f32.mrf.mxu0
          %v2653 = vadd.f32 %v2564, %v2652
          %v2654 = vpop.f32.mrf.mxu0
          %v2655 = vadd.f32 %v2566, %v2654
          %2656 = vmatmul.bf16.gmra.mxu0 %v650
          %v2657 = vpop.f32.mrf.mxu0
          %v2658 = vadd.f32 %v2569, %v2657
          %v2659 = vpop.f32.mrf.mxu0
          %v2660 = vadd.f32 %v2571, %v2659
          %2661 = vmatmul.bf16.gmra.mxu0 %v653
          %v2662 = vpop.f32.mrf.mxu0
          %v2663 = vadd.f32 %v2574, %v2662
          %v2664 = vpop.f32.mrf.mxu0
          %v2665 = vadd.f32 %v2576, %v2664
          %2666 = vmatmul.bf16.gmra.mxu0 %v656
          %v2667 = vpop.f32.mrf.mxu0
          %v2668 = vadd.f32 %v2579, %v2667
          %v2669 = vpop.f32.mrf.mxu0
          %v2670 = vadd.f32 %v2581, %v2669
          %2671 = vdwg.mxu0
          %2672 = vmatpush.bf16.msra.mxu0 %v1280
          %2673 = vmatpush.bf16.msra.mxu0 %v1274
          %2674 = vmatpush.bf16.msra.mxu0 %v1268
          %2675 = vmatpush.bf16.msra.mxu0 %v1262
          %2676 = vmatpush.bf16.msra.mxu0 %v1256
          %2677 = vmatpush.bf16.msra.mxu0 %v1250
          %2678 = vmatpush.bf16.msra.mxu0 %v1244
          %2679 = vmatpush.bf16.msra.mxu0 %v1238
          %2680 = vmatmul.bf16.gmra.mxu0 %v612
          %v2681 = vpop.f32.mrf.mxu0
          %v2682 = vadd.f32 %v2593, %v2681
          %v2683 = vpop.f32.mrf.mxu0
          %v2684 = vadd.f32 %v2595, %v2683
          %2685 = vmatmul.bf16.gmra.mxu0 %v615
          %v2686 = vpop.f32.mrf.mxu0
          %v2687 = vadd.f32 %v2598, %v2686
          %v2688 = vpop.f32.mrf.mxu0
          %v2689 = vadd.f32 %v2600, %v2688
          %2690 = vmatmul.bf16.gmra.mxu0 %v618
          %v2691 = vpop.f32.mrf.mxu0
          %v2692 = vadd.f32 %v2603, %v2691
          %v2693 = vpop.f32.mrf.mxu0
          %v2694 = vadd.f32 %v2605, %v2693
          %2695 = vmatmul.bf16.gmra.mxu0 %v621
          %v2696 = vpop.f32.mrf.mxu0
          %v2697 = vadd.f32 %v2608, %v2696
          %v2698 = vpop.f32.mrf.mxu0
          %v2699 = vadd.f32 %v2610, %v2698
          %2700 = vmatmul.bf16.gmra.mxu0 %v624
          %v2701 = vpop.f32.mrf.mxu0
          %v2702 = vadd.f32 %v2613, %v2701
          %v2703 = vpop.f32.mrf.mxu0
          %v2704 = vadd.f32 %v2615, %v2703
          %2705 = vmatmul.bf16.gmra.mxu0 %v627
          %v2706 = vpop.f32.mrf.mxu0
          %v2707 = vadd.f32 %v2618, %v2706
          %v2708 = vpop.f32.mrf.mxu0
          %v2709 = vadd.f32 %v2620, %v2708
          %2710 = vmatmul.bf16.gmra.mxu0 %v630
          %v2711 = vpop.f32.mrf.mxu0
          %v2712 = vadd.f32 %v2623, %v2711
          %v2713 = vpop.f32.mrf.mxu0
          %v2714 = vadd.f32 %v2625, %v2713
          %2715 = vmatmul.bf16.gmra.mxu0 %v633
          %v2716 = vpop.f32.mrf.mxu0
          %v2717 = vadd.f32 %v2628, %v2716
          %v2718 = vpop.f32.mrf.mxu0
          %v2719 = vadd.f32 %v2630, %v2718
          %2720 = vmatmul.bf16.gmra.mxu0 %v636
          %v2721 = vpop.f32.mrf.mxu0
          %v2722 = vadd.f32 %v2633, %v2721
          %v2723 = vpop.f32.mrf.mxu0
          %v2724 = vadd.f32 %v2635, %v2723
          %2725 = vmatmul.bf16.gmra.mxu0 %v639
          %v2726 = vpop.f32.mrf.mxu0
          %v2727 = vadd.f32 %v2638, %v2726
          %v2728 = vpop.f32.mrf.mxu0
          %v2729 = vadd.f32 %v2640, %v2728
          %2730 = vmatmul.bf16.gmra.mxu0 %v642
          %v2731 = vpop.f32.mrf.mxu0
          %v2732 = vadd.f32 %v2643, %v2731
          %v2733 = vpop.f32.mrf.mxu0
          %v2734 = vadd.f32 %v2645, %v2733
          %2735 = vmatmul.bf16.gmra.mxu0 %v645
          %v2736 = vpop.f32.mrf.mxu0
          %v2737 = vadd.f32 %v2648, %v2736
          %v2738 = vpop.f32.mrf.mxu0
          %v2739 = vadd.f32 %v2650, %v2738
          %2740 = vmatmul.bf16.gmra.mxu0 %v648
          %v2741 = vpop.f32.mrf.mxu0
          %v2742 = vadd.f32 %v2653, %v2741
          %v2743 = vpop.f32.mrf.mxu0
          %v2744 = vadd.f32 %v2655, %v2743
          %2745 = vmatmul.bf16.gmra.mxu0 %v651
          %v2746 = vpop.f32.mrf.mxu0
          %v2747 = vadd.f32 %v2658, %v2746
          %v2748 = vpop.f32.mrf.mxu0
          %v2749 = vadd.f32 %v2660, %v2748
          %2750 = vmatmul.bf16.gmra.mxu0 %v654
          %v2751 = vpop.f32.mrf.mxu0
          %v2752 = vadd.f32 %v2663, %v2751
          %v2753 = vpop.f32.mrf.mxu0
          %v2754 = vadd.f32 %v2665, %v2753
          %2755 = vmatmul.bf16.gmra.mxu0 %v657
          %v2756 = vpop.f32.mrf.mxu0
          %v2757 = vadd.f32 %v2668, %v2756
          %v2758 = vpop.f32.mrf.mxu0
          %v2759 = vadd.f32 %v2670, %v2758
          %2760 = vdwg.mxu0
          %2761 = vmatpush.bf16.msra.mxu0 %v1185
          %2762 = vmatpush.bf16.msra.mxu0 %v1179
          %2763 = vmatpush.bf16.msra.mxu0 %v1173
          %2764 = vmatpush.bf16.msra.mxu0 %v1167
          %2765 = vmatpush.bf16.msra.mxu0 %v1161
          %2766 = vmatpush.bf16.msra.mxu0 %v1155
          %2767 = vmatpush.bf16.msra.mxu0 %v1149
          %2768 = vmatpush.bf16.msra.mxu0 %v1143
          %2769 = vmatmul.bf16.gmra.mxu0 %v610
          %v2770 = vpop.f32.mrf.mxu0
          %v2771 = vadd.f32 0.0, %v2770
          %v2772 = vpop.f32.mrf.mxu0
          %v2773 = vadd.f32 0.0, %v2772
          %2774 = vmatmul.bf16.gmra.mxu0 %v613
          %v2775 = vpop.f32.mrf.mxu0
          %v2776 = vadd.f32 0.0, %v2775
          %v2777 = vpop.f32.mrf.mxu0
          %v2778 = vadd.f32 0.0, %v2777
          %2779 = vmatmul.bf16.gmra.mxu0 %v616
          %v2780 = vpop.f32.mrf.mxu0
          %v2781 = vadd.f32 0.0, %v2780
          %v2782 = vpop.f32.mrf.mxu0
          %v2783 = vadd.f32 0.0, %v2782
          %2784 = vmatmul.bf16.gmra.mxu0 %v619
          %v2785 = vpop.f32.mrf.mxu0
          %v2786 = vadd.f32 0.0, %v2785
          %v2787 = vpop.f32.mrf.mxu0
          %v2788 = vadd.f32 0.0, %v2787
          %2789 = vmatmul.bf16.gmra.mxu0 %v622
          %v2790 = vpop.f32.mrf.mxu0
          %v2791 = vadd.f32 0.0, %v2790
          %v2792 = vpop.f32.mrf.mxu0
          %v2793 = vadd.f32 0.0, %v2792
          %2794 = vmatmul.bf16.gmra.mxu0 %v625
          %v2795 = vpop.f32.mrf.mxu0
          %v2796 = vadd.f32 0.0, %v2795
          %v2797 = vpop.f32.mrf.mxu0
          %v2798 = vadd.f32 0.0, %v2797
          %2799 = vmatmul.bf16.gmra.mxu0 %v628
          %v2800 = vpop.f32.mrf.mxu0
          %v2801 = vadd.f32 0.0, %v2800
          %v2802 = vpop.f32.mrf.mxu0
          %v2803 = vadd.f32 0.0, %v2802
          %2804 = vmatmul.bf16.gmra.mxu0 %v631
          %v2805 = vpop.f32.mrf.mxu0
          %v2806 = vadd.f32 0.0, %v2805
          %v2807 = vpop.f32.mrf.mxu0
          %v2808 = vadd.f32 0.0, %v2807
          %2809 = vmatmul.bf16.gmra.mxu0 %v634
          %v2810 = vpop.f32.mrf.mxu0
          %v2811 = vadd.f32 0.0, %v2810
          %v2812 = vpop.f32.mrf.mxu0
          %v2813 = vadd.f32 0.0, %v2812
          %2814 = vmatmul.bf16.gmra.mxu0 %v637
          %v2815 = vpop.f32.mrf.mxu0
          %v2816 = vadd.f32 0.0, %v2815
          %v2817 = vpop.f32.mrf.mxu0
          %v2818 = vadd.f32 0.0, %v2817
          %2819 = vmatmul.bf16.gmra.mxu0 %v640
          %v2820 = vpop.f32.mrf.mxu0
          %v2821 = vadd.f32 0.0, %v2820
          %v2822 = vpop.f32.mrf.mxu0
          %v2823 = vadd.f32 0.0, %v2822
          %2824 = vmatmul.bf16.gmra.mxu0 %v643
          %v2825 = vpop.f32.mrf.mxu0
          %v2826 = vadd.f32 0.0, %v2825
          %v2827 = vpop.f32.mrf.mxu0
          %v2828 = vadd.f32 0.0, %v2827
          %2829 = vmatmul.bf16.gmra.mxu0 %v646
          %v2830 = vpop.f32.mrf.mxu0
          %v2831 = vadd.f32 0.0, %v2830
          %v2832 = vpop.f32.mrf.mxu0
          %v2833 = vadd.f32 0.0, %v2832
          %2834 = vmatmul.bf16.gmra.mxu0 %v649
          %v2835 = vpop.f32.mrf.mxu0
          %v2836 = vadd.f32 0.0, %v2835
          %v2837 = vpop.f32.mrf.mxu0
          %v2838 = vadd.f32 0.0, %v2837
          %2839 = vmatmul.bf16.gmra.mxu0 %v652
          %v2840 = vpop.f32.mrf.mxu0
          %v2841 = vadd.f32 0.0, %v2840
          %v2842 = vpop.f32.mrf.mxu0
          %v2843 = vadd.f32 0.0, %v2842
          %2844 = vmatmul.bf16.gmra.mxu0 %v655
          %v2845 = vpop.f32.mrf.mxu0
          %v2846 = vadd.f32 0.0, %v2845
          %v2847 = vpop.f32.mrf.mxu0
          %v2848 = vadd.f32 0.0, %v2847
          %2849 = vdwg.mxu0
          %2850 = vmatpush.bf16.msra.mxu0 %v1233
          %2851 = vmatpush.bf16.msra.mxu0 %v1227
          %2852 = vmatpush.bf16.msra.mxu0 %v1221
          %2853 = vmatpush.bf16.msra.mxu0 %v1215
          %2854 = vmatpush.bf16.msra.mxu0 %v1209
          %2855 = vmatpush.bf16.msra.mxu0 %v1203
          %2856 = vmatpush.bf16.msra.mxu0 %v1197
          %2857 = vmatpush.bf16.msra.mxu0 %v1191
          %2858 = vmatmul.bf16.gmra.mxu0 %v611
          %v2859 = vpop.f32.mrf.mxu0
          %v2860 = vadd.f32 %v2771, %v2859
          %v2861 = vpop.f32.mrf.mxu0
          %v2862 = vadd.f32 %v2773, %v2861
          %2863 = vmatmul.bf16.gmra.mxu0 %v614
          %v2864 = vpop.f32.mrf.mxu0
          %v2865 = vadd.f32 %v2776, %v2864
          %v2866 = vpop.f32.mrf.mxu0
          %v2867 = vadd.f32 %v2778, %v2866
          %2868 = vmatmul.bf16.gmra.mxu0 %v617
          %v2869 = vpop.f32.mrf.mxu0
          %v2870 = vadd.f32 %v2781, %v2869
          %v2871 = vpop.f32.mrf.mxu0
          %v2872 = vadd.f32 %v2783, %v2871
          %2873 = vmatmul.bf16.gmra.mxu0 %v620
          %v2874 = vpop.f32.mrf.mxu0
          %v2875 = vadd.f32 %v2786, %v2874
          %v2876 = vpop.f32.mrf.mxu0
          %v2877 = vadd.f32 %v2788, %v2876
          %2878 = vmatmul.bf16.gmra.mxu0 %v623
          %v2879 = vpop.f32.mrf.mxu0
          %v2880 = vadd.f32 %v2791, %v2879
          %v2881 = vpop.f32.mrf.mxu0
          %v2882 = vadd.f32 %v2793, %v2881
          %2883 = vmatmul.bf16.gmra.mxu0 %v626
          %v2884 = vpop.f32.mrf.mxu0
          %v2885 = vadd.f32 %v2796, %v2884
          %v2886 = vpop.f32.mrf.mxu0
          %v2887 = vadd.f32 %v2798, %v2886
          %2888 = vmatmul.bf16.gmra.mxu0 %v629
          %v2889 = vpop.f32.mrf.mxu0
          %v2890 = vadd.f32 %v2801, %v2889
          %v2891 = vpop.f32.mrf.mxu0
          %v2892 = vadd.f32 %v2803, %v2891
          %2893 = vmatmul.bf16.gmra.mxu0 %v632
          %v2894 = vpop.f32.mrf.mxu0
          %v2895 = vadd.f32 %v2806, %v2894
          %v2896 = vpop.f32.mrf.mxu0
          %v2897 = vadd.f32 %v2808, %v2896
          %2898 = vmatmul.bf16.gmra.mxu0 %v635
          %v2899 = vpop.f32.mrf.mxu0
          %v2900 = vadd.f32 %v2811, %v2899
          %v2901 = vpop.f32.mrf.mxu0
          %v2902 = vadd.f32 %v2813, %v2901
          %2903 = vmatmul.bf16.gmra.mxu0 %v638
          %v2904 = vpop.f32.mrf.mxu0
          %v2905 = vadd.f32 %v2816, %v2904
          %v2906 = vpop.f32.mrf.mxu0
          %v2907 = vadd.f32 %v2818, %v2906
          %2908 = vmatmul.bf16.gmra.mxu0 %v641
          %v2909 = vpop.f32.mrf.mxu0
          %v2910 = vadd.f32 %v2821, %v2909
          %v2911 = vpop.f32.mrf.mxu0
          %v2912 = vadd.f32 %v2823, %v2911
          %2913 = vmatmul.bf16.gmra.mxu0 %v644
          %v2914 = vpop.f32.mrf.mxu0
          %v2915 = vadd.f32 %v2826, %v2914
          %v2916 = vpop.f32.mrf.mxu0
          %v2917 = vadd.f32 %v2828, %v2916
          %2918 = vmatmul.bf16.gmra.mxu0 %v647
          %v2919 = vpop.f32.mrf.mxu0
          %v2920 = vadd.f32 %v2831, %v2919
          %v2921 = vpop.f32.mrf.mxu0
          %v2922 = vadd.f32 %v2833, %v2921
          %2923 = vmatmul.bf16.gmra.mxu0 %v650
          %v2924 = vpop.f32.mrf.mxu0
          %v2925 = vadd.f32 %v2836, %v2924
          %v2926 = vpop.f32.mrf.mxu0
          %v2927 = vadd.f32 %v2838, %v2926
          %2928 = vmatmul.bf16.gmra.mxu0 %v653
          %v2929 = vpop.f32.mrf.mxu0
          %v2930 = vadd.f32 %v2841, %v2929
          %v2931 = vpop.f32.mrf.mxu0
          %v2932 = vadd.f32 %v2843, %v2931
          %2933 = vmatmul.bf16.gmra.mxu0 %v656
          %v2934 = vpop.f32.mrf.mxu0
          %v2935 = vadd.f32 %v2846, %v2934
          %v2936 = vpop.f32.mrf.mxu0
          %v2937 = vadd.f32 %v2848, %v2936
          %2938 = vdwg.mxu0
          %2939 = vmatpush.bf16.msra.mxu0 %v1281
          %2940 = vmatpush.bf16.msra.mxu0 %v1275
          %2941 = vmatpush.bf16.msra.mxu0 %v1269
          %2942 = vmatpush.bf16.msra.mxu0 %v1263
          %2943 = vmatpush.bf16.msra.mxu0 %v1257
          %2944 = vmatpush.bf16.msra.mxu0 %v1251
          %2945 = vmatpush.bf16.msra.mxu0 %v1245
          %2946 = vmatpush.bf16.msra.mxu0 %v1239
          %2947 = vmatmul.bf16.gmra.mxu0 %v612
          %v2948 = vpop.f32.mrf.mxu0
          %v2949 = vadd.f32 %v2860, %v2948
          %v2950 = vpop.f32.mrf.mxu0
          %v2951 = vadd.f32 %v2862, %v2950
          %2952 = vmatmul.bf16.gmra.mxu0 %v615
          %v2953 = vpop.f32.mrf.mxu0
          %v2954 = vadd.f32 %v2865, %v2953
          %v2955 = vpop.f32.mrf.mxu0
          %v2956 = vadd.f32 %v2867, %v2955
          %2957 = vmatmul.bf16.gmra.mxu0 %v618
          %v2958 = vpop.f32.mrf.mxu0
          %v2959 = vadd.f32 %v2870, %v2958
          %v2960 = vpop.f32.mrf.mxu0
          %v2961 = vadd.f32 %v2872, %v2960
          %2962 = vmatmul.bf16.gmra.mxu0 %v621
          %v2963 = vpop.f32.mrf.mxu0
          %v2964 = vadd.f32 %v2875, %v2963
          %v2965 = vpop.f32.mrf.mxu0
          %v2966 = vadd.f32 %v2877, %v2965
          %2967 = vmatmul.bf16.gmra.mxu0 %v624
          %v2968 = vpop.f32.mrf.mxu0
          %v2969 = vadd.f32 %v2880, %v2968
          %v2970 = vpop.f32.mrf.mxu0
          %v2971 = vadd.f32 %v2882, %v2970
          %2972 = vmatmul.bf16.gmra.mxu0 %v627
          %v2973 = vpop.f32.mrf.mxu0
          %v2974 = vadd.f32 %v2885, %v2973
          %v2975 = vpop.f32.mrf.mxu0
          %v2976 = vadd.f32 %v2887, %v2975
          %2977 = vmatmul.bf16.gmra.mxu0 %v630
          %v2978 = vpop.f32.mrf.mxu0
          %v2979 = vadd.f32 %v2890, %v2978
          %v2980 = vpop.f32.mrf.mxu0
          %v2981 = vadd.f32 %v2892, %v2980
          %2982 = vmatmul.bf16.gmra.mxu0 %v633
          %v2983 = vpop.f32.mrf.mxu0
          %v2984 = vadd.f32 %v2895, %v2983
          %v2985 = vpop.f32.mrf.mxu0
          %v2986 = vadd.f32 %v2897, %v2985
          %2987 = vmatmul.bf16.gmra.mxu0 %v636
          %v2988 = vpop.f32.mrf.mxu0
          %v2989 = vadd.f32 %v2900, %v2988
          %v2990 = vpop.f32.mrf.mxu0
          %v2991 = vadd.f32 %v2902, %v2990
          %2992 = vmatmul.bf16.gmra.mxu0 %v639
          %v2993 = vpop.f32.mrf.mxu0
          %v2994 = vadd.f32 %v2905, %v2993
          %v2995 = vpop.f32.mrf.mxu0
          %v2996 = vadd.f32 %v2907, %v2995
          %2997 = vmatmul.bf16.gmra.mxu0 %v642
          %v2998 = vpop.f32.mrf.mxu0
          %v2999 = vadd.f32 %v2910, %v2998
          %v3000 = vpop.f32.mrf.mxu0
          %v3001 = vadd.f32 %v2912, %v3000
          %3002 = vmatmul.bf16.gmra.mxu0 %v645
          %v3003 = vpop.f32.mrf.mxu0
          %v3004 = vadd.f32 %v2915, %v3003
          %v3005 = vpop.f32.mrf.mxu0
          %v3006 = vadd.f32 %v2917, %v3005
          %3007 = vmatmul.bf16.gmra.mxu0 %v648
          %v3008 = vpop.f32.mrf.mxu0
          %v3009 = vadd.f32 %v2920, %v3008
          %v3010 = vpop.f32.mrf.mxu0
          %v3011 = vadd.f32 %v2922, %v3010
          %3012 = vmatmul.bf16.gmra.mxu0 %v651
          %v3013 = vpop.f32.mrf.mxu0
          %v3014 = vadd.f32 %v2925, %v3013
          %v3015 = vpop.f32.mrf.mxu0
          %v3016 = vadd.f32 %v2927, %v3015
          %3017 = vmatmul.bf16.gmra.mxu0 %v654
          %v3018 = vpop.f32.mrf.mxu0
          %v3019 = vadd.f32 %v2930, %v3018
          %v3020 = vpop.f32.mrf.mxu0
          %v3021 = vadd.f32 %v2932, %v3020
          %3022 = vmatmul.bf16.gmra.mxu0 %v657
          %v3023 = vpop.f32.mrf.mxu0
          %v3024 = vadd.f32 %v2935, %v3023
          %v3025 = vpop.f32.mrf.mxu0
          %v3026 = vadd.f32 %v2937, %v3025
          %3027 = vdwg.mxu0
          %v3028 = vpack.c.bf16 %v1881, %v1614
          %v3029 = vpack.c.bf16 %v2415, %v2148
          %v3030 = vpack.c.bf16 %v2949, %v2682
          %v3031 = vpack.c.bf16 %v1883, %v1616
          %v3032 = vpack.c.bf16 %v2417, %v2150
          %v3033 = vpack.c.bf16 %v2951, %v2684
          %v3034 = vpack.c.bf16 %v1886, %v1619
          %v3035 = vpack.c.bf16 %v2420, %v2153
          %v3036 = vpack.c.bf16 %v2954, %v2687
          %v3037 = vpack.c.bf16 %v1888, %v1621
          %v3038 = vpack.c.bf16 %v2422, %v2155
          %v3039 = vpack.c.bf16 %v2956, %v2689
          %v3040 = vpack.c.bf16 %v1891, %v1624
          %v3041 = vpack.c.bf16 %v2425, %v2158
          %v3042 = vpack.c.bf16 %v2959, %v2692
          %v3043 = vpack.c.bf16 %v1893, %v1626
          %v3044 = vpack.c.bf16 %v2427, %v2160
          %v3045 = vpack.c.bf16 %v2961, %v2694
          %v3046 = vpack.c.bf16 %v1896, %v1629
          %v3047 = vpack.c.bf16 %v2430, %v2163
          %v3048 = vpack.c.bf16 %v2964, %v2697
          %v3049 = vpack.c.bf16 %v1898, %v1631
          %v3050 = vpack.c.bf16 %v2432, %v2165
          %v3051 = vpack.c.bf16 %v2966, %v2699
          %v3052 = vpack.c.bf16 %v1901, %v1634
          %v3053 = vpack.c.bf16 %v2435, %v2168
          %v3054 = vpack.c.bf16 %v2969, %v2702
          %v3055 = vpack.c.bf16 %v1903, %v1636
          %v3056 = vpack.c.bf16 %v2437, %v2170
          %v3057 = vpack.c.bf16 %v2971, %v2704
          %v3058 = vpack.c.bf16 %v1906, %v1639
          %v3059 = vpack.c.bf16 %v2440, %v2173
          %v3060 = vpack.c.bf16 %v2974, %v2707
          %v3061 = vpack.c.bf16 %v1908, %v1641
          %v3062 = vpack.c.bf16 %v2442, %v2175
          %v3063 = vpack.c.bf16 %v2976, %v2709
          %v3064 = vpack.c.bf16 %v1911, %v1644
          %v3065 = vpack.c.bf16 %v2445, %v2178
          %v3066 = vpack.c.bf16 %v2979, %v2712
          %v3067 = vpack.c.bf16 %v1913, %v1646
          %v3068 = vpack.c.bf16 %v2447, %v2180
          %v3069 = vpack.c.bf16 %v2981, %v2714
          %v3070 = vpack.c.bf16 %v1916, %v1649
          %v3071 = vpack.c.bf16 %v2450, %v2183
          %v3072 = vpack.c.bf16 %v2984, %v2717
          %v3073 = vpack.c.bf16 %v1918, %v1651
          %v3074 = vpack.c.bf16 %v2452, %v2185
          %v3075 = vpack.c.bf16 %v2986, %v2719
          %v3076 = vpack.c.bf16 %v1921, %v1654
          %v3077 = vpack.c.bf16 %v2455, %v2188
          %v3078 = vpack.c.bf16 %v2989, %v2722
          %v3079 = vpack.c.bf16 %v1923, %v1656
          %v3080 = vpack.c.bf16 %v2457, %v2190
          %v3081 = vpack.c.bf16 %v2991, %v2724
          %v3082 = vpack.c.bf16 %v1926, %v1659
          %v3083 = vpack.c.bf16 %v2460, %v2193
          %v3084 = vpack.c.bf16 %v2994, %v2727
          %v3085 = vpack.c.bf16 %v1928, %v1661
          %v3086 = vpack.c.bf16 %v2462, %v2195
          %v3087 = vpack.c.bf16 %v2996, %v2729
          %v3088 = vpack.c.bf16 %v1931, %v1664
          %v3089 = vpack.c.bf16 %v2465, %v2198
          %v3090 = vpack.c.bf16 %v2999, %v2732
          %v3091 = vpack.c.bf16 %v1933, %v1666
          %v3092 = vpack.c.bf16 %v2467, %v2200
          %v3093 = vpack.c.bf16 %v3001, %v2734
          %v3094 = vpack.c.bf16 %v1936, %v1669
          %v3095 = vpack.c.bf16 %v2470, %v2203
          %v3096 = vpack.c.bf16 %v3004, %v2737
          %v3097 = vpack.c.bf16 %v1938, %v1671
          %v3098 = vpack.c.bf16 %v2472, %v2205
          %v3099 = vpack.c.bf16 %v3006, %v2739
          %v3100 = vpack.c.bf16 %v1941, %v1674
          %v3101 = vpack.c.bf16 %v2475, %v2208
          %v3102 = vpack.c.bf16 %v3009, %v2742
          %v3103 = vpack.c.bf16 %v1943, %v1676
          %v3104 = vpack.c.bf16 %v2477, %v2210
          %v3105 = vpack.c.bf16 %v3011, %v2744
          %v3106 = vpack.c.bf16 %v1946, %v1679
          %v3107 = vpack.c.bf16 %v2480, %v2213
          %v3108 = vpack.c.bf16 %v3014, %v2747
          %v3109 = vpack.c.bf16 %v1948, %v1681
          %v3110 = vpack.c.bf16 %v2482, %v2215
          %v3111 = vpack.c.bf16 %v3016, %v2749
          %v3112 = vpack.c.bf16 %v1951, %v1684
          %v3113 = vpack.c.bf16 %v2485, %v2218
          %v3114 = vpack.c.bf16 %v3019, %v2752
          %v3115 = vpack.c.bf16 %v1953, %v1686
          %v3116 = vpack.c.bf16 %v2487, %v2220
          %v3117 = vpack.c.bf16 %v3021, %v2754
          %v3118 = vpack.c.bf16 %v1956, %v1689
          %v3119 = vpack.c.bf16 %v2490, %v2223
          %v3120 = vpack.c.bf16 %v3024, %v2757
          %v3121 = vpack.c.bf16 %v1958, %v1691
          %v3122 = vpack.c.bf16 %v2492, %v2225
          %v3123 = vpack.c.bf16 %v3026, %v2759
          %3124 = vst [vmem:[#allocation3] sm:$0xff] %v3028
          %3125 = vst [vmem:[#allocation3 + $0x8] sm:$0xff] %v3029
          %3126 = vst [vmem:[#allocation3 + $0x10] sm:$0xff] %v3030
          %3127 = vst [vmem:[#allocation3 + $0x18] sm:$0xff] %v3031
          %3128 = vst [vmem:[#allocation3 + $0x20] sm:$0xff] %v3032
          %3129 = vst [vmem:[#allocation3 + $0x28] sm:$0xff] %v3033
          %3130 = vst [vmem:[#allocation3 + $0x30] sm:$0xff] %v3034
          %3131 = vst [vmem:[#allocation3 + $0x38] sm:$0xff] %v3035
          %3132 = vst [vmem:[#allocation3 + $0x40] sm:$0xff] %v3036
          %3133 = vst [vmem:[#allocation3 + $0x48] sm:$0xff] %v3037
          %3134 = vst [vmem:[#allocation3 + $0x50] sm:$0xff] %v3038
          %3135 = vst [vmem:[#allocation3 + $0x58] sm:$0xff] %v3039
          %3136 = vst [vmem:[#allocation3 + $0x60] sm:$0xff] %v3040
          %3137 = vst [vmem:[#allocation3 + $0x68] sm:$0xff] %v3041
          %3138 = vst [vmem:[#allocation3 + $0x70] sm:$0xff] %v3042
          %3139 = vst [vmem:[#allocation3 + $0x78] sm:$0xff] %v3043
          %3140 = vst [vmem:[#allocation3 + $0x80] sm:$0xff] %v3044
          %3141 = vst [vmem:[#allocation3 + $0x88] sm:$0xff] %v3045
          %3142 = vst [vmem:[#allocation3 + $0x90] sm:$0xff] %v3046
          %3143 = vst [vmem:[#allocation3 + $0x98] sm:$0xff] %v3047
          %3144 = vst [vmem:[#allocation3 + $0xa0] sm:$0xff] %v3048
          %3145 = vst [vmem:[#allocation3 + $0xa8] sm:$0xff] %v3049
          %3146 = vst [vmem:[#allocation3 + $0xb0] sm:$0xff] %v3050
          %3147 = vst [vmem:[#allocation3 + $0xb8] sm:$0xff] %v3051
          %3148 = vst [vmem:[#allocation3 + $0xc0] sm:$0xff] %v3052
          %3149 = vst [vmem:[#allocation3 + $0xc8] sm:$0xff] %v3053
          %3150 = vst [vmem:[#allocation3 + $0xd0] sm:$0xff] %v3054
          %3151 = vst [vmem:[#allocation3 + $0xd8] sm:$0xff] %v3055
          %3152 = vst [vmem:[#allocation3 + $0xe0] sm:$0xff] %v3056
          %3153 = vst [vmem:[#allocation3 + $0xe8] sm:$0xff] %v3057
          %3154 = vst [vmem:[#allocation3 + $0xf0] sm:$0xff] %v3058
          %3155 = vst [vmem:[#allocation3 + $0xf8] sm:$0xff] %v3059
          %3156 = vst [vmem:[#allocation3 + $0x100] sm:$0xff] %v3060
          %3157 = vst [vmem:[#allocation3 + $0x108] sm:$0xff] %v3061
          %3158 = vst [vmem:[#allocation3 + $0x110] sm:$0xff] %v3062
          %3159 = vst [vmem:[#allocation3 + $0x118] sm:$0xff] %v3063
          %3160 = vst [vmem:[#allocation3 + $0x120] sm:$0xff] %v3064
          %3161 = vst [vmem:[#allocation3 + $0x128] sm:$0xff] %v3065
          %3162 = vst [vmem:[#allocation3 + $0x130] sm:$0xff] %v3066
          %3163 = vst [vmem:[#allocation3 + $0x138] sm:$0xff] %v3067
          %3164 = vst [vmem:[#allocation3 + $0x140] sm:$0xff] %v3068
          %3165 = vst [vmem:[#allocation3 + $0x148] sm:$0xff] %v3069
          %3166 = vst [vmem:[#allocation3 + $0x150] sm:$0xff] %v3070
          %3167 = vst [vmem:[#allocation3 + $0x158] sm:$0xff] %v3071
          %3168 = vst [vmem:[#allocation3 + $0x160] sm:$0xff] %v3072
          %3169 = vst [vmem:[#allocation3 + $0x168] sm:$0xff] %v3073
          %3170 = vst [vmem:[#allocation3 + $0x170] sm:$0xff] %v3074
          %3171 = vst [vmem:[#allocation3 + $0x178] sm:$0xff] %v3075
          %3172 = vst [vmem:[#allocation3 + $0x180] sm:$0xff] %v3076
          %3173 = vst [vmem:[#allocation3 + $0x188] sm:$0xff] %v3077
          %3174 = vst [vmem:[#allocation3 + $0x190] sm:$0xff] %v3078
          %3175 = vst [vmem:[#allocation3 + $0x198] sm:$0xff] %v3079
          %3176 = vst [vmem:[#allocation3 + $0x1a0] sm:$0xff] %v3080
          %3177 = vst [vmem:[#allocation3 + $0x1a8] sm:$0xff] %v3081
          %3178 = vst [vmem:[#allocation3 + $0x1b0] sm:$0xff] %v3082
          %3179 = vst [vmem:[#allocation3 + $0x1b8] sm:$0xff] %v3083
          %3180 = vst [vmem:[#allocation3 + $0x1c0] sm:$0xff] %v3084
          %3181 = vst [vmem:[#allocation3 + $0x1c8] sm:$0xff] %v3085
          %3182 = vst [vmem:[#allocation3 + $0x1d0] sm:$0xff] %v3086
          %3183 = vst [vmem:[#allocation3 + $0x1d8] sm:$0xff] %v3087
          %3184 = vst [vmem:[#allocation3 + $0x1e0] sm:$0xff] %v3088
          %3185 = vst [vmem:[#allocation3 + $0x1e8] sm:$0xff] %v3089
          %3186 = vst [vmem:[#allocation3 + $0x1f0] sm:$0xff] %v3090
          %3187 = vst [vmem:[#allocation3 + $0x1f8] sm:$0xff] %v3091
          %3188 = vst [vmem:[#allocation3 + $0x200] sm:$0xff] %v3092
          %3189 = vst [vmem:[#allocation3 + $0x208] sm:$0xff] %v3093
          %3190 = vst [vmem:[#allocation3 + $0x210] sm:$0xff] %v3094
          %3191 = vst [vmem:[#allocation3 + $0x218] sm:$0xff] %v3095
          %3192 = vst [vmem:[#allocation3 + $0x220] sm:$0xff] %v3096
          %3193 = vst [vmem:[#allocation3 + $0x228] sm:$0xff] %v3097
          %3194 = vst [vmem:[#allocation3 + $0x230] sm:$0xff] %v3098
          %3195 = vst [vmem:[#allocation3 + $0x238] sm:$0xff] %v3099
          %3196 = vst [vmem:[#allocation3 + $0x240] sm:$0xff] %v3100
          %3197 = vst [vmem:[#allocation3 + $0x248] sm:$0xff] %v3101
          %3198 = vst [vmem:[#allocation3 + $0x250] sm:$0xff] %v3102
          %3199 = vst [vmem:[#allocation3 + $0x258] sm:$0xff] %v3103
          %3200 = vst [vmem:[#allocation3 + $0x260] sm:$0xff] %v3104
          %3201 = vst [vmem:[#allocation3 + $0x268] sm:$0xff] %v3105
          %3202 = vst [vmem:[#allocation3 + $0x270] sm:$0xff] %v3106
          %3203 = vst [vmem:[#allocation3 + $0x278] sm:$0xff] %v3107
          %3204 = vst [vmem:[#allocation3 + $0x280] sm:$0xff] %v3108
          %3205 = vst [vmem:[#allocation3 + $0x288] sm:$0xff] %v3109
          %3206 = vst [vmem:[#allocation3 + $0x290] sm:$0xff] %v3110
          %3207 = vst [vmem:[#allocation3 + $0x298] sm:$0xff] %v3111
          %3208 = vst [vmem:[#allocation3 + $0x2a0] sm:$0xff] %v3112
          %3209 = vst [vmem:[#allocation3 + $0x2a8] sm:$0xff] %v3113
          %3210 = vst [vmem:[#allocation3 + $0x2b0] sm:$0xff] %v3114
          %3211 = vst [vmem:[#allocation3 + $0x2b8] sm:$0xff] %v3115
          %3212 = vst [vmem:[#allocation3 + $0x2c0] sm:$0xff] %v3116
          %3213 = vst [vmem:[#allocation3 + $0x2c8] sm:$0xff] %v3117
          %3214 = vst [vmem:[#allocation3 + $0x2d0] sm:$0xff] %v3118
          %3215 = vst [vmem:[#allocation3 + $0x2d8] sm:$0xff] %v3119
          %3216 = vst [vmem:[#allocation3 + $0x2e0] sm:$0xff] %v3120
          %3217 = vst [vmem:[#allocation3 + $0x2e8] sm:$0xff] %v3121
          %3218 = vst [vmem:[#allocation3 + $0x2f0] sm:$0xff] %v3122
          %3219 = vst [vmem:[#allocation3 + $0x2f8] sm:$0xff] %v3123
        $region44: #{multi_head_attention.1} parent=39 // pred_fallthru
          _
        %s3220 = smul.u32 %s24, 128
        %s3221 = sshra.s32 %s3220, 3
        %s3222 = sand.u32 %s3220, 7
        %s3223 = smul.u32 %s3221, 3
        %s3224 = smul.addr %s3223, 4
        %s3225 = scalar_lea.vmem %s236, %s3224
        %v3226 = vld [vmem:[%s3225] sm:$0xff]
        %v3227 = vld [vmem:[%s3225 + $0x8] sm:$0xf]
        %v3228 = vld [vmem:[%s3225 + $0xc] sm:$0xff]
        %v3229 = vld [vmem:[%s3225 + $0x14] sm:$0xf]
        %v3230 = vld [vmem:[%s3225 + $0x18] sm:$0xff]
        %v3231 = vld [vmem:[%s3225 + $0x20] sm:$0xf]
        %v3232 = vld [vmem:[%s3225 + $0x24] sm:$0xff]
        %v3233 = vld [vmem:[%s3225 + $0x2c] sm:$0xf]
        %v3234 = vld [vmem:[%s3225 + $0x30] sm:$0xff]
        %v3235 = vld [vmem:[%s3225 + $0x38] sm:$0xf]
        %v3236 = vld [vmem:[%s3225 + $0x3c] sm:$0xff]
        %v3237 = vld [vmem:[%s3225 + $0x44] sm:$0xf]
        %v3238 = vld [vmem:[%s3225 + $0x48] sm:$0xff]
        %v3239 = vld [vmem:[%s3225 + $0x50] sm:$0xf]
        %v3240 = vld [vmem:[%s3225 + $0x54] sm:$0xff]
        %v3241 = vld [vmem:[%s3225 + $0x5c] sm:$0xf]
        %v3242 = vld [vmem:[%s3225 + $0x60] sm:$0xff]
        %v3243 = vld [vmem:[%s3225 + $0x68] sm:$0xf]
        %v3244 = vld [vmem:[%s3225 + $0x6c] sm:$0xff]
        %v3245 = vld [vmem:[%s3225 + $0x74] sm:$0xf]
        %v3246 = vld [vmem:[%s3225 + $0x78] sm:$0xff]
        %v3247 = vld [vmem:[%s3225 + $0x80] sm:$0xf]
        %v3248 = vld [vmem:[%s3225 + $0x84] sm:$0xff]
        %v3249 = vld [vmem:[%s3225 + $0x8c] sm:$0xf]
        %v3250 = vld [vmem:[%s3225 + $0x90] sm:$0xff]
        %v3251 = vld [vmem:[%s3225 + $0x98] sm:$0xf]
        %v3252 = vld [vmem:[%s3225 + $0x9c] sm:$0xff]
        %v3253 = vld [vmem:[%s3225 + $0xa4] sm:$0xf]
        %v3254 = vld [vmem:[%s3225 + $0xa8] sm:$0xff]
        %v3255 = vld [vmem:[%s3225 + $0xb0] sm:$0xf]
        %v3256 = vld [vmem:[%s3225 + $0xb4] sm:$0xff]
        %v3257 = vld [vmem:[%s3225 + $0xbc] sm:$0xf]
        %v3258 = vld [vmem:[%s1] sm:$0xff]
        %v3259 = vld [vmem:[%s1 + $0x8] sm:$0xf]
        %v3260 = vld [vmem:[%s1 + $0xc] sm:$0xff]
        %v3261 = vld [vmem:[%s1 + $0x14] sm:$0xf]
        %v3262 = vld [vmem:[%s1 + $0x18] sm:$0xff]
        %v3263 = vld [vmem:[%s1 + $0x20] sm:$0xf]
        %v3264 = vld [vmem:[%s1 + $0x24] sm:$0xff]
        %v3265 = vld [vmem:[%s1 + $0x2c] sm:$0xf]
        %v3266 = vld [vmem:[%s1 + $0x30] sm:$0xff]
        %v3267 = vld [vmem:[%s1 + $0x38] sm:$0xf]
        %v3268 = vld [vmem:[%s1 + $0x3c] sm:$0xff]
        %v3269 = vld [vmem:[%s1 + $0x44] sm:$0xf]
        %v3270 = vld [vmem:[%s1 + $0x48] sm:$0xff]
        %v3271 = vld [vmem:[%s1 + $0x50] sm:$0xf]
        %v3272 = vld [vmem:[%s1 + $0x54] sm:$0xff]
        %v3273 = vld [vmem:[%s1 + $0x5c] sm:$0xf]
        %v3274 = vld [vmem:[%s1 + $0x60] sm:$0xff]
        %v3275 = vld [vmem:[%s1 + $0x68] sm:$0xf]
        %v3276 = vld [vmem:[%s1 + $0x6c] sm:$0xff]
        %v3277 = vld [vmem:[%s1 + $0x74] sm:$0xf]
        %v3278 = vld [vmem:[%s1 + $0x78] sm:$0xff]
        %v3279 = vld [vmem:[%s1 + $0x80] sm:$0xf]
        %v3280 = vld [vmem:[%s1 + $0x84] sm:$0xff]
        %v3281 = vld [vmem:[%s1 + $0x8c] sm:$0xf]
        %v3282 = vld [vmem:[%s1 + $0x90] sm:$0xff]
        %v3283 = vld [vmem:[%s1 + $0x98] sm:$0xf]
        %v3284 = vld [vmem:[%s1 + $0x9c] sm:$0xff]
        %v3285 = vld [vmem:[%s1 + $0xa4] sm:$0xf]
        %v3286 = vld [vmem:[%s1 + $0xa8] sm:$0xff]
        %v3287 = vld [vmem:[%s1 + $0xb0] sm:$0xf]
        %v3288 = vld [vmem:[%s1 + $0xb4] sm:$0xff]
        %v3289 = vld [vmem:[%s1 + $0xbc] sm:$0xf]
        %v3290 = vld [vmem:[%s1 + $0xc0] sm:$0xff]
        %v3291 = vld [vmem:[%s1 + $0xc8] sm:$0xf]
        %v3292 = vld [vmem:[%s1 + $0xcc] sm:$0xff]
        %v3293 = vld [vmem:[%s1 + $0xd4] sm:$0xf]
        %v3294 = vld [vmem:[%s1 + $0xd8] sm:$0xff]
        %v3295 = vld [vmem:[%s1 + $0xe0] sm:$0xf]
        %v3296 = vld [vmem:[%s1 + $0xe4] sm:$0xff]
        %v3297 = vld [vmem:[%s1 + $0xec] sm:$0xf]
        %v3298 = vld [vmem:[%s1 + $0xf0] sm:$0xff]
        %v3299 = vld [vmem:[%s1 + $0xf8] sm:$0xf]
        %v3300 = vld [vmem:[%s1 + $0xfc] sm:$0xff]
        %v3301 = vld [vmem:[%s1 + $0x104] sm:$0xf]
        %v3302 = vld [vmem:[%s1 + $0x108] sm:$0xff]
        %v3303 = vld [vmem:[%s1 + $0x110] sm:$0xf]
        %v3304 = vld [vmem:[%s1 + $0x114] sm:$0xff]
        %v3305 = vld [vmem:[%s1 + $0x11c] sm:$0xf]
        %v3306 = vld [vmem:[%s1 + $0x120] sm:$0xff]
        %v3307 = vld [vmem:[%s1 + $0x128] sm:$0xf]
        %v3308 = vld [vmem:[%s1 + $0x12c] sm:$0xff]
        %v3309 = vld [vmem:[%s1 + $0x134] sm:$0xf]
        %v3310 = vld [vmem:[%s1 + $0x138] sm:$0xff]
        %v3311 = vld [vmem:[%s1 + $0x140] sm:$0xf]
        %v3312 = vld [vmem:[%s1 + $0x144] sm:$0xff]
        %v3313 = vld [vmem:[%s1 + $0x14c] sm:$0xf]
        %v3314 = vld [vmem:[%s1 + $0x150] sm:$0xff]
        %v3315 = vld [vmem:[%s1 + $0x158] sm:$0xf]
        %v3316 = vld [vmem:[%s1 + $0x15c] sm:$0xff]
        %v3317 = vld [vmem:[%s1 + $0x164] sm:$0xf]
        %v3318 = vld [vmem:[%s1 + $0x168] sm:$0xff]
        %v3319 = vld [vmem:[%s1 + $0x170] sm:$0xf]
        %v3320 = vld [vmem:[%s1 + $0x174] sm:$0xff]
        %v3321 = vld [vmem:[%s1 + $0x17c] sm:$0xf]
        %v3322 = vld [vmem:[%s1 + $0x180] sm:$0xff]
        %v3323 = vld [vmem:[%s1 + $0x188] sm:$0xf]
        %v3324 = vld [vmem:[%s1 + $0x18c] sm:$0xff]
        %v3325 = vld [vmem:[%s1 + $0x194] sm:$0xf]
        %v3326 = vld [vmem:[%s1 + $0x198] sm:$0xff]
        %v3327 = vld [vmem:[%s1 + $0x1a0] sm:$0xf]
        %v3328 = vld [vmem:[%s1 + $0x1a4] sm:$0xff]
        %v3329 = vld [vmem:[%s1 + $0x1ac] sm:$0xf]
        %v3330 = vld [vmem:[%s1 + $0x1b0] sm:$0xff]
        %v3331 = vld [vmem:[%s1 + $0x1b8] sm:$0xf]
        %v3332 = vld [vmem:[%s1 + $0x1bc] sm:$0xff]
        %v3333 = vld [vmem:[%s1 + $0x1c4] sm:$0xf]
        %v3334 = vld [vmem:[%s1 + $0x1c8] sm:$0xff]
        %v3335 = vld [vmem:[%s1 + $0x1d0] sm:$0xf]
        %v3336 = vld [vmem:[%s1 + $0x1d4] sm:$0xff]
        %v3337 = vld [vmem:[%s1 + $0x1dc] sm:$0xf]
        %v3338 = vld [vmem:[%s1 + $0x1e0] sm:$0xff]
        %v3339 = vld [vmem:[%s1 + $0x1e8] sm:$0xf]
        %v3340 = vld [vmem:[%s1 + $0x1ec] sm:$0xff]
        %v3341 = vld [vmem:[%s1 + $0x1f4] sm:$0xf]
        %v3342 = vld [vmem:[%s1 + $0x1f8] sm:$0xff]
        %v3343 = vld [vmem:[%s1 + $0x200] sm:$0xf]
        %v3344 = vld [vmem:[%s1 + $0x204] sm:$0xff]
        %v3345 = vld [vmem:[%s1 + $0x20c] sm:$0xf]
        %v3346 = vld [vmem:[%s1 + $0x210] sm:$0xff]
        %v3347 = vld [vmem:[%s1 + $0x218] sm:$0xf]
        %v3348 = vld [vmem:[%s1 + $0x21c] sm:$0xff]
        %v3349 = vld [vmem:[%s1 + $0x224] sm:$0xf]
        %v3350 = vld [vmem:[%s1 + $0x228] sm:$0xff]
        %v3351 = vld [vmem:[%s1 + $0x230] sm:$0xf]
        %v3352 = vld [vmem:[%s1 + $0x234] sm:$0xff]
        %v3353 = vld [vmem:[%s1 + $0x23c] sm:$0xf]
        %v3386 = vunpack.c.l.b16 %v3226
        %v3387 = vunpack.c.h.b16 %v3226
        %v3388 = vunpack.c.l.b16 %v3227
        %v3389 = vunpack.c.l.b16 %v3228
        %v3390 = vunpack.c.h.b16 %v3228
        %v3391 = vunpack.c.l.b16 %v3229
        %v3392 = vunpack.c.l.b16 %v3230
        %v3393 = vunpack.c.h.b16 %v3230
        %v3394 = vunpack.c.l.b16 %v3231
        %v3395 = vunpack.c.l.b16 %v3232
        %v3396 = vunpack.c.h.b16 %v3232
        %v3397 = vunpack.c.l.b16 %v3233
        %v3398 = vunpack.c.l.b16 %v3234
        %v3399 = vunpack.c.h.b16 %v3234
        %v3400 = vunpack.c.l.b16 %v3235
        %v3401 = vunpack.c.l.b16 %v3236
        %v3402 = vunpack.c.h.b16 %v3236
        %v3403 = vunpack.c.l.b16 %v3237
        %v3404 = vunpack.c.l.b16 %v3238
        %v3405 = vunpack.c.h.b16 %v3238
        %v3406 = vunpack.c.l.b16 %v3239
        %v3407 = vunpack.c.l.b16 %v3240
        %v3408 = vunpack.c.h.b16 %v3240
        %v3409 = vunpack.c.l.b16 %v3241
        %v3410 = vunpack.c.l.b16 %v3242
        %v3411 = vunpack.c.h.b16 %v3242
        %v3412 = vunpack.c.l.b16 %v3243
        %v3413 = vunpack.c.l.b16 %v3244
        %v3414 = vunpack.c.h.b16 %v3244
        %v3415 = vunpack.c.l.b16 %v3245
        %v3416 = vunpack.c.l.b16 %v3246
        %v3417 = vunpack.c.h.b16 %v3246
        %v3418 = vunpack.c.l.b16 %v3247
        %v3419 = vunpack.c.l.b16 %v3248
        %v3420 = vunpack.c.h.b16 %v3248
        %v3421 = vunpack.c.l.b16 %v3249
        %v3422 = vunpack.c.l.b16 %v3250
        %v3423 = vunpack.c.h.b16 %v3250
        %v3424 = vunpack.c.l.b16 %v3251
        %v3425 = vunpack.c.l.b16 %v3252
        %v3426 = vunpack.c.h.b16 %v3252
        %v3427 = vunpack.c.l.b16 %v3253
        %v3428 = vunpack.c.l.b16 %v3254
        %v3429 = vunpack.c.h.b16 %v3254
        %v3430 = vunpack.c.l.b16 %v3255
        %v3431 = vunpack.c.l.b16 %v3256
        %v3432 = vunpack.c.h.b16 %v3256
        %v3433 = vunpack.c.l.b16 %v3257
        %v3434 = vpack.c.b16 %v3389, %v3386
        %v3435 = vpack.c.b16 %v3390, %v3387
        %v3436 = vpack.c.b16 %v3391, %v3388
        %v3437 = vpack.c.b16 %v3395, %v3392
        %v3438 = vpack.c.b16 %v3396, %v3393
        %v3439 = vpack.c.b16 %v3397, %v3394
        %v3440 = vpack.c.b16 %v3401, %v3398
        %v3441 = vpack.c.b16 %v3402, %v3399
        %v3442 = vpack.c.b16 %v3403, %v3400
        %v3443 = vpack.c.b16 %v3407, %v3404
        %v3444 = vpack.c.b16 %v3408, %v3405
        %v3445 = vpack.c.b16 %v3409, %v3406
        %v3446 = vpack.c.b16 %v3413, %v3410
        %v3447 = vpack.c.b16 %v3414, %v3411
        %v3448 = vpack.c.b16 %v3415, %v3412
        %v3449 = vpack.c.b16 %v3419, %v3416
        %v3450 = vpack.c.b16 %v3420, %v3417
        %v3451 = vpack.c.b16 %v3421, %v3418
        %v3452 = vpack.c.b16 %v3425, %v3422
        %v3453 = vpack.c.b16 %v3426, %v3423
        %v3454 = vpack.c.b16 %v3427, %v3424
        %v3455 = vpack.c.b16 %v3431, %v3428
        %v3456 = vpack.c.b16 %v3432, %v3429
        %v3457 = vpack.c.b16 %v3433, %v3430
        %v3578 = vunpack.c.l.b16 %v3258
        %v3579 = vunpack.c.h.b16 %v3258
        %v3580 = vunpack.c.l.b16 %v3259
        %v3581 = vunpack.c.l.b16 %v3260
        %v3582 = vunpack.c.h.b16 %v3260
        %v3583 = vunpack.c.l.b16 %v3261
        %v3584 = vunpack.c.l.b16 %v3262
        %v3585 = vunpack.c.h.b16 %v3262
        %v3586 = vunpack.c.l.b16 %v3263
        %v3587 = vunpack.c.l.b16 %v3264
        %v3588 = vunpack.c.h.b16 %v3264
        %v3589 = vunpack.c.l.b16 %v3265
        %v3590 = vunpack.c.l.b16 %v3266
        %v3591 = vunpack.c.h.b16 %v3266
        %v3592 = vunpack.c.l.b16 %v3267
        %v3593 = vunpack.c.l.b16 %v3268
        %v3594 = vunpack.c.h.b16 %v3268
        %v3595 = vunpack.c.l.b16 %v3269
        %v3596 = vunpack.c.l.b16 %v3270
        %v3597 = vunpack.c.h.b16 %v3270
        %v3598 = vunpack.c.l.b16 %v3271
        %v3599 = vunpack.c.l.b16 %v3272
        %v3600 = vunpack.c.h.b16 %v3272
        %v3601 = vunpack.c.l.b16 %v3273
        %v3602 = vunpack.c.l.b16 %v3274
        %v3603 = vunpack.c.h.b16 %v3274
        %v3604 = vunpack.c.l.b16 %v3275
        %v3605 = vunpack.c.l.b16 %v3276
        %v3606 = vunpack.c.h.b16 %v3276
        %v3607 = vunpack.c.l.b16 %v3277
        %v3608 = vunpack.c.l.b16 %v3278
        %v3609 = vunpack.c.h.b16 %v3278
        %v3610 = vunpack.c.l.b16 %v3279
        %v3611 = vunpack.c.l.b16 %v3280
        %v3612 = vunpack.c.h.b16 %v3280
        %v3613 = vunpack.c.l.b16 %v3281
        %v3614 = vunpack.c.l.b16 %v3282
        %v3615 = vunpack.c.h.b16 %v3282
        %v3616 = vunpack.c.l.b16 %v3283
        %v3617 = vunpack.c.l.b16 %v3284
        %v3618 = vunpack.c.h.b16 %v3284
        %v3619 = vunpack.c.l.b16 %v3285
        %v3620 = vunpack.c.l.b16 %v3286
        %v3621 = vunpack.c.h.b16 %v3286
        %v3622 = vunpack.c.l.b16 %v3287
        %v3623 = vunpack.c.l.b16 %v3288
        %v3624 = vunpack.c.h.b16 %v3288
        %v3625 = vunpack.c.l.b16 %v3289
        %v3626 = vunpack.c.l.b16 %v3290
        %v3627 = vunpack.c.h.b16 %v3290
        %v3628 = vunpack.c.l.b16 %v3291
        %v3629 = vunpack.c.l.b16 %v3292
        %v3630 = vunpack.c.h.b16 %v3292
        %v3631 = vunpack.c.l.b16 %v3293
        %v3632 = vunpack.c.l.b16 %v3294
        %v3633 = vunpack.c.h.b16 %v3294
        %v3634 = vunpack.c.l.b16 %v3295
        %v3635 = vunpack.c.l.b16 %v3296
        %v3636 = vunpack.c.h.b16 %v3296
        %v3637 = vunpack.c.l.b16 %v3297
        %v3638 = vunpack.c.l.b16 %v3298
        %v3639 = vunpack.c.h.b16 %v3298
        %v3640 = vunpack.c.l.b16 %v3299
        %v3641 = vunpack.c.l.b16 %v3300
        %v3642 = vunpack.c.h.b16 %v3300
        %v3643 = vunpack.c.l.b16 %v3301
        %v3644 = vunpack.c.l.b16 %v3302
        %v3645 = vunpack.c.h.b16 %v3302
        %v3646 = vunpack.c.l.b16 %v3303
        %v3647 = vunpack.c.l.b16 %v3304
        %v3648 = vunpack.c.h.b16 %v3304
        %v3649 = vunpack.c.l.b16 %v3305
        %v3650 = vunpack.c.l.b16 %v3306
        %v3651 = vunpack.c.h.b16 %v3306
        %v3652 = vunpack.c.l.b16 %v3307
        %v3653 = vunpack.c.l.b16 %v3308
        %v3654 = vunpack.c.h.b16 %v3308
        %v3655 = vunpack.c.l.b16 %v3309
        %v3656 = vunpack.c.l.b16 %v3310
        %v3657 = vunpack.c.h.b16 %v3310
        %v3658 = vunpack.c.l.b16 %v3311
        %v3659 = vunpack.c.l.b16 %v3312
        %v3660 = vunpack.c.h.b16 %v3312
        %v3661 = vunpack.c.l.b16 %v3313
        %v3662 = vunpack.c.l.b16 %v3314
        %v3663 = vunpack.c.h.b16 %v3314
        %v3664 = vunpack.c.l.b16 %v3315
        %v3665 = vunpack.c.l.b16 %v3316
        %v3666 = vunpack.c.h.b16 %v3316
        %v3667 = vunpack.c.l.b16 %v3317
        %v3668 = vunpack.c.l.b16 %v3318
        %v3669 = vunpack.c.h.b16 %v3318
        %v3670 = vunpack.c.l.b16 %v3319
        %v3671 = vunpack.c.l.b16 %v3320
        %v3672 = vunpack.c.h.b16 %v3320
        %v3673 = vunpack.c.l.b16 %v3321
        %v3674 = vunpack.c.l.b16 %v3322
        %v3675 = vunpack.c.h.b16 %v3322
        %v3676 = vunpack.c.l.b16 %v3323
        %v3677 = vunpack.c.l.b16 %v3324
        %v3678 = vunpack.c.h.b16 %v3324
        %v3679 = vunpack.c.l.b16 %v3325
        %v3680 = vunpack.c.l.b16 %v3326
        %v3681 = vunpack.c.h.b16 %v3326
        %v3682 = vunpack.c.l.b16 %v3327
        %v3683 = vunpack.c.l.b16 %v3328
        %v3684 = vunpack.c.h.b16 %v3328
        %v3685 = vunpack.c.l.b16 %v3329
        %v3686 = vunpack.c.l.b16 %v3330
        %v3687 = vunpack.c.h.b16 %v3330
        %v3688 = vunpack.c.l.b16 %v3331
        %v3689 = vunpack.c.l.b16 %v3332
        %v3690 = vunpack.c.h.b16 %v3332
        %v3691 = vunpack.c.l.b16 %v3333
        %v3692 = vunpack.c.l.b16 %v3334
        %v3693 = vunpack.c.h.b16 %v3334
        %v3694 = vunpack.c.l.b16 %v3335
        %v3695 = vunpack.c.l.b16 %v3336
        %v3696 = vunpack.c.h.b16 %v3336
        %v3697 = vunpack.c.l.b16 %v3337
        %v3698 = vunpack.c.l.b16 %v3338
        %v3699 = vunpack.c.h.b16 %v3338
        %v3700 = vunpack.c.l.b16 %v3339
        %v3701 = vunpack.c.l.b16 %v3340
        %v3702 = vunpack.c.h.b16 %v3340
        %v3703 = vunpack.c.l.b16 %v3341
        %v3704 = vunpack.c.l.b16 %v3342
        %v3705 = vunpack.c.h.b16 %v3342
        %v3706 = vunpack.c.l.b16 %v3343
        %v3707 = vunpack.c.l.b16 %v3344
        %v3708 = vunpack.c.h.b16 %v3344
        %v3709 = vunpack.c.l.b16 %v3345
        %v3710 = vunpack.c.l.b16 %v3346
        %v3711 = vunpack.c.h.b16 %v3346
        %v3712 = vunpack.c.l.b16 %v3347
        %v3713 = vunpack.c.l.b16 %v3348
        %v3714 = vunpack.c.h.b16 %v3348
        %v3715 = vunpack.c.l.b16 %v3349
        %v3716 = vunpack.c.l.b16 %v3350
        %v3717 = vunpack.c.h.b16 %v3350
        %v3718 = vunpack.c.l.b16 %v3351
        %v3719 = vunpack.c.l.b16 %v3352
        %v3720 = vunpack.c.h.b16 %v3352
        %v3721 = vunpack.c.l.b16 %v3353
        %v3722 = vpack.c.b16 %v3581, %v3578
        %v3723 = vpack.c.b16 %v3582, %v3579
        %v3724 = vpack.c.b16 %v3583, %v3580
        %v3725 = vpack.c.b16 %v3587, %v3584
        %v3726 = vpack.c.b16 %v3588, %v3585
        %v3727 = vpack.c.b16 %v3589, %v3586
        %v3728 = vpack.c.b16 %v3593, %v3590
        %v3729 = vpack.c.b16 %v3594, %v3591
        %v3730 = vpack.c.b16 %v3595, %v3592
        %v3731 = vpack.c.b16 %v3599, %v3596
        %v3732 = vpack.c.b16 %v3600, %v3597
        %v3733 = vpack.c.b16 %v3601, %v3598
        %v3734 = vpack.c.b16 %v3605, %v3602
        %v3735 = vpack.c.b16 %v3606, %v3603
        %v3736 = vpack.c.b16 %v3607, %v3604
        %v3737 = vpack.c.b16 %v3611, %v3608
        %v3738 = vpack.c.b16 %v3612, %v3609
        %v3739 = vpack.c.b16 %v3613, %v3610
        %v3740 = vpack.c.b16 %v3617, %v3614
        %v3741 = vpack.c.b16 %v3618, %v3615
        %v3742 = vpack.c.b16 %v3619, %v3616
        %v3743 = vpack.c.b16 %v3623, %v3620
        %v3744 = vpack.c.b16 %v3624, %v3621
        %v3745 = vpack.c.b16 %v3625, %v3622
        %v3746 = vpack.c.b16 %v3629, %v3626
        %v3747 = vpack.c.b16 %v3630, %v3627
        %v3748 = vpack.c.b16 %v3631, %v3628
        %v3749 = vpack.c.b16 %v3635, %v3632
        %v3750 = vpack.c.b16 %v3636, %v3633
        %v3751 = vpack.c.b16 %v3637, %v3634
        %v3752 = vpack.c.b16 %v3641, %v3638
        %v3753 = vpack.c.b16 %v3642, %v3639
        %v3754 = vpack.c.b16 %v3643, %v3640
        %v3755 = vpack.c.b16 %v3647, %v3644
        %v3756 = vpack.c.b16 %v3648, %v3645
        %v3757 = vpack.c.b16 %v3649, %v3646
        %v3758 = vpack.c.b16 %v3653, %v3650
        %v3759 = vpack.c.b16 %v3654, %v3651
        %v3760 = vpack.c.b16 %v3655, %v3652
        %v3761 = vpack.c.b16 %v3659, %v3656
        %v3762 = vpack.c.b16 %v3660, %v3657
        %v3763 = vpack.c.b16 %v3661, %v3658
        %v3764 = vpack.c.b16 %v3665, %v3662
        %v3765 = vpack.c.b16 %v3666, %v3663
        %v3766 = vpack.c.b16 %v3667, %v3664
        %v3767 = vpack.c.b16 %v3671, %v3668
        %v3768 = vpack.c.b16 %v3672, %v3669
        %v3769 = vpack.c.b16 %v3673, %v3670
        %v3770 = vpack.c.b16 %v3677, %v3674
        %v3771 = vpack.c.b16 %v3678, %v3675
        %v3772 = vpack.c.b16 %v3679, %v3676
        %v3773 = vpack.c.b16 %v3683, %v3680
        %v3774 = vpack.c.b16 %v3684, %v3681
        %v3775 = vpack.c.b16 %v3685, %v3682
        %v3776 = vpack.c.b16 %v3689, %v3686
        %v3777 = vpack.c.b16 %v3690, %v3687
        %v3778 = vpack.c.b16 %v3691, %v3688
        %v3779 = vpack.c.b16 %v3695, %v3692
        %v3780 = vpack.c.b16 %v3696, %v3693
        %v3781 = vpack.c.b16 %v3697, %v3694
        %v3782 = vpack.c.b16 %v3701, %v3698
        %v3783 = vpack.c.b16 %v3702, %v3699
        %v3784 = vpack.c.b16 %v3703, %v3700
        %v3785 = vpack.c.b16 %v3707, %v3704
        %v3786 = vpack.c.b16 %v3708, %v3705
        %v3787 = vpack.c.b16 %v3709, %v3706
        %v3788 = vpack.c.b16 %v3713, %v3710
        %v3789 = vpack.c.b16 %v3714, %v3711
        %v3790 = vpack.c.b16 %v3715, %v3712
        %v3791 = vpack.c.b16 %v3719, %v3716
        %v3792 = vpack.c.b16 %v3720, %v3717
        %v3793 = vpack.c.b16 %v3721, %v3718
        %3866 = vmatpush.bf16.msra.mxu0 %v3743
        %3867 = vmatpush.bf16.msra.mxu0 %v3740
        %3868 = vmatpush.bf16.msra.mxu0 %v3737
        %3869 = vmatpush.bf16.msra.mxu0 %v3734
        %3870 = vmatpush.bf16.msra.mxu0 %v3731
        %3871 = vmatpush.bf16.msra.mxu0 %v3728
        %3872 = vmatpush.bf16.msra.mxu0 %v3725
        %3873 = vmatpush.bf16.msra.mxu0 %v3722
        %3874 = vmatmul.bf16.gmra.mxu0 %v3434
        %v3875 = vpop.f32.mrf.mxu0
        %v3876 = vadd.f32 0.0, %v3875
        %v3877 = vpop.f32.mrf.mxu0
        %v3878 = vadd.f32 0.0, %v3877
        %3879 = vmatmul.bf16.gmra.mxu0 %v3437
        %v3880 = vpop.f32.mrf.mxu0
        %v3881 = vadd.f32 0.0, %v3880
        %v3882 = vpop.f32.mrf.mxu0
        %v3883 = vadd.f32 0.0, %v3882
        %3884 = vmatmul.bf16.gmra.mxu0 %v3440
        %v3885 = vpop.f32.mrf.mxu0
        %v3886 = vadd.f32 0.0, %v3885
        %v3887 = vpop.f32.mrf.mxu0
        %v3888 = vadd.f32 0.0, %v3887
        %3889 = vmatmul.bf16.gmra.mxu0 %v3443
        %v3890 = vpop.f32.mrf.mxu0
        %v3891 = vadd.f32 0.0, %v3890
        %v3892 = vpop.f32.mrf.mxu0
        %v3893 = vadd.f32 0.0, %v3892
        %3894 = vmatmul.bf16.gmra.mxu0 %v3446
        %v3895 = vpop.f32.mrf.mxu0
        %v3896 = vadd.f32 0.0, %v3895
        %v3897 = vpop.f32.mrf.mxu0
        %v3898 = vadd.f32 0.0, %v3897
        %3899 = vmatmul.bf16.gmra.mxu0 %v3449
        %v3900 = vpop.f32.mrf.mxu0
        %v3901 = vadd.f32 0.0, %v3900
        %v3902 = vpop.f32.mrf.mxu0
        %v3903 = vadd.f32 0.0, %v3902
        %3904 = vmatmul.bf16.gmra.mxu0 %v3452
        %v3905 = vpop.f32.mrf.mxu0
        %v3906 = vadd.f32 0.0, %v3905
        %v3907 = vpop.f32.mrf.mxu0
        %v3908 = vadd.f32 0.0, %v3907
        %3909 = vmatmul.bf16.gmra.mxu0 %v3455
        %v3910 = vpop.f32.mrf.mxu0
        %v3911 = vadd.f32 0.0, %v3910
        %v3912 = vpop.f32.mrf.mxu0
        %v3913 = vadd.f32 0.0, %v3912
        %3914 = vdwg.mxu0
        %3915 = vmatpush.bf16.msra.mxu0 %v3767
        %3916 = vmatpush.bf16.msra.mxu0 %v3764
        %3917 = vmatpush.bf16.msra.mxu0 %v3761
        %3918 = vmatpush.bf16.msra.mxu0 %v3758
        %3919 = vmatpush.bf16.msra.mxu0 %v3755
        %3920 = vmatpush.bf16.msra.mxu0 %v3752
        %3921 = vmatpush.bf16.msra.mxu0 %v3749
        %3922 = vmatpush.bf16.msra.mxu0 %v3746
        %3923 = vmatmul.bf16.gmra.mxu0 %v3435
        %v3924 = vpop.f32.mrf.mxu0
        %v3925 = vadd.f32 %v3876, %v3924
        %v3926 = vpop.f32.mrf.mxu0
        %v3927 = vadd.f32 %v3878, %v3926
        %3928 = vmatmul.bf16.gmra.mxu0 %v3438
        %v3929 = vpop.f32.mrf.mxu0
        %v3930 = vadd.f32 %v3881, %v3929
        %v3931 = vpop.f32.mrf.mxu0
        %v3932 = vadd.f32 %v3883, %v3931
        %3933 = vmatmul.bf16.gmra.mxu0 %v3441
        %v3934 = vpop.f32.mrf.mxu0
        %v3935 = vadd.f32 %v3886, %v3934
        %v3936 = vpop.f32.mrf.mxu0
        %v3937 = vadd.f32 %v3888, %v3936
        %3938 = vmatmul.bf16.gmra.mxu0 %v3444
        %v3939 = vpop.f32.mrf.mxu0
        %v3940 = vadd.f32 %v3891, %v3939
        %v3941 = vpop.f32.mrf.mxu0
        %v3942 = vadd.f32 %v3893, %v3941
        %3943 = vmatmul.bf16.gmra.mxu0 %v3447
        %v3944 = vpop.f32.mrf.mxu0
        %v3945 = vadd.f32 %v3896, %v3944
        %v3946 = vpop.f32.mrf.mxu0
        %v3947 = vadd.f32 %v3898, %v3946
        %3948 = vmatmul.bf16.gmra.mxu0 %v3450
        %v3949 = vpop.f32.mrf.mxu0
        %v3950 = vadd.f32 %v3901, %v3949
        %v3951 = vpop.f32.mrf.mxu0
        %v3952 = vadd.f32 %v3903, %v3951
        %3953 = vmatmul.bf16.gmra.mxu0 %v3453
        %v3954 = vpop.f32.mrf.mxu0
        %v3955 = vadd.f32 %v3906, %v3954
        %v3956 = vpop.f32.mrf.mxu0
        %v3957 = vadd.f32 %v3908, %v3956
        %3958 = vmatmul.bf16.gmra.mxu0 %v3456
        %v3959 = vpop.f32.mrf.mxu0
        %v3960 = vadd.f32 %v3911, %v3959
        %v3961 = vpop.f32.mrf.mxu0
        %v3962 = vadd.f32 %v3913, %v3961
        %3963 = vdwg.mxu0
        %3964 = vmatpush.bf16.msra.mxu0 %v3791
        %3965 = vmatpush.bf16.msra.mxu0 %v3788
        %3966 = vmatpush.bf16.msra.mxu0 %v3785
        %3967 = vmatpush.bf16.msra.mxu0 %v3782
        %3968 = vmatpush.bf16.msra.mxu0 %v3779
        %3969 = vmatpush.bf16.msra.mxu0 %v3776
        %3970 = vmatpush.bf16.msra.mxu0 %v3773
        %3971 = vmatpush.bf16.msra.mxu0 %v3770
        %3972 = vmatmul.bf16.gmra.mxu0 %v3436
        %v3973 = vpop.f32.mrf.mxu0
        %v3974 = vadd.f32 %v3925, %v3973
        %v3975 = vpop.f32.mrf.mxu0
        %v3976 = vadd.f32 %v3927, %v3975
        %3977 = vmatmul.bf16.gmra.mxu0 %v3439
        %v3978 = vpop.f32.mrf.mxu0
        %v3979 = vadd.f32 %v3930, %v3978
        %v3980 = vpop.f32.mrf.mxu0
        %v3981 = vadd.f32 %v3932, %v3980
        %3982 = vmatmul.bf16.gmra.mxu0 %v3442
        %v3983 = vpop.f32.mrf.mxu0
        %v3984 = vadd.f32 %v3935, %v3983
        %v3985 = vpop.f32.mrf.mxu0
        %v3986 = vadd.f32 %v3937, %v3985
        %3987 = vmatmul.bf16.gmra.mxu0 %v3445
        %v3988 = vpop.f32.mrf.mxu0
        %v3989 = vadd.f32 %v3940, %v3988
        %v3990 = vpop.f32.mrf.mxu0
        %v3991 = vadd.f32 %v3942, %v3990
        %3992 = vmatmul.bf16.gmra.mxu0 %v3448
        %v3993 = vpop.f32.mrf.mxu0
        %v3994 = vadd.f32 %v3945, %v3993
        %v3995 = vpop.f32.mrf.mxu0
        %v3996 = vadd.f32 %v3947, %v3995
        %3997 = vmatmul.bf16.gmra.mxu0 %v3451
        %v3998 = vpop.f32.mrf.mxu0
        %v3999 = vadd.f32 %v3950, %v3998
        %v4000 = vpop.f32.mrf.mxu0
        %v4001 = vadd.f32 %v3952, %v4000
        %4002 = vmatmul.bf16.gmra.mxu0 %v3454
        %v4003 = vpop.f32.mrf.mxu0
        %v4004 = vadd.f32 %v3955, %v4003
        %v4005 = vpop.f32.mrf.mxu0
        %v4006 = vadd.f32 %v3957, %v4005
        %4007 = vmatmul.bf16.gmra.mxu0 %v3457
        %v4008 = vpop.f32.mrf.mxu0
        %v4009 = vadd.f32 %v3960, %v4008
        %v4010 = vpop.f32.mrf.mxu0
        %v4011 = vadd.f32 %v3962, %v4010
        %4012 = vdwg.mxu0
        %4013 = vmatpush.bf16.msra.mxu0 %v3744
        %4014 = vmatpush.bf16.msra.mxu0 %v3741
        %4015 = vmatpush.bf16.msra.mxu0 %v3738
        %4016 = vmatpush.bf16.msra.mxu0 %v3735
        %4017 = vmatpush.bf16.msra.mxu0 %v3732
        %4018 = vmatpush.bf16.msra.mxu0 %v3729
        %4019 = vmatpush.bf16.msra.mxu0 %v3726
        %4020 = vmatpush.bf16.msra.mxu0 %v3723
        %4021 = vmatmul.bf16.gmra.mxu0 %v3434
        %v4022 = vpop.f32.mrf.mxu0
        %v4023 = vadd.f32 0.0, %v4022
        %v4024 = vpop.f32.mrf.mxu0
        %v4025 = vadd.f32 0.0, %v4024
        %4026 = vmatmul.bf16.gmra.mxu0 %v3437
        %v4027 = vpop.f32.mrf.mxu0
        %v4028 = vadd.f32 0.0, %v4027
        %v4029 = vpop.f32.mrf.mxu0
        %v4030 = vadd.f32 0.0, %v4029
        %4031 = vmatmul.bf16.gmra.mxu0 %v3440
        %v4032 = vpop.f32.mrf.mxu0
        %v4033 = vadd.f32 0.0, %v4032
        %v4034 = vpop.f32.mrf.mxu0
        %v4035 = vadd.f32 0.0, %v4034
        %4036 = vmatmul.bf16.gmra.mxu0 %v3443
        %v4037 = vpop.f32.mrf.mxu0
        %v4038 = vadd.f32 0.0, %v4037
        %v4039 = vpop.f32.mrf.mxu0
        %v4040 = vadd.f32 0.0, %v4039
        %4041 = vmatmul.bf16.gmra.mxu0 %v3446
        %v4042 = vpop.f32.mrf.mxu0
        %v4043 = vadd.f32 0.0, %v4042
        %v4044 = vpop.f32.mrf.mxu0
        %v4045 = vadd.f32 0.0, %v4044
        %4046 = vmatmul.bf16.gmra.mxu0 %v3449
        %v4047 = vpop.f32.mrf.mxu0
        %v4048 = vadd.f32 0.0, %v4047
        %v4049 = vpop.f32.mrf.mxu0
        %v4050 = vadd.f32 0.0, %v4049
        %4051 = vmatmul.bf16.gmra.mxu0 %v3452
        %v4052 = vpop.f32.mrf.mxu0
        %v4053 = vadd.f32 0.0, %v4052
        %v4054 = vpop.f32.mrf.mxu0
        %v4055 = vadd.f32 0.0, %v4054
        %4056 = vmatmul.bf16.gmra.mxu0 %v3455
        %v4057 = vpop.f32.mrf.mxu0
        %v4058 = vadd.f32 0.0, %v4057
        %v4059 = vpop.f32.mrf.mxu0
        %v4060 = vadd.f32 0.0, %v4059
        %4061 = vdwg.mxu0
        %4062 = vmatpush.bf16.msra.mxu0 %v3768
        %4063 = vmatpush.bf16.msra.mxu0 %v3765
        %4064 = vmatpush.bf16.msra.mxu0 %v3762
        %4065 = vmatpush.bf16.msra.mxu0 %v3759
        %4066 = vmatpush.bf16.msra.mxu0 %v3756
        %4067 = vmatpush.bf16.msra.mxu0 %v3753
        %4068 = vmatpush.bf16.msra.mxu0 %v3750
        %4069 = vmatpush.bf16.msra.mxu0 %v3747
        %4070 = vmatmul.bf16.gmra.mxu0 %v3435
        %v4071 = vpop.f32.mrf.mxu0
        %v4072 = vadd.f32 %v4023, %v4071
        %v4073 = vpop.f32.mrf.mxu0
        %v4074 = vadd.f32 %v4025, %v4073
        %4075 = vmatmul.bf16.gmra.mxu0 %v3438
        %v4076 = vpop.f32.mrf.mxu0
        %v4077 = vadd.f32 %v4028, %v4076
        %v4078 = vpop.f32.mrf.mxu0
        %v4079 = vadd.f32 %v4030, %v4078
        %4080 = vmatmul.bf16.gmra.mxu0 %v3441
        %v4081 = vpop.f32.mrf.mxu0
        %v4082 = vadd.f32 %v4033, %v4081
        %v4083 = vpop.f32.mrf.mxu0
        %v4084 = vadd.f32 %v4035, %v4083
        %4085 = vmatmul.bf16.gmra.mxu0 %v3444
        %v4086 = vpop.f32.mrf.mxu0
        %v4087 = vadd.f32 %v4038, %v4086
        %v4088 = vpop.f32.mrf.mxu0
        %v4089 = vadd.f32 %v4040, %v4088
        %4090 = vmatmul.bf16.gmra.mxu0 %v3447
        %v4091 = vpop.f32.mrf.mxu0
        %v4092 = vadd.f32 %v4043, %v4091
        %v4093 = vpop.f32.mrf.mxu0
        %v4094 = vadd.f32 %v4045, %v4093
        %4095 = vmatmul.bf16.gmra.mxu0 %v3450
        %v4096 = vpop.f32.mrf.mxu0
        %v4097 = vadd.f32 %v4048, %v4096
        %v4098 = vpop.f32.mrf.mxu0
        %v4099 = vadd.f32 %v4050, %v4098
        %4100 = vmatmul.bf16.gmra.mxu0 %v3453
        %v4101 = vpop.f32.mrf.mxu0
        %v4102 = vadd.f32 %v4053, %v4101
        %v4103 = vpop.f32.mrf.mxu0
        %v4104 = vadd.f32 %v4055, %v4103
        %4105 = vmatmul.bf16.gmra.mxu0 %v3456
        %v4106 = vpop.f32.mrf.mxu0
        %v4107 = vadd.f32 %v4058, %v4106
        %v4108 = vpop.f32.mrf.mxu0
        %v4109 = vadd.f32 %v4060, %v4108
        %4110 = vdwg.mxu0
        %4111 = vmatpush.bf16.msra.mxu0 %v3792
        %4112 = vmatpush.bf16.msra.mxu0 %v3789
        %4113 = vmatpush.bf16.msra.mxu0 %v3786
        %4114 = vmatpush.bf16.msra.mxu0 %v3783
        %4115 = vmatpush.bf16.msra.mxu0 %v3780
        %4116 = vmatpush.bf16.msra.mxu0 %v3777
        %4117 = vmatpush.bf16.msra.mxu0 %v3774
        %4118 = vmatpush.bf16.msra.mxu0 %v3771
        %4119 = vmatmul.bf16.gmra.mxu0 %v3436
        %v4120 = vpop.f32.mrf.mxu0
        %v4121 = vadd.f32 %v4072, %v4120
        %v4122 = vpop.f32.mrf.mxu0
        %v4123 = vadd.f32 %v4074, %v4122
        %4124 = vmatmul.bf16.gmra.mxu0 %v3439
        %v4125 = vpop.f32.mrf.mxu0
        %v4126 = vadd.f32 %v4077, %v4125
        %v4127 = vpop.f32.mrf.mxu0
        %v4128 = vadd.f32 %v4079, %v4127
        %4129 = vmatmul.bf16.gmra.mxu0 %v3442
        %v4130 = vpop.f32.mrf.mxu0
        %v4131 = vadd.f32 %v4082, %v4130
        %v4132 = vpop.f32.mrf.mxu0
        %v4133 = vadd.f32 %v4084, %v4132
        %4134 = vmatmul.bf16.gmra.mxu0 %v3445
        %v4135 = vpop.f32.mrf.mxu0
        %v4136 = vadd.f32 %v4087, %v4135
        %v4137 = vpop.f32.mrf.mxu0
        %v4138 = vadd.f32 %v4089, %v4137
        %4139 = vmatmul.bf16.gmra.mxu0 %v3448
        %v4140 = vpop.f32.mrf.mxu0
        %v4141 = vadd.f32 %v4092, %v4140
        %v4142 = vpop.f32.mrf.mxu0
        %v4143 = vadd.f32 %v4094, %v4142
        %4144 = vmatmul.bf16.gmra.mxu0 %v3451
        %v4145 = vpop.f32.mrf.mxu0
        %v4146 = vadd.f32 %v4097, %v4145
        %v4147 = vpop.f32.mrf.mxu0
        %v4148 = vadd.f32 %v4099, %v4147
        %4149 = vmatmul.bf16.gmra.mxu0 %v3454
        %v4150 = vpop.f32.mrf.mxu0
        %v4151 = vadd.f32 %v4102, %v4150
        %v4152 = vpop.f32.mrf.mxu0
        %v4153 = vadd.f32 %v4104, %v4152
        %4154 = vmatmul.bf16.gmra.mxu0 %v3457
        %v4155 = vpop.f32.mrf.mxu0
        %v4156 = vadd.f32 %v4107, %v4155
        %v4157 = vpop.f32.mrf.mxu0
        %v4158 = vadd.f32 %v4109, %v4157
        %4159 = vdwg.mxu0
        %4160 = vmatpush.bf16.msra.mxu0 %v3745
        %4161 = vmatpush.bf16.msra.mxu0 %v3742
        %4162 = vmatpush.bf16.msra.mxu0 %v3739
        %4163 = vmatpush.bf16.msra.mxu0 %v3736
        %4164 = vmatpush.bf16.msra.mxu0 %v3733
        %4165 = vmatpush.bf16.msra.mxu0 %v3730
        %4166 = vmatpush.bf16.msra.mxu0 %v3727
        %4167 = vmatpush.bf16.msra.mxu0 %v3724
        %4168 = vmatmul.bf16.gmra.mxu0 %v3434
        %v4169 = vpop.f32.mrf.mxu0
        %v4170 = vadd.f32 0.0, %v4169
        %v4171 = vpop.f32.mrf.mxu0
        %v4172 = vadd.f32 0.0, %v4171
        %4173 = vmatmul.bf16.gmra.mxu0 %v3437
        %v4174 = vpop.f32.mrf.mxu0
        %v4175 = vadd.f32 0.0, %v4174
        %v4176 = vpop.f32.mrf.mxu0
        %v4177 = vadd.f32 0.0, %v4176
        %4178 = vmatmul.bf16.gmra.mxu0 %v3440
        %v4179 = vpop.f32.mrf.mxu0
        %v4180 = vadd.f32 0.0, %v4179
        %v4181 = vpop.f32.mrf.mxu0
        %v4182 = vadd.f32 0.0, %v4181
        %4183 = vmatmul.bf16.gmra.mxu0 %v3443
        %v4184 = vpop.f32.mrf.mxu0
        %v4185 = vadd.f32 0.0, %v4184
        %v4186 = vpop.f32.mrf.mxu0
        %v4187 = vadd.f32 0.0, %v4186
        %4188 = vmatmul.bf16.gmra.mxu0 %v3446
        %v4189 = vpop.f32.mrf.mxu0
        %v4190 = vadd.f32 0.0, %v4189
        %v4191 = vpop.f32.mrf.mxu0
        %v4192 = vadd.f32 0.0, %v4191
        %4193 = vmatmul.bf16.gmra.mxu0 %v3449
        %v4194 = vpop.f32.mrf.mxu0
        %v4195 = vadd.f32 0.0, %v4194
        %v4196 = vpop.f32.mrf.mxu0
        %v4197 = vadd.f32 0.0, %v4196
        %4198 = vmatmul.bf16.gmra.mxu0 %v3452
        %v4199 = vpop.f32.mrf.mxu0
        %v4200 = vadd.f32 0.0, %v4199
        %v4201 = vpop.f32.mrf.mxu0
        %v4202 = vadd.f32 0.0, %v4201
        %4203 = vmatmul.bf16.gmra.mxu0 %v3455
        %v4204 = vpop.f32.mrf.mxu0
        %v4205 = vadd.f32 0.0, %v4204
        %v4206 = vpop.f32.mrf.mxu0
        %v4207 = vadd.f32 0.0, %v4206
        %4208 = vdwg.mxu0
        %4209 = vmatpush.bf16.msra.mxu0 %v3769
        %4210 = vmatpush.bf16.msra.mxu0 %v3766
        %4211 = vmatpush.bf16.msra.mxu0 %v3763
        %4212 = vmatpush.bf16.msra.mxu0 %v3760
        %4213 = vmatpush.bf16.msra.mxu0 %v3757
        %4214 = vmatpush.bf16.msra.mxu0 %v3754
        %4215 = vmatpush.bf16.msra.mxu0 %v3751
        %4216 = vmatpush.bf16.msra.mxu0 %v3748
        %4217 = vmatmul.bf16.gmra.mxu0 %v3435
        %v4218 = vpop.f32.mrf.mxu0
        %v4219 = vadd.f32 %v4170, %v4218
        %v4220 = vpop.f32.mrf.mxu0
        %v4221 = vadd.f32 %v4172, %v4220
        %4222 = vmatmul.bf16.gmra.mxu0 %v3438
        %v4223 = vpop.f32.mrf.mxu0
        %v4224 = vadd.f32 %v4175, %v4223
        %v4225 = vpop.f32.mrf.mxu0
        %v4226 = vadd.f32 %v4177, %v4225
        %4227 = vmatmul.bf16.gmra.mxu0 %v3441
        %v4228 = vpop.f32.mrf.mxu0
        %v4229 = vadd.f32 %v4180, %v4228
        %v4230 = vpop.f32.mrf.mxu0
        %v4231 = vadd.f32 %v4182, %v4230
        %4232 = vmatmul.bf16.gmra.mxu0 %v3444
        %v4233 = vpop.f32.mrf.mxu0
        %v4234 = vadd.f32 %v4185, %v4233
        %v4235 = vpop.f32.mrf.mxu0
        %v4236 = vadd.f32 %v4187, %v4235
        %4237 = vmatmul.bf16.gmra.mxu0 %v3447
        %v4238 = vpop.f32.mrf.mxu0
        %v4239 = vadd.f32 %v4190, %v4238
        %v4240 = vpop.f32.mrf.mxu0
        %v4241 = vadd.f32 %v4192, %v4240
        %4242 = vmatmul.bf16.gmra.mxu0 %v3450
        %v4243 = vpop.f32.mrf.mxu0
        %v4244 = vadd.f32 %v4195, %v4243
        %v4245 = vpop.f32.mrf.mxu0
        %v4246 = vadd.f32 %v4197, %v4245
        %4247 = vmatmul.bf16.gmra.mxu0 %v3453
        %v4248 = vpop.f32.mrf.mxu0
        %v4249 = vadd.f32 %v4200, %v4248
        %v4250 = vpop.f32.mrf.mxu0
        %v4251 = vadd.f32 %v4202, %v4250
        %4252 = vmatmul.bf16.gmra.mxu0 %v3456
        %v4253 = vpop.f32.mrf.mxu0
        %v4254 = vadd.f32 %v4205, %v4253
        %v4255 = vpop.f32.mrf.mxu0
        %v4256 = vadd.f32 %v4207, %v4255
        %4257 = vdwg.mxu0
        %4258 = vmatpush.bf16.msra.mxu0 %v3793
        %4259 = vmatpush.bf16.msra.mxu0 %v3790
        %4260 = vmatpush.bf16.msra.mxu0 %v3787
        %4261 = vmatpush.bf16.msra.mxu0 %v3784
        %4262 = vmatpush.bf16.msra.mxu0 %v3781
        %4263 = vmatpush.bf16.msra.mxu0 %v3778
        %4264 = vmatpush.bf16.msra.mxu0 %v3775
        %4265 = vmatpush.bf16.msra.mxu0 %v3772
        %4266 = vmatmul.bf16.gmra.mxu0 %v3436
        %v4267 = vpop.f32.mrf.mxu0
        %v4268 = vadd.f32 %v4219, %v4267
        %v4269 = vpop.f32.mrf.mxu0
        %v4270 = vadd.f32 %v4221, %v4269
        %4271 = vmatmul.bf16.gmra.mxu0 %v3439
        %v4272 = vpop.f32.mrf.mxu0
        %v4273 = vadd.f32 %v4224, %v4272
        %v4274 = vpop.f32.mrf.mxu0
        %v4275 = vadd.f32 %v4226, %v4274
        %4276 = vmatmul.bf16.gmra.mxu0 %v3442
        %v4277 = vpop.f32.mrf.mxu0
        %v4278 = vadd.f32 %v4229, %v4277
        %v4279 = vpop.f32.mrf.mxu0
        %v4280 = vadd.f32 %v4231, %v4279
        %4281 = vmatmul.bf16.gmra.mxu0 %v3445
        %v4282 = vpop.f32.mrf.mxu0
        %v4283 = vadd.f32 %v4234, %v4282
        %v4284 = vpop.f32.mrf.mxu0
        %v4285 = vadd.f32 %v4236, %v4284
        %4286 = vmatmul.bf16.gmra.mxu0 %v3448
        %v4287 = vpop.f32.mrf.mxu0
        %v4288 = vadd.f32 %v4239, %v4287
        %v4289 = vpop.f32.mrf.mxu0
        %v4290 = vadd.f32 %v4241, %v4289
        %4291 = vmatmul.bf16.gmra.mxu0 %v3451
        %v4292 = vpop.f32.mrf.mxu0
        %v4293 = vadd.f32 %v4244, %v4292
        %v4294 = vpop.f32.mrf.mxu0
        %v4295 = vadd.f32 %v4246, %v4294
        %4296 = vmatmul.bf16.gmra.mxu0 %v3454
        %v4297 = vpop.f32.mrf.mxu0
        %v4298 = vadd.f32 %v4249, %v4297
        %v4299 = vpop.f32.mrf.mxu0
        %v4300 = vadd.f32 %v4251, %v4299
        %4301 = vmatmul.bf16.gmra.mxu0 %v3457
        %v4302 = vpop.f32.mrf.mxu0
        %v4303 = vadd.f32 %v4254, %v4302
        %v4304 = vpop.f32.mrf.mxu0
        %v4305 = vadd.f32 %v4256, %v4304
        %4306 = vdwg.mxu0
        %v4307 = vpack.c.bf16 %v4121, %v3974
        %v4308 = vpack.c.bf16 %v4268, %v4268
        %v4309 = vpack.c.bf16 %v4123, %v3976
        %v4310 = vpack.c.bf16 %v4270, %v4270
        %v4311 = vpack.c.bf16 %v4126, %v3979
        %v4312 = vpack.c.bf16 %v4273, %v4273
        %v4313 = vpack.c.bf16 %v4128, %v3981
        %v4314 = vpack.c.bf16 %v4275, %v4275
        %v4315 = vpack.c.bf16 %v4131, %v3984
        %v4316 = vpack.c.bf16 %v4278, %v4278
        %v4317 = vpack.c.bf16 %v4133, %v3986
        %v4318 = vpack.c.bf16 %v4280, %v4280
        %v4319 = vpack.c.bf16 %v4136, %v3989
        %v4320 = vpack.c.bf16 %v4283, %v4283
        %v4321 = vpack.c.bf16 %v4138, %v3991
        %v4322 = vpack.c.bf16 %v4285, %v4285
        %v4323 = vpack.c.bf16 %v4141, %v3994
        %v4324 = vpack.c.bf16 %v4288, %v4288
        %v4325 = vpack.c.bf16 %v4143, %v3996
        %v4326 = vpack.c.bf16 %v4290, %v4290
        %v4327 = vpack.c.bf16 %v4146, %v3999
        %v4328 = vpack.c.bf16 %v4293, %v4293
        %v4329 = vpack.c.bf16 %v4148, %v4001
        %v4330 = vpack.c.bf16 %v4295, %v4295
        %v4331 = vpack.c.bf16 %v4151, %v4004
        %v4332 = vpack.c.bf16 %v4298, %v4298
        %v4333 = vpack.c.bf16 %v4153, %v4006
        %v4334 = vpack.c.bf16 %v4300, %v4300
        %v4335 = vpack.c.bf16 %v4156, %v4009
        %v4336 = vpack.c.bf16 %v4303, %v4303
        %v4337 = vpack.c.bf16 %v4158, %v4011
        %v4338 = vpack.c.bf16 %v4305, %v4305
        %4339 = vst [vmem:[#allocation2] sm:$0xff] %v4307
        %4340 = vst [vmem:[#allocation2 + $0x8] sm:$0xf] %v4308
        %4341 = vst [vmem:[#allocation2 + $0xc] sm:$0xff] %v4309
        %4342 = vst [vmem:[#allocation2 + $0x14] sm:$0xf] %v4310
        %4343 = vst [vmem:[#allocation2 + $0x18] sm:$0xff] %v4311
        %4344 = vst [vmem:[#allocation2 + $0x20] sm:$0xf] %v4312
        %4345 = vst [vmem:[#allocation2 + $0x24] sm:$0xff] %v4313
        %4346 = vst [vmem:[#allocation2 + $0x2c] sm:$0xf] %v4314
        %4347 = vst [vmem:[#allocation2 + $0x30] sm:$0xff] %v4315
        %4348 = vst [vmem:[#allocation2 + $0x38] sm:$0xf] %v4316
        %4349 = vst [vmem:[#allocation2 + $0x3c] sm:$0xff] %v4317
        %4350 = vst [vmem:[#allocation2 + $0x44] sm:$0xf] %v4318
        %4351 = vst [vmem:[#allocation2 + $0x48] sm:$0xff] %v4319
        %4352 = vst [vmem:[#allocation2 + $0x50] sm:$0xf] %v4320
        %4353 = vst [vmem:[#allocation2 + $0x54] sm:$0xff] %v4321
        %4354 = vst [vmem:[#allocation2 + $0x5c] sm:$0xf] %v4322
        %4355 = vst [vmem:[#allocation2 + $0x60] sm:$0xff] %v4323
        %4356 = vst [vmem:[#allocation2 + $0x68] sm:$0xf] %v4324
        %4357 = vst [vmem:[#allocation2 + $0x6c] sm:$0xff] %v4325
        %4358 = vst [vmem:[#allocation2 + $0x74] sm:$0xf] %v4326
        %4359 = vst [vmem:[#allocation2 + $0x78] sm:$0xff] %v4327
        %4360 = vst [vmem:[#allocation2 + $0x80] sm:$0xf] %v4328
        %4361 = vst [vmem:[#allocation2 + $0x84] sm:$0xff] %v4329
        %4362 = vst [vmem:[#allocation2 + $0x8c] sm:$0xf] %v4330
        %4363 = vst [vmem:[#allocation2 + $0x90] sm:$0xff] %v4331
        %4364 = vst [vmem:[#allocation2 + $0x98] sm:$0xf] %v4332
        %4365 = vst [vmem:[#allocation2 + $0x9c] sm:$0xff] %v4333
        %4366 = vst [vmem:[#allocation2 + $0xa4] sm:$0xf] %v4334
        %4367 = vst [vmem:[#allocation2 + $0xa8] sm:$0xff] %v4335
        %4368 = vst [vmem:[#allocation2 + $0xb0] sm:$0xf] %v4336
        %4369 = vst [vmem:[#allocation2 + $0xb4] sm:$0xff] %v4337
        %4370 = vst [vmem:[#allocation2 + $0xbc] sm:$0xf] %v4338
        %v4371 = vlaneseq
        %v4372 = vshrl.u32 %v4371, 7
        %v4373 = vadd.s32 %v4372, 8
        %v4374 = vadd.s32 %v4372, 16
        %v4375 = vadd.s32 %v4372, 24
        %v4376 = vadd.s32 %v4372, 32
        %v4377 = vadd.s32 %v4372, 40
        %v4378 = vadd.s32 %v4372, 48
        %v4379 = vadd.s32 %v4372, 56
        %v4380 = vadd.s32 %v4372, 64
        %v4381 = vadd.s32 %v4372, 72
        %v4382 = vadd.s32 %v4372, 80
        %v4383 = vadd.s32 %v4372, 88
        %v4384 = vadd.s32 %v4372, 96
        %v4385 = vadd.s32 %v4372, 104
        %v4386 = vadd.s32 %v4372, 112
        %v4387 = vadd.s32 %v4372, 120
        %v4388 = vstv %s3220
        %v4389 = vadd.s32 %v4388, %v4372
        %v4390 = vadd.s32 %v4388, %v4373
        %v4391 = vadd.s32 %v4388, %v4374
        %v4392 = vadd.s32 %v4388, %v4375
        %v4393 = vadd.s32 %v4388, %v4376
        %v4394 = vadd.s32 %v4388, %v4377
        %v4395 = vadd.s32 %v4388, %v4378
        %v4396 = vadd.s32 %v4388, %v4379
        %v4397 = vadd.s32 %v4388, %v4380
        %v4398 = vadd.s32 %v4388, %v4381
        %v4399 = vadd.s32 %v4388, %v4382
        %v4400 = vadd.s32 %v4388, %v4383
        %v4401 = vadd.s32 %v4388, %v4384
        %v4402 = vadd.s32 %v4388, %v4385
        %v4403 = vadd.s32 %v4388, %v4386
        %v4404 = vadd.s32 %v4388, %v4387
        %v4405 = vlaneseq
        %v4406 = vand.u32 %v4405, 127
        %v4407 = vadd.s32 %v4406, 128
        %vm4408 = vcmp.le.s32.totalorder %v4406, %v4389
        %vm4409 = vcmp.le.s32.totalorder %v4407, %v4389
        %vm4410 = vcmp.le.s32.totalorder %v4406, %v4390
        %vm4411 = vcmp.le.s32.totalorder %v4407, %v4390
        %vm4412 = vcmp.le.s32.totalorder %v4406, %v4391
        %vm4413 = vcmp.le.s32.totalorder %v4407, %v4391
        %vm4414 = vcmp.le.s32.totalorder %v4406, %v4392
        %vm4415 = vcmp.le.s32.totalorder %v4407, %v4392
        %vm4416 = vcmp.le.s32.totalorder %v4406, %v4393
        %vm4417 = vcmp.le.s32.totalorder %v4407, %v4393
        %vm4418 = vcmp.le.s32.totalorder %v4406, %v4394
        %vm4419 = vcmp.le.s32.totalorder %v4407, %v4394
        %vm4420 = vcmp.le.s32.totalorder %v4406, %v4395
        %vm4421 = vcmp.le.s32.totalorder %v4407, %v4395
        %vm4422 = vcmp.le.s32.totalorder %v4406, %v4396
        %vm4423 = vcmp.le.s32.totalorder %v4407, %v4396
        %vm4424 = vcmp.le.s32.totalorder %v4406, %v4397
        %vm4425 = vcmp.le.s32.totalorder %v4407, %v4397
        %vm4426 = vcmp.le.s32.totalorder %v4406, %v4398
        %vm4427 = vcmp.le.s32.totalorder %v4407, %v4398
        %vm4428 = vcmp.le.s32.totalorder %v4406, %v4399
        %vm4429 = vcmp.le.s32.totalorder %v4407, %v4399
        %vm4430 = vcmp.le.s32.totalorder %v4406, %v4400
        %vm4431 = vcmp.le.s32.totalorder %v4407, %v4400
        %vm4432 = vcmp.le.s32.totalorder %v4406, %v4401
        %vm4433 = vcmp.le.s32.totalorder %v4407, %v4401
        %vm4434 = vcmp.le.s32.totalorder %v4406, %v4402
        %vm4435 = vcmp.le.s32.totalorder %v4407, %v4402
        %vm4436 = vcmp.le.s32.totalorder %v4406, %v4403
        %vm4437 = vcmp.le.s32.totalorder %v4407, %v4403
        %vm4438 = vcmp.le.s32.totalorder %v4406, %v4404
        %vm4439 = vcmp.le.s32.totalorder %v4407, %v4404
        %v4440 = vld [vmem:[#allocation2] sm:$0xf]
        %v4441 = vld [vmem:[#allocation2 + $0xc] sm:$0xf]
        %v4442 = vld [vmem:[#allocation2 + $0x18] sm:$0xf]
        %v4443 = vld [vmem:[#allocation2 + $0x24] sm:$0xf]
        %v4444 = vld [vmem:[#allocation2 + $0x30] sm:$0xf]
        %v4445 = vld [vmem:[#allocation2 + $0x3c] sm:$0xf]
        %v4446 = vld [vmem:[#allocation2 + $0x48] sm:$0xf]
        %v4447 = vld [vmem:[#allocation2 + $0x54] sm:$0xf]
        %v4448 = vld [vmem:[#allocation2 + $0x60] sm:$0xf]
        %v4449 = vld [vmem:[#allocation2 + $0x6c] sm:$0xf]
        %v4450 = vld [vmem:[#allocation2 + $0x78] sm:$0xf]
        %v4451 = vld [vmem:[#allocation2 + $0x84] sm:$0xf]
        %v4452 = vld [vmem:[#allocation2 + $0x90] sm:$0xf]
        %v4453 = vld [vmem:[#allocation2 + $0x9c] sm:$0xf]
        %v4454 = vld [vmem:[#allocation2 + $0xa8] sm:$0xf]
        %v4455 = vld [vmem:[#allocation2 + $0xb4] sm:$0xf]
        %v4456 = vld [vmem:[#allocation3] sm:$0xf]
        %v4457 = vld [vmem:[#allocation3 + $0x18] sm:$0xf]
        %v4458 = vld [vmem:[#allocation3 + $0x30] sm:$0xf]
        %v4459 = vld [vmem:[#allocation3 + $0x48] sm:$0xf]
        %v4460 = vld [vmem:[#allocation3 + $0x60] sm:$0xf]
        %v4461 = vld [vmem:[#allocation3 + $0x78] sm:$0xf]
        %v4462 = vld [vmem:[#allocation3 + $0x90] sm:$0xf]
        %v4463 = vld [vmem:[#allocation3 + $0xa8] sm:$0xf]
        %v4464 = vld [vmem:[#allocation3 + $0xc0] sm:$0xf]
        %v4465 = vld [vmem:[#allocation3 + $0xd8] sm:$0xf]
        %v4466 = vld [vmem:[#allocation3 + $0xf0] sm:$0xf]
        %v4467 = vld [vmem:[#allocation3 + $0x108] sm:$0xf]
        %v4468 = vld [vmem:[#allocation3 + $0x120] sm:$0xf]
        %v4469 = vld [vmem:[#allocation3 + $0x138] sm:$0xf]
        %v4470 = vld [vmem:[#allocation3 + $0x150] sm:$0xf]
        %v4471 = vld [vmem:[#allocation3 + $0x168] sm:$0xf]
        %v4472 = vld [vmem:[#allocation3 + $0x180] sm:$0xf]
        %v4473 = vld [vmem:[#allocation3 + $0x198] sm:$0xf]
        %v4474 = vld [vmem:[#allocation3 + $0x1b0] sm:$0xf]
        %v4475 = vld [vmem:[#allocation3 + $0x1c8] sm:$0xf]
        %v4476 = vld [vmem:[#allocation3 + $0x1e0] sm:$0xf]
        %v4477 = vld [vmem:[#allocation3 + $0x1f8] sm:$0xf]
        %v4478 = vld [vmem:[#allocation3 + $0x210] sm:$0xf]
        %v4479 = vld [vmem:[#allocation3 + $0x228] sm:$0xf]
        %v4480 = vld [vmem:[#allocation3 + $0x240] sm:$0xf]
        %v4481 = vld [vmem:[#allocation3 + $0x258] sm:$0xf]
        %v4482 = vld [vmem:[#allocation3 + $0x270] sm:$0xf]
        %v4483 = vld [vmem:[#allocation3 + $0x288] sm:$0xf]
        %v4484 = vld [vmem:[#allocation3 + $0x2a0] sm:$0xf]
        %v4485 = vld [vmem:[#allocation3 + $0x2b8] sm:$0xf]
        %v4486 = vld [vmem:[#allocation3 + $0x2d0] sm:$0xf]
        %v4487 = vld [vmem:[#allocation3 + $0x2e8] sm:$0xf]
        %v4488 = vld [vmem:[#allocation3 + $0xc] sm:$0xf]
        %v4489 = vld [vmem:[#allocation3 + $0x24] sm:$0xf]
        %v4490 = vld [vmem:[#allocation3 + $0x3c] sm:$0xf]
        %v4491 = vld [vmem:[#allocation3 + $0x54] sm:$0xf]
        %v4492 = vld [vmem:[#allocation3 + $0x6c] sm:$0xf]
        %v4493 = vld [vmem:[#allocation3 + $0x84] sm:$0xf]
        %v4494 = vld [vmem:[#allocation3 + $0x9c] sm:$0xf]
        %v4495 = vld [vmem:[#allocation3 + $0xb4] sm:$0xf]
        %v4496 = vld [vmem:[#allocation3 + $0xcc] sm:$0xf]
        %v4497 = vld [vmem:[#allocation3 + $0xe4] sm:$0xf]
        %v4498 = vld [vmem:[#allocation3 + $0xfc] sm:$0xf]
        %v4499 = vld [vmem:[#allocation3 + $0x114] sm:$0xf]
        %v4500 = vld [vmem:[#allocation3 + $0x12c] sm:$0xf]
        %v4501 = vld [vmem:[#allocation3 + $0x144] sm:$0xf]
        %v4502 = vld [vmem:[#allocation3 + $0x15c] sm:$0xf]
        %v4503 = vld [vmem:[#allocation3 + $0x174] sm:$0xf]
        %v4504 = vld [vmem:[#allocation3 + $0x18c] sm:$0xf]
        %v4505 = vld [vmem:[#allocation3 + $0x1a4] sm:$0xf]
        %v4506 = vld [vmem:[#allocation3 + $0x1bc] sm:$0xf]
        %v4507 = vld [vmem:[#allocation3 + $0x1d4] sm:$0xf]
        %v4508 = vld [vmem:[#allocation3 + $0x1ec] sm:$0xf]
        %v4509 = vld [vmem:[#allocation3 + $0x204] sm:$0xf]
        %v4510 = vld [vmem:[#allocation3 + $0x21c] sm:$0xf]
        %v4511 = vld [vmem:[#allocation3 + $0x234] sm:$0xf]
        %v4512 = vld [vmem:[#allocation3 + $0x24c] sm:$0xf]
        %v4513 = vld [vmem:[#allocation3 + $0x264] sm:$0xf]
        %v4514 = vld [vmem:[#allocation3 + $0x27c] sm:$0xf]
        %v4515 = vld [vmem:[#allocation3 + $0x294] sm:$0xf]
        %v4516 = vld [vmem:[#allocation3 + $0x2ac] sm:$0xf]
        %v4517 = vld [vmem:[#allocation3 + $0x2c4] sm:$0xf]
        %v4518 = vld [vmem:[#allocation3 + $0x2dc] sm:$0xf]
        %v4519 = vld [vmem:[#allocation3 + $0x2f4] sm:$0xf]
        %v4536 = vunpack.c.l.b16 %v4440
        %v4537 = vunpack.c.l.b16 %v4441
        %v4538 = vunpack.c.l.b16 %v4442
        %v4539 = vunpack.c.l.b16 %v4443
        %v4540 = vunpack.c.l.b16 %v4444
        %v4541 = vunpack.c.l.b16 %v4445
        %v4542 = vunpack.c.l.b16 %v4446
        %v4543 = vunpack.c.l.b16 %v4447
        %v4544 = vunpack.c.l.b16 %v4448
        %v4545 = vunpack.c.l.b16 %v4449
        %v4546 = vunpack.c.l.b16 %v4450
        %v4547 = vunpack.c.l.b16 %v4451
        %v4548 = vunpack.c.l.b16 %v4452
        %v4549 = vunpack.c.l.b16 %v4453
        %v4550 = vunpack.c.l.b16 %v4454
        %v4551 = vunpack.c.l.b16 %v4455
        %v4552 = vpack.c.b16 %v4537, %v4536
        %v4553 = vpack.c.b16 %v4539, %v4538
        %v4554 = vpack.c.b16 %v4541, %v4540
        %v4555 = vpack.c.b16 %v4543, %v4542
        %v4556 = vpack.c.b16 %v4545, %v4544
        %v4557 = vpack.c.b16 %v4547, %v4546
        %v4558 = vpack.c.b16 %v4549, %v4548
        %v4559 = vpack.c.b16 %v4551, %v4550
        %v4592 = vunpack.c.l.b16 %v4456
        %v4593 = vunpack.c.l.b16 %v4457
        %v4594 = vunpack.c.l.b16 %v4458
        %v4595 = vunpack.c.l.b16 %v4459
        %v4596 = vunpack.c.l.b16 %v4460
        %v4597 = vunpack.c.l.b16 %v4461
        %v4598 = vunpack.c.l.b16 %v4462
        %v4599 = vunpack.c.l.b16 %v4463
        %v4600 = vunpack.c.l.b16 %v4464
        %v4601 = vunpack.c.l.b16 %v4465
        %v4602 = vunpack.c.l.b16 %v4466
        %v4603 = vunpack.c.l.b16 %v4467
        %v4604 = vunpack.c.l.b16 %v4468
        %v4605 = vunpack.c.l.b16 %v4469
        %v4606 = vunpack.c.l.b16 %v4470
        %v4607 = vunpack.c.l.b16 %v4471
        %v4608 = vunpack.c.l.b16 %v4472
        %v4609 = vunpack.c.l.b16 %v4473
        %v4610 = vunpack.c.l.b16 %v4474
        %v4611 = vunpack.c.l.b16 %v4475
        %v4612 = vunpack.c.l.b16 %v4476
        %v4613 = vunpack.c.l.b16 %v4477
        %v4614 = vunpack.c.l.b16 %v4478
        %v4615 = vunpack.c.l.b16 %v4479
        %v4616 = vunpack.c.l.b16 %v4480
        %v4617 = vunpack.c.l.b16 %v4481
        %v4618 = vunpack.c.l.b16 %v4482
        %v4619 = vunpack.c.l.b16 %v4483
        %v4620 = vunpack.c.l.b16 %v4484
        %v4621 = vunpack.c.l.b16 %v4485
        %v4622 = vunpack.c.l.b16 %v4486
        %v4623 = vunpack.c.l.b16 %v4487
        %v4624 = vpack.c.b16 %v4593, %v4592
        %v4625 = vpack.c.b16 %v4595, %v4594
        %v4626 = vpack.c.b16 %v4597, %v4596
        %v4627 = vpack.c.b16 %v4599, %v4598
        %v4628 = vpack.c.b16 %v4601, %v4600
        %v4629 = vpack.c.b16 %v4603, %v4602
        %v4630 = vpack.c.b16 %v4605, %v4604
        %v4631 = vpack.c.b16 %v4607, %v4606
        %v4632 = vpack.c.b16 %v4609, %v4608
        %v4633 = vpack.c.b16 %v4611, %v4610
        %v4634 = vpack.c.b16 %v4613, %v4612
        %v4635 = vpack.c.b16 %v4615, %v4614
        %v4636 = vpack.c.b16 %v4617, %v4616
        %v4637 = vpack.c.b16 %v4619, %v4618
        %v4638 = vpack.c.b16 %v4621, %v4620
        %v4639 = vpack.c.b16 %v4623, %v4622
        %vm4640 = vcmask 523264
        %v4642 = vsel %vm4640, %v4552, 0
        %v4645 = vsel %vm4640, %v4553, 0
        %v4648 = vsel %vm4640, %v4554, 0
        %v4651 = vsel %vm4640, %v4555, 0
        %v4654 = vsel %vm4640, %v4556, 0
        %v4657 = vsel %vm4640, %v4557, 0
        %v4660 = vsel %vm4640, %v4558, 0
        %v4663 = vsel %vm4640, %v4559, 0
        %v4666 = vsel %vm4640, %v4624, 0
        %v4669 = vsel %vm4640, %v4625, 0
        %v4672 = vsel %vm4640, %v4626, 0
        %v4675 = vsel %vm4640, %v4627, 0
        %v4678 = vsel %vm4640, %v4628, 0
        %v4681 = vsel %vm4640, %v4629, 0
        %v4684 = vsel %vm4640, %v4630, 0
        %v4687 = vsel %vm4640, %v4631, 0
        %v4690 = vsel %vm4640, %v4632, 0
        %v4693 = vsel %vm4640, %v4633, 0
        %v4696 = vsel %vm4640, %v4634, 0
        %v4699 = vsel %vm4640, %v4635, 0
        %v4702 = vsel %vm4640, %v4636, 0
        %v4705 = vsel %vm4640, %v4637, 0
        %v4708 = vsel %vm4640, %v4638, 0
        %v4711 = vsel %vm4640, %v4639, 0
        %4713 = vmatpush.bf16.xpose.msra.mxu0 %v4687
        %4714 = vmatpush.bf16.xpose.msra.mxu0 %v4684
        %4715 = vmatpush.bf16.xpose.msra.mxu0 %v4681
        %4716 = vmatpush.bf16.xpose.msra.mxu0 %v4678
        %4717 = vmatpush.bf16.xpose.msra.mxu0 %v4675
        %4718 = vmatpush.bf16.xpose.msra.mxu0 %v4672
        %4719 = vmatpush.bf16.xpose.msra.mxu0 %v4669
        %4720 = vmatpush.bf16.xpose.msra.mxu0 %v4666
        %4721 = vmatmul.bf16.gmra.mxu0 %v4642
        %v4722 = vpop.f32.mrf.mxu0
        %v4723 = vadd.f32 0.0, %v4722
        %v4724 = vpop.f32.mrf.mxu0
        %v4725 = vadd.f32 0.0, %v4724
        %4726 = vmatmul.bf16.gmra.mxu0 %v4645
        %v4727 = vpop.f32.mrf.mxu0
        %v4728 = vadd.f32 0.0, %v4727
        %v4729 = vpop.f32.mrf.mxu0
        %v4730 = vadd.f32 0.0, %v4729
        %4731 = vmatmul.bf16.gmra.mxu0 %v4648
        %v4732 = vpop.f32.mrf.mxu0
        %v4733 = vadd.f32 0.0, %v4732
        %v4734 = vpop.f32.mrf.mxu0
        %v4735 = vadd.f32 0.0, %v4734
        %4736 = vmatmul.bf16.gmra.mxu0 %v4651
        %v4737 = vpop.f32.mrf.mxu0
        %v4738 = vadd.f32 0.0, %v4737
        %v4739 = vpop.f32.mrf.mxu0
        %v4740 = vadd.f32 0.0, %v4739
        %4741 = vmatmul.bf16.gmra.mxu0 %v4654
        %v4742 = vpop.f32.mrf.mxu0
        %v4743 = vadd.f32 0.0, %v4742
        %v4744 = vpop.f32.mrf.mxu0
        %v4745 = vadd.f32 0.0, %v4744
        %4746 = vmatmul.bf16.gmra.mxu0 %v4657
        %v4747 = vpop.f32.mrf.mxu0
        %v4748 = vadd.f32 0.0, %v4747
        %v4749 = vpop.f32.mrf.mxu0
        %v4750 = vadd.f32 0.0, %v4749
        %4751 = vmatmul.bf16.gmra.mxu0 %v4660
        %v4752 = vpop.f32.mrf.mxu0
        %v4753 = vadd.f32 0.0, %v4752
        %v4754 = vpop.f32.mrf.mxu0
        %v4755 = vadd.f32 0.0, %v4754
        %4756 = vmatmul.bf16.gmra.mxu0 %v4663
        %v4757 = vpop.f32.mrf.mxu0
        %v4758 = vadd.f32 0.0, %v4757
        %v4759 = vpop.f32.mrf.mxu0
        %v4760 = vadd.f32 0.0, %v4759
        %4761 = vdwg.mxu0
        %4762 = vmatpush.bf16.xpose.msra.mxu0 %v4711
        %4763 = vmatpush.bf16.xpose.msra.mxu0 %v4708
        %4764 = vmatpush.bf16.xpose.msra.mxu0 %v4705
        %4765 = vmatpush.bf16.xpose.msra.mxu0 %v4702
        %4766 = vmatpush.bf16.xpose.msra.mxu0 %v4699
        %4767 = vmatpush.bf16.xpose.msra.mxu0 %v4696
        %4768 = vmatpush.bf16.xpose.msra.mxu0 %v4693
        %4769 = vmatpush.bf16.xpose.msra.mxu0 %v4690
        %4770 = vmatmul.bf16.gmra.mxu0 %v4642
        %v4771 = vpop.f32.mrf.mxu0
        %v4772 = vadd.f32 0.0, %v4771
        %v4773 = vpop.f32.mrf.mxu0
        %v4774 = vadd.f32 0.0, %v4773
        %4775 = vmatmul.bf16.gmra.mxu0 %v4645
        %v4776 = vpop.f32.mrf.mxu0
        %v4777 = vadd.f32 0.0, %v4776
        %v4778 = vpop.f32.mrf.mxu0
        %v4779 = vadd.f32 0.0, %v4778
        %4780 = vmatmul.bf16.gmra.mxu0 %v4648
        %v4781 = vpop.f32.mrf.mxu0
        %v4782 = vadd.f32 0.0, %v4781
        %v4783 = vpop.f32.mrf.mxu0
        %v4784 = vadd.f32 0.0, %v4783
        %4785 = vmatmul.bf16.gmra.mxu0 %v4651
        %v4786 = vpop.f32.mrf.mxu0
        %v4787 = vadd.f32 0.0, %v4786
        %v4788 = vpop.f32.mrf.mxu0
        %v4789 = vadd.f32 0.0, %v4788
        %4790 = vmatmul.bf16.gmra.mxu0 %v4654
        %v4791 = vpop.f32.mrf.mxu0
        %v4792 = vadd.f32 0.0, %v4791
        %v4793 = vpop.f32.mrf.mxu0
        %v4794 = vadd.f32 0.0, %v4793
        %4795 = vmatmul.bf16.gmra.mxu0 %v4657
        %v4796 = vpop.f32.mrf.mxu0
        %v4797 = vadd.f32 0.0, %v4796
        %v4798 = vpop.f32.mrf.mxu0
        %v4799 = vadd.f32 0.0, %v4798
        %4800 = vmatmul.bf16.gmra.mxu0 %v4660
        %v4801 = vpop.f32.mrf.mxu0
        %v4802 = vadd.f32 0.0, %v4801
        %v4803 = vpop.f32.mrf.mxu0
        %v4804 = vadd.f32 0.0, %v4803
        %4805 = vmatmul.bf16.gmra.mxu0 %v4663
        %v4806 = vpop.f32.mrf.mxu0
        %v4807 = vadd.f32 0.0, %v4806
        %v4808 = vpop.f32.mrf.mxu0
        %v4809 = vadd.f32 0.0, %v4808
        %4810 = vdwg.mxu0
        %v4811 = vsel %vm4408, %v4723, -inf
        %v4812 = vsel %vm4409, %v4772, -inf
        %v4813 = vsel %vm4410, %v4725, -inf
        %v4814 = vsel %vm4411, %v4774, -inf
        %v4815 = vsel %vm4412, %v4728, -inf
        %v4816 = vsel %vm4413, %v4777, -inf
        %v4817 = vsel %vm4414, %v4730, -inf
        %v4818 = vsel %vm4415, %v4779, -inf
        %v4819 = vsel %vm4416, %v4733, -inf
        %v4820 = vsel %vm4417, %v4782, -inf
        %v4821 = vsel %vm4418, %v4735, -inf
        %v4822 = vsel %vm4419, %v4784, -inf
        %v4823 = vsel %vm4420, %v4738, -inf
        %v4824 = vsel %vm4421, %v4787, -inf
        %v4825 = vsel %vm4422, %v4740, -inf
        %v4826 = vsel %vm4423, %v4789, -inf
        %v4827 = vsel %vm4424, %v4743, -inf
        %v4828 = vsel %vm4425, %v4792, -inf
        %v4829 = vsel %vm4426, %v4745, -inf
        %v4830 = vsel %vm4427, %v4794, -inf
        %v4831 = vsel %vm4428, %v4748, -inf
        %v4832 = vsel %vm4429, %v4797, -inf
        %v4833 = vsel %vm4430, %v4750, -inf
        %v4834 = vsel %vm4431, %v4799, -inf
        %v4835 = vsel %vm4432, %v4753, -inf
        %v4836 = vsel %vm4433, %v4802, -inf
        %v4837 = vsel %vm4434, %v4755, -inf
        %v4838 = vsel %vm4435, %v4804, -inf
        %v4839 = vsel %vm4436, %v4758, -inf
        %v4840 = vsel %vm4437, %v4807, -inf
        %v4841 = vsel %vm4438, %v4760, -inf
        %v4842 = vsel %vm4439, %v4809, -inf
        %v4843 = vmax.f32 %v4811, %v4812
        %4844 = vmax.xlane.f32.xlu0 %v4843
        %v4845 = vpop.xlane.xlu0 %4844
        %v4846 = vmax.f32 %v4813, %v4814
        %4847 = vmax.xlane.f32.xlu0 %v4846
        %v4848 = vpop.xlane.xlu0 %4847
        %v4849 = vmax.f32 %v4815, %v4816
        %4850 = vmax.xlane.f32.xlu0 %v4849
        %v4851 = vpop.xlane.xlu0 %4850
        %v4852 = vmax.f32 %v4817, %v4818
        %4853 = vmax.xlane.f32.xlu0 %v4852
        %v4854 = vpop.xlane.xlu0 %4853
        %v4855 = vmax.f32 %v4819, %v4820
        %4856 = vmax.xlane.f32.xlu0 %v4855
        %v4857 = vpop.xlane.xlu0 %4856
        %v4858 = vmax.f32 %v4821, %v4822
        %4859 = vmax.xlane.f32.xlu0 %v4858
        %v4860 = vpop.xlane.xlu0 %4859
        %v4861 = vmax.f32 %v4823, %v4824
        %4862 = vmax.xlane.f32.xlu0 %v4861
        %v4863 = vpop.xlane.xlu0 %4862
        %v4864 = vmax.f32 %v4825, %v4826
        %4865 = vmax.xlane.f32.xlu0 %v4864
        %v4866 = vpop.xlane.xlu0 %4865
        %v4867 = vmax.f32 %v4827, %v4828
        %4868 = vmax.xlane.f32.xlu0 %v4867
        %v4869 = vpop.xlane.xlu0 %4868
        %v4870 = vmax.f32 %v4829, %v4830
        %4871 = vmax.xlane.f32.xlu0 %v4870
        %v4872 = vpop.xlane.xlu0 %4871
        %v4873 = vmax.f32 %v4831, %v4832
        %4874 = vmax.xlane.f32.xlu0 %v4873
        %v4875 = vpop.xlane.xlu0 %4874
        %v4876 = vmax.f32 %v4833, %v4834
        %4877 = vmax.xlane.f32.xlu0 %v4876
        %v4878 = vpop.xlane.xlu0 %4877
        %v4879 = vmax.f32 %v4835, %v4836
        %4880 = vmax.xlane.f32.xlu0 %v4879
        %v4881 = vpop.xlane.xlu0 %4880
        %v4882 = vmax.f32 %v4837, %v4838
        %4883 = vmax.xlane.f32.xlu0 %v4882
        %v4884 = vpop.xlane.xlu0 %4883
        %v4885 = vmax.f32 %v4839, %v4840
        %4886 = vmax.xlane.f32.xlu0 %v4885
        %v4887 = vpop.xlane.xlu0 %4886
        %v4888 = vmax.f32 %v4841, %v4842
        %4889 = vmax.xlane.f32.xlu0 %v4888
        %v4890 = vpop.xlane.xlu0 %4889
        %v4891 = vsub.f32 %v4811, %v4845
        %v4892 = vsub.f32 %v4812, %v4845
        %v4893 = vsub.f32 %v4813, %v4848
        %v4894 = vsub.f32 %v4814, %v4848
        %v4895 = vsub.f32 %v4815, %v4851
        %v4896 = vsub.f32 %v4816, %v4851
        %v4897 = vsub.f32 %v4817, %v4854
        %v4898 = vsub.f32 %v4818, %v4854
        %v4899 = vsub.f32 %v4819, %v4857
        %v4900 = vsub.f32 %v4820, %v4857
        %v4901 = vsub.f32 %v4821, %v4860
        %v4902 = vsub.f32 %v4822, %v4860
        %v4903 = vsub.f32 %v4823, %v4863
        %v4904 = vsub.f32 %v4824, %v4863
        %v4905 = vsub.f32 %v4825, %v4866
        %v4906 = vsub.f32 %v4826, %v4866
        %v4907 = vsub.f32 %v4827, %v4869
        %v4908 = vsub.f32 %v4828, %v4869
        %v4909 = vsub.f32 %v4829, %v4872
        %v4910 = vsub.f32 %v4830, %v4872
        %v4911 = vsub.f32 %v4831, %v4875
        %v4912 = vsub.f32 %v4832, %v4875
        %v4913 = vsub.f32 %v4833, %v4878
        %v4914 = vsub.f32 %v4834, %v4878
        %v4915 = vsub.f32 %v4835, %v4881
        %v4916 = vsub.f32 %v4836, %v4881
        %v4917 = vsub.f32 %v4837, %v4884
        %v4918 = vsub.f32 %v4838, %v4884
        %v4919 = vsub.f32 %v4839, %v4887
        %v4920 = vsub.f32 %v4840, %v4887
        %v4921 = vsub.f32 %v4841, %v4890
        %v4922 = vsub.f32 %v4842, %v4890
        %v4923 = vmul.f32 %v4891, 1.442695
        %v4924 = vpow.pop %v4923
        %v4925 = vmul.f32 %v4892, 1.442695
        %v4926 = vpow.pop %v4925
        %v4927 = vmul.f32 %v4893, 1.442695
        %v4928 = vpow.pop %v4927
        %v4929 = vmul.f32 %v4894, 1.442695
        %v4930 = vpow.pop %v4929
        %v4931 = vmul.f32 %v4895, 1.442695
        %v4932 = vpow.pop %v4931
        %v4933 = vmul.f32 %v4896, 1.442695
        %v4934 = vpow.pop %v4933
        %v4935 = vmul.f32 %v4897, 1.442695
        %v4936 = vpow.pop %v4935
        %v4937 = vmul.f32 %v4898, 1.442695
        %v4938 = vpow.pop %v4937
        %v4939 = vmul.f32 %v4899, 1.442695
        %v4940 = vpow.pop %v4939
        %v4941 = vmul.f32 %v4900, 1.442695
        %v4942 = vpow.pop %v4941
        %v4943 = vmul.f32 %v4901, 1.442695
        %v4944 = vpow.pop %v4943
        %v4945 = vmul.f32 %v4902, 1.442695
        %v4946 = vpow.pop %v4945
        %v4947 = vmul.f32 %v4903, 1.442695
        %v4948 = vpow.pop %v4947
        %v4949 = vmul.f32 %v4904, 1.442695
        %v4950 = vpow.pop %v4949
        %v4951 = vmul.f32 %v4905, 1.442695
        %v4952 = vpow.pop %v4951
        %v4953 = vmul.f32 %v4906, 1.442695
        %v4954 = vpow.pop %v4953
        %v4955 = vmul.f32 %v4907, 1.442695
        %v4956 = vpow.pop %v4955
        %v4957 = vmul.f32 %v4908, 1.442695
        %v4958 = vpow.pop %v4957
        %v4959 = vmul.f32 %v4909, 1.442695
        %v4960 = vpow.pop %v4959
        %v4961 = vmul.f32 %v4910, 1.442695
        %v4962 = vpow.pop %v4961
        %v4963 = vmul.f32 %v4911, 1.442695
        %v4964 = vpow.pop %v4963
        %v4965 = vmul.f32 %v4912, 1.442695
        %v4966 = vpow.pop %v4965
        %v4967 = vmul.f32 %v4913, 1.442695
        %v4968 = vpow.pop %v4967
        %v4969 = vmul.f32 %v4914, 1.442695
        %v4970 = vpow.pop %v4969
        %v4971 = vmul.f32 %v4915, 1.442695
        %v4972 = vpow.pop %v4971
        %v4973 = vmul.f32 %v4916, 1.442695
        %v4974 = vpow.pop %v4973
        %v4975 = vmul.f32 %v4917, 1.442695
        %v4976 = vpow.pop %v4975
        %v4977 = vmul.f32 %v4918, 1.442695
        %v4978 = vpow.pop %v4977
        %v4979 = vmul.f32 %v4919, 1.442695
        %v4980 = vpow.pop %v4979
        %v4981 = vmul.f32 %v4920, 1.442695
        %v4982 = vpow.pop %v4981
        %v4983 = vmul.f32 %v4921, 1.442695
        %v4984 = vpow.pop %v4983
        %v4985 = vmul.f32 %v4922, 1.442695
        %v4986 = vpow.pop %v4985
        %v4987 = vadd.f32 %v4924, %v4926
        %4988 = vadd.xlane.f32.xlu0 %v4987
        %v4989 = vpop.xlane.xlu0 %4988
        %v4990 = vadd.f32 %v4928, %v4930
        %4991 = vadd.xlane.f32.xlu0 %v4990
        %v4992 = vpop.xlane.xlu0 %4991
        %v4993 = vadd.f32 %v4932, %v4934
        %4994 = vadd.xlane.f32.xlu0 %v4993
        %v4995 = vpop.xlane.xlu0 %4994
        %v4996 = vadd.f32 %v4936, %v4938
        %4997 = vadd.xlane.f32.xlu0 %v4996
        %v4998 = vpop.xlane.xlu0 %4997
        %v4999 = vadd.f32 %v4940, %v4942
        %5000 = vadd.xlane.f32.xlu0 %v4999
        %v5001 = vpop.xlane.xlu0 %5000
        %v5002 = vadd.f32 %v4944, %v4946
        %5003 = vadd.xlane.f32.xlu0 %v5002
        %v5004 = vpop.xlane.xlu0 %5003
        %v5005 = vadd.f32 %v4948, %v4950
        %5006 = vadd.xlane.f32.xlu0 %v5005
        %v5007 = vpop.xlane.xlu0 %5006
        %v5008 = vadd.f32 %v4952, %v4954
        %5009 = vadd.xlane.f32.xlu0 %v5008
        %v5010 = vpop.xlane.xlu0 %5009
        %v5011 = vadd.f32 %v4956, %v4958
        %5012 = vadd.xlane.f32.xlu0 %v5011
        %v5013 = vpop.xlane.xlu0 %5012
        %v5014 = vadd.f32 %v4960, %v4962
        %5015 = vadd.xlane.f32.xlu0 %v5014
        %v5016 = vpop.xlane.xlu0 %5015
        %v5017 = vadd.f32 %v4964, %v4966
        %5018 = vadd.xlane.f32.xlu0 %v5017
        %v5019 = vpop.xlane.xlu0 %5018
        %v5020 = vadd.f32 %v4968, %v4970
        %5021 = vadd.xlane.f32.xlu0 %v5020
        %v5022 = vpop.xlane.xlu0 %5021
        %v5023 = vadd.f32 %v4972, %v4974
        %5024 = vadd.xlane.f32.xlu0 %v5023
        %v5025 = vpop.xlane.xlu0 %5024
        %v5026 = vadd.f32 %v4976, %v4978
        %5027 = vadd.xlane.f32.xlu0 %v5026
        %v5028 = vpop.xlane.xlu0 %5027
        %v5029 = vadd.f32 %v4980, %v4982
        %5030 = vadd.xlane.f32.xlu0 %v5029
        %v5031 = vpop.xlane.xlu0 %5030
        %v5032 = vadd.f32 %v4984, %v4986
        %5033 = vadd.xlane.f32.xlu0 %v5032
        %v5034 = vpop.xlane.xlu0 %5033
        %v5035 = vrcp.pop %v4989
        %v5036 = vrcp.pop %v4992
        %v5037 = vrcp.pop %v4995
        %v5038 = vrcp.pop %v4998
        %v5039 = vrcp.pop %v5001
        %v5040 = vrcp.pop %v5004
        %v5041 = vrcp.pop %v5007
        %v5042 = vrcp.pop %v5010
        %v5043 = vrcp.pop %v5013
        %v5044 = vrcp.pop %v5016
        %v5045 = vrcp.pop %v5019
        %v5046 = vrcp.pop %v5022
        %v5047 = vrcp.pop %v5025
        %v5048 = vrcp.pop %v5028
        %v5049 = vrcp.pop %v5031
        %v5050 = vrcp.pop %v5034
        %v5051 = vmul.f32 %v4924, %v5035
        %v5052 = vmul.f32 %v4926, %v5035
        %v5053 = vmul.f32 %v4928, %v5036
        %v5054 = vmul.f32 %v4930, %v5036
        %v5055 = vmul.f32 %v4932, %v5037
        %v5056 = vmul.f32 %v4934, %v5037
        %v5057 = vmul.f32 %v4936, %v5038
        %v5058 = vmul.f32 %v4938, %v5038
        %v5059 = vmul.f32 %v4940, %v5039
        %v5060 = vmul.f32 %v4942, %v5039
        %v5061 = vmul.f32 %v4944, %v5040
        %v5062 = vmul.f32 %v4946, %v5040
        %v5063 = vmul.f32 %v4948, %v5041
        %v5064 = vmul.f32 %v4950, %v5041
        %v5065 = vmul.f32 %v4952, %v5042
        %v5066 = vmul.f32 %v4954, %v5042
        %v5067 = vmul.f32 %v4956, %v5043
        %v5068 = vmul.f32 %v4958, %v5043
        %v5069 = vmul.f32 %v4960, %v5044
        %v5070 = vmul.f32 %v4962, %v5044
        %v5071 = vmul.f32 %v4964, %v5045
        %v5072 = vmul.f32 %v4966, %v5045
        %v5073 = vmul.f32 %v4968, %v5046
        %v5074 = vmul.f32 %v4970, %v5046
        %v5075 = vmul.f32 %v4972, %v5047
        %v5076 = vmul.f32 %v4974, %v5047
        %v5077 = vmul.f32 %v4976, %v5048
        %v5078 = vmul.f32 %v4978, %v5048
        %v5079 = vmul.f32 %v4980, %v5049
        %v5080 = vmul.f32 %v4982, %v5049
        %v5081 = vmul.f32 %v4984, %v5050
        %v5082 = vmul.f32 %v4986, %v5050
        %v5083 = vpack.c.bf16 %v5053, %v5051
        %v5084 = vpack.c.bf16 %v5054, %v5052
        %v5085 = vpack.c.bf16 %v5057, %v5055
        %v5086 = vpack.c.bf16 %v5058, %v5056
        %v5087 = vpack.c.bf16 %v5061, %v5059
        %v5088 = vpack.c.bf16 %v5062, %v5060
        %v5089 = vpack.c.bf16 %v5065, %v5063
        %v5090 = vpack.c.bf16 %v5066, %v5064
        %v5091 = vpack.c.bf16 %v5069, %v5067
        %v5092 = vpack.c.bf16 %v5070, %v5068
        %v5093 = vpack.c.bf16 %v5073, %v5071
        %v5094 = vpack.c.bf16 %v5074, %v5072
        %v5095 = vpack.c.bf16 %v5077, %v5075
        %v5096 = vpack.c.bf16 %v5078, %v5076
        %v5097 = vpack.c.bf16 %v5081, %v5079
        %v5098 = vpack.c.bf16 %v5082, %v5080
        %v5131 = vunpack.c.l.b16 %v4488
        %v5132 = vunpack.c.l.b16 %v4489
        %v5133 = vunpack.c.l.b16 %v4490
        %v5134 = vunpack.c.l.b16 %v4491
        %v5135 = vunpack.c.l.b16 %v4492
        %v5136 = vunpack.c.l.b16 %v4493
        %v5137 = vunpack.c.l.b16 %v4494
        %v5138 = vunpack.c.l.b16 %v4495
        %v5139 = vunpack.c.l.b16 %v4496
        %v5140 = vunpack.c.l.b16 %v4497
        %v5141 = vunpack.c.l.b16 %v4498
        %v5142 = vunpack.c.l.b16 %v4499
        %v5143 = vunpack.c.l.b16 %v4500
        %v5144 = vunpack.c.l.b16 %v4501
        %v5145 = vunpack.c.l.b16 %v4502
        %v5146 = vunpack.c.l.b16 %v4503
        %v5147 = vunpack.c.l.b16 %v4504
        %v5148 = vunpack.c.l.b16 %v4505
        %v5149 = vunpack.c.l.b16 %v4506
        %v5150 = vunpack.c.l.b16 %v4507
        %v5151 = vunpack.c.l.b16 %v4508
        %v5152 = vunpack.c.l.b16 %v4509
        %v5153 = vunpack.c.l.b16 %v4510
        %v5154 = vunpack.c.l.b16 %v4511
        %v5155 = vunpack.c.l.b16 %v4512
        %v5156 = vunpack.c.l.b16 %v4513
        %v5157 = vunpack.c.l.b16 %v4514
        %v5158 = vunpack.c.l.b16 %v4515
        %v5159 = vunpack.c.l.b16 %v4516
        %v5160 = vunpack.c.l.b16 %v4517
        %v5161 = vunpack.c.l.b16 %v4518
        %v5162 = vunpack.c.l.b16 %v4519
        %v5163 = vpack.c.b16 %v5132, %v5131
        %v5164 = vpack.c.b16 %v5134, %v5133
        %v5165 = vpack.c.b16 %v5136, %v5135
        %v5166 = vpack.c.b16 %v5138, %v5137
        %v5167 = vpack.c.b16 %v5140, %v5139
        %v5168 = vpack.c.b16 %v5142, %v5141
        %v5169 = vpack.c.b16 %v5144, %v5143
        %v5170 = vpack.c.b16 %v5146, %v5145
        %v5171 = vpack.c.b16 %v5148, %v5147
        %v5172 = vpack.c.b16 %v5150, %v5149
        %v5173 = vpack.c.b16 %v5152, %v5151
        %v5174 = vpack.c.b16 %v5154, %v5153
        %v5175 = vpack.c.b16 %v5156, %v5155
        %v5176 = vpack.c.b16 %v5158, %v5157
        %v5177 = vpack.c.b16 %v5160, %v5159
        %v5178 = vpack.c.b16 %v5162, %v5161
        %5195 = vmatpush.bf16.msra.mxu0 %v5170
        %5196 = vmatpush.bf16.msra.mxu0 %v5169
        %5197 = vmatpush.bf16.msra.mxu0 %v5168
        %5198 = vmatpush.bf16.msra.mxu0 %v5167
        %5199 = vmatpush.bf16.msra.mxu0 %v5166
        %5200 = vmatpush.bf16.msra.mxu0 %v5165
        %5201 = vmatpush.bf16.msra.mxu0 %v5164
        %5202 = vmatpush.bf16.msra.mxu0 %v5163
        %5203 = vmatmul.bf16.gmra.mxu0 %v5083
        %v5204 = vpop.f32.mrf.mxu0
        %v5205 = vadd.f32 0.0, %v5204
        %v5206 = vpop.f32.mrf.mxu0
        %v5207 = vadd.f32 0.0, %v5206
        %5208 = vmatmul.bf16.gmra.mxu0 %v5085
        %v5209 = vpop.f32.mrf.mxu0
        %v5210 = vadd.f32 0.0, %v5209
        %v5211 = vpop.f32.mrf.mxu0
        %v5212 = vadd.f32 0.0, %v5211
        %5213 = vmatmul.bf16.gmra.mxu0 %v5087
        %v5214 = vpop.f32.mrf.mxu0
        %v5215 = vadd.f32 0.0, %v5214
        %v5216 = vpop.f32.mrf.mxu0
        %v5217 = vadd.f32 0.0, %v5216
        %5218 = vmatmul.bf16.gmra.mxu0 %v5089
        %v5219 = vpop.f32.mrf.mxu0
        %v5220 = vadd.f32 0.0, %v5219
        %v5221 = vpop.f32.mrf.mxu0
        %v5222 = vadd.f32 0.0, %v5221
        %5223 = vmatmul.bf16.gmra.mxu0 %v5091
        %v5224 = vpop.f32.mrf.mxu0
        %v5225 = vadd.f32 0.0, %v5224
        %v5226 = vpop.f32.mrf.mxu0
        %v5227 = vadd.f32 0.0, %v5226
        %5228 = vmatmul.bf16.gmra.mxu0 %v5093
        %v5229 = vpop.f32.mrf.mxu0
        %v5230 = vadd.f32 0.0, %v5229
        %v5231 = vpop.f32.mrf.mxu0
        %v5232 = vadd.f32 0.0, %v5231
        %5233 = vmatmul.bf16.gmra.mxu0 %v5095
        %v5234 = vpop.f32.mrf.mxu0
        %v5235 = vadd.f32 0.0, %v5234
        %v5236 = vpop.f32.mrf.mxu0
        %v5237 = vadd.f32 0.0, %v5236
        %5238 = vmatmul.bf16.gmra.mxu0 %v5097
        %v5239 = vpop.f32.mrf.mxu0
        %v5240 = vadd.f32 0.0, %v5239
        %v5241 = vpop.f32.mrf.mxu0
        %v5242 = vadd.f32 0.0, %v5241
        %5243 = vdwg.mxu0
        %5244 = vmatpush.bf16.msra.mxu0 %v5178
        %5245 = vmatpush.bf16.msra.mxu0 %v5177
        %5246 = vmatpush.bf16.msra.mxu0 %v5176
        %5247 = vmatpush.bf16.msra.mxu0 %v5175
        %5248 = vmatpush.bf16.msra.mxu0 %v5174
        %5249 = vmatpush.bf16.msra.mxu0 %v5173
        %5250 = vmatpush.bf16.msra.mxu0 %v5172
        %5251 = vmatpush.bf16.msra.mxu0 %v5171
        %5252 = vmatmul.bf16.gmra.mxu0 %v5084
        %v5253 = vpop.f32.mrf.mxu0
        %v5254 = vadd.f32 %v5205, %v5253
        %v5255 = vpop.f32.mrf.mxu0
        %v5256 = vadd.f32 %v5207, %v5255
        %5257 = vmatmul.bf16.gmra.mxu0 %v5086
        %v5258 = vpop.f32.mrf.mxu0
        %v5259 = vadd.f32 %v5210, %v5258
        %v5260 = vpop.f32.mrf.mxu0
        %v5261 = vadd.f32 %v5212, %v5260
        %5262 = vmatmul.bf16.gmra.mxu0 %v5088
        %v5263 = vpop.f32.mrf.mxu0
        %v5264 = vadd.f32 %v5215, %v5263
        %v5265 = vpop.f32.mrf.mxu0
        %v5266 = vadd.f32 %v5217, %v5265
        %5267 = vmatmul.bf16.gmra.mxu0 %v5090
        %v5268 = vpop.f32.mrf.mxu0
        %v5269 = vadd.f32 %v5220, %v5268
        %v5270 = vpop.f32.mrf.mxu0
        %v5271 = vadd.f32 %v5222, %v5270
        %5272 = vmatmul.bf16.gmra.mxu0 %v5092
        %v5273 = vpop.f32.mrf.mxu0
        %v5274 = vadd.f32 %v5225, %v5273
        %v5275 = vpop.f32.mrf.mxu0
        %v5276 = vadd.f32 %v5227, %v5275
        %5277 = vmatmul.bf16.gmra.mxu0 %v5094
        %v5278 = vpop.f32.mrf.mxu0
        %v5279 = vadd.f32 %v5230, %v5278
        %v5280 = vpop.f32.mrf.mxu0
        %v5281 = vadd.f32 %v5232, %v5280
        %5282 = vmatmul.bf16.gmra.mxu0 %v5096
        %v5283 = vpop.f32.mrf.mxu0
        %v5284 = vadd.f32 %v5235, %v5283
        %v5285 = vpop.f32.mrf.mxu0
        %v5286 = vadd.f32 %v5237, %v5285
        %5287 = vmatmul.bf16.gmra.mxu0 %v5098
        %v5288 = vpop.f32.mrf.mxu0
        %v5289 = vadd.f32 %v5240, %v5288
        %v5290 = vpop.f32.mrf.mxu0
        %v5291 = vadd.f32 %v5242, %v5290
        %5292 = vdwg.mxu0
        %v5293 = vpack.c.bf16 %v5254, %v5254
        %v5294 = vpack.c.bf16 %v5256, %v5256
        %v5295 = vpack.c.bf16 %v5259, %v5259
        %v5296 = vpack.c.bf16 %v5261, %v5261
        %v5297 = vpack.c.bf16 %v5264, %v5264
        %v5298 = vpack.c.bf16 %v5266, %v5266
        %v5299 = vpack.c.bf16 %v5269, %v5269
        %v5300 = vpack.c.bf16 %v5271, %v5271
        %v5301 = vpack.c.bf16 %v5274, %v5274
        %v5302 = vpack.c.bf16 %v5276, %v5276
        %v5303 = vpack.c.bf16 %v5279, %v5279
        %v5304 = vpack.c.bf16 %v5281, %v5281
        %v5305 = vpack.c.bf16 %v5284, %v5284
        %v5306 = vpack.c.bf16 %v5286, %v5286
        %v5307 = vpack.c.bf16 %v5289, %v5289
        %v5308 = vpack.c.bf16 %v5291, %v5291
        %vm5309 = vcmask 519168
        %5310 = vst.msk [vmem:[#allocation4] sm:$0xf] %vm5309, %v5293
        %5311 = vst.msk [vmem:[#allocation4 + $0xc] sm:$0xf] %vm5309, %v5294
        %5312 = vst.msk [vmem:[#allocation4 + $0x18] sm:$0xf] %vm5309, %v5295
        %5313 = vst.msk [vmem:[#allocation4 + $0x24] sm:$0xf] %vm5309, %v5296
        %5314 = vst.msk [vmem:[#allocation4 + $0x30] sm:$0xf] %vm5309, %v5297
        %5315 = vst.msk [vmem:[#allocation4 + $0x3c] sm:$0xf] %vm5309, %v5298
        %5316 = vst.msk [vmem:[#allocation4 + $0x48] sm:$0xf] %vm5309, %v5299
        %5317 = vst.msk [vmem:[#allocation4 + $0x54] sm:$0xf] %vm5309, %v5300
        %5318 = vst.msk [vmem:[#allocation4 + $0x60] sm:$0xf] %vm5309, %v5301
        %5319 = vst.msk [vmem:[#allocation4 + $0x6c] sm:$0xf] %vm5309, %v5302
        %5320 = vst.msk [vmem:[#allocation4 + $0x78] sm:$0xf] %vm5309, %v5303
        %5321 = vst.msk [vmem:[#allocation4 + $0x84] sm:$0xf] %vm5309, %v5304
        %5322 = vst.msk [vmem:[#allocation4 + $0x90] sm:$0xf] %vm5309, %v5305
        %5323 = vst.msk [vmem:[#allocation4 + $0x9c] sm:$0xf] %vm5309, %v5306
        %5324 = vst.msk [vmem:[#allocation4 + $0xa8] sm:$0xf] %vm5309, %v5307
        %5325 = vst.msk [vmem:[#allocation4 + $0xb4] sm:$0xf] %vm5309, %v5308
        %v5326 = vld [vmem:[#allocation2] sm:$0xf]
        %v5327 = vld [vmem:[#allocation2 + $0xc] sm:$0xf]
        %v5328 = vld [vmem:[#allocation2 + $0x18] sm:$0xf]
        %v5329 = vld [vmem:[#allocation2 + $0x24] sm:$0xf]
        %v5330 = vld [vmem:[#allocation2 + $0x30] sm:$0xf]
        %v5331 = vld [vmem:[#allocation2 + $0x3c] sm:$0xf]
        %v5332 = vld [vmem:[#allocation2 + $0x48] sm:$0xf]
        %v5333 = vld [vmem:[#allocation2 + $0x54] sm:$0xf]
        %v5334 = vld [vmem:[#allocation2 + $0x60] sm:$0xf]
        %v5335 = vld [vmem:[#allocation2 + $0x6c] sm:$0xf]
        %v5336 = vld [vmem:[#allocation2 + $0x78] sm:$0xf]
        %v5337 = vld [vmem:[#allocation2 + $0x84] sm:$0xf]
        %v5338 = vld [vmem:[#allocation2 + $0x90] sm:$0xf]
        %v5339 = vld [vmem:[#allocation2 + $0x9c] sm:$0xf]
        %v5340 = vld [vmem:[#allocation2 + $0xa8] sm:$0xf]
        %v5341 = vld [vmem:[#allocation2 + $0xb4] sm:$0xf]
        %v5342 = vld [vmem:[#allocation3] sm:$0xf]
        %v5343 = vld [vmem:[#allocation3 + $0x18] sm:$0xf]
        %v5344 = vld [vmem:[#allocation3 + $0x30] sm:$0xf]
        %v5345 = vld [vmem:[#allocation3 + $0x48] sm:$0xf]
        %v5346 = vld [vmem:[#allocation3 + $0x60] sm:$0xf]
        %v5347 = vld [vmem:[#allocation3 + $0x78] sm:$0xf]
        %v5348 = vld [vmem:[#allocation3 + $0x90] sm:$0xf]
        %v5349 = vld [vmem:[#allocation3 + $0xa8] sm:$0xf]
        %v5350 = vld [vmem:[#allocation3 + $0xc0] sm:$0xf]
        %v5351 = vld [vmem:[#allocation3 + $0xd8] sm:$0xf]
        %v5352 = vld [vmem:[#allocation3 + $0xf0] sm:$0xf]
        %v5353 = vld [vmem:[#allocation3 + $0x108] sm:$0xf]
        %v5354 = vld [vmem:[#allocation3 + $0x120] sm:$0xf]
        %v5355 = vld [vmem:[#allocation3 + $0x138] sm:$0xf]
        %v5356 = vld [vmem:[#allocation3 + $0x150] sm:$0xf]
        %v5357 = vld [vmem:[#allocation3 + $0x168] sm:$0xf]
        %v5358 = vld [vmem:[#allocation3 + $0x180] sm:$0xf]
        %v5359 = vld [vmem:[#allocation3 + $0x198] sm:$0xf]
        %v5360 = vld [vmem:[#allocation3 + $0x1b0] sm:$0xf]
        %v5361 = vld [vmem:[#allocation3 + $0x1c8] sm:$0xf]
        %v5362 = vld [vmem:[#allocation3 + $0x1e0] sm:$0xf]
        %v5363 = vld [vmem:[#allocation3 + $0x1f8] sm:$0xf]
        %v5364 = vld [vmem:[#allocation3 + $0x210] sm:$0xf]
        %v5365 = vld [vmem:[#allocation3 + $0x228] sm:$0xf]
        %v5366 = vld [vmem:[#allocation3 + $0x240] sm:$0xf]
        %v5367 = vld [vmem:[#allocation3 + $0x258] sm:$0xf]
        %v5368 = vld [vmem:[#allocation3 + $0x270] sm:$0xf]
        %v5369 = vld [vmem:[#allocation3 + $0x288] sm:$0xf]
        %v5370 = vld [vmem:[#allocation3 + $0x2a0] sm:$0xf]
        %v5371 = vld [vmem:[#allocation3 + $0x2b8] sm:$0xf]
        %v5372 = vld [vmem:[#allocation3 + $0x2d0] sm:$0xf]
        %v5373 = vld [vmem:[#allocation3 + $0x2e8] sm:$0xf]
        %v5374 = vld [vmem:[#allocation3 + $0xc] sm:$0xf]
        %v5375 = vld [vmem:[#allocation3 + $0x24] sm:$0xf]
        %v5376 = vld [vmem:[#allocation3 + $0x3c] sm:$0xf]
        %v5377 = vld [vmem:[#allocation3 + $0x54] sm:$0xf]
        %v5378 = vld [vmem:[#allocation3 + $0x6c] sm:$0xf]
        %v5379 = vld [vmem:[#allocation3 + $0x84] sm:$0xf]
        %v5380 = vld [vmem:[#allocation3 + $0x9c] sm:$0xf]
        %v5381 = vld [vmem:[#allocation3 + $0xb4] sm:$0xf]
        %v5382 = vld [vmem:[#allocation3 + $0xcc] sm:$0xf]
        %v5383 = vld [vmem:[#allocation3 + $0xe4] sm:$0xf]
        %v5384 = vld [vmem:[#allocation3 + $0xfc] sm:$0xf]
        %v5385 = vld [vmem:[#allocation3 + $0x114] sm:$0xf]
        %v5386 = vld [vmem:[#allocation3 + $0x12c] sm:$0xf]
        %v5387 = vld [vmem:[#allocation3 + $0x144] sm:$0xf]
        %v5388 = vld [vmem:[#allocation3 + $0x15c] sm:$0xf]
        %v5389 = vld [vmem:[#allocation3 + $0x174] sm:$0xf]
        %v5390 = vld [vmem:[#allocation3 + $0x18c] sm:$0xf]
        %v5391 = vld [vmem:[#allocation3 + $0x1a4] sm:$0xf]
        %v5392 = vld [vmem:[#allocation3 + $0x1bc] sm:$0xf]
        %v5393 = vld [vmem:[#allocation3 + $0x1d4] sm:$0xf]
        %v5394 = vld [vmem:[#allocation3 + $0x1ec] sm:$0xf]
        %v5395 = vld [vmem:[#allocation3 + $0x204] sm:$0xf]
        %v5396 = vld [vmem:[#allocation3 + $0x21c] sm:$0xf]
        %v5397 = vld [vmem:[#allocation3 + $0x234] sm:$0xf]
        %v5398 = vld [vmem:[#allocation3 + $0x24c] sm:$0xf]
        %v5399 = vld [vmem:[#allocation3 + $0x264] sm:$0xf]
        %v5400 = vld [vmem:[#allocation3 + $0x27c] sm:$0xf]
        %v5401 = vld [vmem:[#allocation3 + $0x294] sm:$0xf]
        %v5402 = vld [vmem:[#allocation3 + $0x2ac] sm:$0xf]
        %v5403 = vld [vmem:[#allocation3 + $0x2c4] sm:$0xf]
        %v5404 = vld [vmem:[#allocation3 + $0x2dc] sm:$0xf]
        %v5405 = vld [vmem:[#allocation3 + $0x2f4] sm:$0xf]
        %v5422 = vunpack.c.l.b16 %v5326
        %v5423 = vunpack.c.l.b16 %v5327
        %v5424 = vunpack.c.l.b16 %v5328
        %v5425 = vunpack.c.l.b16 %v5329
        %v5426 = vunpack.c.l.b16 %v5330
        %v5427 = vunpack.c.l.b16 %v5331
        %v5428 = vunpack.c.l.b16 %v5332
        %v5429 = vunpack.c.l.b16 %v5333
        %v5430 = vunpack.c.l.b16 %v5334
        %v5431 = vunpack.c.l.b16 %v5335
        %v5432 = vunpack.c.l.b16 %v5336
        %v5433 = vunpack.c.l.b16 %v5337
        %v5434 = vunpack.c.l.b16 %v5338
        %v5435 = vunpack.c.l.b16 %v5339
        %v5436 = vunpack.c.l.b16 %v5340
        %v5437 = vunpack.c.l.b16 %v5341
        %v5438 = vpack.c.b16 %v5423, %v5422
        %v5439 = vpack.c.b16 %v5425, %v5424
        %v5440 = vpack.c.b16 %v5427, %v5426
        %v5441 = vpack.c.b16 %v5429, %v5428
        %v5442 = vpack.c.b16 %v5431, %v5430
        %v5443 = vpack.c.b16 %v5433, %v5432
        %v5444 = vpack.c.b16 %v5435, %v5434
        %v5445 = vpack.c.b16 %v5437, %v5436
        %5446 = vrot.lane.b32.xlu0 %v5438, 64
        %v5447 = vpop.permute.xlu0 %5446
        %5448 = vrot.lane.b32.xlu0 %v5439, 64
        %v5449 = vpop.permute.xlu0 %5448
        %5450 = vrot.lane.b32.xlu0 %v5440, 64
        %v5451 = vpop.permute.xlu0 %5450
        %5452 = vrot.lane.b32.xlu0 %v5441, 64
        %v5453 = vpop.permute.xlu0 %5452
        %5454 = vrot.lane.b32.xlu0 %v5442, 64
        %v5455 = vpop.permute.xlu0 %5454
        %5456 = vrot.lane.b32.xlu0 %v5443, 64
        %v5457 = vpop.permute.xlu0 %5456
        %5458 = vrot.lane.b32.xlu0 %v5444, 64
        %v5459 = vpop.permute.xlu0 %5458
        %5460 = vrot.lane.b32.xlu0 %v5445, 64
        %v5461 = vpop.permute.xlu0 %5460
        %v5494 = vunpack.c.l.b16 %v5342
        %v5495 = vunpack.c.l.b16 %v5343
        %v5496 = vunpack.c.l.b16 %v5344
        %v5497 = vunpack.c.l.b16 %v5345
        %v5498 = vunpack.c.l.b16 %v5346
        %v5499 = vunpack.c.l.b16 %v5347
        %v5500 = vunpack.c.l.b16 %v5348
        %v5501 = vunpack.c.l.b16 %v5349
        %v5502 = vunpack.c.l.b16 %v5350
        %v5503 = vunpack.c.l.b16 %v5351
        %v5504 = vunpack.c.l.b16 %v5352
        %v5505 = vunpack.c.l.b16 %v5353
        %v5506 = vunpack.c.l.b16 %v5354
        %v5507 = vunpack.c.l.b16 %v5355
        %v5508 = vunpack.c.l.b16 %v5356
        %v5509 = vunpack.c.l.b16 %v5357
        %v5510 = vunpack.c.l.b16 %v5358
        %v5511 = vunpack.c.l.b16 %v5359
        %v5512 = vunpack.c.l.b16 %v5360
        %v5513 = vunpack.c.l.b16 %v5361
        %v5514 = vunpack.c.l.b16 %v5362
        %v5515 = vunpack.c.l.b16 %v5363
        %v5516 = vunpack.c.l.b16 %v5364
        %v5517 = vunpack.c.l.b16 %v5365
        %v5518 = vunpack.c.l.b16 %v5366
        %v5519 = vunpack.c.l.b16 %v5367
        %v5520 = vunpack.c.l.b16 %v5368
        %v5521 = vunpack.c.l.b16 %v5369
        %v5522 = vunpack.c.l.b16 %v5370
        %v5523 = vunpack.c.l.b16 %v5371
        %v5524 = vunpack.c.l.b16 %v5372
        %v5525 = vunpack.c.l.b16 %v5373
        %v5526 = vpack.c.b16 %v5495, %v5494
        %v5527 = vpack.c.b16 %v5497, %v5496
        %v5528 = vpack.c.b16 %v5499, %v5498
        %v5529 = vpack.c.b16 %v5501, %v5500
        %v5530 = vpack.c.b16 %v5503, %v5502
        %v5531 = vpack.c.b16 %v5505, %v5504
        %v5532 = vpack.c.b16 %v5507, %v5506
        %v5533 = vpack.c.b16 %v5509, %v5508
        %v5534 = vpack.c.b16 %v5511, %v5510
        %v5535 = vpack.c.b16 %v5513, %v5512
        %v5536 = vpack.c.b16 %v5515, %v5514
        %v5537 = vpack.c.b16 %v5517, %v5516
        %v5538 = vpack.c.b16 %v5519, %v5518
        %v5539 = vpack.c.b16 %v5521, %v5520
        %v5540 = vpack.c.b16 %v5523, %v5522
        %v5541 = vpack.c.b16 %v5525, %v5524
        %5542 = vrot.lane.b32.xlu0 %v5526, 64
        %v5543 = vpop.permute.xlu0 %5542
        %5544 = vrot.lane.b32.xlu0 %v5527, 64
        %v5545 = vpop.permute.xlu0 %5544
        %5546 = vrot.lane.b32.xlu0 %v5528, 64
        %v5547 = vpop.permute.xlu0 %5546
        %5548 = vrot.lane.b32.xlu0 %v5529, 64
        %v5549 = vpop.permute.xlu0 %5548
        %5550 = vrot.lane.b32.xlu0 %v5530, 64
        %v5551 = vpop.permute.xlu0 %5550
        %5552 = vrot.lane.b32.xlu0 %v5531, 64
        %v5553 = vpop.permute.xlu0 %5552
        %5554 = vrot.lane.b32.xlu0 %v5532, 64
        %v5555 = vpop.permute.xlu0 %5554
        %5556 = vrot.lane.b32.xlu0 %v5533, 64
        %v5557 = vpop.permute.xlu0 %5556
        %5558 = vrot.lane.b32.xlu0 %v5534, 64
        %v5559 = vpop.permute.xlu0 %5558
        %5560 = vrot.lane.b32.xlu0 %v5535, 64
        %v5561 = vpop.permute.xlu0 %5560
        %5562 = vrot.lane.b32.xlu0 %v5536, 64
        %v5563 = vpop.permute.xlu0 %5562
        %5564 = vrot.lane.b32.xlu0 %v5537, 64
        %v5565 = vpop.permute.xlu0 %5564
        %5566 = vrot.lane.b32.xlu0 %v5538, 64
        %v5567 = vpop.permute.xlu0 %5566
        %5568 = vrot.lane.b32.xlu0 %v5539, 64
        %v5569 = vpop.permute.xlu0 %5568
        %5570 = vrot.lane.b32.xlu0 %v5540, 64
        %v5571 = vpop.permute.xlu0 %5570
        %5572 = vrot.lane.b32.xlu0 %v5541, 64
        %v5573 = vpop.permute.xlu0 %5572
        %v5575 = vsel %vm4640, %v5447, 0
        %v5578 = vsel %vm4640, %v5449, 0
        %v5581 = vsel %vm4640, %v5451, 0
        %v5584 = vsel %vm4640, %v5453, 0
        %v5587 = vsel %vm4640, %v5455, 0
        %v5590 = vsel %vm4640, %v5457, 0
        %v5593 = vsel %vm4640, %v5459, 0
        %v5596 = vsel %vm4640, %v5461, 0
        %v5599 = vsel %vm4640, %v5543, 0
        %v5602 = vsel %vm4640, %v5545, 0
        %v5605 = vsel %vm4640, %v5547, 0
        %v5608 = vsel %vm4640, %v5549, 0
        %v5611 = vsel %vm4640, %v5551, 0
        %v5614 = vsel %vm4640, %v5553, 0
        %v5617 = vsel %vm4640, %v5555, 0
        %v5620 = vsel %vm4640, %v5557, 0
        %v5623 = vsel %vm4640, %v5559, 0
        %v5626 = vsel %vm4640, %v5561, 0
        %v5629 = vsel %vm4640, %v5563, 0
        %v5632 = vsel %vm4640, %v5565, 0
        %v5635 = vsel %vm4640, %v5567, 0
        %v5638 = vsel %vm4640, %v5569, 0
        %v5641 = vsel %vm4640, %v5571, 0
        %v5644 = vsel %vm4640, %v5573, 0
        %5646 = vmatpush.bf16.xpose.msra.mxu0 %v5620
        %5647 = vmatpush.bf16.xpose.msra.mxu0 %v5617
        %5648 = vmatpush.bf16.xpose.msra.mxu0 %v5614
        %5649 = vmatpush.bf16.xpose.msra.mxu0 %v5611
        %5650 = vmatpush.bf16.xpose.msra.mxu0 %v5608
        %5651 = vmatpush.bf16.xpose.msra.mxu0 %v5605
        %5652 = vmatpush.bf16.xpose.msra.mxu0 %v5602
        %5653 = vmatpush.bf16.xpose.msra.mxu0 %v5599
        %5654 = vmatmul.bf16.gmra.mxu0 %v5575
        %v5655 = vpop.f32.mrf.mxu0
        %v5656 = vadd.f32 0.0, %v5655
        %v5657 = vpop.f32.mrf.mxu0
        %v5658 = vadd.f32 0.0, %v5657
        %5659 = vmatmul.bf16.gmra.mxu0 %v5578
        %v5660 = vpop.f32.mrf.mxu0
        %v5661 = vadd.f32 0.0, %v5660
        %v5662 = vpop.f32.mrf.mxu0
        %v5663 = vadd.f32 0.0, %v5662
        %5664 = vmatmul.bf16.gmra.mxu0 %v5581
        %v5665 = vpop.f32.mrf.mxu0
        %v5666 = vadd.f32 0.0, %v5665
        %v5667 = vpop.f32.mrf.mxu0
        %v5668 = vadd.f32 0.0, %v5667
        %5669 = vmatmul.bf16.gmra.mxu0 %v5584
        %v5670 = vpop.f32.mrf.mxu0
        %v5671 = vadd.f32 0.0, %v5670
        %v5672 = vpop.f32.mrf.mxu0
        %v5673 = vadd.f32 0.0, %v5672
        %5674 = vmatmul.bf16.gmra.mxu0 %v5587
        %v5675 = vpop.f32.mrf.mxu0
        %v5676 = vadd.f32 0.0, %v5675
        %v5677 = vpop.f32.mrf.mxu0
        %v5678 = vadd.f32 0.0, %v5677
        %5679 = vmatmul.bf16.gmra.mxu0 %v5590
        %v5680 = vpop.f32.mrf.mxu0
        %v5681 = vadd.f32 0.0, %v5680
        %v5682 = vpop.f32.mrf.mxu0
        %v5683 = vadd.f32 0.0, %v5682
        %5684 = vmatmul.bf16.gmra.mxu0 %v5593
        %v5685 = vpop.f32.mrf.mxu0
        %v5686 = vadd.f32 0.0, %v5685
        %v5687 = vpop.f32.mrf.mxu0
        %v5688 = vadd.f32 0.0, %v5687
        %5689 = vmatmul.bf16.gmra.mxu0 %v5596
        %v5690 = vpop.f32.mrf.mxu0
        %v5691 = vadd.f32 0.0, %v5690
        %v5692 = vpop.f32.mrf.mxu0
        %v5693 = vadd.f32 0.0, %v5692
        %5694 = vdwg.mxu0
        %5695 = vmatpush.bf16.xpose.msra.mxu0 %v5644
        %5696 = vmatpush.bf16.xpose.msra.mxu0 %v5641
        %5697 = vmatpush.bf16.xpose.msra.mxu0 %v5638
        %5698 = vmatpush.bf16.xpose.msra.mxu0 %v5635
        %5699 = vmatpush.bf16.xpose.msra.mxu0 %v5632
        %5700 = vmatpush.bf16.xpose.msra.mxu0 %v5629
        %5701 = vmatpush.bf16.xpose.msra.mxu0 %v5626
        %5702 = vmatpush.bf16.xpose.msra.mxu0 %v5623
        %5703 = vmatmul.bf16.gmra.mxu0 %v5575
        %v5704 = vpop.f32.mrf.mxu0
        %v5705 = vadd.f32 0.0, %v5704
        %v5706 = vpop.f32.mrf.mxu0
        %v5707 = vadd.f32 0.0, %v5706
        %5708 = vmatmul.bf16.gmra.mxu0 %v5578
        %v5709 = vpop.f32.mrf.mxu0
        %v5710 = vadd.f32 0.0, %v5709
        %v5711 = vpop.f32.mrf.mxu0
        %v5712 = vadd.f32 0.0, %v5711
        %5713 = vmatmul.bf16.gmra.mxu0 %v5581
        %v5714 = vpop.f32.mrf.mxu0
        %v5715 = vadd.f32 0.0, %v5714
        %v5716 = vpop.f32.mrf.mxu0
        %v5717 = vadd.f32 0.0, %v5716
        %5718 = vmatmul.bf16.gmra.mxu0 %v5584
        %v5719 = vpop.f32.mrf.mxu0
        %v5720 = vadd.f32 0.0, %v5719
        %v5721 = vpop.f32.mrf.mxu0
        %v5722 = vadd.f32 0.0, %v5721
        %5723 = vmatmul.bf16.gmra.mxu0 %v5587
        %v5724 = vpop.f32.mrf.mxu0
        %v5725 = vadd.f32 0.0, %v5724
        %v5726 = vpop.f32.mrf.mxu0
        %v5727 = vadd.f32 0.0, %v5726
        %5728 = vmatmul.bf16.gmra.mxu0 %v5590
        %v5729 = vpop.f32.mrf.mxu0
        %v5730 = vadd.f32 0.0, %v5729
        %v5731 = vpop.f32.mrf.mxu0
        %v5732 = vadd.f32 0.0, %v5731
        %5733 = vmatmul.bf16.gmra.mxu0 %v5593
        %v5734 = vpop.f32.mrf.mxu0
        %v5735 = vadd.f32 0.0, %v5734
        %v5736 = vpop.f32.mrf.mxu0
        %v5737 = vadd.f32 0.0, %v5736
        %5738 = vmatmul.bf16.gmra.mxu0 %v5596
        %v5739 = vpop.f32.mrf.mxu0
        %v5740 = vadd.f32 0.0, %v5739
        %v5741 = vpop.f32.mrf.mxu0
        %v5742 = vadd.f32 0.0, %v5741
        %5743 = vdwg.mxu0
        %v5744 = vsel %vm4408, %v5656, -inf
        %v5745 = vsel %vm4409, %v5705, -inf
        %v5746 = vsel %vm4410, %v5658, -inf
        %v5747 = vsel %vm4411, %v5707, -inf
        %v5748 = vsel %vm4412, %v5661, -inf
        %v5749 = vsel %vm4413, %v5710, -inf
        %v5750 = vsel %vm4414, %v5663, -inf
        %v5751 = vsel %vm4415, %v5712, -inf
        %v5752 = vsel %vm4416, %v5666, -inf
        %v5753 = vsel %vm4417, %v5715, -inf
        %v5754 = vsel %vm4418, %v5668, -inf
        %v5755 = vsel %vm4419, %v5717, -inf
        %v5756 = vsel %vm4420, %v5671, -inf
        %v5757 = vsel %vm4421, %v5720, -inf
        %v5758 = vsel %vm4422, %v5673, -inf
        %v5759 = vsel %vm4423, %v5722, -inf
        %v5760 = vsel %vm4424, %v5676, -inf
        %v5761 = vsel %vm4425, %v5725, -inf
        %v5762 = vsel %vm4426, %v5678, -inf
        %v5763 = vsel %vm4427, %v5727, -inf
        %v5764 = vsel %vm4428, %v5681, -inf
        %v5765 = vsel %vm4429, %v5730, -inf
        %v5766 = vsel %vm4430, %v5683, -inf
        %v5767 = vsel %vm4431, %v5732, -inf
        %v5768 = vsel %vm4432, %v5686, -inf
        %v5769 = vsel %vm4433, %v5735, -inf
        %v5770 = vsel %vm4434, %v5688, -inf
        %v5771 = vsel %vm4435, %v5737, -inf
        %v5772 = vsel %vm4436, %v5691, -inf
        %v5773 = vsel %vm4437, %v5740, -inf
        %v5774 = vsel %vm4438, %v5693, -inf
        %v5775 = vsel %vm4439, %v5742, -inf
        %v5776 = vmax.f32 %v5744, %v5745
        %5777 = vmax.xlane.f32.xlu0 %v5776
        %v5778 = vpop.xlane.xlu0 %5777
        %v5779 = vmax.f32 %v5746, %v5747
        %5780 = vmax.xlane.f32.xlu0 %v5779
        %v5781 = vpop.xlane.xlu0 %5780
        %v5782 = vmax.f32 %v5748, %v5749
        %5783 = vmax.xlane.f32.xlu0 %v5782
        %v5784 = vpop.xlane.xlu0 %5783
        %v5785 = vmax.f32 %v5750, %v5751
        %5786 = vmax.xlane.f32.xlu0 %v5785
        %v5787 = vpop.xlane.xlu0 %5786
        %v5788 = vmax.f32 %v5752, %v5753
        %5789 = vmax.xlane.f32.xlu0 %v5788
        %v5790 = vpop.xlane.xlu0 %5789
        %v5791 = vmax.f32 %v5754, %v5755
        %5792 = vmax.xlane.f32.xlu0 %v5791
        %v5793 = vpop.xlane.xlu0 %5792
        %v5794 = vmax.f32 %v5756, %v5757
        %5795 = vmax.xlane.f32.xlu0 %v5794
        %v5796 = vpop.xlane.xlu0 %5795
        %v5797 = vmax.f32 %v5758, %v5759
        %5798 = vmax.xlane.f32.xlu0 %v5797
        %v5799 = vpop.xlane.xlu0 %5798
        %v5800 = vmax.f32 %v5760, %v5761
        %5801 = vmax.xlane.f32.xlu0 %v5800
        %v5802 = vpop.xlane.xlu0 %5801
        %v5803 = vmax.f32 %v5762, %v5763
        %5804 = vmax.xlane.f32.xlu0 %v5803
        %v5805 = vpop.xlane.xlu0 %5804
        %v5806 = vmax.f32 %v5764, %v5765
        %5807 = vmax.xlane.f32.xlu0 %v5806
        %v5808 = vpop.xlane.xlu0 %5807
        %v5809 = vmax.f32 %v5766, %v5767
        %5810 = vmax.xlane.f32.xlu0 %v5809
        %v5811 = vpop.xlane.xlu0 %5810
        %v5812 = vmax.f32 %v5768, %v5769
        %5813 = vmax.xlane.f32.xlu0 %v5812
        %v5814 = vpop.xlane.xlu0 %5813
        %v5815 = vmax.f32 %v5770, %v5771
        %5816 = vmax.xlane.f32.xlu0 %v5815
        %v5817 = vpop.xlane.xlu0 %5816
        %v5818 = vmax.f32 %v5772, %v5773
        %5819 = vmax.xlane.f32.xlu0 %v5818
        %v5820 = vpop.xlane.xlu0 %5819
        %v5821 = vmax.f32 %v5774, %v5775
        %5822 = vmax.xlane.f32.xlu0 %v5821
        %v5823 = vpop.xlane.xlu0 %5822
        %v5824 = vsub.f32 %v5744, %v5778
        %v5825 = vsub.f32 %v5745, %v5778
        %v5826 = vsub.f32 %v5746, %v5781
        %v5827 = vsub.f32 %v5747, %v5781
        %v5828 = vsub.f32 %v5748, %v5784
        %v5829 = vsub.f32 %v5749, %v5784
        %v5830 = vsub.f32 %v5750, %v5787
        %v5831 = vsub.f32 %v5751, %v5787
        %v5832 = vsub.f32 %v5752, %v5790
        %v5833 = vsub.f32 %v5753, %v5790
        %v5834 = vsub.f32 %v5754, %v5793
        %v5835 = vsub.f32 %v5755, %v5793
        %v5836 = vsub.f32 %v5756, %v5796
        %v5837 = vsub.f32 %v5757, %v5796
        %v5838 = vsub.f32 %v5758, %v5799
        %v5839 = vsub.f32 %v5759, %v5799
        %v5840 = vsub.f32 %v5760, %v5802
        %v5841 = vsub.f32 %v5761, %v5802
        %v5842 = vsub.f32 %v5762, %v5805
        %v5843 = vsub.f32 %v5763, %v5805
        %v5844 = vsub.f32 %v5764, %v5808
        %v5845 = vsub.f32 %v5765, %v5808
        %v5846 = vsub.f32 %v5766, %v5811
        %v5847 = vsub.f32 %v5767, %v5811
        %v5848 = vsub.f32 %v5768, %v5814
        %v5849 = vsub.f32 %v5769, %v5814
        %v5850 = vsub.f32 %v5770, %v5817
        %v5851 = vsub.f32 %v5771, %v5817
        %v5852 = vsub.f32 %v5772, %v5820
        %v5853 = vsub.f32 %v5773, %v5820
        %v5854 = vsub.f32 %v5774, %v5823
        %v5855 = vsub.f32 %v5775, %v5823
        %v5856 = vmul.f32 %v5824, 1.442695
        %v5857 = vpow.pop %v5856
        %v5858 = vmul.f32 %v5825, 1.442695
        %v5859 = vpow.pop %v5858
        %v5860 = vmul.f32 %v5826, 1.442695
        %v5861 = vpow.pop %v5860
        %v5862 = vmul.f32 %v5827, 1.442695
        %v5863 = vpow.pop %v5862
        %v5864 = vmul.f32 %v5828, 1.442695
        %v5865 = vpow.pop %v5864
        %v5866 = vmul.f32 %v5829, 1.442695
        %v5867 = vpow.pop %v5866
        %v5868 = vmul.f32 %v5830, 1.442695
        %v5869 = vpow.pop %v5868
        %v5870 = vmul.f32 %v5831, 1.442695
        %v5871 = vpow.pop %v5870
        %v5872 = vmul.f32 %v5832, 1.442695
        %v5873 = vpow.pop %v5872
        %v5874 = vmul.f32 %v5833, 1.442695
        %v5875 = vpow.pop %v5874
        %v5876 = vmul.f32 %v5834, 1.442695
        %v5877 = vpow.pop %v5876
        %v5878 = vmul.f32 %v5835, 1.442695
        %v5879 = vpow.pop %v5878
        %v5880 = vmul.f32 %v5836, 1.442695
        %v5881 = vpow.pop %v5880
        %v5882 = vmul.f32 %v5837, 1.442695
        %v5883 = vpow.pop %v5882
        %v5884 = vmul.f32 %v5838, 1.442695
        %v5885 = vpow.pop %v5884
        %v5886 = vmul.f32 %v5839, 1.442695
        %v5887 = vpow.pop %v5886
        %v5888 = vmul.f32 %v5840, 1.442695
        %v5889 = vpow.pop %v5888
        %v5890 = vmul.f32 %v5841, 1.442695
        %v5891 = vpow.pop %v5890
        %v5892 = vmul.f32 %v5842, 1.442695
        %v5893 = vpow.pop %v5892
        %v5894 = vmul.f32 %v5843, 1.442695
        %v5895 = vpow.pop %v5894
        %v5896 = vmul.f32 %v5844, 1.442695
        %v5897 = vpow.pop %v5896
        %v5898 = vmul.f32 %v5845, 1.442695
        %v5899 = vpow.pop %v5898
        %v5900 = vmul.f32 %v5846, 1.442695
        %v5901 = vpow.pop %v5900
        %v5902 = vmul.f32 %v5847, 1.442695
        %v5903 = vpow.pop %v5902
        %v5904 = vmul.f32 %v5848, 1.442695
        %v5905 = vpow.pop %v5904
        %v5906 = vmul.f32 %v5849, 1.442695
        %v5907 = vpow.pop %v5906
        %v5908 = vmul.f32 %v5850, 1.442695
        %v5909 = vpow.pop %v5908
        %v5910 = vmul.f32 %v5851, 1.442695
        %v5911 = vpow.pop %v5910
        %v5912 = vmul.f32 %v5852, 1.442695
        %v5913 = vpow.pop %v5912
        %v5914 = vmul.f32 %v5853, 1.442695
        %v5915 = vpow.pop %v5914
        %v5916 = vmul.f32 %v5854, 1.442695
        %v5917 = vpow.pop %v5916
        %v5918 = vmul.f32 %v5855, 1.442695
        %v5919 = vpow.pop %v5918
        %v5920 = vadd.f32 %v5857, %v5859
        %5921 = vadd.xlane.f32.xlu0 %v5920
        %v5922 = vpop.xlane.xlu0 %5921
        %v5923 = vadd.f32 %v5861, %v5863
        %5924 = vadd.xlane.f32.xlu0 %v5923
        %v5925 = vpop.xlane.xlu0 %5924
        %v5926 = vadd.f32 %v5865, %v5867
        %5927 = vadd.xlane.f32.xlu0 %v5926
        %v5928 = vpop.xlane.xlu0 %5927
        %v5929 = vadd.f32 %v5869, %v5871
        %5930 = vadd.xlane.f32.xlu0 %v5929
        %v5931 = vpop.xlane.xlu0 %5930
        %v5932 = vadd.f32 %v5873, %v5875
        %5933 = vadd.xlane.f32.xlu0 %v5932
        %v5934 = vpop.xlane.xlu0 %5933
        %v5935 = vadd.f32 %v5877, %v5879
        %5936 = vadd.xlane.f32.xlu0 %v5935
        %v5937 = vpop.xlane.xlu0 %5936
        %v5938 = vadd.f32 %v5881, %v5883
        %5939 = vadd.xlane.f32.xlu0 %v5938
        %v5940 = vpop.xlane.xlu0 %5939
        %v5941 = vadd.f32 %v5885, %v5887
        %5942 = vadd.xlane.f32.xlu0 %v5941
        %v5943 = vpop.xlane.xlu0 %5942
        %v5944 = vadd.f32 %v5889, %v5891
        %5945 = vadd.xlane.f32.xlu0 %v5944
        %v5946 = vpop.xlane.xlu0 %5945
        %v5947 = vadd.f32 %v5893, %v5895
        %5948 = vadd.xlane.f32.xlu0 %v5947
        %v5949 = vpop.xlane.xlu0 %5948
        %v5950 = vadd.f32 %v5897, %v5899
        %5951 = vadd.xlane.f32.xlu0 %v5950
        %v5952 = vpop.xlane.xlu0 %5951
        %v5953 = vadd.f32 %v5901, %v5903
        %5954 = vadd.xlane.f32.xlu0 %v5953
        %v5955 = vpop.xlane.xlu0 %5954
        %v5956 = vadd.f32 %v5905, %v5907
        %5957 = vadd.xlane.f32.xlu0 %v5956
        %v5958 = vpop.xlane.xlu0 %5957
        %v5959 = vadd.f32 %v5909, %v5911
        %5960 = vadd.xlane.f32.xlu0 %v5959
        %v5961 = vpop.xlane.xlu0 %5960
        %v5962 = vadd.f32 %v5913, %v5915
        %5963 = vadd.xlane.f32.xlu0 %v5962
        %v5964 = vpop.xlane.xlu0 %5963
        %v5965 = vadd.f32 %v5917, %v5919
        %5966 = vadd.xlane.f32.xlu0 %v5965
        %v5967 = vpop.xlane.xlu0 %5966
        %v5968 = vrcp.pop %v5922
        %v5969 = vrcp.pop %v5925
        %v5970 = vrcp.pop %v5928
        %v5971 = vrcp.pop %v5931
        %v5972 = vrcp.pop %v5934
        %v5973 = vrcp.pop %v5937
        %v5974 = vrcp.pop %v5940
        %v5975 = vrcp.pop %v5943
        %v5976 = vrcp.pop %v5946
        %v5977 = vrcp.pop %v5949
        %v5978 = vrcp.pop %v5952
        %v5979 = vrcp.pop %v5955
        %v5980 = vrcp.pop %v5958
        %v5981 = vrcp.pop %v5961
        %v5982 = vrcp.pop %v5964
        %v5983 = vrcp.pop %v5967
        %v5984 = vmul.f32 %v5857, %v5968
        %v5985 = vmul.f32 %v5859, %v5968
        %v5986 = vmul.f32 %v5861, %v5969
        %v5987 = vmul.f32 %v5863, %v5969
        %v5988 = vmul.f32 %v5865, %v5970
        %v5989 = vmul.f32 %v5867, %v5970
        %v5990 = vmul.f32 %v5869, %v5971
        %v5991 = vmul.f32 %v5871, %v5971
        %v5992 = vmul.f32 %v5873, %v5972
        %v5993 = vmul.f32 %v5875, %v5972
        %v5994 = vmul.f32 %v5877, %v5973
        %v5995 = vmul.f32 %v5879, %v5973
        %v5996 = vmul.f32 %v5881, %v5974
        %v5997 = vmul.f32 %v5883, %v5974
        %v5998 = vmul.f32 %v5885, %v5975
        %v5999 = vmul.f32 %v5887, %v5975
        %v6000 = vmul.f32 %v5889, %v5976
        %v6001 = vmul.f32 %v5891, %v5976
        %v6002 = vmul.f32 %v5893, %v5977
        %v6003 = vmul.f32 %v5895, %v5977
        %v6004 = vmul.f32 %v5897, %v5978
        %v6005 = vmul.f32 %v5899, %v5978
        %v6006 = vmul.f32 %v5901, %v5979
        %v6007 = vmul.f32 %v5903, %v5979
        %v6008 = vmul.f32 %v5905, %v5980
        %v6009 = vmul.f32 %v5907, %v5980
        %v6010 = vmul.f32 %v5909, %v5981
        %v6011 = vmul.f32 %v5911, %v5981
        %v6012 = vmul.f32 %v5913, %v5982
        %v6013 = vmul.f32 %v5915, %v5982
        %v6014 = vmul.f32 %v5917, %v5983
        %v6015 = vmul.f32 %v5919, %v5983
        %v6016 = vpack.c.bf16 %v5986, %v5984
        %v6017 = vpack.c.bf16 %v5987, %v5985
        %v6018 = vpack.c.bf16 %v5990, %v5988
        %v6019 = vpack.c.bf16 %v5991, %v5989
        %v6020 = vpack.c.bf16 %v5994, %v5992
        %v6021 = vpack.c.bf16 %v5995, %v5993
        %v6022 = vpack.c.bf16 %v5998, %v5996
        %v6023 = vpack.c.bf16 %v5999, %v5997
        %v6024 = vpack.c.bf16 %v6002, %v6000
        %v6025 = vpack.c.bf16 %v6003, %v6001
        %v6026 = vpack.c.bf16 %v6006, %v6004
        %v6027 = vpack.c.bf16 %v6007, %v6005
        %v6028 = vpack.c.bf16 %v6010, %v6008
        %v6029 = vpack.c.bf16 %v6011, %v6009
        %v6030 = vpack.c.bf16 %v6014, %v6012
        %v6031 = vpack.c.bf16 %v6015, %v6013
        %v6064 = vunpack.c.l.b16 %v5374
        %v6065 = vunpack.c.l.b16 %v5375
        %v6066 = vunpack.c.l.b16 %v5376
        %v6067 = vunpack.c.l.b16 %v5377
        %v6068 = vunpack.c.l.b16 %v5378
        %v6069 = vunpack.c.l.b16 %v5379
        %v6070 = vunpack.c.l.b16 %v5380
        %v6071 = vunpack.c.l.b16 %v5381
        %v6072 = vunpack.c.l.b16 %v5382
        %v6073 = vunpack.c.l.b16 %v5383
        %v6074 = vunpack.c.l.b16 %v5384
        %v6075 = vunpack.c.l.b16 %v5385
        %v6076 = vunpack.c.l.b16 %v5386
        %v6077 = vunpack.c.l.b16 %v5387
        %v6078 = vunpack.c.l.b16 %v5388
        %v6079 = vunpack.c.l.b16 %v5389
        %v6080 = vunpack.c.l.b16 %v5390
        %v6081 = vunpack.c.l.b16 %v5391
        %v6082 = vunpack.c.l.b16 %v5392
        %v6083 = vunpack.c.l.b16 %v5393
        %v6084 = vunpack.c.l.b16 %v5394
        %v6085 = vunpack.c.l.b16 %v5395
        %v6086 = vunpack.c.l.b16 %v5396
        %v6087 = vunpack.c.l.b16 %v5397
        %v6088 = vunpack.c.l.b16 %v5398
        %v6089 = vunpack.c.l.b16 %v5399
        %v6090 = vunpack.c.l.b16 %v5400
        %v6091 = vunpack.c.l.b16 %v5401
        %v6092 = vunpack.c.l.b16 %v5402
        %v6093 = vunpack.c.l.b16 %v5403
        %v6094 = vunpack.c.l.b16 %v5404
        %v6095 = vunpack.c.l.b16 %v5405
        %v6096 = vpack.c.b16 %v6065, %v6064
        %v6097 = vpack.c.b16 %v6067, %v6066
        %v6098 = vpack.c.b16 %v6069, %v6068
        %v6099 = vpack.c.b16 %v6071, %v6070
        %v6100 = vpack.c.b16 %v6073, %v6072
        %v6101 = vpack.c.b16 %v6075, %v6074
        %v6102 = vpack.c.b16 %v6077, %v6076
        %v6103 = vpack.c.b16 %v6079, %v6078
        %v6104 = vpack.c.b16 %v6081, %v6080
        %v6105 = vpack.c.b16 %v6083, %v6082
        %v6106 = vpack.c.b16 %v6085, %v6084
        %v6107 = vpack.c.b16 %v6087, %v6086
        %v6108 = vpack.c.b16 %v6089, %v6088
        %v6109 = vpack.c.b16 %v6091, %v6090
        %v6110 = vpack.c.b16 %v6093, %v6092
        %v6111 = vpack.c.b16 %v6095, %v6094
        %6112 = vrot.lane.b32.xlu0 %v6096, 64
        %v6113 = vpop.permute.xlu0 %6112
        %6114 = vrot.lane.b32.xlu0 %v6097, 64
        %v6115 = vpop.permute.xlu0 %6114
        %6116 = vrot.lane.b32.xlu0 %v6098, 64
        %v6117 = vpop.permute.xlu0 %6116
        %6118 = vrot.lane.b32.xlu0 %v6099, 64
        %v6119 = vpop.permute.xlu0 %6118
        %6120 = vrot.lane.b32.xlu0 %v6100, 64
        %v6121 = vpop.permute.xlu0 %6120
        %6122 = vrot.lane.b32.xlu0 %v6101, 64
        %v6123 = vpop.permute.xlu0 %6122
        %6124 = vrot.lane.b32.xlu0 %v6102, 64
        %v6125 = vpop.permute.xlu0 %6124
        %6126 = vrot.lane.b32.xlu0 %v6103, 64
        %v6127 = vpop.permute.xlu0 %6126
        %6128 = vrot.lane.b32.xlu0 %v6104, 64
        %v6129 = vpop.permute.xlu0 %6128
        %6130 = vrot.lane.b32.xlu0 %v6105, 64
        %v6131 = vpop.permute.xlu0 %6130
        %6132 = vrot.lane.b32.xlu0 %v6106, 64
        %v6133 = vpop.permute.xlu0 %6132
        %6134 = vrot.lane.b32.xlu0 %v6107, 64
        %v6135 = vpop.permute.xlu0 %6134
        %6136 = vrot.lane.b32.xlu0 %v6108, 64
        %v6137 = vpop.permute.xlu0 %6136
        %6138 = vrot.lane.b32.xlu0 %v6109, 64
        %v6139 = vpop.permute.xlu0 %6138
        %6140 = vrot.lane.b32.xlu0 %v6110, 64
        %v6141 = vpop.permute.xlu0 %6140
        %6142 = vrot.lane.b32.xlu0 %v6111, 64
        %v6143 = vpop.permute.xlu0 %6142
        %6160 = vmatpush.bf16.msra.mxu0 %v6127
        %6161 = vmatpush.bf16.msra.mxu0 %v6125
        %6162 = vmatpush.bf16.msra.mxu0 %v6123
        %6163 = vmatpush.bf16.msra.mxu0 %v6121
        %6164 = vmatpush.bf16.msra.mxu0 %v6119
        %6165 = vmatpush.bf16.msra.mxu0 %v6117
        %6166 = vmatpush.bf16.msra.mxu0 %v6115
        %6167 = vmatpush.bf16.msra.mxu0 %v6113
        %6168 = vmatmul.bf16.gmra.mxu0 %v6016
        %v6169 = vpop.f32.mrf.mxu0
        %v6170 = vadd.f32 0.0, %v6169
        %v6171 = vpop.f32.mrf.mxu0
        %v6172 = vadd.f32 0.0, %v6171
        %6173 = vmatmul.bf16.gmra.mxu0 %v6018
        %v6174 = vpop.f32.mrf.mxu0
        %v6175 = vadd.f32 0.0, %v6174
        %v6176 = vpop.f32.mrf.mxu0
        %v6177 = vadd.f32 0.0, %v6176
        %6178 = vmatmul.bf16.gmra.mxu0 %v6020
        %v6179 = vpop.f32.mrf.mxu0
        %v6180 = vadd.f32 0.0, %v6179
        %v6181 = vpop.f32.mrf.mxu0
        %v6182 = vadd.f32 0.0, %v6181
        %6183 = vmatmul.bf16.gmra.mxu0 %v6022
        %v6184 = vpop.f32.mrf.mxu0
        %v6185 = vadd.f32 0.0, %v6184
        %v6186 = vpop.f32.mrf.mxu0
        %v6187 = vadd.f32 0.0, %v6186
        %6188 = vmatmul.bf16.gmra.mxu0 %v6024
        %v6189 = vpop.f32.mrf.mxu0
        %v6190 = vadd.f32 0.0, %v6189
        %v6191 = vpop.f32.mrf.mxu0
        %v6192 = vadd.f32 0.0, %v6191
        %6193 = vmatmul.bf16.gmra.mxu0 %v6026
        %v6194 = vpop.f32.mrf.mxu0
        %v6195 = vadd.f32 0.0, %v6194
        %v6196 = vpop.f32.mrf.mxu0
        %v6197 = vadd.f32 0.0, %v6196
        %6198 = vmatmul.bf16.gmra.mxu0 %v6028
        %v6199 = vpop.f32.mrf.mxu0
        %v6200 = vadd.f32 0.0, %v6199
        %v6201 = vpop.f32.mrf.mxu0
        %v6202 = vadd.f32 0.0, %v6201
        %6203 = vmatmul.bf16.gmra.mxu0 %v6030
        %v6204 = vpop.f32.mrf.mxu0
        %v6205 = vadd.f32 0.0, %v6204
        %v6206 = vpop.f32.mrf.mxu0
        %v6207 = vadd.f32 0.0, %v6206
        %6208 = vdwg.mxu0
        %6209 = vmatpush.bf16.msra.mxu0 %v6143
        %6210 = vmatpush.bf16.msra.mxu0 %v6141
        %6211 = vmatpush.bf16.msra.mxu0 %v6139
        %6212 = vmatpush.bf16.msra.mxu0 %v6137
        %6213 = vmatpush.bf16.msra.mxu0 %v6135
        %6214 = vmatpush.bf16.msra.mxu0 %v6133
        %6215 = vmatpush.bf16.msra.mxu0 %v6131
        %6216 = vmatpush.bf16.msra.mxu0 %v6129
        %6217 = vmatmul.bf16.gmra.mxu0 %v6017
        %v6218 = vpop.f32.mrf.mxu0
        %v6219 = vadd.f32 %v6170, %v6218
        %v6220 = vpop.f32.mrf.mxu0
        %v6221 = vadd.f32 %v6172, %v6220
        %6222 = vmatmul.bf16.gmra.mxu0 %v6019
        %v6223 = vpop.f32.mrf.mxu0
        %v6224 = vadd.f32 %v6175, %v6223
        %v6225 = vpop.f32.mrf.mxu0
        %v6226 = vadd.f32 %v6177, %v6225
        %6227 = vmatmul.bf16.gmra.mxu0 %v6021
        %v6228 = vpop.f32.mrf.mxu0
        %v6229 = vadd.f32 %v6180, %v6228
        %v6230 = vpop.f32.mrf.mxu0
        %v6231 = vadd.f32 %v6182, %v6230
        %6232 = vmatmul.bf16.gmra.mxu0 %v6023
        %v6233 = vpop.f32.mrf.mxu0
        %v6234 = vadd.f32 %v6185, %v6233
        %v6235 = vpop.f32.mrf.mxu0
        %v6236 = vadd.f32 %v6187, %v6235
        %6237 = vmatmul.bf16.gmra.mxu0 %v6025
        %v6238 = vpop.f32.mrf.mxu0
        %v6239 = vadd.f32 %v6190, %v6238
        %v6240 = vpop.f32.mrf.mxu0
        %v6241 = vadd.f32 %v6192, %v6240
        %6242 = vmatmul.bf16.gmra.mxu0 %v6027
        %v6243 = vpop.f32.mrf.mxu0
        %v6244 = vadd.f32 %v6195, %v6243
        %v6245 = vpop.f32.mrf.mxu0
        %v6246 = vadd.f32 %v6197, %v6245
        %6247 = vmatmul.bf16.gmra.mxu0 %v6029
        %v6248 = vpop.f32.mrf.mxu0
        %v6249 = vadd.f32 %v6200, %v6248
        %v6250 = vpop.f32.mrf.mxu0
        %v6251 = vadd.f32 %v6202, %v6250
        %6252 = vmatmul.bf16.gmra.mxu0 %v6031
        %v6253 = vpop.f32.mrf.mxu0
        %v6254 = vadd.f32 %v6205, %v6253
        %v6255 = vpop.f32.mrf.mxu0
        %v6256 = vadd.f32 %v6207, %v6255
        %6257 = vdwg.mxu0
        %v6258 = vpack.c.bf16 %v6219, %v6219
        %v6259 = vpack.c.bf16 %v6221, %v6221
        %v6260 = vpack.c.bf16 %v6224, %v6224
        %v6261 = vpack.c.bf16 %v6226, %v6226
        %v6262 = vpack.c.bf16 %v6229, %v6229
        %v6263 = vpack.c.bf16 %v6231, %v6231
        %v6264 = vpack.c.bf16 %v6234, %v6234
        %v6265 = vpack.c.bf16 %v6236, %v6236
        %v6266 = vpack.c.bf16 %v6239, %v6239
        %v6267 = vpack.c.bf16 %v6241, %v6241
        %v6268 = vpack.c.bf16 %v6244, %v6244
        %v6269 = vpack.c.bf16 %v6246, %v6246
        %v6270 = vpack.c.bf16 %v6249, %v6249
        %v6271 = vpack.c.bf16 %v6251, %v6251
        %v6272 = vpack.c.bf16 %v6254, %v6254
        %v6273 = vpack.c.bf16 %v6256, %v6256
        %6290 = vrot.lane.b32.xlu0 %v6258, 64
        %v6291 = vpop.permute.xlu0 %6290
        %6292 = vrot.lane.b32.xlu0 %v6259, 64
        %v6293 = vpop.permute.xlu0 %6292
        %6294 = vrot.lane.b32.xlu0 %v6260, 64
        %v6295 = vpop.permute.xlu0 %6294
        %6296 = vrot.lane.b32.xlu0 %v6261, 64
        %v6297 = vpop.permute.xlu0 %6296
        %6298 = vrot.lane.b32.xlu0 %v6262, 64
        %v6299 = vpop.permute.xlu0 %6298
        %6300 = vrot.lane.b32.xlu0 %v6263, 64
        %v6301 = vpop.permute.xlu0 %6300
        %6302 = vrot.lane.b32.xlu0 %v6264, 64
        %v6303 = vpop.permute.xlu0 %6302
        %6304 = vrot.lane.b32.xlu0 %v6265, 64
        %v6305 = vpop.permute.xlu0 %6304
        %6306 = vrot.lane.b32.xlu0 %v6266, 64
        %v6307 = vpop.permute.xlu0 %6306
        %6308 = vrot.lane.b32.xlu0 %v6267, 64
        %v6309 = vpop.permute.xlu0 %6308
        %6310 = vrot.lane.b32.xlu0 %v6268, 64
        %v6311 = vpop.permute.xlu0 %6310
        %6312 = vrot.lane.b32.xlu0 %v6269, 64
        %v6313 = vpop.permute.xlu0 %6312
        %6314 = vrot.lane.b32.xlu0 %v6270, 64
        %v6315 = vpop.permute.xlu0 %6314
        %6316 = vrot.lane.b32.xlu0 %v6271, 64
        %v6317 = vpop.permute.xlu0 %6316
        %6318 = vrot.lane.b32.xlu0 %v6272, 64
        %v6319 = vpop.permute.xlu0 %6318
        %6320 = vrot.lane.b32.xlu0 %v6273, 64
        %v6321 = vpop.permute.xlu0 %6320
        %vm6338 = vcmask 1043968
        %6339 = vst.msk [vmem:[#allocation4] sm:$0xf] %vm6338, %v6291
        %6340 = vst.msk [vmem:[#allocation4 + $0xc] sm:$0xf] %vm6338, %v6293
        %6341 = vst.msk [vmem:[#allocation4 + $0x18] sm:$0xf] %vm6338, %v6295
        %6342 = vst.msk [vmem:[#allocation4 + $0x24] sm:$0xf] %vm6338, %v6297
        %6343 = vst.msk [vmem:[#allocation4 + $0x30] sm:$0xf] %vm6338, %v6299
        %6344 = vst.msk [vmem:[#allocation4 + $0x3c] sm:$0xf] %vm6338, %v6301
        %6345 = vst.msk [vmem:[#allocation4 + $0x48] sm:$0xf] %vm6338, %v6303
        %6346 = vst.msk [vmem:[#allocation4 + $0x54] sm:$0xf] %vm6338, %v6305
        %6347 = vst.msk [vmem:[#allocation4 + $0x60] sm:$0xf] %vm6338, %v6307
        %6348 = vst.msk [vmem:[#allocation4 + $0x6c] sm:$0xf] %vm6338, %v6309
        %6349 = vst.msk [vmem:[#allocation4 + $0x78] sm:$0xf] %vm6338, %v6311
        %6350 = vst.msk [vmem:[#allocation4 + $0x84] sm:$0xf] %vm6338, %v6313
        %6351 = vst.msk [vmem:[#allocation4 + $0x90] sm:$0xf] %vm6338, %v6315
        %6352 = vst.msk [vmem:[#allocation4 + $0x9c] sm:$0xf] %vm6338, %v6317
        %6353 = vst.msk [vmem:[#allocation4 + $0xa8] sm:$0xf] %vm6338, %v6319
        %6354 = vst.msk [vmem:[#allocation4 + $0xb4] sm:$0xf] %vm6338, %v6321
        %v6355 = vld [vmem:[#allocation2 + $0x4] sm:$0xf]
        %v6356 = vld [vmem:[#allocation2 + $0x10] sm:$0xf]
        %v6357 = vld [vmem:[#allocation2 + $0x1c] sm:$0xf]
        %v6358 = vld [vmem:[#allocation2 + $0x28] sm:$0xf]
        %v6359 = vld [vmem:[#allocation2 + $0x34] sm:$0xf]
        %v6360 = vld [vmem:[#allocation2 + $0x40] sm:$0xf]
        %v6361 = vld [vmem:[#allocation2 + $0x4c] sm:$0xf]
        %v6362 = vld [vmem:[#allocation2 + $0x58] sm:$0xf]
        %v6363 = vld [vmem:[#allocation2 + $0x64] sm:$0xf]
        %v6364 = vld [vmem:[#allocation2 + $0x70] sm:$0xf]
        %v6365 = vld [vmem:[#allocation2 + $0x7c] sm:$0xf]
        %v6366 = vld [vmem:[#allocation2 + $0x88] sm:$0xf]
        %v6367 = vld [vmem:[#allocation2 + $0x94] sm:$0xf]
        %v6368 = vld [vmem:[#allocation2 + $0xa0] sm:$0xf]
        %v6369 = vld [vmem:[#allocation2 + $0xac] sm:$0xf]
        %v6370 = vld [vmem:[#allocation2 + $0xb8] sm:$0xf]
        %v6371 = vld [vmem:[#allocation3 + $0x4] sm:$0xf]
        %v6372 = vld [vmem:[#allocation3 + $0x1c] sm:$0xf]
        %v6373 = vld [vmem:[#allocation3 + $0x34] sm:$0xf]
        %v6374 = vld [vmem:[#allocation3 + $0x4c] sm:$0xf]
        %v6375 = vld [vmem:[#allocation3 + $0x64] sm:$0xf]
        %v6376 = vld [vmem:[#allocation3 + $0x7c] sm:$0xf]
        %v6377 = vld [vmem:[#allocation3 + $0x94] sm:$0xf]
        %v6378 = vld [vmem:[#allocation3 + $0xac] sm:$0xf]
        %v6379 = vld [vmem:[#allocation3 + $0xc4] sm:$0xf]
        %v6380 = vld [vmem:[#allocation3 + $0xdc] sm:$0xf]
        %v6381 = vld [vmem:[#allocation3 + $0xf4] sm:$0xf]
        %v6382 = vld [vmem:[#allocation3 + $0x10c] sm:$0xf]
        %v6383 = vld [vmem:[#allocation3 + $0x124] sm:$0xf]
        %v6384 = vld [vmem:[#allocation3 + $0x13c] sm:$0xf]
        %v6385 = vld [vmem:[#allocation3 + $0x154] sm:$0xf]
        %v6386 = vld [vmem:[#allocation3 + $0x16c] sm:$0xf]
        %v6387 = vld [vmem:[#allocation3 + $0x184] sm:$0xf]
        %v6388 = vld [vmem:[#allocation3 + $0x19c] sm:$0xf]
        %v6389 = vld [vmem:[#allocation3 + $0x1b4] sm:$0xf]
        %v6390 = vld [vmem:[#allocation3 + $0x1cc] sm:$0xf]
        %v6391 = vld [vmem:[#allocation3 + $0x1e4] sm:$0xf]
        %v6392 = vld [vmem:[#allocation3 + $0x1fc] sm:$0xf]
        %v6393 = vld [vmem:[#allocation3 + $0x214] sm:$0xf]
        %v6394 = vld [vmem:[#allocation3 + $0x22c] sm:$0xf]
        %v6395 = vld [vmem:[#allocation3 + $0x244] sm:$0xf]
        %v6396 = vld [vmem:[#allocation3 + $0x25c] sm:$0xf]
        %v6397 = vld [vmem:[#allocation3 + $0x274] sm:$0xf]
        %v6398 = vld [vmem:[#allocation3 + $0x28c] sm:$0xf]
        %v6399 = vld [vmem:[#allocation3 + $0x2a4] sm:$0xf]
        %v6400 = vld [vmem:[#allocation3 + $0x2bc] sm:$0xf]
        %v6401 = vld [vmem:[#allocation3 + $0x2d4] sm:$0xf]
        %v6402 = vld [vmem:[#allocation3 + $0x2ec] sm:$0xf]
        %v6403 = vld [vmem:[#allocation3 + $0x10] sm:$0xf]
        %v6404 = vld [vmem:[#allocation3 + $0x28] sm:$0xf]
        %v6405 = vld [vmem:[#allocation3 + $0x40] sm:$0xf]
        %v6406 = vld [vmem:[#allocation3 + $0x58] sm:$0xf]
        %v6407 = vld [vmem:[#allocation3 + $0x70] sm:$0xf]
        %v6408 = vld [vmem:[#allocation3 + $0x88] sm:$0xf]
        %v6409 = vld [vmem:[#allocation3 + $0xa0] sm:$0xf]
        %v6410 = vld [vmem:[#allocation3 + $0xb8] sm:$0xf]
        %v6411 = vld [vmem:[#allocation3 + $0xd0] sm:$0xf]
        %v6412 = vld [vmem:[#allocation3 + $0xe8] sm:$0xf]
        %v6413 = vld [vmem:[#allocation3 + $0x100] sm:$0xf]
        %v6414 = vld [vmem:[#allocation3 + $0x118] sm:$0xf]
        %v6415 = vld [vmem:[#allocation3 + $0x130] sm:$0xf]
        %v6416 = vld [vmem:[#allocation3 + $0x148] sm:$0xf]
        %v6417 = vld [vmem:[#allocation3 + $0x160] sm:$0xf]
        %v6418 = vld [vmem:[#allocation3 + $0x178] sm:$0xf]
        %v6419 = vld [vmem:[#allocation3 + $0x190] sm:$0xf]
        %v6420 = vld [vmem:[#allocation3 + $0x1a8] sm:$0xf]
        %v6421 = vld [vmem:[#allocation3 + $0x1c0] sm:$0xf]
        %v6422 = vld [vmem:[#allocation3 + $0x1d8] sm:$0xf]
        %v6423 = vld [vmem:[#allocation3 + $0x1f0] sm:$0xf]
        %v6424 = vld [vmem:[#allocation3 + $0x208] sm:$0xf]
        %v6425 = vld [vmem:[#allocation3 + $0x220] sm:$0xf]
        %v6426 = vld [vmem:[#allocation3 + $0x238] sm:$0xf]
        %v6427 = vld [vmem:[#allocation3 + $0x250] sm:$0xf]
        %v6428 = vld [vmem:[#allocation3 + $0x268] sm:$0xf]
        %v6429 = vld [vmem:[#allocation3 + $0x280] sm:$0xf]
        %v6430 = vld [vmem:[#allocation3 + $0x298] sm:$0xf]
        %v6431 = vld [vmem:[#allocation3 + $0x2b0] sm:$0xf]
        %v6432 = vld [vmem:[#allocation3 + $0x2c8] sm:$0xf]
        %v6433 = vld [vmem:[#allocation3 + $0x2e0] sm:$0xf]
        %v6434 = vld [vmem:[#allocation3 + $0x2f8] sm:$0xf]
        %v6451 = vunpack.c.l.b16 %v6355
        %v6452 = vunpack.c.l.b16 %v6356
        %v6453 = vunpack.c.l.b16 %v6357
        %v6454 = vunpack.c.l.b16 %v6358
        %v6455 = vunpack.c.l.b16 %v6359
        %v6456 = vunpack.c.l.b16 %v6360
        %v6457 = vunpack.c.l.b16 %v6361
        %v6458 = vunpack.c.l.b16 %v6362
        %v6459 = vunpack.c.l.b16 %v6363
        %v6460 = vunpack.c.l.b16 %v6364
        %v6461 = vunpack.c.l.b16 %v6365
        %v6462 = vunpack.c.l.b16 %v6366
        %v6463 = vunpack.c.l.b16 %v6367
        %v6464 = vunpack.c.l.b16 %v6368
        %v6465 = vunpack.c.l.b16 %v6369
        %v6466 = vunpack.c.l.b16 %v6370
        %v6467 = vpack.c.b16 %v6452, %v6451
        %v6468 = vpack.c.b16 %v6454, %v6453
        %v6469 = vpack.c.b16 %v6456, %v6455
        %v6470 = vpack.c.b16 %v6458, %v6457
        %v6471 = vpack.c.b16 %v6460, %v6459
        %v6472 = vpack.c.b16 %v6462, %v6461
        %v6473 = vpack.c.b16 %v6464, %v6463
        %v6474 = vpack.c.b16 %v6466, %v6465
        %v6507 = vunpack.c.l.b16 %v6371
        %v6508 = vunpack.c.l.b16 %v6372
        %v6509 = vunpack.c.l.b16 %v6373
        %v6510 = vunpack.c.l.b16 %v6374
        %v6511 = vunpack.c.l.b16 %v6375
        %v6512 = vunpack.c.l.b16 %v6376
        %v6513 = vunpack.c.l.b16 %v6377
        %v6514 = vunpack.c.l.b16 %v6378
        %v6515 = vunpack.c.l.b16 %v6379
        %v6516 = vunpack.c.l.b16 %v6380
        %v6517 = vunpack.c.l.b16 %v6381
        %v6518 = vunpack.c.l.b16 %v6382
        %v6519 = vunpack.c.l.b16 %v6383
        %v6520 = vunpack.c.l.b16 %v6384
        %v6521 = vunpack.c.l.b16 %v6385
        %v6522 = vunpack.c.l.b16 %v6386
        %v6523 = vunpack.c.l.b16 %v6387
        %v6524 = vunpack.c.l.b16 %v6388
        %v6525 = vunpack.c.l.b16 %v6389
        %v6526 = vunpack.c.l.b16 %v6390
        %v6527 = vunpack.c.l.b16 %v6391
        %v6528 = vunpack.c.l.b16 %v6392
        %v6529 = vunpack.c.l.b16 %v6393
        %v6530 = vunpack.c.l.b16 %v6394
        %v6531 = vunpack.c.l.b16 %v6395
        %v6532 = vunpack.c.l.b16 %v6396
        %v6533 = vunpack.c.l.b16 %v6397
        %v6534 = vunpack.c.l.b16 %v6398
        %v6535 = vunpack.c.l.b16 %v6399
        %v6536 = vunpack.c.l.b16 %v6400
        %v6537 = vunpack.c.l.b16 %v6401
        %v6538 = vunpack.c.l.b16 %v6402
        %v6539 = vpack.c.b16 %v6508, %v6507
        %v6540 = vpack.c.b16 %v6510, %v6509
        %v6541 = vpack.c.b16 %v6512, %v6511
        %v6542 = vpack.c.b16 %v6514, %v6513
        %v6543 = vpack.c.b16 %v6516, %v6515
        %v6544 = vpack.c.b16 %v6518, %v6517
        %v6545 = vpack.c.b16 %v6520, %v6519
        %v6546 = vpack.c.b16 %v6522, %v6521
        %v6547 = vpack.c.b16 %v6524, %v6523
        %v6548 = vpack.c.b16 %v6526, %v6525
        %v6549 = vpack.c.b16 %v6528, %v6527
        %v6550 = vpack.c.b16 %v6530, %v6529
        %v6551 = vpack.c.b16 %v6532, %v6531
        %v6552 = vpack.c.b16 %v6534, %v6533
        %v6553 = vpack.c.b16 %v6536, %v6535
        %v6554 = vpack.c.b16 %v6538, %v6537
        %v6556 = vsel %vm4640, %v6467, 0
        %v6559 = vsel %vm4640, %v6468, 0
        %v6562 = vsel %vm4640, %v6469, 0
        %v6565 = vsel %vm4640, %v6470, 0
        %v6568 = vsel %vm4640, %v6471, 0
        %v6571 = vsel %vm4640, %v6472, 0
        %v6574 = vsel %vm4640, %v6473, 0
        %v6577 = vsel %vm4640, %v6474, 0
        %v6580 = vsel %vm4640, %v6539, 0
        %v6583 = vsel %vm4640, %v6540, 0
        %v6586 = vsel %vm4640, %v6541, 0
        %v6589 = vsel %vm4640, %v6542, 0
        %v6592 = vsel %vm4640, %v6543, 0
        %v6595 = vsel %vm4640, %v6544, 0
        %v6598 = vsel %vm4640, %v6545, 0
        %v6601 = vsel %vm4640, %v6546, 0
        %v6604 = vsel %vm4640, %v6547, 0
        %v6607 = vsel %vm4640, %v6548, 0
        %v6610 = vsel %vm4640, %v6549, 0
        %v6613 = vsel %vm4640, %v6550, 0
        %v6616 = vsel %vm4640, %v6551, 0
        %v6619 = vsel %vm4640, %v6552, 0
        %v6622 = vsel %vm4640, %v6553, 0
        %v6625 = vsel %vm4640, %v6554, 0
        %6627 = vmatpush.bf16.xpose.msra.mxu0 %v6601
        %6628 = vmatpush.bf16.xpose.msra.mxu0 %v6598
        %6629 = vmatpush.bf16.xpose.msra.mxu0 %v6595
        %6630 = vmatpush.bf16.xpose.msra.mxu0 %v6592
        %6631 = vmatpush.bf16.xpose.msra.mxu0 %v6589
        %6632 = vmatpush.bf16.xpose.msra.mxu0 %v6586
        %6633 = vmatpush.bf16.xpose.msra.mxu0 %v6583
        %6634 = vmatpush.bf16.xpose.msra.mxu0 %v6580
        %6635 = vmatmul.bf16.gmra.mxu0 %v6556
        %v6636 = vpop.f32.mrf.mxu0
        %v6637 = vadd.f32 0.0, %v6636
        %v6638 = vpop.f32.mrf.mxu0
        %v6639 = vadd.f32 0.0, %v6638
        %6640 = vmatmul.bf16.gmra.mxu0 %v6559
        %v6641 = vpop.f32.mrf.mxu0
        %v6642 = vadd.f32 0.0, %v6641
        %v6643 = vpop.f32.mrf.mxu0
        %v6644 = vadd.f32 0.0, %v6643
        %6645 = vmatmul.bf16.gmra.mxu0 %v6562
        %v6646 = vpop.f32.mrf.mxu0
        %v6647 = vadd.f32 0.0, %v6646
        %v6648 = vpop.f32.mrf.mxu0
        %v6649 = vadd.f32 0.0, %v6648
        %6650 = vmatmul.bf16.gmra.mxu0 %v6565
        %v6651 = vpop.f32.mrf.mxu0
        %v6652 = vadd.f32 0.0, %v6651
        %v6653 = vpop.f32.mrf.mxu0
        %v6654 = vadd.f32 0.0, %v6653
        %6655 = vmatmul.bf16.gmra.mxu0 %v6568
        %v6656 = vpop.f32.mrf.mxu0
        %v6657 = vadd.f32 0.0, %v6656
        %v6658 = vpop.f32.mrf.mxu0
        %v6659 = vadd.f32 0.0, %v6658
        %6660 = vmatmul.bf16.gmra.mxu0 %v6571
        %v6661 = vpop.f32.mrf.mxu0
        %v6662 = vadd.f32 0.0, %v6661
        %v6663 = vpop.f32.mrf.mxu0
        %v6664 = vadd.f32 0.0, %v6663
        %6665 = vmatmul.bf16.gmra.mxu0 %v6574
        %v6666 = vpop.f32.mrf.mxu0
        %v6667 = vadd.f32 0.0, %v6666
        %v6668 = vpop.f32.mrf.mxu0
        %v6669 = vadd.f32 0.0, %v6668
        %6670 = vmatmul.bf16.gmra.mxu0 %v6577
        %v6671 = vpop.f32.mrf.mxu0
        %v6672 = vadd.f32 0.0, %v6671
        %v6673 = vpop.f32.mrf.mxu0
        %v6674 = vadd.f32 0.0, %v6673
        %6675 = vdwg.mxu0
        %6676 = vmatpush.bf16.xpose.msra.mxu0 %v6625
        %6677 = vmatpush.bf16.xpose.msra.mxu0 %v6622
        %6678 = vmatpush.bf16.xpose.msra.mxu0 %v6619
        %6679 = vmatpush.bf16.xpose.msra.mxu0 %v6616
        %6680 = vmatpush.bf16.xpose.msra.mxu0 %v6613
        %6681 = vmatpush.bf16.xpose.msra.mxu0 %v6610
        %6682 = vmatpush.bf16.xpose.msra.mxu0 %v6607
        %6683 = vmatpush.bf16.xpose.msra.mxu0 %v6604
        %6684 = vmatmul.bf16.gmra.mxu0 %v6556
        %v6685 = vpop.f32.mrf.mxu0
        %v6686 = vadd.f32 0.0, %v6685
        %v6687 = vpop.f32.mrf.mxu0
        %v6688 = vadd.f32 0.0, %v6687
        %6689 = vmatmul.bf16.gmra.mxu0 %v6559
        %v6690 = vpop.f32.mrf.mxu0
        %v6691 = vadd.f32 0.0, %v6690
        %v6692 = vpop.f32.mrf.mxu0
        %v6693 = vadd.f32 0.0, %v6692
        %6694 = vmatmul.bf16.gmra.mxu0 %v6562
        %v6695 = vpop.f32.mrf.mxu0
        %v6696 = vadd.f32 0.0, %v6695
        %v6697 = vpop.f32.mrf.mxu0
        %v6698 = vadd.f32 0.0, %v6697
        %6699 = vmatmul.bf16.gmra.mxu0 %v6565
        %v6700 = vpop.f32.mrf.mxu0
        %v6701 = vadd.f32 0.0, %v6700
        %v6702 = vpop.f32.mrf.mxu0
        %v6703 = vadd.f32 0.0, %v6702
        %6704 = vmatmul.bf16.gmra.mxu0 %v6568
        %v6705 = vpop.f32.mrf.mxu0
        %v6706 = vadd.f32 0.0, %v6705
        %v6707 = vpop.f32.mrf.mxu0
        %v6708 = vadd.f32 0.0, %v6707
        %6709 = vmatmul.bf16.gmra.mxu0 %v6571
        %v6710 = vpop.f32.mrf.mxu0
        %v6711 = vadd.f32 0.0, %v6710
        %v6712 = vpop.f32.mrf.mxu0
        %v6713 = vadd.f32 0.0, %v6712
        %6714 = vmatmul.bf16.gmra.mxu0 %v6574
        %v6715 = vpop.f32.mrf.mxu0
        %v6716 = vadd.f32 0.0, %v6715
        %v6717 = vpop.f32.mrf.mxu0
        %v6718 = vadd.f32 0.0, %v6717
        %6719 = vmatmul.bf16.gmra.mxu0 %v6577
        %v6720 = vpop.f32.mrf.mxu0
        %v6721 = vadd.f32 0.0, %v6720
        %v6722 = vpop.f32.mrf.mxu0
        %v6723 = vadd.f32 0.0, %v6722
        %6724 = vdwg.mxu0
        %v6725 = vsel %vm4408, %v6637, -inf
        %v6726 = vsel %vm4409, %v6686, -inf
        %v6727 = vsel %vm4410, %v6639, -inf
        %v6728 = vsel %vm4411, %v6688, -inf
        %v6729 = vsel %vm4412, %v6642, -inf
        %v6730 = vsel %vm4413, %v6691, -inf
        %v6731 = vsel %vm4414, %v6644, -inf
        %v6732 = vsel %vm4415, %v6693, -inf
        %v6733 = vsel %vm4416, %v6647, -inf
        %v6734 = vsel %vm4417, %v6696, -inf
        %v6735 = vsel %vm4418, %v6649, -inf
        %v6736 = vsel %vm4419, %v6698, -inf
        %v6737 = vsel %vm4420, %v6652, -inf
        %v6738 = vsel %vm4421, %v6701, -inf
        %v6739 = vsel %vm4422, %v6654, -inf
        %v6740 = vsel %vm4423, %v6703, -inf
        %v6741 = vsel %vm4424, %v6657, -inf
        %v6742 = vsel %vm4425, %v6706, -inf
        %v6743 = vsel %vm4426, %v6659, -inf
        %v6744 = vsel %vm4427, %v6708, -inf
        %v6745 = vsel %vm4428, %v6662, -inf
        %v6746 = vsel %vm4429, %v6711, -inf
        %v6747 = vsel %vm4430, %v6664, -inf
        %v6748 = vsel %vm4431, %v6713, -inf
        %v6749 = vsel %vm4432, %v6667, -inf
        %v6750 = vsel %vm4433, %v6716, -inf
        %v6751 = vsel %vm4434, %v6669, -inf
        %v6752 = vsel %vm4435, %v6718, -inf
        %v6753 = vsel %vm4436, %v6672, -inf
        %v6754 = vsel %vm4437, %v6721, -inf
        %v6755 = vsel %vm4438, %v6674, -inf
        %v6756 = vsel %vm4439, %v6723, -inf
        %v6757 = vmax.f32 %v6725, %v6726
        %6758 = vmax.xlane.f32.xlu0 %v6757
        %v6759 = vpop.xlane.xlu0 %6758
        %v6760 = vmax.f32 %v6727, %v6728
        %6761 = vmax.xlane.f32.xlu0 %v6760
        %v6762 = vpop.xlane.xlu0 %6761
        %v6763 = vmax.f32 %v6729, %v6730
        %6764 = vmax.xlane.f32.xlu0 %v6763
        %v6765 = vpop.xlane.xlu0 %6764
        %v6766 = vmax.f32 %v6731, %v6732
        %6767 = vmax.xlane.f32.xlu0 %v6766
        %v6768 = vpop.xlane.xlu0 %6767
        %v6769 = vmax.f32 %v6733, %v6734
        %6770 = vmax.xlane.f32.xlu0 %v6769
        %v6771 = vpop.xlane.xlu0 %6770
        %v6772 = vmax.f32 %v6735, %v6736
        %6773 = vmax.xlane.f32.xlu0 %v6772
        %v6774 = vpop.xlane.xlu0 %6773
        %v6775 = vmax.f32 %v6737, %v6738
        %6776 = vmax.xlane.f32.xlu0 %v6775
        %v6777 = vpop.xlane.xlu0 %6776
        %v6778 = vmax.f32 %v6739, %v6740
        %6779 = vmax.xlane.f32.xlu0 %v6778
        %v6780 = vpop.xlane.xlu0 %6779
        %v6781 = vmax.f32 %v6741, %v6742
        %6782 = vmax.xlane.f32.xlu0 %v6781
        %v6783 = vpop.xlane.xlu0 %6782
        %v6784 = vmax.f32 %v6743, %v6744
        %6785 = vmax.xlane.f32.xlu0 %v6784
        %v6786 = vpop.xlane.xlu0 %6785
        %v6787 = vmax.f32 %v6745, %v6746
        %6788 = vmax.xlane.f32.xlu0 %v6787
        %v6789 = vpop.xlane.xlu0 %6788
        %v6790 = vmax.f32 %v6747, %v6748
        %6791 = vmax.xlane.f32.xlu0 %v6790
        %v6792 = vpop.xlane.xlu0 %6791
        %v6793 = vmax.f32 %v6749, %v6750
        %6794 = vmax.xlane.f32.xlu0 %v6793
        %v6795 = vpop.xlane.xlu0 %6794
        %v6796 = vmax.f32 %v6751, %v6752
        %6797 = vmax.xlane.f32.xlu0 %v6796
        %v6798 = vpop.xlane.xlu0 %6797
        %v6799 = vmax.f32 %v6753, %v6754
        %6800 = vmax.xlane.f32.xlu0 %v6799
        %v6801 = vpop.xlane.xlu0 %6800
        %v6802 = vmax.f32 %v6755, %v6756
        %6803 = vmax.xlane.f32.xlu0 %v6802
        %v6804 = vpop.xlane.xlu0 %6803
        %v6805 = vsub.f32 %v6725, %v6759
        %v6806 = vsub.f32 %v6726, %v6759
        %v6807 = vsub.f32 %v6727, %v6762
        %v6808 = vsub.f32 %v6728, %v6762
        %v6809 = vsub.f32 %v6729, %v6765
        %v6810 = vsub.f32 %v6730, %v6765
        %v6811 = vsub.f32 %v6731, %v6768
        %v6812 = vsub.f32 %v6732, %v6768
        %v6813 = vsub.f32 %v6733, %v6771
        %v6814 = vsub.f32 %v6734, %v6771
        %v6815 = vsub.f32 %v6735, %v6774
        %v6816 = vsub.f32 %v6736, %v6774
        %v6817 = vsub.f32 %v6737, %v6777
        %v6818 = vsub.f32 %v6738, %v6777
        %v6819 = vsub.f32 %v6739, %v6780
        %v6820 = vsub.f32 %v6740, %v6780
        %v6821 = vsub.f32 %v6741, %v6783
        %v6822 = vsub.f32 %v6742, %v6783
        %v6823 = vsub.f32 %v6743, %v6786
        %v6824 = vsub.f32 %v6744, %v6786
        %v6825 = vsub.f32 %v6745, %v6789
        %v6826 = vsub.f32 %v6746, %v6789
        %v6827 = vsub.f32 %v6747, %v6792
        %v6828 = vsub.f32 %v6748, %v6792
        %v6829 = vsub.f32 %v6749, %v6795
        %v6830 = vsub.f32 %v6750, %v6795
        %v6831 = vsub.f32 %v6751, %v6798
        %v6832 = vsub.f32 %v6752, %v6798
        %v6833 = vsub.f32 %v6753, %v6801
        %v6834 = vsub.f32 %v6754, %v6801
        %v6835 = vsub.f32 %v6755, %v6804
        %v6836 = vsub.f32 %v6756, %v6804
        %v6837 = vmul.f32 %v6805, 1.442695
        %v6838 = vpow.pop %v6837
        %v6839 = vmul.f32 %v6806, 1.442695
        %v6840 = vpow.pop %v6839
        %v6841 = vmul.f32 %v6807, 1.442695
        %v6842 = vpow.pop %v6841
        %v6843 = vmul.f32 %v6808, 1.442695
        %v6844 = vpow.pop %v6843
        %v6845 = vmul.f32 %v6809, 1.442695
        %v6846 = vpow.pop %v6845
        %v6847 = vmul.f32 %v6810, 1.442695
        %v6848 = vpow.pop %v6847
        %v6849 = vmul.f32 %v6811, 1.442695
        %v6850 = vpow.pop %v6849
        %v6851 = vmul.f32 %v6812, 1.442695
        %v6852 = vpow.pop %v6851
        %v6853 = vmul.f32 %v6813, 1.442695
        %v6854 = vpow.pop %v6853
        %v6855 = vmul.f32 %v6814, 1.442695
        %v6856 = vpow.pop %v6855
        %v6857 = vmul.f32 %v6815, 1.442695
        %v6858 = vpow.pop %v6857
        %v6859 = vmul.f32 %v6816, 1.442695
        %v6860 = vpow.pop %v6859
        %v6861 = vmul.f32 %v6817, 1.442695
        %v6862 = vpow.pop %v6861
        %v6863 = vmul.f32 %v6818, 1.442695
        %v6864 = vpow.pop %v6863
        %v6865 = vmul.f32 %v6819, 1.442695
        %v6866 = vpow.pop %v6865
        %v6867 = vmul.f32 %v6820, 1.442695
        %v6868 = vpow.pop %v6867
        %v6869 = vmul.f32 %v6821, 1.442695
        %v6870 = vpow.pop %v6869
        %v6871 = vmul.f32 %v6822, 1.442695
        %v6872 = vpow.pop %v6871
        %v6873 = vmul.f32 %v6823, 1.442695
        %v6874 = vpow.pop %v6873
        %v6875 = vmul.f32 %v6824, 1.442695
        %v6876 = vpow.pop %v6875
        %v6877 = vmul.f32 %v6825, 1.442695
        %v6878 = vpow.pop %v6877
        %v6879 = vmul.f32 %v6826, 1.442695
        %v6880 = vpow.pop %v6879
        %v6881 = vmul.f32 %v6827, 1.442695
        %v6882 = vpow.pop %v6881
        %v6883 = vmul.f32 %v6828, 1.442695
        %v6884 = vpow.pop %v6883
        %v6885 = vmul.f32 %v6829, 1.442695
        %v6886 = vpow.pop %v6885
        %v6887 = vmul.f32 %v6830, 1.442695
        %v6888 = vpow.pop %v6887
        %v6889 = vmul.f32 %v6831, 1.442695
        %v6890 = vpow.pop %v6889
        %v6891 = vmul.f32 %v6832, 1.442695
        %v6892 = vpow.pop %v6891
        %v6893 = vmul.f32 %v6833, 1.442695
        %v6894 = vpow.pop %v6893
        %v6895 = vmul.f32 %v6834, 1.442695
        %v6896 = vpow.pop %v6895
        %v6897 = vmul.f32 %v6835, 1.442695
        %v6898 = vpow.pop %v6897
        %v6899 = vmul.f32 %v6836, 1.442695
        %v6900 = vpow.pop %v6899
        %v6901 = vadd.f32 %v6838, %v6840
        %6902 = vadd.xlane.f32.xlu0 %v6901
        %v6903 = vpop.xlane.xlu0 %6902
        %v6904 = vadd.f32 %v6842, %v6844
        %6905 = vadd.xlane.f32.xlu0 %v6904
        %v6906 = vpop.xlane.xlu0 %6905
        %v6907 = vadd.f32 %v6846, %v6848
        %6908 = vadd.xlane.f32.xlu0 %v6907
        %v6909 = vpop.xlane.xlu0 %6908
        %v6910 = vadd.f32 %v6850, %v6852
        %6911 = vadd.xlane.f32.xlu0 %v6910
        %v6912 = vpop.xlane.xlu0 %6911
        %v6913 = vadd.f32 %v6854, %v6856
        %6914 = vadd.xlane.f32.xlu0 %v6913
        %v6915 = vpop.xlane.xlu0 %6914
        %v6916 = vadd.f32 %v6858, %v6860
        %6917 = vadd.xlane.f32.xlu0 %v6916
        %v6918 = vpop.xlane.xlu0 %6917
        %v6919 = vadd.f32 %v6862, %v6864
        %6920 = vadd.xlane.f32.xlu0 %v6919
        %v6921 = vpop.xlane.xlu0 %6920
        %v6922 = vadd.f32 %v6866, %v6868
        %6923 = vadd.xlane.f32.xlu0 %v6922
        %v6924 = vpop.xlane.xlu0 %6923
        %v6925 = vadd.f32 %v6870, %v6872
        %6926 = vadd.xlane.f32.xlu0 %v6925
        %v6927 = vpop.xlane.xlu0 %6926
        %v6928 = vadd.f32 %v6874, %v6876
        %6929 = vadd.xlane.f32.xlu0 %v6928
        %v6930 = vpop.xlane.xlu0 %6929
        %v6931 = vadd.f32 %v6878, %v6880
        %6932 = vadd.xlane.f32.xlu0 %v6931
        %v6933 = vpop.xlane.xlu0 %6932
        %v6934 = vadd.f32 %v6882, %v6884
        %6935 = vadd.xlane.f32.xlu0 %v6934
        %v6936 = vpop.xlane.xlu0 %6935
        %v6937 = vadd.f32 %v6886, %v6888
        %6938 = vadd.xlane.f32.xlu0 %v6937
        %v6939 = vpop.xlane.xlu0 %6938
        %v6940 = vadd.f32 %v6890, %v6892
        %6941 = vadd.xlane.f32.xlu0 %v6940
        %v6942 = vpop.xlane.xlu0 %6941
        %v6943 = vadd.f32 %v6894, %v6896
        %6944 = vadd.xlane.f32.xlu0 %v6943
        %v6945 = vpop.xlane.xlu0 %6944
        %v6946 = vadd.f32 %v6898, %v6900
        %6947 = vadd.xlane.f32.xlu0 %v6946
        %v6948 = vpop.xlane.xlu0 %6947
        %v6949 = vrcp.pop %v6903
        %v6950 = vrcp.pop %v6906
        %v6951 = vrcp.pop %v6909
        %v6952 = vrcp.pop %v6912
        %v6953 = vrcp.pop %v6915
        %v6954 = vrcp.pop %v6918
        %v6955 = vrcp.pop %v6921
        %v6956 = vrcp.pop %v6924
        %v6957 = vrcp.pop %v6927
        %v6958 = vrcp.pop %v6930
        %v6959 = vrcp.pop %v6933
        %v6960 = vrcp.pop %v6936
        %v6961 = vrcp.pop %v6939
        %v6962 = vrcp.pop %v6942
        %v6963 = vrcp.pop %v6945
        %v6964 = vrcp.pop %v6948
        %v6965 = vmul.f32 %v6838, %v6949
        %v6966 = vmul.f32 %v6840, %v6949
        %v6967 = vmul.f32 %v6842, %v6950
        %v6968 = vmul.f32 %v6844, %v6950
        %v6969 = vmul.f32 %v6846, %v6951
        %v6970 = vmul.f32 %v6848, %v6951
        %v6971 = vmul.f32 %v6850, %v6952
        %v6972 = vmul.f32 %v6852, %v6952
        %v6973 = vmul.f32 %v6854, %v6953
        %v6974 = vmul.f32 %v6856, %v6953
        %v6975 = vmul.f32 %v6858, %v6954
        %v6976 = vmul.f32 %v6860, %v6954
        %v6977 = vmul.f32 %v6862, %v6955
        %v6978 = vmul.f32 %v6864, %v6955
        %v6979 = vmul.f32 %v6866, %v6956
        %v6980 = vmul.f32 %v6868, %v6956
        %v6981 = vmul.f32 %v6870, %v6957
        %v6982 = vmul.f32 %v6872, %v6957
        %v6983 = vmul.f32 %v6874, %v6958
        %v6984 = vmul.f32 %v6876, %v6958
        %v6985 = vmul.f32 %v6878, %v6959
        %v6986 = vmul.f32 %v6880, %v6959
        %v6987 = vmul.f32 %v6882, %v6960
        %v6988 = vmul.f32 %v6884, %v6960
        %v6989 = vmul.f32 %v6886, %v6961
        %v6990 = vmul.f32 %v6888, %v6961
        %v6991 = vmul.f32 %v6890, %v6962
        %v6992 = vmul.f32 %v6892, %v6962
        %v6993 = vmul.f32 %v6894, %v6963
        %v6994 = vmul.f32 %v6896, %v6963
        %v6995 = vmul.f32 %v6898, %v6964
        %v6996 = vmul.f32 %v6900, %v6964
        %v6997 = vpack.c.bf16 %v6967, %v6965
        %v6998 = vpack.c.bf16 %v6968, %v6966
        %v6999 = vpack.c.bf16 %v6971, %v6969
        %v7000 = vpack.c.bf16 %v6972, %v6970
        %v7001 = vpack.c.bf16 %v6975, %v6973
        %v7002 = vpack.c.bf16 %v6976, %v6974
        %v7003 = vpack.c.bf16 %v6979, %v6977
        %v7004 = vpack.c.bf16 %v6980, %v6978
        %v7005 = vpack.c.bf16 %v6983, %v6981
        %v7006 = vpack.c.bf16 %v6984, %v6982
        %v7007 = vpack.c.bf16 %v6987, %v6985
        %v7008 = vpack.c.bf16 %v6988, %v6986
        %v7009 = vpack.c.bf16 %v6991, %v6989
        %v7010 = vpack.c.bf16 %v6992, %v6990
        %v7011 = vpack.c.bf16 %v6995, %v6993
        %v7012 = vpack.c.bf16 %v6996, %v6994
        %v7045 = vunpack.c.l.b16 %v6403
        %v7046 = vunpack.c.l.b16 %v6404
        %v7047 = vunpack.c.l.b16 %v6405
        %v7048 = vunpack.c.l.b16 %v6406
        %v7049 = vunpack.c.l.b16 %v6407
        %v7050 = vunpack.c.l.b16 %v6408
        %v7051 = vunpack.c.l.b16 %v6409
        %v7052 = vunpack.c.l.b16 %v6410
        %v7053 = vunpack.c.l.b16 %v6411
        %v7054 = vunpack.c.l.b16 %v6412
        %v7055 = vunpack.c.l.b16 %v6413
        %v7056 = vunpack.c.l.b16 %v6414
        %v7057 = vunpack.c.l.b16 %v6415
        %v7058 = vunpack.c.l.b16 %v6416
        %v7059 = vunpack.c.l.b16 %v6417
        %v7060 = vunpack.c.l.b16 %v6418
        %v7061 = vunpack.c.l.b16 %v6419
        %v7062 = vunpack.c.l.b16 %v6420
        %v7063 = vunpack.c.l.b16 %v6421
        %v7064 = vunpack.c.l.b16 %v6422
        %v7065 = vunpack.c.l.b16 %v6423
        %v7066 = vunpack.c.l.b16 %v6424
        %v7067 = vunpack.c.l.b16 %v6425
        %v7068 = vunpack.c.l.b16 %v6426
        %v7069 = vunpack.c.l.b16 %v6427
        %v7070 = vunpack.c.l.b16 %v6428
        %v7071 = vunpack.c.l.b16 %v6429
        %v7072 = vunpack.c.l.b16 %v6430
        %v7073 = vunpack.c.l.b16 %v6431
        %v7074 = vunpack.c.l.b16 %v6432
        %v7075 = vunpack.c.l.b16 %v6433
        %v7076 = vunpack.c.l.b16 %v6434
        %v7077 = vpack.c.b16 %v7046, %v7045
        %v7078 = vpack.c.b16 %v7048, %v7047
        %v7079 = vpack.c.b16 %v7050, %v7049
        %v7080 = vpack.c.b16 %v7052, %v7051
        %v7081 = vpack.c.b16 %v7054, %v7053
        %v7082 = vpack.c.b16 %v7056, %v7055
        %v7083 = vpack.c.b16 %v7058, %v7057
        %v7084 = vpack.c.b16 %v7060, %v7059
        %v7085 = vpack.c.b16 %v7062, %v7061
        %v7086 = vpack.c.b16 %v7064, %v7063
        %v7087 = vpack.c.b16 %v7066, %v7065
        %v7088 = vpack.c.b16 %v7068, %v7067
        %v7089 = vpack.c.b16 %v7070, %v7069
        %v7090 = vpack.c.b16 %v7072, %v7071
        %v7091 = vpack.c.b16 %v7074, %v7073
        %v7092 = vpack.c.b16 %v7076, %v7075
        %7109 = vmatpush.bf16.msra.mxu0 %v7084
        %7110 = vmatpush.bf16.msra.mxu0 %v7083
        %7111 = vmatpush.bf16.msra.mxu0 %v7082
        %7112 = vmatpush.bf16.msra.mxu0 %v7081
        %7113 = vmatpush.bf16.msra.mxu0 %v7080
        %7114 = vmatpush.bf16.msra.mxu0 %v7079
        %7115 = vmatpush.bf16.msra.mxu0 %v7078
        %7116 = vmatpush.bf16.msra.mxu0 %v7077
        %7117 = vmatmul.bf16.gmra.mxu0 %v6997
        %v7118 = vpop.f32.mrf.mxu0
        %v7119 = vadd.f32 0.0, %v7118
        %v7120 = vpop.f32.mrf.mxu0
        %v7121 = vadd.f32 0.0, %v7120
        %7122 = vmatmul.bf16.gmra.mxu0 %v6999
        %v7123 = vpop.f32.mrf.mxu0
        %v7124 = vadd.f32 0.0, %v7123
        %v7125 = vpop.f32.mrf.mxu0
        %v7126 = vadd.f32 0.0, %v7125
        %7127 = vmatmul.bf16.gmra.mxu0 %v7001
        %v7128 = vpop.f32.mrf.mxu0
        %v7129 = vadd.f32 0.0, %v7128
        %v7130 = vpop.f32.mrf.mxu0
        %v7131 = vadd.f32 0.0, %v7130
        %7132 = vmatmul.bf16.gmra.mxu0 %v7003
        %v7133 = vpop.f32.mrf.mxu0
        %v7134 = vadd.f32 0.0, %v7133
        %v7135 = vpop.f32.mrf.mxu0
        %v7136 = vadd.f32 0.0, %v7135
        %7137 = vmatmul.bf16.gmra.mxu0 %v7005
        %v7138 = vpop.f32.mrf.mxu0
        %v7139 = vadd.f32 0.0, %v7138
        %v7140 = vpop.f32.mrf.mxu0
        %v7141 = vadd.f32 0.0, %v7140
        %7142 = vmatmul.bf16.gmra.mxu0 %v7007
        %v7143 = vpop.f32.mrf.mxu0
        %v7144 = vadd.f32 0.0, %v7143
        %v7145 = vpop.f32.mrf.mxu0
        %v7146 = vadd.f32 0.0, %v7145
        %7147 = vmatmul.bf16.gmra.mxu0 %v7009
        %v7148 = vpop.f32.mrf.mxu0
        %v7149 = vadd.f32 0.0, %v7148
        %v7150 = vpop.f32.mrf.mxu0
        %v7151 = vadd.f32 0.0, %v7150
        %7152 = vmatmul.bf16.gmra.mxu0 %v7011
        %v7153 = vpop.f32.mrf.mxu0
        %v7154 = vadd.f32 0.0, %v7153
        %v7155 = vpop.f32.mrf.mxu0
        %v7156 = vadd.f32 0.0, %v7155
        %7157 = vdwg.mxu0
        %7158 = vmatpush.bf16.msra.mxu0 %v7092
        %7159 = vmatpush.bf16.msra.mxu0 %v7091
        %7160 = vmatpush.bf16.msra.mxu0 %v7090
        %7161 = vmatpush.bf16.msra.mxu0 %v7089
        %7162 = vmatpush.bf16.msra.mxu0 %v7088
        %7163 = vmatpush.bf16.msra.mxu0 %v7087
        %7164 = vmatpush.bf16.msra.mxu0 %v7086
        %7165 = vmatpush.bf16.msra.mxu0 %v7085
        %7166 = vmatmul.bf16.gmra.mxu0 %v6998
        %v7167 = vpop.f32.mrf.mxu0
        %v7168 = vadd.f32 %v7119, %v7167
        %v7169 = vpop.f32.mrf.mxu0
        %v7170 = vadd.f32 %v7121, %v7169
        %7171 = vmatmul.bf16.gmra.mxu0 %v7000
        %v7172 = vpop.f32.mrf.mxu0
        %v7173 = vadd.f32 %v7124, %v7172
        %v7174 = vpop.f32.mrf.mxu0
        %v7175 = vadd.f32 %v7126, %v7174
        %7176 = vmatmul.bf16.gmra.mxu0 %v7002
        %v7177 = vpop.f32.mrf.mxu0
        %v7178 = vadd.f32 %v7129, %v7177
        %v7179 = vpop.f32.mrf.mxu0
        %v7180 = vadd.f32 %v7131, %v7179
        %7181 = vmatmul.bf16.gmra.mxu0 %v7004
        %v7182 = vpop.f32.mrf.mxu0
        %v7183 = vadd.f32 %v7134, %v7182
        %v7184 = vpop.f32.mrf.mxu0
        %v7185 = vadd.f32 %v7136, %v7184
        %7186 = vmatmul.bf16.gmra.mxu0 %v7006
        %v7187 = vpop.f32.mrf.mxu0
        %v7188 = vadd.f32 %v7139, %v7187
        %v7189 = vpop.f32.mrf.mxu0
        %v7190 = vadd.f32 %v7141, %v7189
        %7191 = vmatmul.bf16.gmra.mxu0 %v7008
        %v7192 = vpop.f32.mrf.mxu0
        %v7193 = vadd.f32 %v7144, %v7192
        %v7194 = vpop.f32.mrf.mxu0
        %v7195 = vadd.f32 %v7146, %v7194
        %7196 = vmatmul.bf16.gmra.mxu0 %v7010
        %v7197 = vpop.f32.mrf.mxu0
        %v7198 = vadd.f32 %v7149, %v7197
        %v7199 = vpop.f32.mrf.mxu0
        %v7200 = vadd.f32 %v7151, %v7199
        %7201 = vmatmul.bf16.gmra.mxu0 %v7012
        %v7202 = vpop.f32.mrf.mxu0
        %v7203 = vadd.f32 %v7154, %v7202
        %v7204 = vpop.f32.mrf.mxu0
        %v7205 = vadd.f32 %v7156, %v7204
        %7206 = vdwg.mxu0
        %v7207 = vpack.c.bf16 %v7168, %v7168
        %v7208 = vpack.c.bf16 %v7170, %v7170
        %v7209 = vpack.c.bf16 %v7173, %v7173
        %v7210 = vpack.c.bf16 %v7175, %v7175
        %v7211 = vpack.c.bf16 %v7178, %v7178
        %v7212 = vpack.c.bf16 %v7180, %v7180
        %v7213 = vpack.c.bf16 %v7183, %v7183
        %v7214 = vpack.c.bf16 %v7185, %v7185
        %v7215 = vpack.c.bf16 %v7188, %v7188
        %v7216 = vpack.c.bf16 %v7190, %v7190
        %v7217 = vpack.c.bf16 %v7193, %v7193
        %v7218 = vpack.c.bf16 %v7195, %v7195
        %v7219 = vpack.c.bf16 %v7198, %v7198
        %v7220 = vpack.c.bf16 %v7200, %v7200
        %v7221 = vpack.c.bf16 %v7203, %v7203
        %v7222 = vpack.c.bf16 %v7205, %v7205
        %7223 = vst.msk [vmem:[#allocation4 + $0x4] sm:$0xf] %vm5309, %v7207
        %7224 = vst.msk [vmem:[#allocation4 + $0x10] sm:$0xf] %vm5309, %v7208
        %7225 = vst.msk [vmem:[#allocation4 + $0x1c] sm:$0xf] %vm5309, %v7209
        %7226 = vst.msk [vmem:[#allocation4 + $0x28] sm:$0xf] %vm5309, %v7210
        %7227 = vst.msk [vmem:[#allocation4 + $0x34] sm:$0xf] %vm5309, %v7211
        %7228 = vst.msk [vmem:[#allocation4 + $0x40] sm:$0xf] %vm5309, %v7212
        %7229 = vst.msk [vmem:[#allocation4 + $0x4c] sm:$0xf] %vm5309, %v7213
        %7230 = vst.msk [vmem:[#allocation4 + $0x58] sm:$0xf] %vm5309, %v7214
        %7231 = vst.msk [vmem:[#allocation4 + $0x64] sm:$0xf] %vm5309, %v7215
        %7232 = vst.msk [vmem:[#allocation4 + $0x70] sm:$0xf] %vm5309, %v7216
        %7233 = vst.msk [vmem:[#allocation4 + $0x7c] sm:$0xf] %vm5309, %v7217
        %7234 = vst.msk [vmem:[#allocation4 + $0x88] sm:$0xf] %vm5309, %v7218
        %7235 = vst.msk [vmem:[#allocation4 + $0x94] sm:$0xf] %vm5309, %v7219
        %7236 = vst.msk [vmem:[#allocation4 + $0xa0] sm:$0xf] %vm5309, %v7220
        %7237 = vst.msk [vmem:[#allocation4 + $0xac] sm:$0xf] %vm5309, %v7221
        %7238 = vst.msk [vmem:[#allocation4 + $0xb8] sm:$0xf] %vm5309, %v7222
        %v7239 = vld [vmem:[#allocation2 + $0x4] sm:$0xf]
        %v7240 = vld [vmem:[#allocation2 + $0x10] sm:$0xf]
        %v7241 = vld [vmem:[#allocation2 + $0x1c] sm:$0xf]
        %v7242 = vld [vmem:[#allocation2 + $0x28] sm:$0xf]
        %v7243 = vld [vmem:[#allocation2 + $0x34] sm:$0xf]
        %v7244 = vld [vmem:[#allocation2 + $0x40] sm:$0xf]
        %v7245 = vld [vmem:[#allocation2 + $0x4c] sm:$0xf]
        %v7246 = vld [vmem:[#allocation2 + $0x58] sm:$0xf]
        %v7247 = vld [vmem:[#allocation2 + $0x64] sm:$0xf]
        %v7248 = vld [vmem:[#allocation2 + $0x70] sm:$0xf]
        %v7249 = vld [vmem:[#allocation2 + $0x7c] sm:$0xf]
        %v7250 = vld [vmem:[#allocation2 + $0x88] sm:$0xf]
        %v7251 = vld [vmem:[#allocation2 + $0x94] sm:$0xf]
        %v7252 = vld [vmem:[#allocation2 + $0xa0] sm:$0xf]
        %v7253 = vld [vmem:[#allocation2 + $0xac] sm:$0xf]
        %v7254 = vld [vmem:[#allocation2 + $0xb8] sm:$0xf]
        %v7255 = vld [vmem:[#allocation3 + $0x4] sm:$0xf]
        %v7256 = vld [vmem:[#allocation3 + $0x1c] sm:$0xf]
        %v7257 = vld [vmem:[#allocation3 + $0x34] sm:$0xf]
        %v7258 = vld [vmem:[#allocation3 + $0x4c] sm:$0xf]
        %v7259 = vld [vmem:[#allocation3 + $0x64] sm:$0xf]
        %v7260 = vld [vmem:[#allocation3 + $0x7c] sm:$0xf]
        %v7261 = vld [vmem:[#allocation3 + $0x94] sm:$0xf]
        %v7262 = vld [vmem:[#allocation3 + $0xac] sm:$0xf]
        %v7263 = vld [vmem:[#allocation3 + $0xc4] sm:$0xf]
        %v7264 = vld [vmem:[#allocation3 + $0xdc] sm:$0xf]
        %v7265 = vld [vmem:[#allocation3 + $0xf4] sm:$0xf]
        %v7266 = vld [vmem:[#allocation3 + $0x10c] sm:$0xf]
        %v7267 = vld [vmem:[#allocation3 + $0x124] sm:$0xf]
        %v7268 = vld [vmem:[#allocation3 + $0x13c] sm:$0xf]
        %v7269 = vld [vmem:[#allocation3 + $0x154] sm:$0xf]
        %v7270 = vld [vmem:[#allocation3 + $0x16c] sm:$0xf]
        %v7271 = vld [vmem:[#allocation3 + $0x184] sm:$0xf]
        %v7272 = vld [vmem:[#allocation3 + $0x19c] sm:$0xf]
        %v7273 = vld [vmem:[#allocation3 + $0x1b4] sm:$0xf]
        %v7274 = vld [vmem:[#allocation3 + $0x1cc] sm:$0xf]
        %v7275 = vld [vmem:[#allocation3 + $0x1e4] sm:$0xf]
        %v7276 = vld [vmem:[#allocation3 + $0x1fc] sm:$0xf]
        %v7277 = vld [vmem:[#allocation3 + $0x214] sm:$0xf]
        %v7278 = vld [vmem:[#allocation3 + $0x22c] sm:$0xf]
        %v7279 = vld [vmem:[#allocation3 + $0x244] sm:$0xf]
        %v7280 = vld [vmem:[#allocation3 + $0x25c] sm:$0xf]
        %v7281 = vld [vmem:[#allocation3 + $0x274] sm:$0xf]
        %v7282 = vld [vmem:[#allocation3 + $0x28c] sm:$0xf]
        %v7283 = vld [vmem:[#allocation3 + $0x2a4] sm:$0xf]
        %v7284 = vld [vmem:[#allocation3 + $0x2bc] sm:$0xf]
        %v7285 = vld [vmem:[#allocation3 + $0x2d4] sm:$0xf]
        %v7286 = vld [vmem:[#allocation3 + $0x2ec] sm:$0xf]
        %v7287 = vld [vmem:[#allocation3 + $0x10] sm:$0xf]
        %v7288 = vld [vmem:[#allocation3 + $0x28] sm:$0xf]
        %v7289 = vld [vmem:[#allocation3 + $0x40] sm:$0xf]
        %v7290 = vld [vmem:[#allocation3 + $0x58] sm:$0xf]
        %v7291 = vld [vmem:[#allocation3 + $0x70] sm:$0xf]
        %v7292 = vld [vmem:[#allocation3 + $0x88] sm:$0xf]
        %v7293 = vld [vmem:[#allocation3 + $0xa0] sm:$0xf]
        %v7294 = vld [vmem:[#allocation3 + $0xb8] sm:$0xf]
        %v7295 = vld [vmem:[#allocation3 + $0xd0] sm:$0xf]
        %v7296 = vld [vmem:[#allocation3 + $0xe8] sm:$0xf]
        %v7297 = vld [vmem:[#allocation3 + $0x100] sm:$0xf]
        %v7298 = vld [vmem:[#allocation3 + $0x118] sm:$0xf]
        %v7299 = vld [vmem:[#allocation3 + $0x130] sm:$0xf]
        %v7300 = vld [vmem:[#allocation3 + $0x148] sm:$0xf]
        %v7301 = vld [vmem:[#allocation3 + $0x160] sm:$0xf]
        %v7302 = vld [vmem:[#allocation3 + $0x178] sm:$0xf]
        %v7303 = vld [vmem:[#allocation3 + $0x190] sm:$0xf]
        %v7304 = vld [vmem:[#allocation3 + $0x1a8] sm:$0xf]
        %v7305 = vld [vmem:[#allocation3 + $0x1c0] sm:$0xf]
        %v7306 = vld [vmem:[#allocation3 + $0x1d8] sm:$0xf]
        %v7307 = vld [vmem:[#allocation3 + $0x1f0] sm:$0xf]
        %v7308 = vld [vmem:[#allocation3 + $0x208] sm:$0xf]
        %v7309 = vld [vmem:[#allocation3 + $0x220] sm:$0xf]
        %v7310 = vld [vmem:[#allocation3 + $0x238] sm:$0xf]
        %v7311 = vld [vmem:[#allocation3 + $0x250] sm:$0xf]
        %v7312 = vld [vmem:[#allocation3 + $0x268] sm:$0xf]
        %v7313 = vld [vmem:[#allocation3 + $0x280] sm:$0xf]
        %v7314 = vld [vmem:[#allocation3 + $0x298] sm:$0xf]
        %v7315 = vld [vmem:[#allocation3 + $0x2b0] sm:$0xf]
        %v7316 = vld [vmem:[#allocation3 + $0x2c8] sm:$0xf]
        %v7317 = vld [vmem:[#allocation3 + $0x2e0] sm:$0xf]
        %v7318 = vld [vmem:[#allocation3 + $0x2f8] sm:$0xf]
        %v7335 = vunpack.c.l.b16 %v7239
        %v7336 = vunpack.c.l.b16 %v7240
        %v7337 = vunpack.c.l.b16 %v7241
        %v7338 = vunpack.c.l.b16 %v7242
        %v7339 = vunpack.c.l.b16 %v7243
        %v7340 = vunpack.c.l.b16 %v7244
        %v7341 = vunpack.c.l.b16 %v7245
        %v7342 = vunpack.c.l.b16 %v7246
        %v7343 = vunpack.c.l.b16 %v7247
        %v7344 = vunpack.c.l.b16 %v7248
        %v7345 = vunpack.c.l.b16 %v7249
        %v7346 = vunpack.c.l.b16 %v7250
        %v7347 = vunpack.c.l.b16 %v7251
        %v7348 = vunpack.c.l.b16 %v7252
        %v7349 = vunpack.c.l.b16 %v7253
        %v7350 = vunpack.c.l.b16 %v7254
        %v7351 = vpack.c.b16 %v7336, %v7335
        %v7352 = vpack.c.b16 %v7338, %v7337
        %v7353 = vpack.c.b16 %v7340, %v7339
        %v7354 = vpack.c.b16 %v7342, %v7341
        %v7355 = vpack.c.b16 %v7344, %v7343
        %v7356 = vpack.c.b16 %v7346, %v7345
        %v7357 = vpack.c.b16 %v7348, %v7347
        %v7358 = vpack.c.b16 %v7350, %v7349
        %7359 = vrot.lane.b32.xlu0 %v7351, 64
        %v7360 = vpop.permute.xlu0 %7359
        %7361 = vrot.lane.b32.xlu0 %v7352, 64
        %v7362 = vpop.permute.xlu0 %7361
        %7363 = vrot.lane.b32.xlu0 %v7353, 64
        %v7364 = vpop.permute.xlu0 %7363
        %7365 = vrot.lane.b32.xlu0 %v7354, 64
        %v7366 = vpop.permute.xlu0 %7365
        %7367 = vrot.lane.b32.xlu0 %v7355, 64
        %v7368 = vpop.permute.xlu0 %7367
        %7369 = vrot.lane.b32.xlu0 %v7356, 64
        %v7370 = vpop.permute.xlu0 %7369
        %7371 = vrot.lane.b32.xlu0 %v7357, 64
        %v7372 = vpop.permute.xlu0 %7371
        %7373 = vrot.lane.b32.xlu0 %v7358, 64
        %v7374 = vpop.permute.xlu0 %7373
        %v7407 = vunpack.c.l.b16 %v7255
        %v7408 = vunpack.c.l.b16 %v7256
        %v7409 = vunpack.c.l.b16 %v7257
        %v7410 = vunpack.c.l.b16 %v7258
        %v7411 = vunpack.c.l.b16 %v7259
        %v7412 = vunpack.c.l.b16 %v7260
        %v7413 = vunpack.c.l.b16 %v7261
        %v7414 = vunpack.c.l.b16 %v7262
        %v7415 = vunpack.c.l.b16 %v7263
        %v7416 = vunpack.c.l.b16 %v7264
        %v7417 = vunpack.c.l.b16 %v7265
        %v7418 = vunpack.c.l.b16 %v7266
        %v7419 = vunpack.c.l.b16 %v7267
        %v7420 = vunpack.c.l.b16 %v7268
        %v7421 = vunpack.c.l.b16 %v7269
        %v7422 = vunpack.c.l.b16 %v7270
        %v7423 = vunpack.c.l.b16 %v7271
        %v7424 = vunpack.c.l.b16 %v7272
        %v7425 = vunpack.c.l.b16 %v7273
        %v7426 = vunpack.c.l.b16 %v7274
        %v7427 = vunpack.c.l.b16 %v7275
        %v7428 = vunpack.c.l.b16 %v7276
        %v7429 = vunpack.c.l.b16 %v7277
        %v7430 = vunpack.c.l.b16 %v7278
        %v7431 = vunpack.c.l.b16 %v7279
        %v7432 = vunpack.c.l.b16 %v7280
        %v7433 = vunpack.c.l.b16 %v7281
        %v7434 = vunpack.c.l.b16 %v7282
        %v7435 = vunpack.c.l.b16 %v7283
        %v7436 = vunpack.c.l.b16 %v7284
        %v7437 = vunpack.c.l.b16 %v7285
        %v7438 = vunpack.c.l.b16 %v7286
        %v7439 = vpack.c.b16 %v7408, %v7407
        %v7440 = vpack.c.b16 %v7410, %v7409
        %v7441 = vpack.c.b16 %v7412, %v7411
        %v7442 = vpack.c.b16 %v7414, %v7413
        %v7443 = vpack.c.b16 %v7416, %v7415
        %v7444 = vpack.c.b16 %v7418, %v7417
        %v7445 = vpack.c.b16 %v7420, %v7419
        %v7446 = vpack.c.b16 %v7422, %v7421
        %v7447 = vpack.c.b16 %v7424, %v7423
        %v7448 = vpack.c.b16 %v7426, %v7425
        %v7449 = vpack.c.b16 %v7428, %v7427
        %v7450 = vpack.c.b16 %v7430, %v7429
        %v7451 = vpack.c.b16 %v7432, %v7431
        %v7452 = vpack.c.b16 %v7434, %v7433
        %v7453 = vpack.c.b16 %v7436, %v7435
        %v7454 = vpack.c.b16 %v7438, %v7437
        %7455 = vrot.lane.b32.xlu0 %v7439, 64
        %v7456 = vpop.permute.xlu0 %7455
        %7457 = vrot.lane.b32.xlu0 %v7440, 64
        %v7458 = vpop.permute.xlu0 %7457
        %7459 = vrot.lane.b32.xlu0 %v7441, 64
        %v7460 = vpop.permute.xlu0 %7459
        %7461 = vrot.lane.b32.xlu0 %v7442, 64
        %v7462 = vpop.permute.xlu0 %7461
        %7463 = vrot.lane.b32.xlu0 %v7443, 64
        %v7464 = vpop.permute.xlu0 %7463
        %7465 = vrot.lane.b32.xlu0 %v7444, 64
        %v7466 = vpop.permute.xlu0 %7465
        %7467 = vrot.lane.b32.xlu0 %v7445, 64
        %v7468 = vpop.permute.xlu0 %7467
        %7469 = vrot.lane.b32.xlu0 %v7446, 64
        %v7470 = vpop.permute.xlu0 %7469
        %7471 = vrot.lane.b32.xlu0 %v7447, 64
        %v7472 = vpop.permute.xlu0 %7471
        %7473 = vrot.lane.b32.xlu0 %v7448, 64
        %v7474 = vpop.permute.xlu0 %7473
        %7475 = vrot.lane.b32.xlu0 %v7449, 64
        %v7476 = vpop.permute.xlu0 %7475
        %7477 = vrot.lane.b32.xlu0 %v7450, 64
        %v7478 = vpop.permute.xlu0 %7477
        %7479 = vrot.lane.b32.xlu0 %v7451, 64
        %v7480 = vpop.permute.xlu0 %7479
        %7481 = vrot.lane.b32.xlu0 %v7452, 64
        %v7482 = vpop.permute.xlu0 %7481
        %7483 = vrot.lane.b32.xlu0 %v7453, 64
        %v7484 = vpop.permute.xlu0 %7483
        %7485 = vrot.lane.b32.xlu0 %v7454, 64
        %v7486 = vpop.permute.xlu0 %7485
        %v7488 = vsel %vm4640, %v7360, 0
        %v7491 = vsel %vm4640, %v7362, 0
        %v7494 = vsel %vm4640, %v7364, 0
        %v7497 = vsel %vm4640, %v7366, 0
        %v7500 = vsel %vm4640, %v7368, 0
        %v7503 = vsel %vm4640, %v7370, 0
        %v7506 = vsel %vm4640, %v7372, 0
        %v7509 = vsel %vm4640, %v7374, 0
        %v7512 = vsel %vm4640, %v7456, 0
        %v7515 = vsel %vm4640, %v7458, 0
        %v7518 = vsel %vm4640, %v7460, 0
        %v7521 = vsel %vm4640, %v7462, 0
        %v7524 = vsel %vm4640, %v7464, 0
        %v7527 = vsel %vm4640, %v7466, 0
        %v7530 = vsel %vm4640, %v7468, 0
        %v7533 = vsel %vm4640, %v7470, 0
        %v7536 = vsel %vm4640, %v7472, 0
        %v7539 = vsel %vm4640, %v7474, 0
        %v7542 = vsel %vm4640, %v7476, 0
        %v7545 = vsel %vm4640, %v7478, 0
        %v7548 = vsel %vm4640, %v7480, 0
        %v7551 = vsel %vm4640, %v7482, 0
        %v7554 = vsel %vm4640, %v7484, 0
        %v7557 = vsel %vm4640, %v7486, 0
        %7559 = vmatpush.bf16.xpose.msra.mxu0 %v7533
        %7560 = vmatpush.bf16.xpose.msra.mxu0 %v7530
        %7561 = vmatpush.bf16.xpose.msra.mxu0 %v7527
        %7562 = vmatpush.bf16.xpose.msra.mxu0 %v7524
        %7563 = vmatpush.bf16.xpose.msra.mxu0 %v7521
        %7564 = vmatpush.bf16.xpose.msra.mxu0 %v7518
        %7565 = vmatpush.bf16.xpose.msra.mxu0 %v7515
        %7566 = vmatpush.bf16.xpose.msra.mxu0 %v7512
        %7567 = vmatmul.bf16.gmra.mxu0 %v7488
        %v7568 = vpop.f32.mrf.mxu0
        %v7569 = vadd.f32 0.0, %v7568
        %v7570 = vpop.f32.mrf.mxu0
        %v7571 = vadd.f32 0.0, %v7570
        %7572 = vmatmul.bf16.gmra.mxu0 %v7491
        %v7573 = vpop.f32.mrf.mxu0
        %v7574 = vadd.f32 0.0, %v7573
        %v7575 = vpop.f32.mrf.mxu0
        %v7576 = vadd.f32 0.0, %v7575
        %7577 = vmatmul.bf16.gmra.mxu0 %v7494
        %v7578 = vpop.f32.mrf.mxu0
        %v7579 = vadd.f32 0.0, %v7578
        %v7580 = vpop.f32.mrf.mxu0
        %v7581 = vadd.f32 0.0, %v7580
        %7582 = vmatmul.bf16.gmra.mxu0 %v7497
        %v7583 = vpop.f32.mrf.mxu0
        %v7584 = vadd.f32 0.0, %v7583
        %v7585 = vpop.f32.mrf.mxu0
        %v7586 = vadd.f32 0.0, %v7585
        %7587 = vmatmul.bf16.gmra.mxu0 %v7500
        %v7588 = vpop.f32.mrf.mxu0
        %v7589 = vadd.f32 0.0, %v7588
        %v7590 = vpop.f32.mrf.mxu0
        %v7591 = vadd.f32 0.0, %v7590
        %7592 = vmatmul.bf16.gmra.mxu0 %v7503
        %v7593 = vpop.f32.mrf.mxu0
        %v7594 = vadd.f32 0.0, %v7593
        %v7595 = vpop.f32.mrf.mxu0
        %v7596 = vadd.f32 0.0, %v7595
        %7597 = vmatmul.bf16.gmra.mxu0 %v7506
        %v7598 = vpop.f32.mrf.mxu0
        %v7599 = vadd.f32 0.0, %v7598
        %v7600 = vpop.f32.mrf.mxu0
        %v7601 = vadd.f32 0.0, %v7600
        %7602 = vmatmul.bf16.gmra.mxu0 %v7509
        %v7603 = vpop.f32.mrf.mxu0
        %v7604 = vadd.f32 0.0, %v7603
        %v7605 = vpop.f32.mrf.mxu0
        %v7606 = vadd.f32 0.0, %v7605
        %7607 = vdwg.mxu0
        %7608 = vmatpush.bf16.xpose.msra.mxu0 %v7557
        %7609 = vmatpush.bf16.xpose.msra.mxu0 %v7554
        %7610 = vmatpush.bf16.xpose.msra.mxu0 %v7551
        %7611 = vmatpush.bf16.xpose.msra.mxu0 %v7548
        %7612 = vmatpush.bf16.xpose.msra.mxu0 %v7545
        %7613 = vmatpush.bf16.xpose.msra.mxu0 %v7542
        %7614 = vmatpush.bf16.xpose.msra.mxu0 %v7539
        %7615 = vmatpush.bf16.xpose.msra.mxu0 %v7536
        %7616 = vmatmul.bf16.gmra.mxu0 %v7488
        %v7617 = vpop.f32.mrf.mxu0
        %v7618 = vadd.f32 0.0, %v7617
        %v7619 = vpop.f32.mrf.mxu0
        %v7620 = vadd.f32 0.0, %v7619
        %7621 = vmatmul.bf16.gmra.mxu0 %v7491
        %v7622 = vpop.f32.mrf.mxu0
        %v7623 = vadd.f32 0.0, %v7622
        %v7624 = vpop.f32.mrf.mxu0
        %v7625 = vadd.f32 0.0, %v7624
        %7626 = vmatmul.bf16.gmra.mxu0 %v7494
        %v7627 = vpop.f32.mrf.mxu0
        %v7628 = vadd.f32 0.0, %v7627
        %v7629 = vpop.f32.mrf.mxu0
        %v7630 = vadd.f32 0.0, %v7629
        %7631 = vmatmul.bf16.gmra.mxu0 %v7497
        %v7632 = vpop.f32.mrf.mxu0
        %v7633 = vadd.f32 0.0, %v7632
        %v7634 = vpop.f32.mrf.mxu0
        %v7635 = vadd.f32 0.0, %v7634
        %7636 = vmatmul.bf16.gmra.mxu0 %v7500
        %v7637 = vpop.f32.mrf.mxu0
        %v7638 = vadd.f32 0.0, %v7637
        %v7639 = vpop.f32.mrf.mxu0
        %v7640 = vadd.f32 0.0, %v7639
        %7641 = vmatmul.bf16.gmra.mxu0 %v7503
        %v7642 = vpop.f32.mrf.mxu0
        %v7643 = vadd.f32 0.0, %v7642
        %v7644 = vpop.f32.mrf.mxu0
        %v7645 = vadd.f32 0.0, %v7644
        %7646 = vmatmul.bf16.gmra.mxu0 %v7506
        %v7647 = vpop.f32.mrf.mxu0
        %v7648 = vadd.f32 0.0, %v7647
        %v7649 = vpop.f32.mrf.mxu0
        %v7650 = vadd.f32 0.0, %v7649
        %7651 = vmatmul.bf16.gmra.mxu0 %v7509
        %v7652 = vpop.f32.mrf.mxu0
        %v7653 = vadd.f32 0.0, %v7652
        %v7654 = vpop.f32.mrf.mxu0
        %v7655 = vadd.f32 0.0, %v7654
        %7656 = vdwg.mxu0
        %v7657 = vsel %vm4408, %v7569, -inf
        %v7658 = vsel %vm4409, %v7618, -inf
        %v7659 = vsel %vm4410, %v7571, -inf
        %v7660 = vsel %vm4411, %v7620, -inf
        %v7661 = vsel %vm4412, %v7574, -inf
        %v7662 = vsel %vm4413, %v7623, -inf
        %v7663 = vsel %vm4414, %v7576, -inf
        %v7664 = vsel %vm4415, %v7625, -inf
        %v7665 = vsel %vm4416, %v7579, -inf
        %v7666 = vsel %vm4417, %v7628, -inf
        %v7667 = vsel %vm4418, %v7581, -inf
        %v7668 = vsel %vm4419, %v7630, -inf
        %v7669 = vsel %vm4420, %v7584, -inf
        %v7670 = vsel %vm4421, %v7633, -inf
        %v7671 = vsel %vm4422, %v7586, -inf
        %v7672 = vsel %vm4423, %v7635, -inf
        %v7673 = vsel %vm4424, %v7589, -inf
        %v7674 = vsel %vm4425, %v7638, -inf
        %v7675 = vsel %vm4426, %v7591, -inf
        %v7676 = vsel %vm4427, %v7640, -inf
        %v7677 = vsel %vm4428, %v7594, -inf
        %v7678 = vsel %vm4429, %v7643, -inf
        %v7679 = vsel %vm4430, %v7596, -inf
        %v7680 = vsel %vm4431, %v7645, -inf
        %v7681 = vsel %vm4432, %v7599, -inf
        %v7682 = vsel %vm4433, %v7648, -inf
        %v7683 = vsel %vm4434, %v7601, -inf
        %v7684 = vsel %vm4435, %v7650, -inf
        %v7685 = vsel %vm4436, %v7604, -inf
        %v7686 = vsel %vm4437, %v7653, -inf
        %v7687 = vsel %vm4438, %v7606, -inf
        %v7688 = vsel %vm4439, %v7655, -inf
        %v7689 = vmax.f32 %v7657, %v7658
        %7690 = vmax.xlane.f32.xlu0 %v7689
        %v7691 = vpop.xlane.xlu0 %7690
        %v7692 = vmax.f32 %v7659, %v7660
        %7693 = vmax.xlane.f32.xlu0 %v7692
        %v7694 = vpop.xlane.xlu0 %7693
        %v7695 = vmax.f32 %v7661, %v7662
        %7696 = vmax.xlane.f32.xlu0 %v7695
        %v7697 = vpop.xlane.xlu0 %7696
        %v7698 = vmax.f32 %v7663, %v7664
        %7699 = vmax.xlane.f32.xlu0 %v7698
        %v7700 = vpop.xlane.xlu0 %7699
        %v7701 = vmax.f32 %v7665, %v7666
        %7702 = vmax.xlane.f32.xlu0 %v7701
        %v7703 = vpop.xlane.xlu0 %7702
        %v7704 = vmax.f32 %v7667, %v7668
        %7705 = vmax.xlane.f32.xlu0 %v7704
        %v7706 = vpop.xlane.xlu0 %7705
        %v7707 = vmax.f32 %v7669, %v7670
        %7708 = vmax.xlane.f32.xlu0 %v7707
        %v7709 = vpop.xlane.xlu0 %7708
        %v7710 = vmax.f32 %v7671, %v7672
        %7711 = vmax.xlane.f32.xlu0 %v7710
        %v7712 = vpop.xlane.xlu0 %7711
        %v7713 = vmax.f32 %v7673, %v7674
        %7714 = vmax.xlane.f32.xlu0 %v7713
        %v7715 = vpop.xlane.xlu0 %7714
        %v7716 = vmax.f32 %v7675, %v7676
        %7717 = vmax.xlane.f32.xlu0 %v7716
        %v7718 = vpop.xlane.xlu0 %7717
        %v7719 = vmax.f32 %v7677, %v7678
        %7720 = vmax.xlane.f32.xlu0 %v7719
        %v7721 = vpop.xlane.xlu0 %7720
        %v7722 = vmax.f32 %v7679, %v7680
        %7723 = vmax.xlane.f32.xlu0 %v7722
        %v7724 = vpop.xlane.xlu0 %7723
        %v7725 = vmax.f32 %v7681, %v7682
        %7726 = vmax.xlane.f32.xlu0 %v7725
        %v7727 = vpop.xlane.xlu0 %7726
        %v7728 = vmax.f32 %v7683, %v7684
        %7729 = vmax.xlane.f32.xlu0 %v7728
        %v7730 = vpop.xlane.xlu0 %7729
        %v7731 = vmax.f32 %v7685, %v7686
        %7732 = vmax.xlane.f32.xlu0 %v7731
        %v7733 = vpop.xlane.xlu0 %7732
        %v7734 = vmax.f32 %v7687, %v7688
        %7735 = vmax.xlane.f32.xlu0 %v7734
        %v7736 = vpop.xlane.xlu0 %7735
        %v7737 = vsub.f32 %v7657, %v7691
        %v7738 = vsub.f32 %v7658, %v7691
        %v7739 = vsub.f32 %v7659, %v7694
        %v7740 = vsub.f32 %v7660, %v7694
        %v7741 = vsub.f32 %v7661, %v7697
        %v7742 = vsub.f32 %v7662, %v7697
        %v7743 = vsub.f32 %v7663, %v7700
        %v7744 = vsub.f32 %v7664, %v7700
        %v7745 = vsub.f32 %v7665, %v7703
        %v7746 = vsub.f32 %v7666, %v7703
        %v7747 = vsub.f32 %v7667, %v7706
        %v7748 = vsub.f32 %v7668, %v7706
        %v7749 = vsub.f32 %v7669, %v7709
        %v7750 = vsub.f32 %v7670, %v7709
        %v7751 = vsub.f32 %v7671, %v7712
        %v7752 = vsub.f32 %v7672, %v7712
        %v7753 = vsub.f32 %v7673, %v7715
        %v7754 = vsub.f32 %v7674, %v7715
        %v7755 = vsub.f32 %v7675, %v7718
        %v7756 = vsub.f32 %v7676, %v7718
        %v7757 = vsub.f32 %v7677, %v7721
        %v7758 = vsub.f32 %v7678, %v7721
        %v7759 = vsub.f32 %v7679, %v7724
        %v7760 = vsub.f32 %v7680, %v7724
        %v7761 = vsub.f32 %v7681, %v7727
        %v7762 = vsub.f32 %v7682, %v7727
        %v7763 = vsub.f32 %v7683, %v7730
        %v7764 = vsub.f32 %v7684, %v7730
        %v7765 = vsub.f32 %v7685, %v7733
        %v7766 = vsub.f32 %v7686, %v7733
        %v7767 = vsub.f32 %v7687, %v7736
        %v7768 = vsub.f32 %v7688, %v7736
        %v7769 = vmul.f32 %v7737, 1.442695
        %v7770 = vpow.pop %v7769
        %v7771 = vmul.f32 %v7738, 1.442695
        %v7772 = vpow.pop %v7771
        %v7773 = vmul.f32 %v7739, 1.442695
        %v7774 = vpow.pop %v7773
        %v7775 = vmul.f32 %v7740, 1.442695
        %v7776 = vpow.pop %v7775
        %v7777 = vmul.f32 %v7741, 1.442695
        %v7778 = vpow.pop %v7777
        %v7779 = vmul.f32 %v7742, 1.442695
        %v7780 = vpow.pop %v7779
        %v7781 = vmul.f32 %v7743, 1.442695
        %v7782 = vpow.pop %v7781
        %v7783 = vmul.f32 %v7744, 1.442695
        %v7784 = vpow.pop %v7783
        %v7785 = vmul.f32 %v7745, 1.442695
        %v7786 = vpow.pop %v7785
        %v7787 = vmul.f32 %v7746, 1.442695
        %v7788 = vpow.pop %v7787
        %v7789 = vmul.f32 %v7747, 1.442695
        %v7790 = vpow.pop %v7789
        %v7791 = vmul.f32 %v7748, 1.442695
        %v7792 = vpow.pop %v7791
        %v7793 = vmul.f32 %v7749, 1.442695
        %v7794 = vpow.pop %v7793
        %v7795 = vmul.f32 %v7750, 1.442695
        %v7796 = vpow.pop %v7795
        %v7797 = vmul.f32 %v7751, 1.442695
        %v7798 = vpow.pop %v7797
        %v7799 = vmul.f32 %v7752, 1.442695
        %v7800 = vpow.pop %v7799
        %v7801 = vmul.f32 %v7753, 1.442695
        %v7802 = vpow.pop %v7801
        %v7803 = vmul.f32 %v7754, 1.442695
        %v7804 = vpow.pop %v7803
        %v7805 = vmul.f32 %v7755, 1.442695
        %v7806 = vpow.pop %v7805
        %v7807 = vmul.f32 %v7756, 1.442695
        %v7808 = vpow.pop %v7807
        %v7809 = vmul.f32 %v7757, 1.442695
        %v7810 = vpow.pop %v7809
        %v7811 = vmul.f32 %v7758, 1.442695
        %v7812 = vpow.pop %v7811
        %v7813 = vmul.f32 %v7759, 1.442695
        %v7814 = vpow.pop %v7813
        %v7815 = vmul.f32 %v7760, 1.442695
        %v7816 = vpow.pop %v7815
        %v7817 = vmul.f32 %v7761, 1.442695
        %v7818 = vpow.pop %v7817
        %v7819 = vmul.f32 %v7762, 1.442695
        %v7820 = vpow.pop %v7819
        %v7821 = vmul.f32 %v7763, 1.442695
        %v7822 = vpow.pop %v7821
        %v7823 = vmul.f32 %v7764, 1.442695
        %v7824 = vpow.pop %v7823
        %v7825 = vmul.f32 %v7765, 1.442695
        %v7826 = vpow.pop %v7825
        %v7827 = vmul.f32 %v7766, 1.442695
        %v7828 = vpow.pop %v7827
        %v7829 = vmul.f32 %v7767, 1.442695
        %v7830 = vpow.pop %v7829
        %v7831 = vmul.f32 %v7768, 1.442695
        %v7832 = vpow.pop %v7831
        %v7833 = vadd.f32 %v7770, %v7772
        %7834 = vadd.xlane.f32.xlu0 %v7833
        %v7835 = vpop.xlane.xlu0 %7834
        %v7836 = vadd.f32 %v7774, %v7776
        %7837 = vadd.xlane.f32.xlu0 %v7836
        %v7838 = vpop.xlane.xlu0 %7837
        %v7839 = vadd.f32 %v7778, %v7780
        %7840 = vadd.xlane.f32.xlu0 %v7839
        %v7841 = vpop.xlane.xlu0 %7840
        %v7842 = vadd.f32 %v7782, %v7784
        %7843 = vadd.xlane.f32.xlu0 %v7842
        %v7844 = vpop.xlane.xlu0 %7843
        %v7845 = vadd.f32 %v7786, %v7788
        %7846 = vadd.xlane.f32.xlu0 %v7845
        %v7847 = vpop.xlane.xlu0 %7846
        %v7848 = vadd.f32 %v7790, %v7792
        %7849 = vadd.xlane.f32.xlu0 %v7848
        %v7850 = vpop.xlane.xlu0 %7849
        %v7851 = vadd.f32 %v7794, %v7796
        %7852 = vadd.xlane.f32.xlu0 %v7851
        %v7853 = vpop.xlane.xlu0 %7852
        %v7854 = vadd.f32 %v7798, %v7800
        %7855 = vadd.xlane.f32.xlu0 %v7854
        %v7856 = vpop.xlane.xlu0 %7855
        %v7857 = vadd.f32 %v7802, %v7804
        %7858 = vadd.xlane.f32.xlu0 %v7857
        %v7859 = vpop.xlane.xlu0 %7858
        %v7860 = vadd.f32 %v7806, %v7808
        %7861 = vadd.xlane.f32.xlu0 %v7860
        %v7862 = vpop.xlane.xlu0 %7861
        %v7863 = vadd.f32 %v7810, %v7812
        %7864 = vadd.xlane.f32.xlu0 %v7863
        %v7865 = vpop.xlane.xlu0 %7864
        %v7866 = vadd.f32 %v7814, %v7816
        %7867 = vadd.xlane.f32.xlu0 %v7866
        %v7868 = vpop.xlane.xlu0 %7867
        %v7869 = vadd.f32 %v7818, %v7820
        %7870 = vadd.xlane.f32.xlu0 %v7869
        %v7871 = vpop.xlane.xlu0 %7870
        %v7872 = vadd.f32 %v7822, %v7824
        %7873 = vadd.xlane.f32.xlu0 %v7872
        %v7874 = vpop.xlane.xlu0 %7873
        %v7875 = vadd.f32 %v7826, %v7828
        %7876 = vadd.xlane.f32.xlu0 %v7875
        %v7877 = vpop.xlane.xlu0 %7876
        %v7878 = vadd.f32 %v7830, %v7832
        %7879 = vadd.xlane.f32.xlu0 %v7878
        %v7880 = vpop.xlane.xlu0 %7879
        %v7881 = vrcp.pop %v7835
        %v7882 = vrcp.pop %v7838
        %v7883 = vrcp.pop %v7841
        %v7884 = vrcp.pop %v7844
        %v7885 = vrcp.pop %v7847
        %v7886 = vrcp.pop %v7850
        %v7887 = vrcp.pop %v7853
        %v7888 = vrcp.pop %v7856
        %v7889 = vrcp.pop %v7859
        %v7890 = vrcp.pop %v7862
        %v7891 = vrcp.pop %v7865
        %v7892 = vrcp.pop %v7868
        %v7893 = vrcp.pop %v7871
        %v7894 = vrcp.pop %v7874
        %v7895 = vrcp.pop %v7877
        %v7896 = vrcp.pop %v7880
        %v7897 = vmul.f32 %v7770, %v7881
        %v7898 = vmul.f32 %v7772, %v7881
        %v7899 = vmul.f32 %v7774, %v7882
        %v7900 = vmul.f32 %v7776, %v7882
        %v7901 = vmul.f32 %v7778, %v7883
        %v7902 = vmul.f32 %v7780, %v7883
        %v7903 = vmul.f32 %v7782, %v7884
        %v7904 = vmul.f32 %v7784, %v7884
        %v7905 = vmul.f32 %v7786, %v7885
        %v7906 = vmul.f32 %v7788, %v7885
        %v7907 = vmul.f32 %v7790, %v7886
        %v7908 = vmul.f32 %v7792, %v7886
        %v7909 = vmul.f32 %v7794, %v7887
        %v7910 = vmul.f32 %v7796, %v7887
        %v7911 = vmul.f32 %v7798, %v7888
        %v7912 = vmul.f32 %v7800, %v7888
        %v7913 = vmul.f32 %v7802, %v7889
        %v7914 = vmul.f32 %v7804, %v7889
        %v7915 = vmul.f32 %v7806, %v7890
        %v7916 = vmul.f32 %v7808, %v7890
        %v7917 = vmul.f32 %v7810, %v7891
        %v7918 = vmul.f32 %v7812, %v7891
        %v7919 = vmul.f32 %v7814, %v7892
        %v7920 = vmul.f32 %v7816, %v7892
        %v7921 = vmul.f32 %v7818, %v7893
        %v7922 = vmul.f32 %v7820, %v7893
        %v7923 = vmul.f32 %v7822, %v7894
        %v7924 = vmul.f32 %v7824, %v7894
        %v7925 = vmul.f32 %v7826, %v7895
        %v7926 = vmul.f32 %v7828, %v7895
        %v7927 = vmul.f32 %v7830, %v7896
        %v7928 = vmul.f32 %v7832, %v7896
        %v7929 = vpack.c.bf16 %v7899, %v7897
        %v7930 = vpack.c.bf16 %v7900, %v7898
        %v7931 = vpack.c.bf16 %v7903, %v7901
        %v7932 = vpack.c.bf16 %v7904, %v7902
        %v7933 = vpack.c.bf16 %v7907, %v7905
        %v7934 = vpack.c.bf16 %v7908, %v7906
        %v7935 = vpack.c.bf16 %v7911, %v7909
        %v7936 = vpack.c.bf16 %v7912, %v7910
        %v7937 = vpack.c.bf16 %v7915, %v7913
        %v7938 = vpack.c.bf16 %v7916, %v7914
        %v7939 = vpack.c.bf16 %v7919, %v7917
        %v7940 = vpack.c.bf16 %v7920, %v7918
        %v7941 = vpack.c.bf16 %v7923, %v7921
        %v7942 = vpack.c.bf16 %v7924, %v7922
        %v7943 = vpack.c.bf16 %v7927, %v7925
        %v7944 = vpack.c.bf16 %v7928, %v7926
        %v7977 = vunpack.c.l.b16 %v7287
        %v7978 = vunpack.c.l.b16 %v7288
        %v7979 = vunpack.c.l.b16 %v7289
        %v7980 = vunpack.c.l.b16 %v7290
        %v7981 = vunpack.c.l.b16 %v7291
        %v7982 = vunpack.c.l.b16 %v7292
        %v7983 = vunpack.c.l.b16 %v7293
        %v7984 = vunpack.c.l.b16 %v7294
        %v7985 = vunpack.c.l.b16 %v7295
        %v7986 = vunpack.c.l.b16 %v7296
        %v7987 = vunpack.c.l.b16 %v7297
        %v7988 = vunpack.c.l.b16 %v7298
        %v7989 = vunpack.c.l.b16 %v7299
        %v7990 = vunpack.c.l.b16 %v7300
        %v7991 = vunpack.c.l.b16 %v7301
        %v7992 = vunpack.c.l.b16 %v7302
        %v7993 = vunpack.c.l.b16 %v7303
        %v7994 = vunpack.c.l.b16 %v7304
        %v7995 = vunpack.c.l.b16 %v7305
        %v7996 = vunpack.c.l.b16 %v7306
        %v7997 = vunpack.c.l.b16 %v7307
        %v7998 = vunpack.c.l.b16 %v7308
        %v7999 = vunpack.c.l.b16 %v7309
        %v8000 = vunpack.c.l.b16 %v7310
        %v8001 = vunpack.c.l.b16 %v7311
        %v8002 = vunpack.c.l.b16 %v7312
        %v8003 = vunpack.c.l.b16 %v7313
        %v8004 = vunpack.c.l.b16 %v7314
        %v8005 = vunpack.c.l.b16 %v7315
        %v8006 = vunpack.c.l.b16 %v7316
        %v8007 = vunpack.c.l.b16 %v7317
        %v8008 = vunpack.c.l.b16 %v7318
        %v8009 = vpack.c.b16 %v7978, %v7977
        %v8010 = vpack.c.b16 %v7980, %v7979
        %v8011 = vpack.c.b16 %v7982, %v7981
        %v8012 = vpack.c.b16 %v7984, %v7983
        %v8013 = vpack.c.b16 %v7986, %v7985
        %v8014 = vpack.c.b16 %v7988, %v7987
        %v8015 = vpack.c.b16 %v7990, %v7989
        %v8016 = vpack.c.b16 %v7992, %v7991
        %v8017 = vpack.c.b16 %v7994, %v7993
        %v8018 = vpack.c.b16 %v7996, %v7995
        %v8019 = vpack.c.b16 %v7998, %v7997
        %v8020 = vpack.c.b16 %v8000, %v7999
        %v8021 = vpack.c.b16 %v8002, %v8001
        %v8022 = vpack.c.b16 %v8004, %v8003
        %v8023 = vpack.c.b16 %v8006, %v8005
        %v8024 = vpack.c.b16 %v8008, %v8007
        %8025 = vrot.lane.b32.xlu0 %v8009, 64
        %v8026 = vpop.permute.xlu0 %8025
        %8027 = vrot.lane.b32.xlu0 %v8010, 64
        %v8028 = vpop.permute.xlu0 %8027
        %8029 = vrot.lane.b32.xlu0 %v8011, 64
        %v8030 = vpop.permute.xlu0 %8029
        %8031 = vrot.lane.b32.xlu0 %v8012, 64
        %v8032 = vpop.permute.xlu0 %8031
        %8033 = vrot.lane.b32.xlu0 %v8013, 64
        %v8034 = vpop.permute.xlu0 %8033
        %8035 = vrot.lane.b32.xlu0 %v8014, 64
        %v8036 = vpop.permute.xlu0 %8035
        %8037 = vrot.lane.b32.xlu0 %v8015, 64
        %v8038 = vpop.permute.xlu0 %8037
        %8039 = vrot.lane.b32.xlu0 %v8016, 64
        %v8040 = vpop.permute.xlu0 %8039
        %8041 = vrot.lane.b32.xlu0 %v8017, 64
        %v8042 = vpop.permute.xlu0 %8041
        %8043 = vrot.lane.b32.xlu0 %v8018, 64
        %v8044 = vpop.permute.xlu0 %8043
        %8045 = vrot.lane.b32.xlu0 %v8019, 64
        %v8046 = vpop.permute.xlu0 %8045
        %8047 = vrot.lane.b32.xlu0 %v8020, 64
        %v8048 = vpop.permute.xlu0 %8047
        %8049 = vrot.lane.b32.xlu0 %v8021, 64
        %v8050 = vpop.permute.xlu0 %8049
        %8051 = vrot.lane.b32.xlu0 %v8022, 64
        %v8052 = vpop.permute.xlu0 %8051
        %8053 = vrot.lane.b32.xlu0 %v8023, 64
        %v8054 = vpop.permute.xlu0 %8053
        %8055 = vrot.lane.b32.xlu0 %v8024, 64
        %v8056 = vpop.permute.xlu0 %8055
        %8073 = vmatpush.bf16.msra.mxu0 %v8040
        %8074 = vmatpush.bf16.msra.mxu0 %v8038
        %8075 = vmatpush.bf16.msra.mxu0 %v8036
        %8076 = vmatpush.bf16.msra.mxu0 %v8034
        %8077 = vmatpush.bf16.msra.mxu0 %v8032
        %8078 = vmatpush.bf16.msra.mxu0 %v8030
        %8079 = vmatpush.bf16.msra.mxu0 %v8028
        %8080 = vmatpush.bf16.msra.mxu0 %v8026
        %8081 = vmatmul.bf16.gmra.mxu0 %v7929
        %v8082 = vpop.f32.mrf.mxu0
        %v8083 = vadd.f32 0.0, %v8082
        %v8084 = vpop.f32.mrf.mxu0
        %v8085 = vadd.f32 0.0, %v8084
        %8086 = vmatmul.bf16.gmra.mxu0 %v7931
        %v8087 = vpop.f32.mrf.mxu0
        %v8088 = vadd.f32 0.0, %v8087
        %v8089 = vpop.f32.mrf.mxu0
        %v8090 = vadd.f32 0.0, %v8089
        %8091 = vmatmul.bf16.gmra.mxu0 %v7933
        %v8092 = vpop.f32.mrf.mxu0
        %v8093 = vadd.f32 0.0, %v8092
        %v8094 = vpop.f32.mrf.mxu0
        %v8095 = vadd.f32 0.0, %v8094
        %8096 = vmatmul.bf16.gmra.mxu0 %v7935
        %v8097 = vpop.f32.mrf.mxu0
        %v8098 = vadd.f32 0.0, %v8097
        %v8099 = vpop.f32.mrf.mxu0
        %v8100 = vadd.f32 0.0, %v8099
        %8101 = vmatmul.bf16.gmra.mxu0 %v7937
        %v8102 = vpop.f32.mrf.mxu0
        %v8103 = vadd.f32 0.0, %v8102
        %v8104 = vpop.f32.mrf.mxu0
        %v8105 = vadd.f32 0.0, %v8104
        %8106 = vmatmul.bf16.gmra.mxu0 %v7939
        %v8107 = vpop.f32.mrf.mxu0
        %v8108 = vadd.f32 0.0, %v8107
        %v8109 = vpop.f32.mrf.mxu0
        %v8110 = vadd.f32 0.0, %v8109
        %8111 = vmatmul.bf16.gmra.mxu0 %v7941
        %v8112 = vpop.f32.mrf.mxu0
        %v8113 = vadd.f32 0.0, %v8112
        %v8114 = vpop.f32.mrf.mxu0
        %v8115 = vadd.f32 0.0, %v8114
        %8116 = vmatmul.bf16.gmra.mxu0 %v7943
        %v8117 = vpop.f32.mrf.mxu0
        %v8118 = vadd.f32 0.0, %v8117
        %v8119 = vpop.f32.mrf.mxu0
        %v8120 = vadd.f32 0.0, %v8119
        %8121 = vdwg.mxu0
        %8122 = vmatpush.bf16.msra.mxu0 %v8056
        %8123 = vmatpush.bf16.msra.mxu0 %v8054
        %8124 = vmatpush.bf16.msra.mxu0 %v8052
        %8125 = vmatpush.bf16.msra.mxu0 %v8050
        %8126 = vmatpush.bf16.msra.mxu0 %v8048
        %8127 = vmatpush.bf16.msra.mxu0 %v8046
        %8128 = vmatpush.bf16.msra.mxu0 %v8044
        %8129 = vmatpush.bf16.msra.mxu0 %v8042
        %8130 = vmatmul.bf16.gmra.mxu0 %v7930
        %v8131 = vpop.f32.mrf.mxu0
        %v8132 = vadd.f32 %v8083, %v8131
        %v8133 = vpop.f32.mrf.mxu0
        %v8134 = vadd.f32 %v8085, %v8133
        %8135 = vmatmul.bf16.gmra.mxu0 %v7932
        %v8136 = vpop.f32.mrf.mxu0
        %v8137 = vadd.f32 %v8088, %v8136
        %v8138 = vpop.f32.mrf.mxu0
        %v8139 = vadd.f32 %v8090, %v8138
        %8140 = vmatmul.bf16.gmra.mxu0 %v7934
        %v8141 = vpop.f32.mrf.mxu0
        %v8142 = vadd.f32 %v8093, %v8141
        %v8143 = vpop.f32.mrf.mxu0
        %v8144 = vadd.f32 %v8095, %v8143
        %8145 = vmatmul.bf16.gmra.mxu0 %v7936
        %v8146 = vpop.f32.mrf.mxu0
        %v8147 = vadd.f32 %v8098, %v8146
        %v8148 = vpop.f32.mrf.mxu0
        %v8149 = vadd.f32 %v8100, %v8148
        %8150 = vmatmul.bf16.gmra.mxu0 %v7938
        %v8151 = vpop.f32.mrf.mxu0
        %v8152 = vadd.f32 %v8103, %v8151
        %v8153 = vpop.f32.mrf.mxu0
        %v8154 = vadd.f32 %v8105, %v8153
        %8155 = vmatmul.bf16.gmra.mxu0 %v7940
        %v8156 = vpop.f32.mrf.mxu0
        %v8157 = vadd.f32 %v8108, %v8156
        %v8158 = vpop.f32.mrf.mxu0
        %v8159 = vadd.f32 %v8110, %v8158
        %8160 = vmatmul.bf16.gmra.mxu0 %v7942
        %v8161 = vpop.f32.mrf.mxu0
        %v8162 = vadd.f32 %v8113, %v8161
        %v8163 = vpop.f32.mrf.mxu0
        %v8164 = vadd.f32 %v8115, %v8163
        %8165 = vmatmul.bf16.gmra.mxu0 %v7944
        %v8166 = vpop.f32.mrf.mxu0
        %v8167 = vadd.f32 %v8118, %v8166
        %v8168 = vpop.f32.mrf.mxu0
        %v8169 = vadd.f32 %v8120, %v8168
        %8170 = vdwg.mxu0
        %v8171 = vpack.c.bf16 %v8132, %v8132
        %v8172 = vpack.c.bf16 %v8134, %v8134
        %v8173 = vpack.c.bf16 %v8137, %v8137
        %v8174 = vpack.c.bf16 %v8139, %v8139
        %v8175 = vpack.c.bf16 %v8142, %v8142
        %v8176 = vpack.c.bf16 %v8144, %v8144
        %v8177 = vpack.c.bf16 %v8147, %v8147
        %v8178 = vpack.c.bf16 %v8149, %v8149
        %v8179 = vpack.c.bf16 %v8152, %v8152
        %v8180 = vpack.c.bf16 %v8154, %v8154
        %v8181 = vpack.c.bf16 %v8157, %v8157
        %v8182 = vpack.c.bf16 %v8159, %v8159
        %v8183 = vpack.c.bf16 %v8162, %v8162
        %v8184 = vpack.c.bf16 %v8164, %v8164
        %v8185 = vpack.c.bf16 %v8167, %v8167
        %v8186 = vpack.c.bf16 %v8169, %v8169
        %8203 = vrot.lane.b32.xlu0 %v8171, 64
        %v8204 = vpop.permute.xlu0 %8203
        %8205 = vrot.lane.b32.xlu0 %v8172, 64
        %v8206 = vpop.permute.xlu0 %8205
        %8207 = vrot.lane.b32.xlu0 %v8173, 64
        %v8208 = vpop.permute.xlu0 %8207
        %8209 = vrot.lane.b32.xlu0 %v8174, 64
        %v8210 = vpop.permute.xlu0 %8209
        %8211 = vrot.lane.b32.xlu0 %v8175, 64
        %v8212 = vpop.permute.xlu0 %8211
        %8213 = vrot.lane.b32.xlu0 %v8176, 64
        %v8214 = vpop.permute.xlu0 %8213
        %8215 = vrot.lane.b32.xlu0 %v8177, 64
        %v8216 = vpop.permute.xlu0 %8215
        %8217 = vrot.lane.b32.xlu0 %v8178, 64
        %v8218 = vpop.permute.xlu0 %8217
        %8219 = vrot.lane.b32.xlu0 %v8179, 64
        %v8220 = vpop.permute.xlu0 %8219
        %8221 = vrot.lane.b32.xlu0 %v8180, 64
        %v8222 = vpop.permute.xlu0 %8221
        %8223 = vrot.lane.b32.xlu0 %v8181, 64
        %v8224 = vpop.permute.xlu0 %8223
        %8225 = vrot.lane.b32.xlu0 %v8182, 64
        %v8226 = vpop.permute.xlu0 %8225
        %8227 = vrot.lane.b32.xlu0 %v8183, 64
        %v8228 = vpop.permute.xlu0 %8227
        %8229 = vrot.lane.b32.xlu0 %v8184, 64
        %v8230 = vpop.permute.xlu0 %8229
        %8231 = vrot.lane.b32.xlu0 %v8185, 64
        %v8232 = vpop.permute.xlu0 %8231
        %8233 = vrot.lane.b32.xlu0 %v8186, 64
        %v8234 = vpop.permute.xlu0 %8233
        %8251 = vst.msk [vmem:[#allocation4 + $0x4] sm:$0xf] %vm6338, %v8204
        %8252 = vst.msk [vmem:[#allocation4 + $0x10] sm:$0xf] %vm6338, %v8206
        %8253 = vst.msk [vmem:[#allocation4 + $0x1c] sm:$0xf] %vm6338, %v8208
        %8254 = vst.msk [vmem:[#allocation4 + $0x28] sm:$0xf] %vm6338, %v8210
        %8255 = vst.msk [vmem:[#allocation4 + $0x34] sm:$0xf] %vm6338, %v8212
        %8256 = vst.msk [vmem:[#allocation4 + $0x40] sm:$0xf] %vm6338, %v8214
        %8257 = vst.msk [vmem:[#allocation4 + $0x4c] sm:$0xf] %vm6338, %v8216
        %8258 = vst.msk [vmem:[#allocation4 + $0x58] sm:$0xf] %vm6338, %v8218
        %8259 = vst.msk [vmem:[#allocation4 + $0x64] sm:$0xf] %vm6338, %v8220
        %8260 = vst.msk [vmem:[#allocation4 + $0x70] sm:$0xf] %vm6338, %v8222
        %8261 = vst.msk [vmem:[#allocation4 + $0x7c] sm:$0xf] %vm6338, %v8224
        %8262 = vst.msk [vmem:[#allocation4 + $0x88] sm:$0xf] %vm6338, %v8226
        %8263 = vst.msk [vmem:[#allocation4 + $0x94] sm:$0xf] %vm6338, %v8228
        %8264 = vst.msk [vmem:[#allocation4 + $0xa0] sm:$0xf] %vm6338, %v8230
        %8265 = vst.msk [vmem:[#allocation4 + $0xac] sm:$0xf] %vm6338, %v8232
        %8266 = vst.msk [vmem:[#allocation4 + $0xb8] sm:$0xf] %vm6338, %v8234
        %v8267 = vld [vmem:[#allocation2 + $0x8] sm:$0xf]
        %v8268 = vld [vmem:[#allocation2 + $0x14] sm:$0xf]
        %v8269 = vld [vmem:[#allocation2 + $0x20] sm:$0xf]
        %v8270 = vld [vmem:[#allocation2 + $0x2c] sm:$0xf]
        %v8271 = vld [vmem:[#allocation2 + $0x38] sm:$0xf]
        %v8272 = vld [vmem:[#allocation2 + $0x44] sm:$0xf]
        %v8273 = vld [vmem:[#allocation2 + $0x50] sm:$0xf]
        %v8274 = vld [vmem:[#allocation2 + $0x5c] sm:$0xf]
        %v8275 = vld [vmem:[#allocation2 + $0x68] sm:$0xf]
        %v8276 = vld [vmem:[#allocation2 + $0x74] sm:$0xf]
        %v8277 = vld [vmem:[#allocation2 + $0x80] sm:$0xf]
        %v8278 = vld [vmem:[#allocation2 + $0x8c] sm:$0xf]
        %v8279 = vld [vmem:[#allocation2 + $0x98] sm:$0xf]
        %v8280 = vld [vmem:[#allocation2 + $0xa4] sm:$0xf]
        %v8281 = vld [vmem:[#allocation2 + $0xb0] sm:$0xf]
        %v8282 = vld [vmem:[#allocation2 + $0xbc] sm:$0xf]
        %v8283 = vld [vmem:[#allocation3 + $0x8] sm:$0xf]
        %v8284 = vld [vmem:[#allocation3 + $0x20] sm:$0xf]
        %v8285 = vld [vmem:[#allocation3 + $0x38] sm:$0xf]
        %v8286 = vld [vmem:[#allocation3 + $0x50] sm:$0xf]
        %v8287 = vld [vmem:[#allocation3 + $0x68] sm:$0xf]
        %v8288 = vld [vmem:[#allocation3 + $0x80] sm:$0xf]
        %v8289 = vld [vmem:[#allocation3 + $0x98] sm:$0xf]
        %v8290 = vld [vmem:[#allocation3 + $0xb0] sm:$0xf]
        %v8291 = vld [vmem:[#allocation3 + $0xc8] sm:$0xf]
        %v8292 = vld [vmem:[#allocation3 + $0xe0] sm:$0xf]
        %v8293 = vld [vmem:[#allocation3 + $0xf8] sm:$0xf]
        %v8294 = vld [vmem:[#allocation3 + $0x110] sm:$0xf]
        %v8295 = vld [vmem:[#allocation3 + $0x128] sm:$0xf]
        %v8296 = vld [vmem:[#allocation3 + $0x140] sm:$0xf]
        %v8297 = vld [vmem:[#allocation3 + $0x158] sm:$0xf]
        %v8298 = vld [vmem:[#allocation3 + $0x170] sm:$0xf]
        %v8299 = vld [vmem:[#allocation3 + $0x188] sm:$0xf]
        %v8300 = vld [vmem:[#allocation3 + $0x1a0] sm:$0xf]
        %v8301 = vld [vmem:[#allocation3 + $0x1b8] sm:$0xf]
        %v8302 = vld [vmem:[#allocation3 + $0x1d0] sm:$0xf]
        %v8303 = vld [vmem:[#allocation3 + $0x1e8] sm:$0xf]
        %v8304 = vld [vmem:[#allocation3 + $0x200] sm:$0xf]
        %v8305 = vld [vmem:[#allocation3 + $0x218] sm:$0xf]
        %v8306 = vld [vmem:[#allocation3 + $0x230] sm:$0xf]
        %v8307 = vld [vmem:[#allocation3 + $0x248] sm:$0xf]
        %v8308 = vld [vmem:[#allocation3 + $0x260] sm:$0xf]
        %v8309 = vld [vmem:[#allocation3 + $0x278] sm:$0xf]
        %v8310 = vld [vmem:[#allocation3 + $0x290] sm:$0xf]
        %v8311 = vld [vmem:[#allocation3 + $0x2a8] sm:$0xf]
        %v8312 = vld [vmem:[#allocation3 + $0x2c0] sm:$0xf]
        %v8313 = vld [vmem:[#allocation3 + $0x2d8] sm:$0xf]
        %v8314 = vld [vmem:[#allocation3 + $0x2f0] sm:$0xf]
        %v8315 = vld [vmem:[#allocation3 + $0x14] sm:$0xf]
        %v8316 = vld [vmem:[#allocation3 + $0x2c] sm:$0xf]
        %v8317 = vld [vmem:[#allocation3 + $0x44] sm:$0xf]
        %v8318 = vld [vmem:[#allocation3 + $0x5c] sm:$0xf]
        %v8319 = vld [vmem:[#allocation3 + $0x74] sm:$0xf]
        %v8320 = vld [vmem:[#allocation3 + $0x8c] sm:$0xf]
        %v8321 = vld [vmem:[#allocation3 + $0xa4] sm:$0xf]
        %v8322 = vld [vmem:[#allocation3 + $0xbc] sm:$0xf]
        %v8323 = vld [vmem:[#allocation3 + $0xd4] sm:$0xf]
        %v8324 = vld [vmem:[#allocation3 + $0xec] sm:$0xf]
        %v8325 = vld [vmem:[#allocation3 + $0x104] sm:$0xf]
        %v8326 = vld [vmem:[#allocation3 + $0x11c] sm:$0xf]
        %v8327 = vld [vmem:[#allocation3 + $0x134] sm:$0xf]
        %v8328 = vld [vmem:[#allocation3 + $0x14c] sm:$0xf]
        %v8329 = vld [vmem:[#allocation3 + $0x164] sm:$0xf]
        %v8330 = vld [vmem:[#allocation3 + $0x17c] sm:$0xf]
        %v8331 = vld [vmem:[#allocation3 + $0x194] sm:$0xf]
        %v8332 = vld [vmem:[#allocation3 + $0x1ac] sm:$0xf]
        %v8333 = vld [vmem:[#allocation3 + $0x1c4] sm:$0xf]
        %v8334 = vld [vmem:[#allocation3 + $0x1dc] sm:$0xf]
        %v8335 = vld [vmem:[#allocation3 + $0x1f4] sm:$0xf]
        %v8336 = vld [vmem:[#allocation3 + $0x20c] sm:$0xf]
        %v8337 = vld [vmem:[#allocation3 + $0x224] sm:$0xf]
        %v8338 = vld [vmem:[#allocation3 + $0x23c] sm:$0xf]
        %v8339 = vld [vmem:[#allocation3 + $0x254] sm:$0xf]
        %v8340 = vld [vmem:[#allocation3 + $0x26c] sm:$0xf]
        %v8341 = vld [vmem:[#allocation3 + $0x284] sm:$0xf]
        %v8342 = vld [vmem:[#allocation3 + $0x29c] sm:$0xf]
        %v8343 = vld [vmem:[#allocation3 + $0x2b4] sm:$0xf]
        %v8344 = vld [vmem:[#allocation3 + $0x2cc] sm:$0xf]
        %v8345 = vld [vmem:[#allocation3 + $0x2e4] sm:$0xf]
        %v8346 = vld [vmem:[#allocation3 + $0x2fc] sm:$0xf]
        %v8363 = vunpack.c.l.b16 %v8267
        %v8364 = vunpack.c.l.b16 %v8268
        %v8365 = vunpack.c.l.b16 %v8269
        %v8366 = vunpack.c.l.b16 %v8270
        %v8367 = vunpack.c.l.b16 %v8271
        %v8368 = vunpack.c.l.b16 %v8272
        %v8369 = vunpack.c.l.b16 %v8273
        %v8370 = vunpack.c.l.b16 %v8274
        %v8371 = vunpack.c.l.b16 %v8275
        %v8372 = vunpack.c.l.b16 %v8276
        %v8373 = vunpack.c.l.b16 %v8277
        %v8374 = vunpack.c.l.b16 %v8278
        %v8375 = vunpack.c.l.b16 %v8279
        %v8376 = vunpack.c.l.b16 %v8280
        %v8377 = vunpack.c.l.b16 %v8281
        %v8378 = vunpack.c.l.b16 %v8282
        %v8379 = vpack.c.b16 %v8364, %v8363
        %v8380 = vpack.c.b16 %v8366, %v8365
        %v8381 = vpack.c.b16 %v8368, %v8367
        %v8382 = vpack.c.b16 %v8370, %v8369
        %v8383 = vpack.c.b16 %v8372, %v8371
        %v8384 = vpack.c.b16 %v8374, %v8373
        %v8385 = vpack.c.b16 %v8376, %v8375
        %v8386 = vpack.c.b16 %v8378, %v8377
        %v8419 = vunpack.c.l.b16 %v8283
        %v8420 = vunpack.c.l.b16 %v8284
        %v8421 = vunpack.c.l.b16 %v8285
        %v8422 = vunpack.c.l.b16 %v8286
        %v8423 = vunpack.c.l.b16 %v8287
        %v8424 = vunpack.c.l.b16 %v8288
        %v8425 = vunpack.c.l.b16 %v8289
        %v8426 = vunpack.c.l.b16 %v8290
        %v8427 = vunpack.c.l.b16 %v8291
        %v8428 = vunpack.c.l.b16 %v8292
        %v8429 = vunpack.c.l.b16 %v8293
        %v8430 = vunpack.c.l.b16 %v8294
        %v8431 = vunpack.c.l.b16 %v8295
        %v8432 = vunpack.c.l.b16 %v8296
        %v8433 = vunpack.c.l.b16 %v8297
        %v8434 = vunpack.c.l.b16 %v8298
        %v8435 = vunpack.c.l.b16 %v8299
        %v8436 = vunpack.c.l.b16 %v8300
        %v8437 = vunpack.c.l.b16 %v8301
        %v8438 = vunpack.c.l.b16 %v8302
        %v8439 = vunpack.c.l.b16 %v8303
        %v8440 = vunpack.c.l.b16 %v8304
        %v8441 = vunpack.c.l.b16 %v8305
        %v8442 = vunpack.c.l.b16 %v8306
        %v8443 = vunpack.c.l.b16 %v8307
        %v8444 = vunpack.c.l.b16 %v8308
        %v8445 = vunpack.c.l.b16 %v8309
        %v8446 = vunpack.c.l.b16 %v8310
        %v8447 = vunpack.c.l.b16 %v8311
        %v8448 = vunpack.c.l.b16 %v8312
        %v8449 = vunpack.c.l.b16 %v8313
        %v8450 = vunpack.c.l.b16 %v8314
        %v8451 = vpack.c.b16 %v8420, %v8419
        %v8452 = vpack.c.b16 %v8422, %v8421
        %v8453 = vpack.c.b16 %v8424, %v8423
        %v8454 = vpack.c.b16 %v8426, %v8425
        %v8455 = vpack.c.b16 %v8428, %v8427
        %v8456 = vpack.c.b16 %v8430, %v8429
        %v8457 = vpack.c.b16 %v8432, %v8431
        %v8458 = vpack.c.b16 %v8434, %v8433
        %v8459 = vpack.c.b16 %v8436, %v8435
        %v8460 = vpack.c.b16 %v8438, %v8437
        %v8461 = vpack.c.b16 %v8440, %v8439
        %v8462 = vpack.c.b16 %v8442, %v8441
        %v8463 = vpack.c.b16 %v8444, %v8443
        %v8464 = vpack.c.b16 %v8446, %v8445
        %v8465 = vpack.c.b16 %v8448, %v8447
        %v8466 = vpack.c.b16 %v8450, %v8449
        %v8468 = vsel %vm4640, %v8379, 0
        %v8471 = vsel %vm4640, %v8380, 0
        %v8474 = vsel %vm4640, %v8381, 0
        %v8477 = vsel %vm4640, %v8382, 0
        %v8480 = vsel %vm4640, %v8383, 0
        %v8483 = vsel %vm4640, %v8384, 0
        %v8486 = vsel %vm4640, %v8385, 0
        %v8489 = vsel %vm4640, %v8386, 0
        %v8492 = vsel %vm4640, %v8451, 0
        %v8495 = vsel %vm4640, %v8452, 0
        %v8498 = vsel %vm4640, %v8453, 0
        %v8501 = vsel %vm4640, %v8454, 0
        %v8504 = vsel %vm4640, %v8455, 0
        %v8507 = vsel %vm4640, %v8456, 0
        %v8510 = vsel %vm4640, %v8457, 0
        %v8513 = vsel %vm4640, %v8458, 0
        %v8516 = vsel %vm4640, %v8459, 0
        %v8519 = vsel %vm4640, %v8460, 0
        %v8522 = vsel %vm4640, %v8461, 0
        %v8525 = vsel %vm4640, %v8462, 0
        %v8528 = vsel %vm4640, %v8463, 0
        %v8531 = vsel %vm4640, %v8464, 0
        %v8534 = vsel %vm4640, %v8465, 0
        %v8537 = vsel %vm4640, %v8466, 0
        %8539 = vmatpush.bf16.xpose.msra.mxu0 %v8513
        %8540 = vmatpush.bf16.xpose.msra.mxu0 %v8510
        %8541 = vmatpush.bf16.xpose.msra.mxu0 %v8507
        %8542 = vmatpush.bf16.xpose.msra.mxu0 %v8504
        %8543 = vmatpush.bf16.xpose.msra.mxu0 %v8501
        %8544 = vmatpush.bf16.xpose.msra.mxu0 %v8498
        %8545 = vmatpush.bf16.xpose.msra.mxu0 %v8495
        %8546 = vmatpush.bf16.xpose.msra.mxu0 %v8492
        %8547 = vmatmul.bf16.gmra.mxu0 %v8468
        %v8548 = vpop.f32.mrf.mxu0
        %v8549 = vadd.f32 0.0, %v8548
        %v8550 = vpop.f32.mrf.mxu0
        %v8551 = vadd.f32 0.0, %v8550
        %8552 = vmatmul.bf16.gmra.mxu0 %v8471
        %v8553 = vpop.f32.mrf.mxu0
        %v8554 = vadd.f32 0.0, %v8553
        %v8555 = vpop.f32.mrf.mxu0
        %v8556 = vadd.f32 0.0, %v8555
        %8557 = vmatmul.bf16.gmra.mxu0 %v8474
        %v8558 = vpop.f32.mrf.mxu0
        %v8559 = vadd.f32 0.0, %v8558
        %v8560 = vpop.f32.mrf.mxu0
        %v8561 = vadd.f32 0.0, %v8560
        %8562 = vmatmul.bf16.gmra.mxu0 %v8477
        %v8563 = vpop.f32.mrf.mxu0
        %v8564 = vadd.f32 0.0, %v8563
        %v8565 = vpop.f32.mrf.mxu0
        %v8566 = vadd.f32 0.0, %v8565
        %8567 = vmatmul.bf16.gmra.mxu0 %v8480
        %v8568 = vpop.f32.mrf.mxu0
        %v8569 = vadd.f32 0.0, %v8568
        %v8570 = vpop.f32.mrf.mxu0
        %v8571 = vadd.f32 0.0, %v8570
        %8572 = vmatmul.bf16.gmra.mxu0 %v8483
        %v8573 = vpop.f32.mrf.mxu0
        %v8574 = vadd.f32 0.0, %v8573
        %v8575 = vpop.f32.mrf.mxu0
        %v8576 = vadd.f32 0.0, %v8575
        %8577 = vmatmul.bf16.gmra.mxu0 %v8486
        %v8578 = vpop.f32.mrf.mxu0
        %v8579 = vadd.f32 0.0, %v8578
        %v8580 = vpop.f32.mrf.mxu0
        %v8581 = vadd.f32 0.0, %v8580
        %8582 = vmatmul.bf16.gmra.mxu0 %v8489
        %v8583 = vpop.f32.mrf.mxu0
        %v8584 = vadd.f32 0.0, %v8583
        %v8585 = vpop.f32.mrf.mxu0
        %v8586 = vadd.f32 0.0, %v8585
        %8587 = vdwg.mxu0
        %8588 = vmatpush.bf16.xpose.msra.mxu0 %v8537
        %8589 = vmatpush.bf16.xpose.msra.mxu0 %v8534
        %8590 = vmatpush.bf16.xpose.msra.mxu0 %v8531
        %8591 = vmatpush.bf16.xpose.msra.mxu0 %v8528
        %8592 = vmatpush.bf16.xpose.msra.mxu0 %v8525
        %8593 = vmatpush.bf16.xpose.msra.mxu0 %v8522
        %8594 = vmatpush.bf16.xpose.msra.mxu0 %v8519
        %8595 = vmatpush.bf16.xpose.msra.mxu0 %v8516
        %8596 = vmatmul.bf16.gmra.mxu0 %v8468
        %v8597 = vpop.f32.mrf.mxu0
        %v8598 = vadd.f32 0.0, %v8597
        %v8599 = vpop.f32.mrf.mxu0
        %v8600 = vadd.f32 0.0, %v8599
        %8601 = vmatmul.bf16.gmra.mxu0 %v8471
        %v8602 = vpop.f32.mrf.mxu0
        %v8603 = vadd.f32 0.0, %v8602
        %v8604 = vpop.f32.mrf.mxu0
        %v8605 = vadd.f32 0.0, %v8604
        %8606 = vmatmul.bf16.gmra.mxu0 %v8474
        %v8607 = vpop.f32.mrf.mxu0
        %v8608 = vadd.f32 0.0, %v8607
        %v8609 = vpop.f32.mrf.mxu0
        %v8610 = vadd.f32 0.0, %v8609
        %8611 = vmatmul.bf16.gmra.mxu0 %v8477
        %v8612 = vpop.f32.mrf.mxu0
        %v8613 = vadd.f32 0.0, %v8612
        %v8614 = vpop.f32.mrf.mxu0
        %v8615 = vadd.f32 0.0, %v8614
        %8616 = vmatmul.bf16.gmra.mxu0 %v8480
        %v8617 = vpop.f32.mrf.mxu0
        %v8618 = vadd.f32 0.0, %v8617
        %v8619 = vpop.f32.mrf.mxu0
        %v8620 = vadd.f32 0.0, %v8619
        %8621 = vmatmul.bf16.gmra.mxu0 %v8483
        %v8622 = vpop.f32.mrf.mxu0
        %v8623 = vadd.f32 0.0, %v8622
        %v8624 = vpop.f32.mrf.mxu0
        %v8625 = vadd.f32 0.0, %v8624
        %8626 = vmatmul.bf16.gmra.mxu0 %v8486
        %v8627 = vpop.f32.mrf.mxu0
        %v8628 = vadd.f32 0.0, %v8627
        %v8629 = vpop.f32.mrf.mxu0
        %v8630 = vadd.f32 0.0, %v8629
        %8631 = vmatmul.bf16.gmra.mxu0 %v8489
        %v8632 = vpop.f32.mrf.mxu0
        %v8633 = vadd.f32 0.0, %v8632
        %v8634 = vpop.f32.mrf.mxu0
        %v8635 = vadd.f32 0.0, %v8634
        %8636 = vdwg.mxu0
        %v8637 = vsel %vm4408, %v8549, -inf
        %v8638 = vsel %vm4409, %v8598, -inf
        %v8639 = vsel %vm4410, %v8551, -inf
        %v8640 = vsel %vm4411, %v8600, -inf
        %v8641 = vsel %vm4412, %v8554, -inf
        %v8642 = vsel %vm4413, %v8603, -inf
        %v8643 = vsel %vm4414, %v8556, -inf
        %v8644 = vsel %vm4415, %v8605, -inf
        %v8645 = vsel %vm4416, %v8559, -inf
        %v8646 = vsel %vm4417, %v8608, -inf
        %v8647 = vsel %vm4418, %v8561, -inf
        %v8648 = vsel %vm4419, %v8610, -inf
        %v8649 = vsel %vm4420, %v8564, -inf
        %v8650 = vsel %vm4421, %v8613, -inf
        %v8651 = vsel %vm4422, %v8566, -inf
        %v8652 = vsel %vm4423, %v8615, -inf
        %v8653 = vsel %vm4424, %v8569, -inf
        %v8654 = vsel %vm4425, %v8618, -inf
        %v8655 = vsel %vm4426, %v8571, -inf
        %v8656 = vsel %vm4427, %v8620, -inf
        %v8657 = vsel %vm4428, %v8574, -inf
        %v8658 = vsel %vm4429, %v8623, -inf
        %v8659 = vsel %vm4430, %v8576, -inf
        %v8660 = vsel %vm4431, %v8625, -inf
        %v8661 = vsel %vm4432, %v8579, -inf
        %v8662 = vsel %vm4433, %v8628, -inf
        %v8663 = vsel %vm4434, %v8581, -inf
        %v8664 = vsel %vm4435, %v8630, -inf
        %v8665 = vsel %vm4436, %v8584, -inf
        %v8666 = vsel %vm4437, %v8633, -inf
        %v8667 = vsel %vm4438, %v8586, -inf
        %v8668 = vsel %vm4439, %v8635, -inf
        %v8669 = vmax.f32 %v8637, %v8638
        %8670 = vmax.xlane.f32.xlu0 %v8669
        %v8671 = vpop.xlane.xlu0 %8670
        %v8672 = vmax.f32 %v8639, %v8640
        %8673 = vmax.xlane.f32.xlu0 %v8672
        %v8674 = vpop.xlane.xlu0 %8673
        %v8675 = vmax.f32 %v8641, %v8642
        %8676 = vmax.xlane.f32.xlu0 %v8675
        %v8677 = vpop.xlane.xlu0 %8676
        %v8678 = vmax.f32 %v8643, %v8644
        %8679 = vmax.xlane.f32.xlu0 %v8678
        %v8680 = vpop.xlane.xlu0 %8679
        %v8681 = vmax.f32 %v8645, %v8646
        %8682 = vmax.xlane.f32.xlu0 %v8681
        %v8683 = vpop.xlane.xlu0 %8682
        %v8684 = vmax.f32 %v8647, %v8648
        %8685 = vmax.xlane.f32.xlu0 %v8684
        %v8686 = vpop.xlane.xlu0 %8685
        %v8687 = vmax.f32 %v8649, %v8650
        %8688 = vmax.xlane.f32.xlu0 %v8687
        %v8689 = vpop.xlane.xlu0 %8688
        %v8690 = vmax.f32 %v8651, %v8652
        %8691 = vmax.xlane.f32.xlu0 %v8690
        %v8692 = vpop.xlane.xlu0 %8691
        %v8693 = vmax.f32 %v8653, %v8654
        %8694 = vmax.xlane.f32.xlu0 %v8693
        %v8695 = vpop.xlane.xlu0 %8694
        %v8696 = vmax.f32 %v8655, %v8656
        %8697 = vmax.xlane.f32.xlu0 %v8696
        %v8698 = vpop.xlane.xlu0 %8697
        %v8699 = vmax.f32 %v8657, %v8658
        %8700 = vmax.xlane.f32.xlu0 %v8699
        %v8701 = vpop.xlane.xlu0 %8700
        %v8702 = vmax.f32 %v8659, %v8660
        %8703 = vmax.xlane.f32.xlu0 %v8702
        %v8704 = vpop.xlane.xlu0 %8703
        %v8705 = vmax.f32 %v8661, %v8662
        %8706 = vmax.xlane.f32.xlu0 %v8705
        %v8707 = vpop.xlane.xlu0 %8706
        %v8708 = vmax.f32 %v8663, %v8664
        %8709 = vmax.xlane.f32.xlu0 %v8708
        %v8710 = vpop.xlane.xlu0 %8709
        %v8711 = vmax.f32 %v8665, %v8666
        %8712 = vmax.xlane.f32.xlu0 %v8711
        %v8713 = vpop.xlane.xlu0 %8712
        %v8714 = vmax.f32 %v8667, %v8668
        %8715 = vmax.xlane.f32.xlu0 %v8714
        %v8716 = vpop.xlane.xlu0 %8715
        %v8717 = vsub.f32 %v8637, %v8671
        %v8718 = vsub.f32 %v8638, %v8671
        %v8719 = vsub.f32 %v8639, %v8674
        %v8720 = vsub.f32 %v8640, %v8674
        %v8721 = vsub.f32 %v8641, %v8677
        %v8722 = vsub.f32 %v8642, %v8677
        %v8723 = vsub.f32 %v8643, %v8680
        %v8724 = vsub.f32 %v8644, %v8680
        %v8725 = vsub.f32 %v8645, %v8683
        %v8726 = vsub.f32 %v8646, %v8683
        %v8727 = vsub.f32 %v8647, %v8686
        %v8728 = vsub.f32 %v8648, %v8686
        %v8729 = vsub.f32 %v8649, %v8689
        %v8730 = vsub.f32 %v8650, %v8689
        %v8731 = vsub.f32 %v8651, %v8692
        %v8732 = vsub.f32 %v8652, %v8692
        %v8733 = vsub.f32 %v8653, %v8695
        %v8734 = vsub.f32 %v8654, %v8695
        %v8735 = vsub.f32 %v8655, %v8698
        %v8736 = vsub.f32 %v8656, %v8698
        %v8737 = vsub.f32 %v8657, %v8701
        %v8738 = vsub.f32 %v8658, %v8701
        %v8739 = vsub.f32 %v8659, %v8704
        %v8740 = vsub.f32 %v8660, %v8704
        %v8741 = vsub.f32 %v8661, %v8707
        %v8742 = vsub.f32 %v8662, %v8707
        %v8743 = vsub.f32 %v8663, %v8710
        %v8744 = vsub.f32 %v8664, %v8710
        %v8745 = vsub.f32 %v8665, %v8713
        %v8746 = vsub.f32 %v8666, %v8713
        %v8747 = vsub.f32 %v8667, %v8716
        %v8748 = vsub.f32 %v8668, %v8716
        %v8749 = vmul.f32 %v8717, 1.442695
        %v8750 = vpow.pop %v8749
        %v8751 = vmul.f32 %v8718, 1.442695
        %v8752 = vpow.pop %v8751
        %v8753 = vmul.f32 %v8719, 1.442695
        %v8754 = vpow.pop %v8753
        %v8755 = vmul.f32 %v8720, 1.442695
        %v8756 = vpow.pop %v8755
        %v8757 = vmul.f32 %v8721, 1.442695
        %v8758 = vpow.pop %v8757
        %v8759 = vmul.f32 %v8722, 1.442695
        %v8760 = vpow.pop %v8759
        %v8761 = vmul.f32 %v8723, 1.442695
        %v8762 = vpow.pop %v8761
        %v8763 = vmul.f32 %v8724, 1.442695
        %v8764 = vpow.pop %v8763
        %v8765 = vmul.f32 %v8725, 1.442695
        %v8766 = vpow.pop %v8765
        %v8767 = vmul.f32 %v8726, 1.442695
        %v8768 = vpow.pop %v8767
        %v8769 = vmul.f32 %v8727, 1.442695
        %v8770 = vpow.pop %v8769
        %v8771 = vmul.f32 %v8728, 1.442695
        %v8772 = vpow.pop %v8771
        %v8773 = vmul.f32 %v8729, 1.442695
        %v8774 = vpow.pop %v8773
        %v8775 = vmul.f32 %v8730, 1.442695
        %v8776 = vpow.pop %v8775
        %v8777 = vmul.f32 %v8731, 1.442695
        %v8778 = vpow.pop %v8777
        %v8779 = vmul.f32 %v8732, 1.442695
        %v8780 = vpow.pop %v8779
        %v8781 = vmul.f32 %v8733, 1.442695
        %v8782 = vpow.pop %v8781
        %v8783 = vmul.f32 %v8734, 1.442695
        %v8784 = vpow.pop %v8783
        %v8785 = vmul.f32 %v8735, 1.442695
        %v8786 = vpow.pop %v8785
        %v8787 = vmul.f32 %v8736, 1.442695
        %v8788 = vpow.pop %v8787
        %v8789 = vmul.f32 %v8737, 1.442695
        %v8790 = vpow.pop %v8789
        %v8791 = vmul.f32 %v8738, 1.442695
        %v8792 = vpow.pop %v8791
        %v8793 = vmul.f32 %v8739, 1.442695
        %v8794 = vpow.pop %v8793
        %v8795 = vmul.f32 %v8740, 1.442695
        %v8796 = vpow.pop %v8795
        %v8797 = vmul.f32 %v8741, 1.442695
        %v8798 = vpow.pop %v8797
        %v8799 = vmul.f32 %v8742, 1.442695
        %v8800 = vpow.pop %v8799
        %v8801 = vmul.f32 %v8743, 1.442695
        %v8802 = vpow.pop %v8801
        %v8803 = vmul.f32 %v8744, 1.442695
        %v8804 = vpow.pop %v8803
        %v8805 = vmul.f32 %v8745, 1.442695
        %v8806 = vpow.pop %v8805
        %v8807 = vmul.f32 %v8746, 1.442695
        %v8808 = vpow.pop %v8807
        %v8809 = vmul.f32 %v8747, 1.442695
        %v8810 = vpow.pop %v8809
        %v8811 = vmul.f32 %v8748, 1.442695
        %v8812 = vpow.pop %v8811
        %v8813 = vadd.f32 %v8750, %v8752
        %8814 = vadd.xlane.f32.xlu0 %v8813
        %v8815 = vpop.xlane.xlu0 %8814
        %v8816 = vadd.f32 %v8754, %v8756
        %8817 = vadd.xlane.f32.xlu0 %v8816
        %v8818 = vpop.xlane.xlu0 %8817
        %v8819 = vadd.f32 %v8758, %v8760
        %8820 = vadd.xlane.f32.xlu0 %v8819
        %v8821 = vpop.xlane.xlu0 %8820
        %v8822 = vadd.f32 %v8762, %v8764
        %8823 = vadd.xlane.f32.xlu0 %v8822
        %v8824 = vpop.xlane.xlu0 %8823
        %v8825 = vadd.f32 %v8766, %v8768
        %8826 = vadd.xlane.f32.xlu0 %v8825
        %v8827 = vpop.xlane.xlu0 %8826
        %v8828 = vadd.f32 %v8770, %v8772
        %8829 = vadd.xlane.f32.xlu0 %v8828
        %v8830 = vpop.xlane.xlu0 %8829
        %v8831 = vadd.f32 %v8774, %v8776
        %8832 = vadd.xlane.f32.xlu0 %v8831
        %v8833 = vpop.xlane.xlu0 %8832
        %v8834 = vadd.f32 %v8778, %v8780
        %8835 = vadd.xlane.f32.xlu0 %v8834
        %v8836 = vpop.xlane.xlu0 %8835
        %v8837 = vadd.f32 %v8782, %v8784
        %8838 = vadd.xlane.f32.xlu0 %v8837
        %v8839 = vpop.xlane.xlu0 %8838
        %v8840 = vadd.f32 %v8786, %v8788
        %8841 = vadd.xlane.f32.xlu0 %v8840
        %v8842 = vpop.xlane.xlu0 %8841
        %v8843 = vadd.f32 %v8790, %v8792
        %8844 = vadd.xlane.f32.xlu0 %v8843
        %v8845 = vpop.xlane.xlu0 %8844
        %v8846 = vadd.f32 %v8794, %v8796
        %8847 = vadd.xlane.f32.xlu0 %v8846
        %v8848 = vpop.xlane.xlu0 %8847
        %v8849 = vadd.f32 %v8798, %v8800
        %8850 = vadd.xlane.f32.xlu0 %v8849
        %v8851 = vpop.xlane.xlu0 %8850
        %v8852 = vadd.f32 %v8802, %v8804
        %8853 = vadd.xlane.f32.xlu0 %v8852
        %v8854 = vpop.xlane.xlu0 %8853
        %v8855 = vadd.f32 %v8806, %v8808
        %8856 = vadd.xlane.f32.xlu0 %v8855
        %v8857 = vpop.xlane.xlu0 %8856
        %v8858 = vadd.f32 %v8810, %v8812
        %8859 = vadd.xlane.f32.xlu0 %v8858
        %v8860 = vpop.xlane.xlu0 %8859
        %v8861 = vrcp.pop %v8815
        %v8862 = vrcp.pop %v8818
        %v8863 = vrcp.pop %v8821
        %v8864 = vrcp.pop %v8824
        %v8865 = vrcp.pop %v8827
        %v8866 = vrcp.pop %v8830
        %v8867 = vrcp.pop %v8833
        %v8868 = vrcp.pop %v8836
        %v8869 = vrcp.pop %v8839
        %v8870 = vrcp.pop %v8842
        %v8871 = vrcp.pop %v8845
        %v8872 = vrcp.pop %v8848
        %v8873 = vrcp.pop %v8851
        %v8874 = vrcp.pop %v8854
        %v8875 = vrcp.pop %v8857
        %v8876 = vrcp.pop %v8860
        %v8877 = vmul.f32 %v8750, %v8861
        %v8878 = vmul.f32 %v8752, %v8861
        %v8879 = vmul.f32 %v8754, %v8862
        %v8880 = vmul.f32 %v8756, %v8862
        %v8881 = vmul.f32 %v8758, %v8863
        %v8882 = vmul.f32 %v8760, %v8863
        %v8883 = vmul.f32 %v8762, %v8864
        %v8884 = vmul.f32 %v8764, %v8864
        %v8885 = vmul.f32 %v8766, %v8865
        %v8886 = vmul.f32 %v8768, %v8865
        %v8887 = vmul.f32 %v8770, %v8866
        %v8888 = vmul.f32 %v8772, %v8866
        %v8889 = vmul.f32 %v8774, %v8867
        %v8890 = vmul.f32 %v8776, %v8867
        %v8891 = vmul.f32 %v8778, %v8868
        %v8892 = vmul.f32 %v8780, %v8868
        %v8893 = vmul.f32 %v8782, %v8869
        %v8894 = vmul.f32 %v8784, %v8869
        %v8895 = vmul.f32 %v8786, %v8870
        %v8896 = vmul.f32 %v8788, %v8870
        %v8897 = vmul.f32 %v8790, %v8871
        %v8898 = vmul.f32 %v8792, %v8871
        %v8899 = vmul.f32 %v8794, %v8872
        %v8900 = vmul.f32 %v8796, %v8872
        %v8901 = vmul.f32 %v8798, %v8873
        %v8902 = vmul.f32 %v8800, %v8873
        %v8903 = vmul.f32 %v8802, %v8874
        %v8904 = vmul.f32 %v8804, %v8874
        %v8905 = vmul.f32 %v8806, %v8875
        %v8906 = vmul.f32 %v8808, %v8875
        %v8907 = vmul.f32 %v8810, %v8876
        %v8908 = vmul.f32 %v8812, %v8876
        %v8909 = vpack.c.bf16 %v8879, %v8877
        %v8910 = vpack.c.bf16 %v8880, %v8878
        %v8911 = vpack.c.bf16 %v8883, %v8881
        %v8912 = vpack.c.bf16 %v8884, %v8882
        %v8913 = vpack.c.bf16 %v8887, %v8885
        %v8914 = vpack.c.bf16 %v8888, %v8886
        %v8915 = vpack.c.bf16 %v8891, %v8889
        %v8916 = vpack.c.bf16 %v8892, %v8890
        %v8917 = vpack.c.bf16 %v8895, %v8893
        %v8918 = vpack.c.bf16 %v8896, %v8894
        %v8919 = vpack.c.bf16 %v8899, %v8897
        %v8920 = vpack.c.bf16 %v8900, %v8898
        %v8921 = vpack.c.bf16 %v8903, %v8901
        %v8922 = vpack.c.bf16 %v8904, %v8902
        %v8923 = vpack.c.bf16 %v8907, %v8905
        %v8924 = vpack.c.bf16 %v8908, %v8906
        %v8957 = vunpack.c.l.b16 %v8315
        %v8958 = vunpack.c.l.b16 %v8316
        %v8959 = vunpack.c.l.b16 %v8317
        %v8960 = vunpack.c.l.b16 %v8318
        %v8961 = vunpack.c.l.b16 %v8319
        %v8962 = vunpack.c.l.b16 %v8320
        %v8963 = vunpack.c.l.b16 %v8321
        %v8964 = vunpack.c.l.b16 %v8322
        %v8965 = vunpack.c.l.b16 %v8323
        %v8966 = vunpack.c.l.b16 %v8324
        %v8967 = vunpack.c.l.b16 %v8325
        %v8968 = vunpack.c.l.b16 %v8326
        %v8969 = vunpack.c.l.b16 %v8327
        %v8970 = vunpack.c.l.b16 %v8328
        %v8971 = vunpack.c.l.b16 %v8329
        %v8972 = vunpack.c.l.b16 %v8330
        %v8973 = vunpack.c.l.b16 %v8331
        %v8974 = vunpack.c.l.b16 %v8332
        %v8975 = vunpack.c.l.b16 %v8333
        %v8976 = vunpack.c.l.b16 %v8334
        %v8977 = vunpack.c.l.b16 %v8335
        %v8978 = vunpack.c.l.b16 %v8336
        %v8979 = vunpack.c.l.b16 %v8337
        %v8980 = vunpack.c.l.b16 %v8338
        %v8981 = vunpack.c.l.b16 %v8339
        %v8982 = vunpack.c.l.b16 %v8340
        %v8983 = vunpack.c.l.b16 %v8341
        %v8984 = vunpack.c.l.b16 %v8342
        %v8985 = vunpack.c.l.b16 %v8343
        %v8986 = vunpack.c.l.b16 %v8344
        %v8987 = vunpack.c.l.b16 %v8345
        %v8988 = vunpack.c.l.b16 %v8346
        %v8989 = vpack.c.b16 %v8958, %v8957
        %v8990 = vpack.c.b16 %v8960, %v8959
        %v8991 = vpack.c.b16 %v8962, %v8961
        %v8992 = vpack.c.b16 %v8964, %v8963
        %v8993 = vpack.c.b16 %v8966, %v8965
        %v8994 = vpack.c.b16 %v8968, %v8967
        %v8995 = vpack.c.b16 %v8970, %v8969
        %v8996 = vpack.c.b16 %v8972, %v8971
        %v8997 = vpack.c.b16 %v8974, %v8973
        %v8998 = vpack.c.b16 %v8976, %v8975
        %v8999 = vpack.c.b16 %v8978, %v8977
        %v9000 = vpack.c.b16 %v8980, %v8979
        %v9001 = vpack.c.b16 %v8982, %v8981
        %v9002 = vpack.c.b16 %v8984, %v8983
        %v9003 = vpack.c.b16 %v8986, %v8985
        %v9004 = vpack.c.b16 %v8988, %v8987
        %9021 = vmatpush.bf16.msra.mxu0 %v8996
        %9022 = vmatpush.bf16.msra.mxu0 %v8995
        %9023 = vmatpush.bf16.msra.mxu0 %v8994
        %9024 = vmatpush.bf16.msra.mxu0 %v8993
        %9025 = vmatpush.bf16.msra.mxu0 %v8992
        %9026 = vmatpush.bf16.msra.mxu0 %v8991
        %9027 = vmatpush.bf16.msra.mxu0 %v8990
        %9028 = vmatpush.bf16.msra.mxu0 %v8989
        %9029 = vmatmul.bf16.gmra.mxu0 %v8909
        %v9030 = vpop.f32.mrf.mxu0
        %v9031 = vadd.f32 0.0, %v9030
        %v9032 = vpop.f32.mrf.mxu0
        %v9033 = vadd.f32 0.0, %v9032
        %9034 = vmatmul.bf16.gmra.mxu0 %v8911
        %v9035 = vpop.f32.mrf.mxu0
        %v9036 = vadd.f32 0.0, %v9035
        %v9037 = vpop.f32.mrf.mxu0
        %v9038 = vadd.f32 0.0, %v9037
        %9039 = vmatmul.bf16.gmra.mxu0 %v8913
        %v9040 = vpop.f32.mrf.mxu0
        %v9041 = vadd.f32 0.0, %v9040
        %v9042 = vpop.f32.mrf.mxu0
        %v9043 = vadd.f32 0.0, %v9042
        %9044 = vmatmul.bf16.gmra.mxu0 %v8915
        %v9045 = vpop.f32.mrf.mxu0
        %v9046 = vadd.f32 0.0, %v9045
        %v9047 = vpop.f32.mrf.mxu0
        %v9048 = vadd.f32 0.0, %v9047
        %9049 = vmatmul.bf16.gmra.mxu0 %v8917
        %v9050 = vpop.f32.mrf.mxu0
        %v9051 = vadd.f32 0.0, %v9050
        %v9052 = vpop.f32.mrf.mxu0
        %v9053 = vadd.f32 0.0, %v9052
        %9054 = vmatmul.bf16.gmra.mxu0 %v8919
        %v9055 = vpop.f32.mrf.mxu0
        %v9056 = vadd.f32 0.0, %v9055
        %v9057 = vpop.f32.mrf.mxu0
        %v9058 = vadd.f32 0.0, %v9057
        %9059 = vmatmul.bf16.gmra.mxu0 %v8921
        %v9060 = vpop.f32.mrf.mxu0
        %v9061 = vadd.f32 0.0, %v9060
        %v9062 = vpop.f32.mrf.mxu0
        %v9063 = vadd.f32 0.0, %v9062
        %9064 = vmatmul.bf16.gmra.mxu0 %v8923
        %v9065 = vpop.f32.mrf.mxu0
        %v9066 = vadd.f32 0.0, %v9065
        %v9067 = vpop.f32.mrf.mxu0
        %v9068 = vadd.f32 0.0, %v9067
        %9069 = vdwg.mxu0
        %9070 = vmatpush.bf16.msra.mxu0 %v9004
        %9071 = vmatpush.bf16.msra.mxu0 %v9003
        %9072 = vmatpush.bf16.msra.mxu0 %v9002
        %9073 = vmatpush.bf16.msra.mxu0 %v9001
        %9074 = vmatpush.bf16.msra.mxu0 %v9000
        %9075 = vmatpush.bf16.msra.mxu0 %v8999
        %9076 = vmatpush.bf16.msra.mxu0 %v8998
        %9077 = vmatpush.bf16.msra.mxu0 %v8997
        %9078 = vmatmul.bf16.gmra.mxu0 %v8910
        %v9079 = vpop.f32.mrf.mxu0
        %v9080 = vadd.f32 %v9031, %v9079
        %v9081 = vpop.f32.mrf.mxu0
        %v9082 = vadd.f32 %v9033, %v9081
        %9083 = vmatmul.bf16.gmra.mxu0 %v8912
        %v9084 = vpop.f32.mrf.mxu0
        %v9085 = vadd.f32 %v9036, %v9084
        %v9086 = vpop.f32.mrf.mxu0
        %v9087 = vadd.f32 %v9038, %v9086
        %9088 = vmatmul.bf16.gmra.mxu0 %v8914
        %v9089 = vpop.f32.mrf.mxu0
        %v9090 = vadd.f32 %v9041, %v9089
        %v9091 = vpop.f32.mrf.mxu0
        %v9092 = vadd.f32 %v9043, %v9091
        %9093 = vmatmul.bf16.gmra.mxu0 %v8916
        %v9094 = vpop.f32.mrf.mxu0
        %v9095 = vadd.f32 %v9046, %v9094
        %v9096 = vpop.f32.mrf.mxu0
        %v9097 = vadd.f32 %v9048, %v9096
        %9098 = vmatmul.bf16.gmra.mxu0 %v8918
        %v9099 = vpop.f32.mrf.mxu0
        %v9100 = vadd.f32 %v9051, %v9099
        %v9101 = vpop.f32.mrf.mxu0
        %v9102 = vadd.f32 %v9053, %v9101
        %9103 = vmatmul.bf16.gmra.mxu0 %v8920
        %v9104 = vpop.f32.mrf.mxu0
        %v9105 = vadd.f32 %v9056, %v9104
        %v9106 = vpop.f32.mrf.mxu0
        %v9107 = vadd.f32 %v9058, %v9106
        %9108 = vmatmul.bf16.gmra.mxu0 %v8922
        %v9109 = vpop.f32.mrf.mxu0
        %v9110 = vadd.f32 %v9061, %v9109
        %v9111 = vpop.f32.mrf.mxu0
        %v9112 = vadd.f32 %v9063, %v9111
        %9113 = vmatmul.bf16.gmra.mxu0 %v8924
        %v9114 = vpop.f32.mrf.mxu0
        %v9115 = vadd.f32 %v9066, %v9114
        %v9116 = vpop.f32.mrf.mxu0
        %v9117 = vadd.f32 %v9068, %v9116
        %9118 = vdwg.mxu0
        %v9119 = vpack.c.bf16 %v9080, %v9080
        %v9120 = vpack.c.bf16 %v9082, %v9082
        %v9121 = vpack.c.bf16 %v9085, %v9085
        %v9122 = vpack.c.bf16 %v9087, %v9087
        %v9123 = vpack.c.bf16 %v9090, %v9090
        %v9124 = vpack.c.bf16 %v9092, %v9092
        %v9125 = vpack.c.bf16 %v9095, %v9095
        %v9126 = vpack.c.bf16 %v9097, %v9097
        %v9127 = vpack.c.bf16 %v9100, %v9100
        %v9128 = vpack.c.bf16 %v9102, %v9102
        %v9129 = vpack.c.bf16 %v9105, %v9105
        %v9130 = vpack.c.bf16 %v9107, %v9107
        %v9131 = vpack.c.bf16 %v9110, %v9110
        %v9132 = vpack.c.bf16 %v9112, %v9112
        %v9133 = vpack.c.bf16 %v9115, %v9115
        %v9134 = vpack.c.bf16 %v9117, %v9117
        %9135 = vst.msk [vmem:[#allocation4 + $0x8] sm:$0xf] %vm5309, %v9119
        %9136 = vst.msk [vmem:[#allocation4 + $0x14] sm:$0xf] %vm5309, %v9120
        %9137 = vst.msk [vmem:[#allocation4 + $0x20] sm:$0xf] %vm5309, %v9121
        %9138 = vst.msk [vmem:[#allocation4 + $0x2c] sm:$0xf] %vm5309, %v9122
        %9139 = vst.msk [vmem:[#allocation4 + $0x38] sm:$0xf] %vm5309, %v9123
        %9140 = vst.msk [vmem:[#allocation4 + $0x44] sm:$0xf] %vm5309, %v9124
        %9141 = vst.msk [vmem:[#allocation4 + $0x50] sm:$0xf] %vm5309, %v9125
        %9142 = vst.msk [vmem:[#allocation4 + $0x5c] sm:$0xf] %vm5309, %v9126
        %9143 = vst.msk [vmem:[#allocation4 + $0x68] sm:$0xf] %vm5309, %v9127
        %9144 = vst.msk [vmem:[#allocation4 + $0x74] sm:$0xf] %vm5309, %v9128
        %9145 = vst.msk [vmem:[#allocation4 + $0x80] sm:$0xf] %vm5309, %v9129
        %9146 = vst.msk [vmem:[#allocation4 + $0x8c] sm:$0xf] %vm5309, %v9130
        %9147 = vst.msk [vmem:[#allocation4 + $0x98] sm:$0xf] %vm5309, %v9131
        %9148 = vst.msk [vmem:[#allocation4 + $0xa4] sm:$0xf] %vm5309, %v9132
        %9149 = vst.msk [vmem:[#allocation4 + $0xb0] sm:$0xf] %vm5309, %v9133
        %9150 = vst.msk [vmem:[#allocation4 + $0xbc] sm:$0xf] %vm5309, %v9134
        %v9151 = vld [vmem:[#allocation2 + $0x8] sm:$0xf]
        %v9152 = vld [vmem:[#allocation2 + $0x14] sm:$0xf]
        %v9153 = vld [vmem:[#allocation2 + $0x20] sm:$0xf]
        %v9154 = vld [vmem:[#allocation2 + $0x2c] sm:$0xf]
        %v9155 = vld [vmem:[#allocation2 + $0x38] sm:$0xf]
        %v9156 = vld [vmem:[#allocation2 + $0x44] sm:$0xf]
        %v9157 = vld [vmem:[#allocation2 + $0x50] sm:$0xf]
        %v9158 = vld [vmem:[#allocation2 + $0x5c] sm:$0xf]
        %v9159 = vld [vmem:[#allocation2 + $0x68] sm:$0xf]
        %v9160 = vld [vmem:[#allocation2 + $0x74] sm:$0xf]
        %v9161 = vld [vmem:[#allocation2 + $0x80] sm:$0xf]
        %v9162 = vld [vmem:[#allocation2 + $0x8c] sm:$0xf]
        %v9163 = vld [vmem:[#allocation2 + $0x98] sm:$0xf]
        %v9164 = vld [vmem:[#allocation2 + $0xa4] sm:$0xf]
        %v9165 = vld [vmem:[#allocation2 + $0xb0] sm:$0xf]
        %v9166 = vld [vmem:[#allocation2 + $0xbc] sm:$0xf]
        %v9167 = vld [vmem:[#allocation3 + $0x8] sm:$0xf]
        %v9168 = vld [vmem:[#allocation3 + $0x20] sm:$0xf]
        %v9169 = vld [vmem:[#allocation3 + $0x38] sm:$0xf]
        %v9170 = vld [vmem:[#allocation3 + $0x50] sm:$0xf]
        %v9171 = vld [vmem:[#allocation3 + $0x68] sm:$0xf]
        %v9172 = vld [vmem:[#allocation3 + $0x80] sm:$0xf]
        %v9173 = vld [vmem:[#allocation3 + $0x98] sm:$0xf]
        %v9174 = vld [vmem:[#allocation3 + $0xb0] sm:$0xf]
        %v9175 = vld [vmem:[#allocation3 + $0xc8] sm:$0xf]
        %v9176 = vld [vmem:[#allocation3 + $0xe0] sm:$0xf]
        %v9177 = vld [vmem:[#allocation3 + $0xf8] sm:$0xf]
        %v9178 = vld [vmem:[#allocation3 + $0x110] sm:$0xf]
        %v9179 = vld [vmem:[#allocation3 + $0x128] sm:$0xf]
        %v9180 = vld [vmem:[#allocation3 + $0x140] sm:$0xf]
        %v9181 = vld [vmem:[#allocation3 + $0x158] sm:$0xf]
        %v9182 = vld [vmem:[#allocation3 + $0x170] sm:$0xf]
        %v9183 = vld [vmem:[#allocation3 + $0x188] sm:$0xf]
        %v9184 = vld [vmem:[#allocation3 + $0x1a0] sm:$0xf]
        %v9185 = vld [vmem:[#allocation3 + $0x1b8] sm:$0xf]
        %v9186 = vld [vmem:[#allocation3 + $0x1d0] sm:$0xf]
        %v9187 = vld [vmem:[#allocation3 + $0x1e8] sm:$0xf]
        %v9188 = vld [vmem:[#allocation3 + $0x200] sm:$0xf]
        %v9189 = vld [vmem:[#allocation3 + $0x218] sm:$0xf]
        %v9190 = vld [vmem:[#allocation3 + $0x230] sm:$0xf]
        %v9191 = vld [vmem:[#allocation3 + $0x248] sm:$0xf]
        %v9192 = vld [vmem:[#allocation3 + $0x260] sm:$0xf]
        %v9193 = vld [vmem:[#allocation3 + $0x278] sm:$0xf]
        %v9194 = vld [vmem:[#allocation3 + $0x290] sm:$0xf]
        %v9195 = vld [vmem:[#allocation3 + $0x2a8] sm:$0xf]
        %v9196 = vld [vmem:[#allocation3 + $0x2c0] sm:$0xf]
        %v9197 = vld [vmem:[#allocation3 + $0x2d8] sm:$0xf]
        %v9198 = vld [vmem:[#allocation3 + $0x2f0] sm:$0xf]
        %v9199 = vld [vmem:[#allocation3 + $0x14] sm:$0xf]
        %v9200 = vld [vmem:[#allocation3 + $0x2c] sm:$0xf]
        %v9201 = vld [vmem:[#allocation3 + $0x44] sm:$0xf]
        %v9202 = vld [vmem:[#allocation3 + $0x5c] sm:$0xf]
        %v9203 = vld [vmem:[#allocation3 + $0x74] sm:$0xf]
        %v9204 = vld [vmem:[#allocation3 + $0x8c] sm:$0xf]
        %v9205 = vld [vmem:[#allocation3 + $0xa4] sm:$0xf]
        %v9206 = vld [vmem:[#allocation3 + $0xbc] sm:$0xf]
        %v9207 = vld [vmem:[#allocation3 + $0xd4] sm:$0xf]
        %v9208 = vld [vmem:[#allocation3 + $0xec] sm:$0xf]
        %v9209 = vld [vmem:[#allocation3 + $0x104] sm:$0xf]
        %v9210 = vld [vmem:[#allocation3 + $0x11c] sm:$0xf]
        %v9211 = vld [vmem:[#allocation3 + $0x134] sm:$0xf]
        %v9212 = vld [vmem:[#allocation3 + $0x14c] sm:$0xf]
        %v9213 = vld [vmem:[#allocation3 + $0x164] sm:$0xf]
        %v9214 = vld [vmem:[#allocation3 + $0x17c] sm:$0xf]
        %v9215 = vld [vmem:[#allocation3 + $0x194] sm:$0xf]
        %v9216 = vld [vmem:[#allocation3 + $0x1ac] sm:$0xf]
        %v9217 = vld [vmem:[#allocation3 + $0x1c4] sm:$0xf]
        %v9218 = vld [vmem:[#allocation3 + $0x1dc] sm:$0xf]
        %v9219 = vld [vmem:[#allocation3 + $0x1f4] sm:$0xf]
        %v9220 = vld [vmem:[#allocation3 + $0x20c] sm:$0xf]
        %v9221 = vld [vmem:[#allocation3 + $0x224] sm:$0xf]
        %v9222 = vld [vmem:[#allocation3 + $0x23c] sm:$0xf]
        %v9223 = vld [vmem:[#allocation3 + $0x254] sm:$0xf]
        %v9224 = vld [vmem:[#allocation3 + $0x26c] sm:$0xf]
        %v9225 = vld [vmem:[#allocation3 + $0x284] sm:$0xf]
        %v9226 = vld [vmem:[#allocation3 + $0x29c] sm:$0xf]
        %v9227 = vld [vmem:[#allocation3 + $0x2b4] sm:$0xf]
        %v9228 = vld [vmem:[#allocation3 + $0x2cc] sm:$0xf]
        %v9229 = vld [vmem:[#allocation3 + $0x2e4] sm:$0xf]
        %v9230 = vld [vmem:[#allocation3 + $0x2fc] sm:$0xf]
        %v9247 = vunpack.c.l.b16 %v9151
        %v9248 = vunpack.c.l.b16 %v9152
        %v9249 = vunpack.c.l.b16 %v9153
        %v9250 = vunpack.c.l.b16 %v9154
        %v9251 = vunpack.c.l.b16 %v9155
        %v9252 = vunpack.c.l.b16 %v9156
        %v9253 = vunpack.c.l.b16 %v9157
        %v9254 = vunpack.c.l.b16 %v9158
        %v9255 = vunpack.c.l.b16 %v9159
        %v9256 = vunpack.c.l.b16 %v9160
        %v9257 = vunpack.c.l.b16 %v9161
        %v9258 = vunpack.c.l.b16 %v9162
        %v9259 = vunpack.c.l.b16 %v9163
        %v9260 = vunpack.c.l.b16 %v9164
        %v9261 = vunpack.c.l.b16 %v9165
        %v9262 = vunpack.c.l.b16 %v9166
        %v9263 = vpack.c.b16 %v9248, %v9247
        %v9264 = vpack.c.b16 %v9250, %v9249
        %v9265 = vpack.c.b16 %v9252, %v9251
        %v9266 = vpack.c.b16 %v9254, %v9253
        %v9267 = vpack.c.b16 %v9256, %v9255
        %v9268 = vpack.c.b16 %v9258, %v9257
        %v9269 = vpack.c.b16 %v9260, %v9259
        %v9270 = vpack.c.b16 %v9262, %v9261
        %9271 = vrot.lane.b32.xlu0 %v9263, 64
        %v9272 = vpop.permute.xlu0 %9271
        %9273 = vrot.lane.b32.xlu0 %v9264, 64
        %v9274 = vpop.permute.xlu0 %9273
        %9275 = vrot.lane.b32.xlu0 %v9265, 64
        %v9276 = vpop.permute.xlu0 %9275
        %9277 = vrot.lane.b32.xlu0 %v9266, 64
        %v9278 = vpop.permute.xlu0 %9277
        %9279 = vrot.lane.b32.xlu0 %v9267, 64
        %v9280 = vpop.permute.xlu0 %9279
        %9281 = vrot.lane.b32.xlu0 %v9268, 64
        %v9282 = vpop.permute.xlu0 %9281
        %9283 = vrot.lane.b32.xlu0 %v9269, 64
        %v9284 = vpop.permute.xlu0 %9283
        %9285 = vrot.lane.b32.xlu0 %v9270, 64
        %v9286 = vpop.permute.xlu0 %9285
        %v9319 = vunpack.c.l.b16 %v9167
        %v9320 = vunpack.c.l.b16 %v9168
        %v9321 = vunpack.c.l.b16 %v9169
        %v9322 = vunpack.c.l.b16 %v9170
        %v9323 = vunpack.c.l.b16 %v9171
        %v9324 = vunpack.c.l.b16 %v9172
        %v9325 = vunpack.c.l.b16 %v9173
        %v9326 = vunpack.c.l.b16 %v9174
        %v9327 = vunpack.c.l.b16 %v9175
        %v9328 = vunpack.c.l.b16 %v9176
        %v9329 = vunpack.c.l.b16 %v9177
        %v9330 = vunpack.c.l.b16 %v9178
        %v9331 = vunpack.c.l.b16 %v9179
        %v9332 = vunpack.c.l.b16 %v9180
        %v9333 = vunpack.c.l.b16 %v9181
        %v9334 = vunpack.c.l.b16 %v9182
        %v9335 = vunpack.c.l.b16 %v9183
        %v9336 = vunpack.c.l.b16 %v9184
        %v9337 = vunpack.c.l.b16 %v9185
        %v9338 = vunpack.c.l.b16 %v9186
        %v9339 = vunpack.c.l.b16 %v9187
        %v9340 = vunpack.c.l.b16 %v9188
        %v9341 = vunpack.c.l.b16 %v9189
        %v9342 = vunpack.c.l.b16 %v9190
        %v9343 = vunpack.c.l.b16 %v9191
        %v9344 = vunpack.c.l.b16 %v9192
        %v9345 = vunpack.c.l.b16 %v9193
        %v9346 = vunpack.c.l.b16 %v9194
        %v9347 = vunpack.c.l.b16 %v9195
        %v9348 = vunpack.c.l.b16 %v9196
        %v9349 = vunpack.c.l.b16 %v9197
        %v9350 = vunpack.c.l.b16 %v9198
        %v9351 = vpack.c.b16 %v9320, %v9319
        %v9352 = vpack.c.b16 %v9322, %v9321
        %v9353 = vpack.c.b16 %v9324, %v9323
        %v9354 = vpack.c.b16 %v9326, %v9325
        %v9355 = vpack.c.b16 %v9328, %v9327
        %v9356 = vpack.c.b16 %v9330, %v9329
        %v9357 = vpack.c.b16 %v9332, %v9331
        %v9358 = vpack.c.b16 %v9334, %v9333
        %v9359 = vpack.c.b16 %v9336, %v9335
        %v9360 = vpack.c.b16 %v9338, %v9337
        %v9361 = vpack.c.b16 %v9340, %v9339
        %v9362 = vpack.c.b16 %v9342, %v9341
        %v9363 = vpack.c.b16 %v9344, %v9343
        %v9364 = vpack.c.b16 %v9346, %v9345
        %v9365 = vpack.c.b16 %v9348, %v9347
        %v9366 = vpack.c.b16 %v9350, %v9349
        %9367 = vrot.lane.b32.xlu0 %v9351, 64
        %v9368 = vpop.permute.xlu0 %9367
        %9369 = vrot.lane.b32.xlu0 %v9352, 64
        %v9370 = vpop.permute.xlu0 %9369
        %9371 = vrot.lane.b32.xlu0 %v9353, 64
        %v9372 = vpop.permute.xlu0 %9371
        %9373 = vrot.lane.b32.xlu0 %v9354, 64
        %v9374 = vpop.permute.xlu0 %9373
        %9375 = vrot.lane.b32.xlu0 %v9355, 64
        %v9376 = vpop.permute.xlu0 %9375
        %9377 = vrot.lane.b32.xlu0 %v9356, 64
        %v9378 = vpop.permute.xlu0 %9377
        %9379 = vrot.lane.b32.xlu0 %v9357, 64
        %v9380 = vpop.permute.xlu0 %9379
        %9381 = vrot.lane.b32.xlu0 %v9358, 64
        %v9382 = vpop.permute.xlu0 %9381
        %9383 = vrot.lane.b32.xlu0 %v9359, 64
        %v9384 = vpop.permute.xlu0 %9383
        %9385 = vrot.lane.b32.xlu0 %v9360, 64
        %v9386 = vpop.permute.xlu0 %9385
        %9387 = vrot.lane.b32.xlu0 %v9361, 64
        %v9388 = vpop.permute.xlu0 %9387
        %9389 = vrot.lane.b32.xlu0 %v9362, 64
        %v9390 = vpop.permute.xlu0 %9389
        %9391 = vrot.lane.b32.xlu0 %v9363, 64
        %v9392 = vpop.permute.xlu0 %9391
        %9393 = vrot.lane.b32.xlu0 %v9364, 64
        %v9394 = vpop.permute.xlu0 %9393
        %9395 = vrot.lane.b32.xlu0 %v9365, 64
        %v9396 = vpop.permute.xlu0 %9395
        %9397 = vrot.lane.b32.xlu0 %v9366, 64
        %v9398 = vpop.permute.xlu0 %9397
        %v9400 = vsel %vm4640, %v9272, 0
        %v9403 = vsel %vm4640, %v9274, 0
        %v9406 = vsel %vm4640, %v9276, 0
        %v9409 = vsel %vm4640, %v9278, 0
        %v9412 = vsel %vm4640, %v9280, 0
        %v9415 = vsel %vm4640, %v9282, 0
        %v9418 = vsel %vm4640, %v9284, 0
        %v9421 = vsel %vm4640, %v9286, 0
        %v9424 = vsel %vm4640, %v9368, 0
        %v9427 = vsel %vm4640, %v9370, 0
        %v9430 = vsel %vm4640, %v9372, 0
        %v9433 = vsel %vm4640, %v9374, 0
        %v9436 = vsel %vm4640, %v9376, 0
        %v9439 = vsel %vm4640, %v9378, 0
        %v9442 = vsel %vm4640, %v9380, 0
        %v9445 = vsel %vm4640, %v9382, 0
        %v9448 = vsel %vm4640, %v9384, 0
        %v9451 = vsel %vm4640, %v9386, 0
        %v9454 = vsel %vm4640, %v9388, 0
        %v9457 = vsel %vm4640, %v9390, 0
        %v9460 = vsel %vm4640, %v9392, 0
        %v9463 = vsel %vm4640, %v9394, 0
        %v9466 = vsel %vm4640, %v9396, 0
        %v9469 = vsel %vm4640, %v9398, 0
        %9471 = vmatpush.bf16.xpose.msra.mxu0 %v9445
        %9472 = vmatpush.bf16.xpose.msra.mxu0 %v9442
        %9473 = vmatpush.bf16.xpose.msra.mxu0 %v9439
        %9474 = vmatpush.bf16.xpose.msra.mxu0 %v9436
        %9475 = vmatpush.bf16.xpose.msra.mxu0 %v9433
        %9476 = vmatpush.bf16.xpose.msra.mxu0 %v9430
        %9477 = vmatpush.bf16.xpose.msra.mxu0 %v9427
        %9478 = vmatpush.bf16.xpose.msra.mxu0 %v9424
        %9479 = vmatmul.bf16.gmra.mxu0 %v9400
        %v9480 = vpop.f32.mrf.mxu0
        %v9481 = vadd.f32 0.0, %v9480
        %v9482 = vpop.f32.mrf.mxu0
        %v9483 = vadd.f32 0.0, %v9482
        %9484 = vmatmul.bf16.gmra.mxu0 %v9403
        %v9485 = vpop.f32.mrf.mxu0
        %v9486 = vadd.f32 0.0, %v9485
        %v9487 = vpop.f32.mrf.mxu0
        %v9488 = vadd.f32 0.0, %v9487
        %9489 = vmatmul.bf16.gmra.mxu0 %v9406
        %v9490 = vpop.f32.mrf.mxu0
        %v9491 = vadd.f32 0.0, %v9490
        %v9492 = vpop.f32.mrf.mxu0
        %v9493 = vadd.f32 0.0, %v9492
        %9494 = vmatmul.bf16.gmra.mxu0 %v9409
        %v9495 = vpop.f32.mrf.mxu0
        %v9496 = vadd.f32 0.0, %v9495
        %v9497 = vpop.f32.mrf.mxu0
        %v9498 = vadd.f32 0.0, %v9497
        %9499 = vmatmul.bf16.gmra.mxu0 %v9412
        %v9500 = vpop.f32.mrf.mxu0
        %v9501 = vadd.f32 0.0, %v9500
        %v9502 = vpop.f32.mrf.mxu0
        %v9503 = vadd.f32 0.0, %v9502
        %9504 = vmatmul.bf16.gmra.mxu0 %v9415
        %v9505 = vpop.f32.mrf.mxu0
        %v9506 = vadd.f32 0.0, %v9505
        %v9507 = vpop.f32.mrf.mxu0
        %v9508 = vadd.f32 0.0, %v9507
        %9509 = vmatmul.bf16.gmra.mxu0 %v9418
        %v9510 = vpop.f32.mrf.mxu0
        %v9511 = vadd.f32 0.0, %v9510
        %v9512 = vpop.f32.mrf.mxu0
        %v9513 = vadd.f32 0.0, %v9512
        %9514 = vmatmul.bf16.gmra.mxu0 %v9421
        %v9515 = vpop.f32.mrf.mxu0
        %v9516 = vadd.f32 0.0, %v9515
        %v9517 = vpop.f32.mrf.mxu0
        %v9518 = vadd.f32 0.0, %v9517
        %9519 = vdwg.mxu0
        %9520 = vmatpush.bf16.xpose.msra.mxu0 %v9469
        %9521 = vmatpush.bf16.xpose.msra.mxu0 %v9466
        %9522 = vmatpush.bf16.xpose.msra.mxu0 %v9463
        %9523 = vmatpush.bf16.xpose.msra.mxu0 %v9460
        %9524 = vmatpush.bf16.xpose.msra.mxu0 %v9457
        %9525 = vmatpush.bf16.xpose.msra.mxu0 %v9454
        %9526 = vmatpush.bf16.xpose.msra.mxu0 %v9451
        %9527 = vmatpush.bf16.xpose.msra.mxu0 %v9448
        %9528 = vmatmul.bf16.gmra.mxu0 %v9400
        %v9529 = vpop.f32.mrf.mxu0
        %v9530 = vadd.f32 0.0, %v9529
        %v9531 = vpop.f32.mrf.mxu0
        %v9532 = vadd.f32 0.0, %v9531
        %9533 = vmatmul.bf16.gmra.mxu0 %v9403
        %v9534 = vpop.f32.mrf.mxu0
        %v9535 = vadd.f32 0.0, %v9534
        %v9536 = vpop.f32.mrf.mxu0
        %v9537 = vadd.f32 0.0, %v9536
        %9538 = vmatmul.bf16.gmra.mxu0 %v9406
        %v9539 = vpop.f32.mrf.mxu0
        %v9540 = vadd.f32 0.0, %v9539
        %v9541 = vpop.f32.mrf.mxu0
        %v9542 = vadd.f32 0.0, %v9541
        %9543 = vmatmul.bf16.gmra.mxu0 %v9409
        %v9544 = vpop.f32.mrf.mxu0
        %v9545 = vadd.f32 0.0, %v9544
        %v9546 = vpop.f32.mrf.mxu0
        %v9547 = vadd.f32 0.0, %v9546
        %9548 = vmatmul.bf16.gmra.mxu0 %v9412
        %v9549 = vpop.f32.mrf.mxu0
        %v9550 = vadd.f32 0.0, %v9549
        %v9551 = vpop.f32.mrf.mxu0
        %v9552 = vadd.f32 0.0, %v9551
        %9553 = vmatmul.bf16.gmra.mxu0 %v9415
        %v9554 = vpop.f32.mrf.mxu0
        %v9555 = vadd.f32 0.0, %v9554
        %v9556 = vpop.f32.mrf.mxu0
        %v9557 = vadd.f32 0.0, %v9556
        %9558 = vmatmul.bf16.gmra.mxu0 %v9418
        %v9559 = vpop.f32.mrf.mxu0
        %v9560 = vadd.f32 0.0, %v9559
        %v9561 = vpop.f32.mrf.mxu0
        %v9562 = vadd.f32 0.0, %v9561
        %9563 = vmatmul.bf16.gmra.mxu0 %v9421
        %v9564 = vpop.f32.mrf.mxu0
        %v9565 = vadd.f32 0.0, %v9564
        %v9566 = vpop.f32.mrf.mxu0
        %v9567 = vadd.f32 0.0, %v9566
        %9568 = vdwg.mxu0
        %v9569 = vsel %vm4408, %v9481, -inf
        %v9570 = vsel %vm4409, %v9530, -inf
        %v9571 = vsel %vm4410, %v9483, -inf
        %v9572 = vsel %vm4411, %v9532, -inf
        %v9573 = vsel %vm4412, %v9486, -inf
        %v9574 = vsel %vm4413, %v9535, -inf
        %v9575 = vsel %vm4414, %v9488, -inf
        %v9576 = vsel %vm4415, %v9537, -inf
        %v9577 = vsel %vm4416, %v9491, -inf
        %v9578 = vsel %vm4417, %v9540, -inf
        %v9579 = vsel %vm4418, %v9493, -inf
        %v9580 = vsel %vm4419, %v9542, -inf
        %v9581 = vsel %vm4420, %v9496, -inf
        %v9582 = vsel %vm4421, %v9545, -inf
        %v9583 = vsel %vm4422, %v9498, -inf
        %v9584 = vsel %vm4423, %v9547, -inf
        %v9585 = vsel %vm4424, %v9501, -inf
        %v9586 = vsel %vm4425, %v9550, -inf
        %v9587 = vsel %vm4426, %v9503, -inf
        %v9588 = vsel %vm4427, %v9552, -inf
        %v9589 = vsel %vm4428, %v9506, -inf
        %v9590 = vsel %vm4429, %v9555, -inf
        %v9591 = vsel %vm4430, %v9508, -inf
        %v9592 = vsel %vm4431, %v9557, -inf
        %v9593 = vsel %vm4432, %v9511, -inf
        %v9594 = vsel %vm4433, %v9560, -inf
        %v9595 = vsel %vm4434, %v9513, -inf
        %v9596 = vsel %vm4435, %v9562, -inf
        %v9597 = vsel %vm4436, %v9516, -inf
        %v9598 = vsel %vm4437, %v9565, -inf
        %v9599 = vsel %vm4438, %v9518, -inf
        %v9600 = vsel %vm4439, %v9567, -inf
        %v9601 = vmax.f32 %v9569, %v9570
        %9602 = vmax.xlane.f32.xlu0 %v9601
        %v9603 = vpop.xlane.xlu0 %9602
        %v9604 = vmax.f32 %v9571, %v9572
        %9605 = vmax.xlane.f32.xlu0 %v9604
        %v9606 = vpop.xlane.xlu0 %9605
        %v9607 = vmax.f32 %v9573, %v9574
        %9608 = vmax.xlane.f32.xlu0 %v9607
        %v9609 = vpop.xlane.xlu0 %9608
        %v9610 = vmax.f32 %v9575, %v9576
        %9611 = vmax.xlane.f32.xlu0 %v9610
        %v9612 = vpop.xlane.xlu0 %9611
        %v9613 = vmax.f32 %v9577, %v9578
        %9614 = vmax.xlane.f32.xlu0 %v9613
        %v9615 = vpop.xlane.xlu0 %9614
        %v9616 = vmax.f32 %v9579, %v9580
        %9617 = vmax.xlane.f32.xlu0 %v9616
        %v9618 = vpop.xlane.xlu0 %9617
        %v9619 = vmax.f32 %v9581, %v9582
        %9620 = vmax.xlane.f32.xlu0 %v9619
        %v9621 = vpop.xlane.xlu0 %9620
        %v9622 = vmax.f32 %v9583, %v9584
        %9623 = vmax.xlane.f32.xlu0 %v9622
        %v9624 = vpop.xlane.xlu0 %9623
        %v9625 = vmax.f32 %v9585, %v9586
        %9626 = vmax.xlane.f32.xlu0 %v9625
        %v9627 = vpop.xlane.xlu0 %9626
        %v9628 = vmax.f32 %v9587, %v9588
        %9629 = vmax.xlane.f32.xlu0 %v9628
        %v9630 = vpop.xlane.xlu0 %9629
        %v9631 = vmax.f32 %v9589, %v9590
        %9632 = vmax.xlane.f32.xlu0 %v9631
        %v9633 = vpop.xlane.xlu0 %9632
        %v9634 = vmax.f32 %v9591, %v9592
        %9635 = vmax.xlane.f32.xlu0 %v9634
        %v9636 = vpop.xlane.xlu0 %9635
        %v9637 = vmax.f32 %v9593, %v9594
        %9638 = vmax.xlane.f32.xlu0 %v9637
        %v9639 = vpop.xlane.xlu0 %9638
        %v9640 = vmax.f32 %v9595, %v9596
        %9641 = vmax.xlane.f32.xlu0 %v9640
        %v9642 = vpop.xlane.xlu0 %9641
        %v9643 = vmax.f32 %v9597, %v9598
        %9644 = vmax.xlane.f32.xlu0 %v9643
        %v9645 = vpop.xlane.xlu0 %9644
        %v9646 = vmax.f32 %v9599, %v9600
        %9647 = vmax.xlane.f32.xlu0 %v9646
        %v9648 = vpop.xlane.xlu0 %9647
        %v9649 = vsub.f32 %v9569, %v9603
        %v9650 = vsub.f32 %v9570, %v9603
        %v9651 = vsub.f32 %v9571, %v9606
        %v9652 = vsub.f32 %v9572, %v9606
        %v9653 = vsub.f32 %v9573, %v9609
        %v9654 = vsub.f32 %v9574, %v9609
        %v9655 = vsub.f32 %v9575, %v9612
        %v9656 = vsub.f32 %v9576, %v9612
        %v9657 = vsub.f32 %v9577, %v9615
        %v9658 = vsub.f32 %v9578, %v9615
        %v9659 = vsub.f32 %v9579, %v9618
        %v9660 = vsub.f32 %v9580, %v9618
        %v9661 = vsub.f32 %v9581, %v9621
        %v9662 = vsub.f32 %v9582, %v9621
        %v9663 = vsub.f32 %v9583, %v9624
        %v9664 = vsub.f32 %v9584, %v9624
        %v9665 = vsub.f32 %v9585, %v9627
        %v9666 = vsub.f32 %v9586, %v9627
        %v9667 = vsub.f32 %v9587, %v9630
        %v9668 = vsub.f32 %v9588, %v9630
        %v9669 = vsub.f32 %v9589, %v9633
        %v9670 = vsub.f32 %v9590, %v9633
        %v9671 = vsub.f32 %v9591, %v9636
        %v9672 = vsub.f32 %v9592, %v9636
        %v9673 = vsub.f32 %v9593, %v9639
        %v9674 = vsub.f32 %v9594, %v9639
        %v9675 = vsub.f32 %v9595, %v9642
        %v9676 = vsub.f32 %v9596, %v9642
        %v9677 = vsub.f32 %v9597, %v9645
        %v9678 = vsub.f32 %v9598, %v9645
        %v9679 = vsub.f32 %v9599, %v9648
        %v9680 = vsub.f32 %v9600, %v9648
        %v9681 = vmul.f32 %v9649, 1.442695
        %v9682 = vpow.pop %v9681
        %v9683 = vmul.f32 %v9650, 1.442695
        %v9684 = vpow.pop %v9683
        %v9685 = vmul.f32 %v9651, 1.442695
        %v9686 = vpow.pop %v9685
        %v9687 = vmul.f32 %v9652, 1.442695
        %v9688 = vpow.pop %v9687
        %v9689 = vmul.f32 %v9653, 1.442695
        %v9690 = vpow.pop %v9689
        %v9691 = vmul.f32 %v9654, 1.442695
        %v9692 = vpow.pop %v9691
        %v9693 = vmul.f32 %v9655, 1.442695
        %v9694 = vpow.pop %v9693
        %v9695 = vmul.f32 %v9656, 1.442695
        %v9696 = vpow.pop %v9695
        %v9697 = vmul.f32 %v9657, 1.442695
        %v9698 = vpow.pop %v9697
        %v9699 = vmul.f32 %v9658, 1.442695
        %v9700 = vpow.pop %v9699
        %v9701 = vmul.f32 %v9659, 1.442695
        %v9702 = vpow.pop %v9701
        %v9703 = vmul.f32 %v9660, 1.442695
        %v9704 = vpow.pop %v9703
        %v9705 = vmul.f32 %v9661, 1.442695
        %v9706 = vpow.pop %v9705
        %v9707 = vmul.f32 %v9662, 1.442695
        %v9708 = vpow.pop %v9707
        %v9709 = vmul.f32 %v9663, 1.442695
        %v9710 = vpow.pop %v9709
        %v9711 = vmul.f32 %v9664, 1.442695
        %v9712 = vpow.pop %v9711
        %v9713 = vmul.f32 %v9665, 1.442695
        %v9714 = vpow.pop %v9713
        %v9715 = vmul.f32 %v9666, 1.442695
        %v9716 = vpow.pop %v9715
        %v9717 = vmul.f32 %v9667, 1.442695
        %v9718 = vpow.pop %v9717
        %v9719 = vmul.f32 %v9668, 1.442695
        %v9720 = vpow.pop %v9719
        %v9721 = vmul.f32 %v9669, 1.442695
        %v9722 = vpow.pop %v9721
        %v9723 = vmul.f32 %v9670, 1.442695
        %v9724 = vpow.pop %v9723
        %v9725 = vmul.f32 %v9671, 1.442695
        %v9726 = vpow.pop %v9725
        %v9727 = vmul.f32 %v9672, 1.442695
        %v9728 = vpow.pop %v9727
        %v9729 = vmul.f32 %v9673, 1.442695
        %v9730 = vpow.pop %v9729
        %v9731 = vmul.f32 %v9674, 1.442695
        %v9732 = vpow.pop %v9731
        %v9733 = vmul.f32 %v9675, 1.442695
        %v9734 = vpow.pop %v9733
        %v9735 = vmul.f32 %v9676, 1.442695
        %v9736 = vpow.pop %v9735
        %v9737 = vmul.f32 %v9677, 1.442695
        %v9738 = vpow.pop %v9737
        %v9739 = vmul.f32 %v9678, 1.442695
        %v9740 = vpow.pop %v9739
        %v9741 = vmul.f32 %v9679, 1.442695
        %v9742 = vpow.pop %v9741
        %v9743 = vmul.f32 %v9680, 1.442695
        %v9744 = vpow.pop %v9743
        %v9745 = vadd.f32 %v9682, %v9684
        %9746 = vadd.xlane.f32.xlu0 %v9745
        %v9747 = vpop.xlane.xlu0 %9746
        %v9748 = vadd.f32 %v9686, %v9688
        %9749 = vadd.xlane.f32.xlu0 %v9748
        %v9750 = vpop.xlane.xlu0 %9749
        %v9751 = vadd.f32 %v9690, %v9692
        %9752 = vadd.xlane.f32.xlu0 %v9751
        %v9753 = vpop.xlane.xlu0 %9752
        %v9754 = vadd.f32 %v9694, %v9696
        %9755 = vadd.xlane.f32.xlu0 %v9754
        %v9756 = vpop.xlane.xlu0 %9755
        %v9757 = vadd.f32 %v9698, %v9700
        %9758 = vadd.xlane.f32.xlu0 %v9757
        %v9759 = vpop.xlane.xlu0 %9758
        %v9760 = vadd.f32 %v9702, %v9704
        %9761 = vadd.xlane.f32.xlu0 %v9760
        %v9762 = vpop.xlane.xlu0 %9761
        %v9763 = vadd.f32 %v9706, %v9708
        %9764 = vadd.xlane.f32.xlu0 %v9763
        %v9765 = vpop.xlane.xlu0 %9764
        %v9766 = vadd.f32 %v9710, %v9712
        %9767 = vadd.xlane.f32.xlu0 %v9766
        %v9768 = vpop.xlane.xlu0 %9767
        %v9769 = vadd.f32 %v9714, %v9716
        %9770 = vadd.xlane.f32.xlu0 %v9769
        %v9771 = vpop.xlane.xlu0 %9770
        %v9772 = vadd.f32 %v9718, %v9720
        %9773 = vadd.xlane.f32.xlu0 %v9772
        %v9774 = vpop.xlane.xlu0 %9773
        %v9775 = vadd.f32 %v9722, %v9724
        %9776 = vadd.xlane.f32.xlu0 %v9775
        %v9777 = vpop.xlane.xlu0 %9776
        %v9778 = vadd.f32 %v9726, %v9728
        %9779 = vadd.xlane.f32.xlu0 %v9778
        %v9780 = vpop.xlane.xlu0 %9779
        %v9781 = vadd.f32 %v9730, %v9732
        %9782 = vadd.xlane.f32.xlu0 %v9781
        %v9783 = vpop.xlane.xlu0 %9782
        %v9784 = vadd.f32 %v9734, %v9736
        %9785 = vadd.xlane.f32.xlu0 %v9784
        %v9786 = vpop.xlane.xlu0 %9785
        %v9787 = vadd.f32 %v9738, %v9740
        %9788 = vadd.xlane.f32.xlu0 %v9787
        %v9789 = vpop.xlane.xlu0 %9788
        %v9790 = vadd.f32 %v9742, %v9744
        %9791 = vadd.xlane.f32.xlu0 %v9790
        %v9792 = vpop.xlane.xlu0 %9791
        %v9793 = vrcp.pop %v9747
        %v9794 = vrcp.pop %v9750
        %v9795 = vrcp.pop %v9753
        %v9796 = vrcp.pop %v9756
        %v9797 = vrcp.pop %v9759
        %v9798 = vrcp.pop %v9762
        %v9799 = vrcp.pop %v9765
        %v9800 = vrcp.pop %v9768
        %v9801 = vrcp.pop %v9771
        %v9802 = vrcp.pop %v9774
        %v9803 = vrcp.pop %v9777
        %v9804 = vrcp.pop %v9780
        %v9805 = vrcp.pop %v9783
        %v9806 = vrcp.pop %v9786
        %v9807 = vrcp.pop %v9789
        %v9808 = vrcp.pop %v9792
        %v9809 = vmul.f32 %v9682, %v9793
        %v9810 = vmul.f32 %v9684, %v9793
        %v9811 = vmul.f32 %v9686, %v9794
        %v9812 = vmul.f32 %v9688, %v9794
        %v9813 = vmul.f32 %v9690, %v9795
        %v9814 = vmul.f32 %v9692, %v9795
        %v9815 = vmul.f32 %v9694, %v9796
        %v9816 = vmul.f32 %v9696, %v9796
        %v9817 = vmul.f32 %v9698, %v9797
        %v9818 = vmul.f32 %v9700, %v9797
        %v9819 = vmul.f32 %v9702, %v9798
        %v9820 = vmul.f32 %v9704, %v9798
        %v9821 = vmul.f32 %v9706, %v9799
        %v9822 = vmul.f32 %v9708, %v9799
        %v9823 = vmul.f32 %v9710, %v9800
        %v9824 = vmul.f32 %v9712, %v9800
        %v9825 = vmul.f32 %v9714, %v9801
        %v9826 = vmul.f32 %v9716, %v9801
        %v9827 = vmul.f32 %v9718, %v9802
        %v9828 = vmul.f32 %v9720, %v9802
        %v9829 = vmul.f32 %v9722, %v9803
        %v9830 = vmul.f32 %v9724, %v9803
        %v9831 = vmul.f32 %v9726, %v9804
        %v9832 = vmul.f32 %v9728, %v9804
        %v9833 = vmul.f32 %v9730, %v9805
        %v9834 = vmul.f32 %v9732, %v9805
        %v9835 = vmul.f32 %v9734, %v9806
        %v9836 = vmul.f32 %v9736, %v9806
        %v9837 = vmul.f32 %v9738, %v9807
        %v9838 = vmul.f32 %v9740, %v9807
        %v9839 = vmul.f32 %v9742, %v9808
        %v9840 = vmul.f32 %v9744, %v9808
        %v9841 = vpack.c.bf16 %v9811, %v9809
        %v9842 = vpack.c.bf16 %v9812, %v9810
        %v9843 = vpack.c.bf16 %v9815, %v9813
        %v9844 = vpack.c.bf16 %v9816, %v9814
        %v9845 = vpack.c.bf16 %v9819, %v9817
        %v9846 = vpack.c.bf16 %v9820, %v9818
        %v9847 = vpack.c.bf16 %v9823, %v9821
        %v9848 = vpack.c.bf16 %v9824, %v9822
        %v9849 = vpack.c.bf16 %v9827, %v9825
        %v9850 = vpack.c.bf16 %v9828, %v9826
        %v9851 = vpack.c.bf16 %v9831, %v9829
        %v9852 = vpack.c.bf16 %v9832, %v9830
        %v9853 = vpack.c.bf16 %v9835, %v9833
        %v9854 = vpack.c.bf16 %v9836, %v9834
        %v9855 = vpack.c.bf16 %v9839, %v9837
        %v9856 = vpack.c.bf16 %v9840, %v9838
        %v9889 = vunpack.c.l.b16 %v9199
        %v9890 = vunpack.c.l.b16 %v9200
        %v9891 = vunpack.c.l.b16 %v9201
        %v9892 = vunpack.c.l.b16 %v9202
        %v9893 = vunpack.c.l.b16 %v9203
        %v9894 = vunpack.c.l.b16 %v9204
        %v9895 = vunpack.c.l.b16 %v9205
        %v9896 = vunpack.c.l.b16 %v9206
        %v9897 = vunpack.c.l.b16 %v9207
        %v9898 = vunpack.c.l.b16 %v9208
        %v9899 = vunpack.c.l.b16 %v9209
        %v9900 = vunpack.c.l.b16 %v9210
        %v9901 = vunpack.c.l.b16 %v9211
        %v9902 = vunpack.c.l.b16 %v9212
        %v9903 = vunpack.c.l.b16 %v9213
        %v9904 = vunpack.c.l.b16 %v9214
        %v9905 = vunpack.c.l.b16 %v9215
        %v9906 = vunpack.c.l.b16 %v9216
        %v9907 = vunpack.c.l.b16 %v9217
        %v9908 = vunpack.c.l.b16 %v9218
        %v9909 = vunpack.c.l.b16 %v9219
        %v9910 = vunpack.c.l.b16 %v9220
        %v9911 = vunpack.c.l.b16 %v9221
        %v9912 = vunpack.c.l.b16 %v9222
        %v9913 = vunpack.c.l.b16 %v9223
        %v9914 = vunpack.c.l.b16 %v9224
        %v9915 = vunpack.c.l.b16 %v9225
        %v9916 = vunpack.c.l.b16 %v9226
        %v9917 = vunpack.c.l.b16 %v9227
        %v9918 = vunpack.c.l.b16 %v9228
        %v9919 = vunpack.c.l.b16 %v9229
        %v9920 = vunpack.c.l.b16 %v9230
        %v9921 = vpack.c.b16 %v9890, %v9889
        %v9922 = vpack.c.b16 %v9892, %v9891
        %v9923 = vpack.c.b16 %v9894, %v9893
        %v9924 = vpack.c.b16 %v9896, %v9895
        %v9925 = vpack.c.b16 %v9898, %v9897
        %v9926 = vpack.c.b16 %v9900, %v9899
        %v9927 = vpack.c.b16 %v9902, %v9901
        %v9928 = vpack.c.b16 %v9904, %v9903
        %v9929 = vpack.c.b16 %v9906, %v9905
        %v9930 = vpack.c.b16 %v9908, %v9907
        %v9931 = vpack.c.b16 %v9910, %v9909
        %v9932 = vpack.c.b16 %v9912, %v9911
        %v9933 = vpack.c.b16 %v9914, %v9913
        %v9934 = vpack.c.b16 %v9916, %v9915
        %v9935 = vpack.c.b16 %v9918, %v9917
        %v9936 = vpack.c.b16 %v9920, %v9919
        %9937 = vrot.lane.b32.xlu0 %v9921, 64
        %v9938 = vpop.permute.xlu0 %9937
        %9939 = vrot.lane.b32.xlu0 %v9922, 64
        %v9940 = vpop.permute.xlu0 %9939
        %9941 = vrot.lane.b32.xlu0 %v9923, 64
        %v9942 = vpop.permute.xlu0 %9941
        %9943 = vrot.lane.b32.xlu0 %v9924, 64
        %v9944 = vpop.permute.xlu0 %9943
        %9945 = vrot.lane.b32.xlu0 %v9925, 64
        %v9946 = vpop.permute.xlu0 %9945
        %9947 = vrot.lane.b32.xlu0 %v9926, 64
        %v9948 = vpop.permute.xlu0 %9947
        %9949 = vrot.lane.b32.xlu0 %v9927, 64
        %v9950 = vpop.permute.xlu0 %9949
        %9951 = vrot.lane.b32.xlu0 %v9928, 64
        %v9952 = vpop.permute.xlu0 %9951
        %9953 = vrot.lane.b32.xlu0 %v9929, 64
        %v9954 = vpop.permute.xlu0 %9953
        %9955 = vrot.lane.b32.xlu0 %v9930, 64
        %v9956 = vpop.permute.xlu0 %9955
        %9957 = vrot.lane.b32.xlu0 %v9931, 64
        %v9958 = vpop.permute.xlu0 %9957
        %9959 = vrot.lane.b32.xlu0 %v9932, 64
        %v9960 = vpop.permute.xlu0 %9959
        %9961 = vrot.lane.b32.xlu0 %v9933, 64
        %v9962 = vpop.permute.xlu0 %9961
        %9963 = vrot.lane.b32.xlu0 %v9934, 64
        %v9964 = vpop.permute.xlu0 %9963
        %9965 = vrot.lane.b32.xlu0 %v9935, 64
        %v9966 = vpop.permute.xlu0 %9965
        %9967 = vrot.lane.b32.xlu0 %v9936, 64
        %v9968 = vpop.permute.xlu0 %9967
        %9985 = vmatpush.bf16.msra.mxu0 %v9952
        %9986 = vmatpush.bf16.msra.mxu0 %v9950
        %9987 = vmatpush.bf16.msra.mxu0 %v9948
        %9988 = vmatpush.bf16.msra.mxu0 %v9946
        %9989 = vmatpush.bf16.msra.mxu0 %v9944
        %9990 = vmatpush.bf16.msra.mxu0 %v9942
        %9991 = vmatpush.bf16.msra.mxu0 %v9940
        %9992 = vmatpush.bf16.msra.mxu0 %v9938
        %9993 = vmatmul.bf16.gmra.mxu0 %v9841
        %v9994 = vpop.f32.mrf.mxu0
        %v9995 = vadd.f32 0.0, %v9994
        %v9996 = vpop.f32.mrf.mxu0
        %v9997 = vadd.f32 0.0, %v9996
        %9998 = vmatmul.bf16.gmra.mxu0 %v9843
        %v9999 = vpop.f32.mrf.mxu0
        %v10000 = vadd.f32 0.0, %v9999
        %v10001 = vpop.f32.mrf.mxu0
        %v10002 = vadd.f32 0.0, %v10001
        %10003 = vmatmul.bf16.gmra.mxu0 %v9845
        %v10004 = vpop.f32.mrf.mxu0
        %v10005 = vadd.f32 0.0, %v10004
        %v10006 = vpop.f32.mrf.mxu0
        %v10007 = vadd.f32 0.0, %v10006
        %10008 = vmatmul.bf16.gmra.mxu0 %v9847
        %v10009 = vpop.f32.mrf.mxu0
        %v10010 = vadd.f32 0.0, %v10009
        %v10011 = vpop.f32.mrf.mxu0
        %v10012 = vadd.f32 0.0, %v10011
        %10013 = vmatmul.bf16.gmra.mxu0 %v9849
        %v10014 = vpop.f32.mrf.mxu0
        %v10015 = vadd.f32 0.0, %v10014
        %v10016 = vpop.f32.mrf.mxu0
        %v10017 = vadd.f32 0.0, %v10016
        %10018 = vmatmul.bf16.gmra.mxu0 %v9851
        %v10019 = vpop.f32.mrf.mxu0
        %v10020 = vadd.f32 0.0, %v10019
        %v10021 = vpop.f32.mrf.mxu0
        %v10022 = vadd.f32 0.0, %v10021
        %10023 = vmatmul.bf16.gmra.mxu0 %v9853
        %v10024 = vpop.f32.mrf.mxu0
        %v10025 = vadd.f32 0.0, %v10024
        %v10026 = vpop.f32.mrf.mxu0
        %v10027 = vadd.f32 0.0, %v10026
        %10028 = vmatmul.bf16.gmra.mxu0 %v9855
        %v10029 = vpop.f32.mrf.mxu0
        %v10030 = vadd.f32 0.0, %v10029
        %v10031 = vpop.f32.mrf.mxu0
        %v10032 = vadd.f32 0.0, %v10031
        %10033 = vdwg.mxu0
        %10034 = vmatpush.bf16.msra.mxu0 %v9968
        %10035 = vmatpush.bf16.msra.mxu0 %v9966
        %10036 = vmatpush.bf16.msra.mxu0 %v9964
        %10037 = vmatpush.bf16.msra.mxu0 %v9962
        %10038 = vmatpush.bf16.msra.mxu0 %v9960
        %10039 = vmatpush.bf16.msra.mxu0 %v9958
        %10040 = vmatpush.bf16.msra.mxu0 %v9956
        %10041 = vmatpush.bf16.msra.mxu0 %v9954
        %10042 = vmatmul.bf16.gmra.mxu0 %v9842
        %v10043 = vpop.f32.mrf.mxu0
        %v10044 = vadd.f32 %v9995, %v10043
        %v10045 = vpop.f32.mrf.mxu0
        %v10046 = vadd.f32 %v9997, %v10045
        %10047 = vmatmul.bf16.gmra.mxu0 %v9844
        %v10048 = vpop.f32.mrf.mxu0
        %v10049 = vadd.f32 %v10000, %v10048
        %v10050 = vpop.f32.mrf.mxu0
        %v10051 = vadd.f32 %v10002, %v10050
        %10052 = vmatmul.bf16.gmra.mxu0 %v9846
        %v10053 = vpop.f32.mrf.mxu0
        %v10054 = vadd.f32 %v10005, %v10053
        %v10055 = vpop.f32.mrf.mxu0
        %v10056 = vadd.f32 %v10007, %v10055
        %10057 = vmatmul.bf16.gmra.mxu0 %v9848
        %v10058 = vpop.f32.mrf.mxu0
        %v10059 = vadd.f32 %v10010, %v10058
        %v10060 = vpop.f32.mrf.mxu0
        %v10061 = vadd.f32 %v10012, %v10060
        %10062 = vmatmul.bf16.gmra.mxu0 %v9850
        %v10063 = vpop.f32.mrf.mxu0
        %v10064 = vadd.f32 %v10015, %v10063
        %v10065 = vpop.f32.mrf.mxu0
        %v10066 = vadd.f32 %v10017, %v10065
        %10067 = vmatmul.bf16.gmra.mxu0 %v9852
        %v10068 = vpop.f32.mrf.mxu0
        %v10069 = vadd.f32 %v10020, %v10068
        %v10070 = vpop.f32.mrf.mxu0
        %v10071 = vadd.f32 %v10022, %v10070
        %10072 = vmatmul.bf16.gmra.mxu0 %v9854
        %v10073 = vpop.f32.mrf.mxu0
        %v10074 = vadd.f32 %v10025, %v10073
        %v10075 = vpop.f32.mrf.mxu0
        %v10076 = vadd.f32 %v10027, %v10075
        %10077 = vmatmul.bf16.gmra.mxu0 %v9856
        %v10078 = vpop.f32.mrf.mxu0
        %v10079 = vadd.f32 %v10030, %v10078
        %v10080 = vpop.f32.mrf.mxu0
        %v10081 = vadd.f32 %v10032, %v10080
        %10082 = vdwg.mxu0
        %v10083 = vpack.c.bf16 %v10044, %v10044
        %v10084 = vpack.c.bf16 %v10046, %v10046
        %v10085 = vpack.c.bf16 %v10049, %v10049
        %v10086 = vpack.c.bf16 %v10051, %v10051
        %v10087 = vpack.c.bf16 %v10054, %v10054
        %v10088 = vpack.c.bf16 %v10056, %v10056
        %v10089 = vpack.c.bf16 %v10059, %v10059
        %v10090 = vpack.c.bf16 %v10061, %v10061
        %v10091 = vpack.c.bf16 %v10064, %v10064
        %v10092 = vpack.c.bf16 %v10066, %v10066
        %v10093 = vpack.c.bf16 %v10069, %v10069
        %v10094 = vpack.c.bf16 %v10071, %v10071
        %v10095 = vpack.c.bf16 %v10074, %v10074
        %v10096 = vpack.c.bf16 %v10076, %v10076
        %v10097 = vpack.c.bf16 %v10079, %v10079
        %v10098 = vpack.c.bf16 %v10081, %v10081
        %10115 = vrot.lane.b32.xlu0 %v10083, 64
        %v10116 = vpop.permute.xlu0 %10115
        %10117 = vrot.lane.b32.xlu0 %v10084, 64
        %v10118 = vpop.permute.xlu0 %10117
        %10119 = vrot.lane.b32.xlu0 %v10085, 64
        %v10120 = vpop.permute.xlu0 %10119
        %10121 = vrot.lane.b32.xlu0 %v10086, 64
        %v10122 = vpop.permute.xlu0 %10121
        %10123 = vrot.lane.b32.xlu0 %v10087, 64
        %v10124 = vpop.permute.xlu0 %10123
        %10125 = vrot.lane.b32.xlu0 %v10088, 64
        %v10126 = vpop.permute.xlu0 %10125
        %10127 = vrot.lane.b32.xlu0 %v10089, 64
        %v10128 = vpop.permute.xlu0 %10127
        %10129 = vrot.lane.b32.xlu0 %v10090, 64
        %v10130 = vpop.permute.xlu0 %10129
        %10131 = vrot.lane.b32.xlu0 %v10091, 64
        %v10132 = vpop.permute.xlu0 %10131
        %10133 = vrot.lane.b32.xlu0 %v10092, 64
        %v10134 = vpop.permute.xlu0 %10133
        %10135 = vrot.lane.b32.xlu0 %v10093, 64
        %v10136 = vpop.permute.xlu0 %10135
        %10137 = vrot.lane.b32.xlu0 %v10094, 64
        %v10138 = vpop.permute.xlu0 %10137
        %10139 = vrot.lane.b32.xlu0 %v10095, 64
        %v10140 = vpop.permute.xlu0 %10139
        %10141 = vrot.lane.b32.xlu0 %v10096, 64
        %v10142 = vpop.permute.xlu0 %10141
        %10143 = vrot.lane.b32.xlu0 %v10097, 64
        %v10144 = vpop.permute.xlu0 %10143
        %10145 = vrot.lane.b32.xlu0 %v10098, 64
        %v10146 = vpop.permute.xlu0 %10145
        %10163 = vst.msk [vmem:[#allocation4 + $0x8] sm:$0xf] %vm6338, %v10116
        %10164 = vst.msk [vmem:[#allocation4 + $0x14] sm:$0xf] %vm6338, %v10118
        %10165 = vst.msk [vmem:[#allocation4 + $0x20] sm:$0xf] %vm6338, %v10120
        %10166 = vst.msk [vmem:[#allocation4 + $0x2c] sm:$0xf] %vm6338, %v10122
        %10167 = vst.msk [vmem:[#allocation4 + $0x38] sm:$0xf] %vm6338, %v10124
        %10168 = vst.msk [vmem:[#allocation4 + $0x44] sm:$0xf] %vm6338, %v10126
        %10169 = vst.msk [vmem:[#allocation4 + $0x50] sm:$0xf] %vm6338, %v10128
        %10170 = vst.msk [vmem:[#allocation4 + $0x5c] sm:$0xf] %vm6338, %v10130
        %10171 = vst.msk [vmem:[#allocation4 + $0x68] sm:$0xf] %vm6338, %v10132
        %10172 = vst.msk [vmem:[#allocation4 + $0x74] sm:$0xf] %vm6338, %v10134
        %10173 = vst.msk [vmem:[#allocation4 + $0x80] sm:$0xf] %vm6338, %v10136
        %10174 = vst.msk [vmem:[#allocation4 + $0x8c] sm:$0xf] %vm6338, %v10138
        %10175 = vst.msk [vmem:[#allocation4 + $0x98] sm:$0xf] %vm6338, %v10140
        %10176 = vst.msk [vmem:[#allocation4 + $0xa4] sm:$0xf] %vm6338, %v10142
        %10177 = vst.msk [vmem:[#allocation4 + $0xb0] sm:$0xf] %vm6338, %v10144
        %10178 = vst.msk [vmem:[#allocation4 + $0xbc] sm:$0xf] %vm6338, %v10146
        %v10179 = vld [vmem:[#allocation4] sm:$0xff]
        %v10180 = vld [vmem:[#allocation4 + $0x8] sm:$0xf]
        %v10181 = vld [vmem:[#allocation4 + $0xc] sm:$0xff]
        %v10182 = vld [vmem:[#allocation4 + $0x14] sm:$0xf]
        %v10183 = vld [vmem:[#allocation4 + $0x18] sm:$0xff]
        %v10184 = vld [vmem:[#allocation4 + $0x20] sm:$0xf]
        %v10185 = vld [vmem:[#allocation4 + $0x24] sm:$0xff]
        %v10186 = vld [vmem:[#allocation4 + $0x2c] sm:$0xf]
        %v10187 = vld [vmem:[#allocation4 + $0x30] sm:$0xff]
        %v10188 = vld [vmem:[#allocation4 + $0x38] sm:$0xf]
        %v10189 = vld [vmem:[#allocation4 + $0x3c] sm:$0xff]
        %v10190 = vld [vmem:[#allocation4 + $0x44] sm:$0xf]
        %v10191 = vld [vmem:[#allocation4 + $0x48] sm:$0xff]
        %v10192 = vld [vmem:[#allocation4 + $0x50] sm:$0xf]
        %v10193 = vld [vmem:[#allocation4 + $0x54] sm:$0xff]
        %v10194 = vld [vmem:[#allocation4 + $0x5c] sm:$0xf]
        %v10195 = vld [vmem:[#allocation4 + $0x60] sm:$0xff]
        %v10196 = vld [vmem:[#allocation4 + $0x68] sm:$0xf]
        %v10197 = vld [vmem:[#allocation4 + $0x6c] sm:$0xff]
        %v10198 = vld [vmem:[#allocation4 + $0x74] sm:$0xf]
        %v10199 = vld [vmem:[#allocation4 + $0x78] sm:$0xff]
        %v10200 = vld [vmem:[#allocation4 + $0x80] sm:$0xf]
        %v10201 = vld [vmem:[#allocation4 + $0x84] sm:$0xff]
        %v10202 = vld [vmem:[#allocation4 + $0x8c] sm:$0xf]
        %v10203 = vld [vmem:[#allocation4 + $0x90] sm:$0xff]
        %v10204 = vld [vmem:[#allocation4 + $0x98] sm:$0xf]
        %v10205 = vld [vmem:[#allocation4 + $0x9c] sm:$0xff]
        %v10206 = vld [vmem:[#allocation4 + $0xa4] sm:$0xf]
        %v10207 = vld [vmem:[#allocation4 + $0xa8] sm:$0xff]
        %v10208 = vld [vmem:[#allocation4 + $0xb0] sm:$0xf]
        %v10209 = vld [vmem:[#allocation4 + $0xb4] sm:$0xff]
        %v10210 = vld [vmem:[#allocation4 + $0xbc] sm:$0xf]
        %v10211 = vld [vmem:[%s3] sm:$0xff]
        %v10212 = vld [vmem:[%s3 + $0x8] sm:$0xf]
        %v10213 = vld [vmem:[%s3 + $0xc] sm:$0xff]
        %v10214 = vld [vmem:[%s3 + $0x14] sm:$0xf]
        %v10215 = vld [vmem:[%s3 + $0x18] sm:$0xff]
        %v10216 = vld [vmem:[%s3 + $0x20] sm:$0xf]
        %v10217 = vld [vmem:[%s3 + $0x24] sm:$0xff]
        %v10218 = vld [vmem:[%s3 + $0x2c] sm:$0xf]
        %v10219 = vld [vmem:[%s3 + $0x30] sm:$0xff]
        %v10220 = vld [vmem:[%s3 + $0x38] sm:$0xf]
        %v10221 = vld [vmem:[%s3 + $0x3c] sm:$0xff]
        %v10222 = vld [vmem:[%s3 + $0x44] sm:$0xf]
        %v10223 = vld [vmem:[%s3 + $0x48] sm:$0xff]
        %v10224 = vld [vmem:[%s3 + $0x50] sm:$0xf]
        %v10225 = vld [vmem:[%s3 + $0x54] sm:$0xff]
        %v10226 = vld [vmem:[%s3 + $0x5c] sm:$0xf]
        %v10227 = vld [vmem:[%s3 + $0x60] sm:$0xff]
        %v10228 = vld [vmem:[%s3 + $0x68] sm:$0xf]
        %v10229 = vld [vmem:[%s3 + $0x6c] sm:$0xff]
        %v10230 = vld [vmem:[%s3 + $0x74] sm:$0xf]
        %v10231 = vld [vmem:[%s3 + $0x78] sm:$0xff]
        %v10232 = vld [vmem:[%s3 + $0x80] sm:$0xf]
        %v10233 = vld [vmem:[%s3 + $0x84] sm:$0xff]
        %v10234 = vld [vmem:[%s3 + $0x8c] sm:$0xf]
        %v10235 = vld [vmem:[%s3 + $0x90] sm:$0xff]
        %v10236 = vld [vmem:[%s3 + $0x98] sm:$0xf]
        %v10237 = vld [vmem:[%s3 + $0x9c] sm:$0xff]
        %v10238 = vld [vmem:[%s3 + $0xa4] sm:$0xf]
        %v10239 = vld [vmem:[%s3 + $0xa8] sm:$0xff]
        %v10240 = vld [vmem:[%s3 + $0xb0] sm:$0xf]
        %v10241 = vld [vmem:[%s3 + $0xb4] sm:$0xff]
        %v10242 = vld [vmem:[%s3 + $0xbc] sm:$0xf]
        %v10243 = vld [vmem:[%s3 + $0xc0] sm:$0xff]
        %v10244 = vld [vmem:[%s3 + $0xc8] sm:$0xf]
        %v10245 = vld [vmem:[%s3 + $0xcc] sm:$0xff]
        %v10246 = vld [vmem:[%s3 + $0xd4] sm:$0xf]
        %v10247 = vld [vmem:[%s3 + $0xd8] sm:$0xff]
        %v10248 = vld [vmem:[%s3 + $0xe0] sm:$0xf]
        %v10249 = vld [vmem:[%s3 + $0xe4] sm:$0xff]
        %v10250 = vld [vmem:[%s3 + $0xec] sm:$0xf]
        %v10251 = vld [vmem:[%s3 + $0xf0] sm:$0xff]
        %v10252 = vld [vmem:[%s3 + $0xf8] sm:$0xf]
        %v10253 = vld [vmem:[%s3 + $0xfc] sm:$0xff]
        %v10254 = vld [vmem:[%s3 + $0x104] sm:$0xf]
        %v10255 = vld [vmem:[%s3 + $0x108] sm:$0xff]
        %v10256 = vld [vmem:[%s3 + $0x110] sm:$0xf]
        %v10257 = vld [vmem:[%s3 + $0x114] sm:$0xff]
        %v10258 = vld [vmem:[%s3 + $0x11c] sm:$0xf]
        %v10259 = vld [vmem:[%s3 + $0x120] sm:$0xff]
        %v10260 = vld [vmem:[%s3 + $0x128] sm:$0xf]
        %v10261 = vld [vmem:[%s3 + $0x12c] sm:$0xff]
        %v10262 = vld [vmem:[%s3 + $0x134] sm:$0xf]
        %v10263 = vld [vmem:[%s3 + $0x138] sm:$0xff]
        %v10264 = vld [vmem:[%s3 + $0x140] sm:$0xf]
        %v10265 = vld [vmem:[%s3 + $0x144] sm:$0xff]
        %v10266 = vld [vmem:[%s3 + $0x14c] sm:$0xf]
        %v10267 = vld [vmem:[%s3 + $0x150] sm:$0xff]
        %v10268 = vld [vmem:[%s3 + $0x158] sm:$0xf]
        %v10269 = vld [vmem:[%s3 + $0x15c] sm:$0xff]
        %v10270 = vld [vmem:[%s3 + $0x164] sm:$0xf]
        %v10271 = vld [vmem:[%s3 + $0x168] sm:$0xff]
        %v10272 = vld [vmem:[%s3 + $0x170] sm:$0xf]
        %v10273 = vld [vmem:[%s3 + $0x174] sm:$0xff]
        %v10274 = vld [vmem:[%s3 + $0x17c] sm:$0xf]
        %v10275 = vld [vmem:[%s3 + $0x180] sm:$0xff]
        %v10276 = vld [vmem:[%s3 + $0x188] sm:$0xf]
        %v10277 = vld [vmem:[%s3 + $0x18c] sm:$0xff]
        %v10278 = vld [vmem:[%s3 + $0x194] sm:$0xf]
        %v10279 = vld [vmem:[%s3 + $0x198] sm:$0xff]
        %v10280 = vld [vmem:[%s3 + $0x1a0] sm:$0xf]
        %v10281 = vld [vmem:[%s3 + $0x1a4] sm:$0xff]
        %v10282 = vld [vmem:[%s3 + $0x1ac] sm:$0xf]
        %v10283 = vld [vmem:[%s3 + $0x1b0] sm:$0xff]
        %v10284 = vld [vmem:[%s3 + $0x1b8] sm:$0xf]
        %v10285 = vld [vmem:[%s3 + $0x1bc] sm:$0xff]
        %v10286 = vld [vmem:[%s3 + $0x1c4] sm:$0xf]
        %v10287 = vld [vmem:[%s3 + $0x1c8] sm:$0xff]
        %v10288 = vld [vmem:[%s3 + $0x1d0] sm:$0xf]
        %v10289 = vld [vmem:[%s3 + $0x1d4] sm:$0xff]
        %v10290 = vld [vmem:[%s3 + $0x1dc] sm:$0xf]
        %v10291 = vld [vmem:[%s3 + $0x1e0] sm:$0xff]
        %v10292 = vld [vmem:[%s3 + $0x1e8] sm:$0xf]
        %v10293 = vld [vmem:[%s3 + $0x1ec] sm:$0xff]
        %v10294 = vld [vmem:[%s3 + $0x1f4] sm:$0xf]
        %v10295 = vld [vmem:[%s3 + $0x1f8] sm:$0xff]
        %v10296 = vld [vmem:[%s3 + $0x200] sm:$0xf]
        %v10297 = vld [vmem:[%s3 + $0x204] sm:$0xff]
        %v10298 = vld [vmem:[%s3 + $0x20c] sm:$0xf]
        %v10299 = vld [vmem:[%s3 + $0x210] sm:$0xff]
        %v10300 = vld [vmem:[%s3 + $0x218] sm:$0xf]
        %v10301 = vld [vmem:[%s3 + $0x21c] sm:$0xff]
        %v10302 = vld [vmem:[%s3 + $0x224] sm:$0xf]
        %v10303 = vld [vmem:[%s3 + $0x228] sm:$0xff]
        %v10304 = vld [vmem:[%s3 + $0x230] sm:$0xf]
        %v10305 = vld [vmem:[%s3 + $0x234] sm:$0xff]
        %v10306 = vld [vmem:[%s3 + $0x23c] sm:$0xf]
        %v10307 = vld [vmem:[%s4] sm:$0x7]
        %v10309 = vperm.slane %v10307, 0
        %v10310 = vperm.slane %v10307, 1
        %v10311 = vperm.slane %v10307, 2
        %v10347 = vunpack.c.l.b16 %v10179
        %v10348 = vunpack.c.h.b16 %v10179
        %v10349 = vunpack.c.l.b16 %v10180
        %v10350 = vunpack.c.l.b16 %v10181
        %v10351 = vunpack.c.h.b16 %v10181
        %v10352 = vunpack.c.l.b16 %v10182
        %v10353 = vunpack.c.l.b16 %v10183
        %v10354 = vunpack.c.h.b16 %v10183
        %v10355 = vunpack.c.l.b16 %v10184
        %v10356 = vunpack.c.l.b16 %v10185
        %v10357 = vunpack.c.h.b16 %v10185
        %v10358 = vunpack.c.l.b16 %v10186
        %v10359 = vunpack.c.l.b16 %v10187
        %v10360 = vunpack.c.h.b16 %v10187
        %v10361 = vunpack.c.l.b16 %v10188
        %v10362 = vunpack.c.l.b16 %v10189
        %v10363 = vunpack.c.h.b16 %v10189
        %v10364 = vunpack.c.l.b16 %v10190
        %v10365 = vunpack.c.l.b16 %v10191
        %v10366 = vunpack.c.h.b16 %v10191
        %v10367 = vunpack.c.l.b16 %v10192
        %v10368 = vunpack.c.l.b16 %v10193
        %v10369 = vunpack.c.h.b16 %v10193
        %v10370 = vunpack.c.l.b16 %v10194
        %v10371 = vunpack.c.l.b16 %v10195
        %v10372 = vunpack.c.h.b16 %v10195
        %v10373 = vunpack.c.l.b16 %v10196
        %v10374 = vunpack.c.l.b16 %v10197
        %v10375 = vunpack.c.h.b16 %v10197
        %v10376 = vunpack.c.l.b16 %v10198
        %v10377 = vunpack.c.l.b16 %v10199
        %v10378 = vunpack.c.h.b16 %v10199
        %v10379 = vunpack.c.l.b16 %v10200
        %v10380 = vunpack.c.l.b16 %v10201
        %v10381 = vunpack.c.h.b16 %v10201
        %v10382 = vunpack.c.l.b16 %v10202
        %v10383 = vunpack.c.l.b16 %v10203
        %v10384 = vunpack.c.h.b16 %v10203
        %v10385 = vunpack.c.l.b16 %v10204
        %v10386 = vunpack.c.l.b16 %v10205
        %v10387 = vunpack.c.h.b16 %v10205
        %v10388 = vunpack.c.l.b16 %v10206
        %v10389 = vunpack.c.l.b16 %v10207
        %v10390 = vunpack.c.h.b16 %v10207
        %v10391 = vunpack.c.l.b16 %v10208
        %v10392 = vunpack.c.l.b16 %v10209
        %v10393 = vunpack.c.h.b16 %v10209
        %v10394 = vunpack.c.l.b16 %v10210
        %v10395 = vpack.c.b16 %v10350, %v10347
        %v10396 = vpack.c.b16 %v10351, %v10348
        %v10397 = vpack.c.b16 %v10352, %v10349
        %v10398 = vpack.c.b16 %v10356, %v10353
        %v10399 = vpack.c.b16 %v10357, %v10354
        %v10400 = vpack.c.b16 %v10358, %v10355
        %v10401 = vpack.c.b16 %v10362, %v10359
        %v10402 = vpack.c.b16 %v10363, %v10360
        %v10403 = vpack.c.b16 %v10364, %v10361
        %v10404 = vpack.c.b16 %v10368, %v10365
        %v10405 = vpack.c.b16 %v10369, %v10366
        %v10406 = vpack.c.b16 %v10370, %v10367
        %v10407 = vpack.c.b16 %v10374, %v10371
        %v10408 = vpack.c.b16 %v10375, %v10372
        %v10409 = vpack.c.b16 %v10376, %v10373
        %v10410 = vpack.c.b16 %v10380, %v10377
        %v10411 = vpack.c.b16 %v10381, %v10378
        %v10412 = vpack.c.b16 %v10382, %v10379
        %v10413 = vpack.c.b16 %v10386, %v10383
        %v10414 = vpack.c.b16 %v10387, %v10384
        %v10415 = vpack.c.b16 %v10388, %v10385
        %v10416 = vpack.c.b16 %v10392, %v10389
        %v10417 = vpack.c.b16 %v10393, %v10390
        %v10418 = vpack.c.b16 %v10394, %v10391
        %v10539 = vunpack.c.l.b16 %v10211
        %v10540 = vunpack.c.h.b16 %v10211
        %v10541 = vunpack.c.l.b16 %v10212
        %v10542 = vunpack.c.l.b16 %v10213
        %v10543 = vunpack.c.h.b16 %v10213
        %v10544 = vunpack.c.l.b16 %v10214
        %v10545 = vunpack.c.l.b16 %v10215
        %v10546 = vunpack.c.h.b16 %v10215
        %v10547 = vunpack.c.l.b16 %v10216
        %v10548 = vunpack.c.l.b16 %v10217
        %v10549 = vunpack.c.h.b16 %v10217
        %v10550 = vunpack.c.l.b16 %v10218
        %v10551 = vunpack.c.l.b16 %v10219
        %v10552 = vunpack.c.h.b16 %v10219
        %v10553 = vunpack.c.l.b16 %v10220
        %v10554 = vunpack.c.l.b16 %v10221
        %v10555 = vunpack.c.h.b16 %v10221
        %v10556 = vunpack.c.l.b16 %v10222
        %v10557 = vunpack.c.l.b16 %v10223
        %v10558 = vunpack.c.h.b16 %v10223
        %v10559 = vunpack.c.l.b16 %v10224
        %v10560 = vunpack.c.l.b16 %v10225
        %v10561 = vunpack.c.h.b16 %v10225
        %v10562 = vunpack.c.l.b16 %v10226
        %v10563 = vunpack.c.l.b16 %v10227
        %v10564 = vunpack.c.h.b16 %v10227
        %v10565 = vunpack.c.l.b16 %v10228
        %v10566 = vunpack.c.l.b16 %v10229
        %v10567 = vunpack.c.h.b16 %v10229
        %v10568 = vunpack.c.l.b16 %v10230
        %v10569 = vunpack.c.l.b16 %v10231
        %v10570 = vunpack.c.h.b16 %v10231
        %v10571 = vunpack.c.l.b16 %v10232
        %v10572 = vunpack.c.l.b16 %v10233
        %v10573 = vunpack.c.h.b16 %v10233
        %v10574 = vunpack.c.l.b16 %v10234
        %v10575 = vunpack.c.l.b16 %v10235
        %v10576 = vunpack.c.h.b16 %v10235
        %v10577 = vunpack.c.l.b16 %v10236
        %v10578 = vunpack.c.l.b16 %v10237
        %v10579 = vunpack.c.h.b16 %v10237
        %v10580 = vunpack.c.l.b16 %v10238
        %v10581 = vunpack.c.l.b16 %v10239
        %v10582 = vunpack.c.h.b16 %v10239
        %v10583 = vunpack.c.l.b16 %v10240
        %v10584 = vunpack.c.l.b16 %v10241
        %v10585 = vunpack.c.h.b16 %v10241
        %v10586 = vunpack.c.l.b16 %v10242
        %v10587 = vunpack.c.l.b16 %v10243
        %v10588 = vunpack.c.h.b16 %v10243
        %v10589 = vunpack.c.l.b16 %v10244
        %v10590 = vunpack.c.l.b16 %v10245
        %v10591 = vunpack.c.h.b16 %v10245
        %v10592 = vunpack.c.l.b16 %v10246
        %v10593 = vunpack.c.l.b16 %v10247
        %v10594 = vunpack.c.h.b16 %v10247
        %v10595 = vunpack.c.l.b16 %v10248
        %v10596 = vunpack.c.l.b16 %v10249
        %v10597 = vunpack.c.h.b16 %v10249
        %v10598 = vunpack.c.l.b16 %v10250
        %v10599 = vunpack.c.l.b16 %v10251
        %v10600 = vunpack.c.h.b16 %v10251
        %v10601 = vunpack.c.l.b16 %v10252
        %v10602 = vunpack.c.l.b16 %v10253
        %v10603 = vunpack.c.h.b16 %v10253
        %v10604 = vunpack.c.l.b16 %v10254
        %v10605 = vunpack.c.l.b16 %v10255
        %v10606 = vunpack.c.h.b16 %v10255
        %v10607 = vunpack.c.l.b16 %v10256
        %v10608 = vunpack.c.l.b16 %v10257
        %v10609 = vunpack.c.h.b16 %v10257
        %v10610 = vunpack.c.l.b16 %v10258
        %v10611 = vunpack.c.l.b16 %v10259
        %v10612 = vunpack.c.h.b16 %v10259
        %v10613 = vunpack.c.l.b16 %v10260
        %v10614 = vunpack.c.l.b16 %v10261
        %v10615 = vunpack.c.h.b16 %v10261
        %v10616 = vunpack.c.l.b16 %v10262
        %v10617 = vunpack.c.l.b16 %v10263
        %v10618 = vunpack.c.h.b16 %v10263
        %v10619 = vunpack.c.l.b16 %v10264
        %v10620 = vunpack.c.l.b16 %v10265
        %v10621 = vunpack.c.h.b16 %v10265
        %v10622 = vunpack.c.l.b16 %v10266
        %v10623 = vunpack.c.l.b16 %v10267
        %v10624 = vunpack.c.h.b16 %v10267
        %v10625 = vunpack.c.l.b16 %v10268
        %v10626 = vunpack.c.l.b16 %v10269
        %v10627 = vunpack.c.h.b16 %v10269
        %v10628 = vunpack.c.l.b16 %v10270
        %v10629 = vunpack.c.l.b16 %v10271
        %v10630 = vunpack.c.h.b16 %v10271
        %v10631 = vunpack.c.l.b16 %v10272
        %v10632 = vunpack.c.l.b16 %v10273
        %v10633 = vunpack.c.h.b16 %v10273
        %v10634 = vunpack.c.l.b16 %v10274
        %v10635 = vunpack.c.l.b16 %v10275
        %v10636 = vunpack.c.h.b16 %v10275
        %v10637 = vunpack.c.l.b16 %v10276
        %v10638 = vunpack.c.l.b16 %v10277
        %v10639 = vunpack.c.h.b16 %v10277
        %v10640 = vunpack.c.l.b16 %v10278
        %v10641 = vunpack.c.l.b16 %v10279
        %v10642 = vunpack.c.h.b16 %v10279
        %v10643 = vunpack.c.l.b16 %v10280
        %v10644 = vunpack.c.l.b16 %v10281
        %v10645 = vunpack.c.h.b16 %v10281
        %v10646 = vunpack.c.l.b16 %v10282
        %v10647 = vunpack.c.l.b16 %v10283
        %v10648 = vunpack.c.h.b16 %v10283
        %v10649 = vunpack.c.l.b16 %v10284
        %v10650 = vunpack.c.l.b16 %v10285
        %v10651 = vunpack.c.h.b16 %v10285
        %v10652 = vunpack.c.l.b16 %v10286
        %v10653 = vunpack.c.l.b16 %v10287
        %v10654 = vunpack.c.h.b16 %v10287
        %v10655 = vunpack.c.l.b16 %v10288
        %v10656 = vunpack.c.l.b16 %v10289
        %v10657 = vunpack.c.h.b16 %v10289
        %v10658 = vunpack.c.l.b16 %v10290
        %v10659 = vunpack.c.l.b16 %v10291
        %v10660 = vunpack.c.h.b16 %v10291
        %v10661 = vunpack.c.l.b16 %v10292
        %v10662 = vunpack.c.l.b16 %v10293
        %v10663 = vunpack.c.h.b16 %v10293
        %v10664 = vunpack.c.l.b16 %v10294
        %v10665 = vunpack.c.l.b16 %v10295
        %v10666 = vunpack.c.h.b16 %v10295
        %v10667 = vunpack.c.l.b16 %v10296
        %v10668 = vunpack.c.l.b16 %v10297
        %v10669 = vunpack.c.h.b16 %v10297
        %v10670 = vunpack.c.l.b16 %v10298
        %v10671 = vunpack.c.l.b16 %v10299
        %v10672 = vunpack.c.h.b16 %v10299
        %v10673 = vunpack.c.l.b16 %v10300
        %v10674 = vunpack.c.l.b16 %v10301
        %v10675 = vunpack.c.h.b16 %v10301
        %v10676 = vunpack.c.l.b16 %v10302
        %v10677 = vunpack.c.l.b16 %v10303
        %v10678 = vunpack.c.h.b16 %v10303
        %v10679 = vunpack.c.l.b16 %v10304
        %v10680 = vunpack.c.l.b16 %v10305
        %v10681 = vunpack.c.h.b16 %v10305
        %v10682 = vunpack.c.l.b16 %v10306
        %v10683 = vpack.c.b16 %v10542, %v10539
        %v10684 = vpack.c.b16 %v10543, %v10540
        %v10685 = vpack.c.b16 %v10544, %v10541
        %v10686 = vpack.c.b16 %v10548, %v10545
        %v10687 = vpack.c.b16 %v10549, %v10546
        %v10688 = vpack.c.b16 %v10550, %v10547
        %v10689 = vpack.c.b16 %v10554, %v10551
        %v10690 = vpack.c.b16 %v10555, %v10552
        %v10691 = vpack.c.b16 %v10556, %v10553
        %v10692 = vpack.c.b16 %v10560, %v10557
        %v10693 = vpack.c.b16 %v10561, %v10558
        %v10694 = vpack.c.b16 %v10562, %v10559
        %v10695 = vpack.c.b16 %v10566, %v10563
        %v10696 = vpack.c.b16 %v10567, %v10564
        %v10697 = vpack.c.b16 %v10568, %v10565
        %v10698 = vpack.c.b16 %v10572, %v10569
        %v10699 = vpack.c.b16 %v10573, %v10570
        %v10700 = vpack.c.b16 %v10574, %v10571
        %v10701 = vpack.c.b16 %v10578, %v10575
        %v10702 = vpack.c.b16 %v10579, %v10576
        %v10703 = vpack.c.b16 %v10580, %v10577
        %v10704 = vpack.c.b16 %v10584, %v10581
        %v10705 = vpack.c.b16 %v10585, %v10582
        %v10706 = vpack.c.b16 %v10586, %v10583
        %v10707 = vpack.c.b16 %v10590, %v10587
        %v10708 = vpack.c.b16 %v10591, %v10588
        %v10709 = vpack.c.b16 %v10592, %v10589
        %v10710 = vpack.c.b16 %v10596, %v10593
        %v10711 = vpack.c.b16 %v10597, %v10594
        %v10712 = vpack.c.b16 %v10598, %v10595
        %v10713 = vpack.c.b16 %v10602, %v10599
        %v10714 = vpack.c.b16 %v10603, %v10600
        %v10715 = vpack.c.b16 %v10604, %v10601
        %v10716 = vpack.c.b16 %v10608, %v10605
        %v10717 = vpack.c.b16 %v10609, %v10606
        %v10718 = vpack.c.b16 %v10610, %v10607
        %v10719 = vpack.c.b16 %v10614, %v10611
        %v10720 = vpack.c.b16 %v10615, %v10612
        %v10721 = vpack.c.b16 %v10616, %v10613
        %v10722 = vpack.c.b16 %v10620, %v10617
        %v10723 = vpack.c.b16 %v10621, %v10618
        %v10724 = vpack.c.b16 %v10622, %v10619
        %v10725 = vpack.c.b16 %v10626, %v10623
        %v10726 = vpack.c.b16 %v10627, %v10624
        %v10727 = vpack.c.b16 %v10628, %v10625
        %v10728 = vpack.c.b16 %v10632, %v10629
        %v10729 = vpack.c.b16 %v10633, %v10630
        %v10730 = vpack.c.b16 %v10634, %v10631
        %v10731 = vpack.c.b16 %v10638, %v10635
        %v10732 = vpack.c.b16 %v10639, %v10636
        %v10733 = vpack.c.b16 %v10640, %v10637
        %v10734 = vpack.c.b16 %v10644, %v10641
        %v10735 = vpack.c.b16 %v10645, %v10642
        %v10736 = vpack.c.b16 %v10646, %v10643
        %v10737 = vpack.c.b16 %v10650, %v10647
        %v10738 = vpack.c.b16 %v10651, %v10648
        %v10739 = vpack.c.b16 %v10652, %v10649
        %v10740 = vpack.c.b16 %v10656, %v10653
        %v10741 = vpack.c.b16 %v10657, %v10654
        %v10742 = vpack.c.b16 %v10658, %v10655
        %v10743 = vpack.c.b16 %v10662, %v10659
        %v10744 = vpack.c.b16 %v10663, %v10660
        %v10745 = vpack.c.b16 %v10664, %v10661
        %v10746 = vpack.c.b16 %v10668, %v10665
        %v10747 = vpack.c.b16 %v10669, %v10666
        %v10748 = vpack.c.b16 %v10670, %v10667
        %v10749 = vpack.c.b16 %v10674, %v10671
        %v10750 = vpack.c.b16 %v10675, %v10672
        %v10751 = vpack.c.b16 %v10676, %v10673
        %v10752 = vpack.c.b16 %v10680, %v10677
        %v10753 = vpack.c.b16 %v10681, %v10678
        %v10754 = vpack.c.b16 %v10682, %v10679
        %10827 = vmatpush.bf16.msra.mxu0 %v10704
        %10828 = vmatpush.bf16.msra.mxu0 %v10701
        %10829 = vmatpush.bf16.msra.mxu0 %v10698
        %10830 = vmatpush.bf16.msra.mxu0 %v10695
        %10831 = vmatpush.bf16.msra.mxu0 %v10692
        %10832 = vmatpush.bf16.msra.mxu0 %v10689
        %10833 = vmatpush.bf16.msra.mxu0 %v10686
        %10834 = vmatpush.bf16.msra.mxu0 %v10683
        %10835 = vmatmul.bf16.gmra.mxu0 %v10395
        %v10836 = vpop.f32.mrf.mxu0
        %v10837 = vadd.f32 %v10309, %v10836
        %v10838 = vpop.f32.mrf.mxu0
        %v10839 = vadd.f32 %v10309, %v10838
        %10840 = vmatmul.bf16.gmra.mxu0 %v10398
        %v10841 = vpop.f32.mrf.mxu0
        %v10842 = vadd.f32 %v10309, %v10841
        %v10843 = vpop.f32.mrf.mxu0
        %v10844 = vadd.f32 %v10309, %v10843
        %10845 = vmatmul.bf16.gmra.mxu0 %v10401
        %v10846 = vpop.f32.mrf.mxu0
        %v10847 = vadd.f32 %v10309, %v10846
        %v10848 = vpop.f32.mrf.mxu0
        %v10849 = vadd.f32 %v10309, %v10848
        %10850 = vmatmul.bf16.gmra.mxu0 %v10404
        %v10851 = vpop.f32.mrf.mxu0
        %v10852 = vadd.f32 %v10309, %v10851
        %v10853 = vpop.f32.mrf.mxu0
        %v10854 = vadd.f32 %v10309, %v10853
        %10855 = vmatmul.bf16.gmra.mxu0 %v10407
        %v10856 = vpop.f32.mrf.mxu0
        %v10857 = vadd.f32 %v10309, %v10856
        %v10858 = vpop.f32.mrf.mxu0
        %v10859 = vadd.f32 %v10309, %v10858
        %10860 = vmatmul.bf16.gmra.mxu0 %v10410
        %v10861 = vpop.f32.mrf.mxu0
        %v10862 = vadd.f32 %v10309, %v10861
        %v10863 = vpop.f32.mrf.mxu0
        %v10864 = vadd.f32 %v10309, %v10863
        %10865 = vmatmul.bf16.gmra.mxu0 %v10413
        %v10866 = vpop.f32.mrf.mxu0
        %v10867 = vadd.f32 %v10309, %v10866
        %v10868 = vpop.f32.mrf.mxu0
        %v10869 = vadd.f32 %v10309, %v10868
        %10870 = vmatmul.bf16.gmra.mxu0 %v10416
        %v10871 = vpop.f32.mrf.mxu0
        %v10872 = vadd.f32 %v10309, %v10871
        %v10873 = vpop.f32.mrf.mxu0
        %v10874 = vadd.f32 %v10309, %v10873
        %10875 = vdwg.mxu0
        %10876 = vmatpush.bf16.msra.mxu0 %v10728
        %10877 = vmatpush.bf16.msra.mxu0 %v10725
        %10878 = vmatpush.bf16.msra.mxu0 %v10722
        %10879 = vmatpush.bf16.msra.mxu0 %v10719
        %10880 = vmatpush.bf16.msra.mxu0 %v10716
        %10881 = vmatpush.bf16.msra.mxu0 %v10713
        %10882 = vmatpush.bf16.msra.mxu0 %v10710
        %10883 = vmatpush.bf16.msra.mxu0 %v10707
        %10884 = vmatmul.bf16.gmra.mxu0 %v10396
        %v10885 = vpop.f32.mrf.mxu0
        %v10886 = vadd.f32 %v10837, %v10885
        %v10887 = vpop.f32.mrf.mxu0
        %v10888 = vadd.f32 %v10839, %v10887
        %10889 = vmatmul.bf16.gmra.mxu0 %v10399
        %v10890 = vpop.f32.mrf.mxu0
        %v10891 = vadd.f32 %v10842, %v10890
        %v10892 = vpop.f32.mrf.mxu0
        %v10893 = vadd.f32 %v10844, %v10892
        %10894 = vmatmul.bf16.gmra.mxu0 %v10402
        %v10895 = vpop.f32.mrf.mxu0
        %v10896 = vadd.f32 %v10847, %v10895
        %v10897 = vpop.f32.mrf.mxu0
        %v10898 = vadd.f32 %v10849, %v10897
        %10899 = vmatmul.bf16.gmra.mxu0 %v10405
        %v10900 = vpop.f32.mrf.mxu0
        %v10901 = vadd.f32 %v10852, %v10900
        %v10902 = vpop.f32.mrf.mxu0
        %v10903 = vadd.f32 %v10854, %v10902
        %10904 = vmatmul.bf16.gmra.mxu0 %v10408
        %v10905 = vpop.f32.mrf.mxu0
        %v10906 = vadd.f32 %v10857, %v10905
        %v10907 = vpop.f32.mrf.mxu0
        %v10908 = vadd.f32 %v10859, %v10907
        %10909 = vmatmul.bf16.gmra.mxu0 %v10411
        %v10910 = vpop.f32.mrf.mxu0
        %v10911 = vadd.f32 %v10862, %v10910
        %v10912 = vpop.f32.mrf.mxu0
        %v10913 = vadd.f32 %v10864, %v10912
        %10914 = vmatmul.bf16.gmra.mxu0 %v10414
        %v10915 = vpop.f32.mrf.mxu0
        %v10916 = vadd.f32 %v10867, %v10915
        %v10917 = vpop.f32.mrf.mxu0
        %v10918 = vadd.f32 %v10869, %v10917
        %10919 = vmatmul.bf16.gmra.mxu0 %v10417
        %v10920 = vpop.f32.mrf.mxu0
        %v10921 = vadd.f32 %v10872, %v10920
        %v10922 = vpop.f32.mrf.mxu0
        %v10923 = vadd.f32 %v10874, %v10922
        %10924 = vdwg.mxu0
        %10925 = vmatpush.bf16.msra.mxu0 %v10752
        %10926 = vmatpush.bf16.msra.mxu0 %v10749
        %10927 = vmatpush.bf16.msra.mxu0 %v10746
        %10928 = vmatpush.bf16.msra.mxu0 %v10743
        %10929 = vmatpush.bf16.msra.mxu0 %v10740
        %10930 = vmatpush.bf16.msra.mxu0 %v10737
        %10931 = vmatpush.bf16.msra.mxu0 %v10734
        %10932 = vmatpush.bf16.msra.mxu0 %v10731
        %10933 = vmatmul.bf16.gmra.mxu0 %v10397
        %v10934 = vpop.f32.mrf.mxu0
        %v10935 = vadd.f32 %v10886, %v10934
        %v10936 = vpop.f32.mrf.mxu0
        %v10937 = vadd.f32 %v10888, %v10936
        %10938 = vmatmul.bf16.gmra.mxu0 %v10400
        %v10939 = vpop.f32.mrf.mxu0
        %v10940 = vadd.f32 %v10891, %v10939
        %v10941 = vpop.f32.mrf.mxu0
        %v10942 = vadd.f32 %v10893, %v10941
        %10943 = vmatmul.bf16.gmra.mxu0 %v10403
        %v10944 = vpop.f32.mrf.mxu0
        %v10945 = vadd.f32 %v10896, %v10944
        %v10946 = vpop.f32.mrf.mxu0
        %v10947 = vadd.f32 %v10898, %v10946
        %10948 = vmatmul.bf16.gmra.mxu0 %v10406
        %v10949 = vpop.f32.mrf.mxu0
        %v10950 = vadd.f32 %v10901, %v10949
        %v10951 = vpop.f32.mrf.mxu0
        %v10952 = vadd.f32 %v10903, %v10951
        %10953 = vmatmul.bf16.gmra.mxu0 %v10409
        %v10954 = vpop.f32.mrf.mxu0
        %v10955 = vadd.f32 %v10906, %v10954
        %v10956 = vpop.f32.mrf.mxu0
        %v10957 = vadd.f32 %v10908, %v10956
        %10958 = vmatmul.bf16.gmra.mxu0 %v10412
        %v10959 = vpop.f32.mrf.mxu0
        %v10960 = vadd.f32 %v10911, %v10959
        %v10961 = vpop.f32.mrf.mxu0
        %v10962 = vadd.f32 %v10913, %v10961
        %10963 = vmatmul.bf16.gmra.mxu0 %v10415
        %v10964 = vpop.f32.mrf.mxu0
        %v10965 = vadd.f32 %v10916, %v10964
        %v10966 = vpop.f32.mrf.mxu0
        %v10967 = vadd.f32 %v10918, %v10966
        %10968 = vmatmul.bf16.gmra.mxu0 %v10418
        %v10969 = vpop.f32.mrf.mxu0
        %v10970 = vadd.f32 %v10921, %v10969
        %v10971 = vpop.f32.mrf.mxu0
        %v10972 = vadd.f32 %v10923, %v10971
        %10973 = vdwg.mxu0
        %10974 = vmatpush.bf16.msra.mxu0 %v10705
        %10975 = vmatpush.bf16.msra.mxu0 %v10702
        %10976 = vmatpush.bf16.msra.mxu0 %v10699
        %10977 = vmatpush.bf16.msra.mxu0 %v10696
        %10978 = vmatpush.bf16.msra.mxu0 %v10693
        %10979 = vmatpush.bf16.msra.mxu0 %v10690
        %10980 = vmatpush.bf16.msra.mxu0 %v10687
        %10981 = vmatpush.bf16.msra.mxu0 %v10684
        %10982 = vmatmul.bf16.gmra.mxu0 %v10395
        %v10983 = vpop.f32.mrf.mxu0
        %v10984 = vadd.f32 %v10310, %v10983
        %v10985 = vpop.f32.mrf.mxu0
        %v10986 = vadd.f32 %v10310, %v10985
        %10987 = vmatmul.bf16.gmra.mxu0 %v10398
        %v10988 = vpop.f32.mrf.mxu0
        %v10989 = vadd.f32 %v10310, %v10988
        %v10990 = vpop.f32.mrf.mxu0
        %v10991 = vadd.f32 %v10310, %v10990
        %10992 = vmatmul.bf16.gmra.mxu0 %v10401
        %v10993 = vpop.f32.mrf.mxu0
        %v10994 = vadd.f32 %v10310, %v10993
        %v10995 = vpop.f32.mrf.mxu0
        %v10996 = vadd.f32 %v10310, %v10995
        %10997 = vmatmul.bf16.gmra.mxu0 %v10404
        %v10998 = vpop.f32.mrf.mxu0
        %v10999 = vadd.f32 %v10310, %v10998
        %v11000 = vpop.f32.mrf.mxu0
        %v11001 = vadd.f32 %v10310, %v11000
        %11002 = vmatmul.bf16.gmra.mxu0 %v10407
        %v11003 = vpop.f32.mrf.mxu0
        %v11004 = vadd.f32 %v10310, %v11003
        %v11005 = vpop.f32.mrf.mxu0
        %v11006 = vadd.f32 %v10310, %v11005
        %11007 = vmatmul.bf16.gmra.mxu0 %v10410
        %v11008 = vpop.f32.mrf.mxu0
        %v11009 = vadd.f32 %v10310, %v11008
        %v11010 = vpop.f32.mrf.mxu0
        %v11011 = vadd.f32 %v10310, %v11010
        %11012 = vmatmul.bf16.gmra.mxu0 %v10413
        %v11013 = vpop.f32.mrf.mxu0
        %v11014 = vadd.f32 %v10310, %v11013
        %v11015 = vpop.f32.mrf.mxu0
        %v11016 = vadd.f32 %v10310, %v11015
        %11017 = vmatmul.bf16.gmra.mxu0 %v10416
        %v11018 = vpop.f32.mrf.mxu0
        %v11019 = vadd.f32 %v10310, %v11018
        %v11020 = vpop.f32.mrf.mxu0
        %v11021 = vadd.f32 %v10310, %v11020
        %11022 = vdwg.mxu0
        %11023 = vmatpush.bf16.msra.mxu0 %v10729
        %11024 = vmatpush.bf16.msra.mxu0 %v10726
        %11025 = vmatpush.bf16.msra.mxu0 %v10723
        %11026 = vmatpush.bf16.msra.mxu0 %v10720
        %11027 = vmatpush.bf16.msra.mxu0 %v10717
        %11028 = vmatpush.bf16.msra.mxu0 %v10714
        %11029 = vmatpush.bf16.msra.mxu0 %v10711
        %11030 = vmatpush.bf16.msra.mxu0 %v10708
        %11031 = vmatmul.bf16.gmra.mxu0 %v10396
        %v11032 = vpop.f32.mrf.mxu0
        %v11033 = vadd.f32 %v10984, %v11032
        %v11034 = vpop.f32.mrf.mxu0
        %v11035 = vadd.f32 %v10986, %v11034
        %11036 = vmatmul.bf16.gmra.mxu0 %v10399
        %v11037 = vpop.f32.mrf.mxu0
        %v11038 = vadd.f32 %v10989, %v11037
        %v11039 = vpop.f32.mrf.mxu0
        %v11040 = vadd.f32 %v10991, %v11039
        %11041 = vmatmul.bf16.gmra.mxu0 %v10402
        %v11042 = vpop.f32.mrf.mxu0
        %v11043 = vadd.f32 %v10994, %v11042
        %v11044 = vpop.f32.mrf.mxu0
        %v11045 = vadd.f32 %v10996, %v11044
        %11046 = vmatmul.bf16.gmra.mxu0 %v10405
        %v11047 = vpop.f32.mrf.mxu0
        %v11048 = vadd.f32 %v10999, %v11047
        %v11049 = vpop.f32.mrf.mxu0
        %v11050 = vadd.f32 %v11001, %v11049
        %11051 = vmatmul.bf16.gmra.mxu0 %v10408
        %v11052 = vpop.f32.mrf.mxu0
        %v11053 = vadd.f32 %v11004, %v11052
        %v11054 = vpop.f32.mrf.mxu0
        %v11055 = vadd.f32 %v11006, %v11054
        %11056 = vmatmul.bf16.gmra.mxu0 %v10411
        %v11057 = vpop.f32.mrf.mxu0
        %v11058 = vadd.f32 %v11009, %v11057
        %v11059 = vpop.f32.mrf.mxu0
        %v11060 = vadd.f32 %v11011, %v11059
        %11061 = vmatmul.bf16.gmra.mxu0 %v10414
        %v11062 = vpop.f32.mrf.mxu0
        %v11063 = vadd.f32 %v11014, %v11062
        %v11064 = vpop.f32.mrf.mxu0
        %v11065 = vadd.f32 %v11016, %v11064
        %11066 = vmatmul.bf16.gmra.mxu0 %v10417
        %v11067 = vpop.f32.mrf.mxu0
        %v11068 = vadd.f32 %v11019, %v11067
        %v11069 = vpop.f32.mrf.mxu0
        %v11070 = vadd.f32 %v11021, %v11069
        %11071 = vdwg.mxu0
        %11072 = vmatpush.bf16.msra.mxu0 %v10753
        %11073 = vmatpush.bf16.msra.mxu0 %v10750
        %11074 = vmatpush.bf16.msra.mxu0 %v10747
        %11075 = vmatpush.bf16.msra.mxu0 %v10744
        %11076 = vmatpush.bf16.msra.mxu0 %v10741
        %11077 = vmatpush.bf16.msra.mxu0 %v10738
        %11078 = vmatpush.bf16.msra.mxu0 %v10735
        %11079 = vmatpush.bf16.msra.mxu0 %v10732
        %11080 = vmatmul.bf16.gmra.mxu0 %v10397
        %v11081 = vpop.f32.mrf.mxu0
        %v11082 = vadd.f32 %v11033, %v11081
        %v11083 = vpop.f32.mrf.mxu0
        %v11084 = vadd.f32 %v11035, %v11083
        %11085 = vmatmul.bf16.gmra.mxu0 %v10400
        %v11086 = vpop.f32.mrf.mxu0
        %v11087 = vadd.f32 %v11038, %v11086
        %v11088 = vpop.f32.mrf.mxu0
        %v11089 = vadd.f32 %v11040, %v11088
        %11090 = vmatmul.bf16.gmra.mxu0 %v10403
        %v11091 = vpop.f32.mrf.mxu0
        %v11092 = vadd.f32 %v11043, %v11091
        %v11093 = vpop.f32.mrf.mxu0
        %v11094 = vadd.f32 %v11045, %v11093
        %11095 = vmatmul.bf16.gmra.mxu0 %v10406
        %v11096 = vpop.f32.mrf.mxu0
        %v11097 = vadd.f32 %v11048, %v11096
        %v11098 = vpop.f32.mrf.mxu0
        %v11099 = vadd.f32 %v11050, %v11098
        %11100 = vmatmul.bf16.gmra.mxu0 %v10409
        %v11101 = vpop.f32.mrf.mxu0
        %v11102 = vadd.f32 %v11053, %v11101
        %v11103 = vpop.f32.mrf.mxu0
        %v11104 = vadd.f32 %v11055, %v11103
        %11105 = vmatmul.bf16.gmra.mxu0 %v10412
        %v11106 = vpop.f32.mrf.mxu0
        %v11107 = vadd.f32 %v11058, %v11106
        %v11108 = vpop.f32.mrf.mxu0
        %v11109 = vadd.f32 %v11060, %v11108
        %11110 = vmatmul.bf16.gmra.mxu0 %v10415
        %v11111 = vpop.f32.mrf.mxu0
        %v11112 = vadd.f32 %v11063, %v11111
        %v11113 = vpop.f32.mrf.mxu0
        %v11114 = vadd.f32 %v11065, %v11113
        %11115 = vmatmul.bf16.gmra.mxu0 %v10418
        %v11116 = vpop.f32.mrf.mxu0
        %v11117 = vadd.f32 %v11068, %v11116
        %v11118 = vpop.f32.mrf.mxu0
        %v11119 = vadd.f32 %v11070, %v11118
        %11120 = vdwg.mxu0
        %11121 = vmatpush.bf16.msra.mxu0 %v10706
        %11122 = vmatpush.bf16.msra.mxu0 %v10703
        %11123 = vmatpush.bf16.msra.mxu0 %v10700
        %11124 = vmatpush.bf16.msra.mxu0 %v10697
        %11125 = vmatpush.bf16.msra.mxu0 %v10694
        %11126 = vmatpush.bf16.msra.mxu0 %v10691
        %11127 = vmatpush.bf16.msra.mxu0 %v10688
        %11128 = vmatpush.bf16.msra.mxu0 %v10685
        %11129 = vmatmul.bf16.gmra.mxu0 %v10395
        %v11130 = vpop.f32.mrf.mxu0
        %v11131 = vadd.f32 %v10311, %v11130
        %v11132 = vpop.f32.mrf.mxu0
        %v11133 = vadd.f32 %v10311, %v11132
        %11134 = vmatmul.bf16.gmra.mxu0 %v10398
        %v11135 = vpop.f32.mrf.mxu0
        %v11136 = vadd.f32 %v10311, %v11135
        %v11137 = vpop.f32.mrf.mxu0
        %v11138 = vadd.f32 %v10311, %v11137
        %11139 = vmatmul.bf16.gmra.mxu0 %v10401
        %v11140 = vpop.f32.mrf.mxu0
        %v11141 = vadd.f32 %v10311, %v11140
        %v11142 = vpop.f32.mrf.mxu0
        %v11143 = vadd.f32 %v10311, %v11142
        %11144 = vmatmul.bf16.gmra.mxu0 %v10404
        %v11145 = vpop.f32.mrf.mxu0
        %v11146 = vadd.f32 %v10311, %v11145
        %v11147 = vpop.f32.mrf.mxu0
        %v11148 = vadd.f32 %v10311, %v11147
        %11149 = vmatmul.bf16.gmra.mxu0 %v10407
        %v11150 = vpop.f32.mrf.mxu0
        %v11151 = vadd.f32 %v10311, %v11150
        %v11152 = vpop.f32.mrf.mxu0
        %v11153 = vadd.f32 %v10311, %v11152
        %11154 = vmatmul.bf16.gmra.mxu0 %v10410
        %v11155 = vpop.f32.mrf.mxu0
        %v11156 = vadd.f32 %v10311, %v11155
        %v11157 = vpop.f32.mrf.mxu0
        %v11158 = vadd.f32 %v10311, %v11157
        %11159 = vmatmul.bf16.gmra.mxu0 %v10413
        %v11160 = vpop.f32.mrf.mxu0
        %v11161 = vadd.f32 %v10311, %v11160
        %v11162 = vpop.f32.mrf.mxu0
        %v11163 = vadd.f32 %v10311, %v11162
        %11164 = vmatmul.bf16.gmra.mxu0 %v10416
        %v11165 = vpop.f32.mrf.mxu0
        %v11166 = vadd.f32 %v10311, %v11165
        %v11167 = vpop.f32.mrf.mxu0
        %v11168 = vadd.f32 %v10311, %v11167
        %11169 = vdwg.mxu0
        %11170 = vmatpush.bf16.msra.mxu0 %v10730
        %11171 = vmatpush.bf16.msra.mxu0 %v10727
        %11172 = vmatpush.bf16.msra.mxu0 %v10724
        %11173 = vmatpush.bf16.msra.mxu0 %v10721
        %11174 = vmatpush.bf16.msra.mxu0 %v10718
        %11175 = vmatpush.bf16.msra.mxu0 %v10715
        %11176 = vmatpush.bf16.msra.mxu0 %v10712
        %11177 = vmatpush.bf16.msra.mxu0 %v10709
        %11178 = vmatmul.bf16.gmra.mxu0 %v10396
        %v11179 = vpop.f32.mrf.mxu0
        %v11180 = vadd.f32 %v11131, %v11179
        %v11181 = vpop.f32.mrf.mxu0
        %v11182 = vadd.f32 %v11133, %v11181
        %11183 = vmatmul.bf16.gmra.mxu0 %v10399
        %v11184 = vpop.f32.mrf.mxu0
        %v11185 = vadd.f32 %v11136, %v11184
        %v11186 = vpop.f32.mrf.mxu0
        %v11187 = vadd.f32 %v11138, %v11186
        %11188 = vmatmul.bf16.gmra.mxu0 %v10402
        %v11189 = vpop.f32.mrf.mxu0
        %v11190 = vadd.f32 %v11141, %v11189
        %v11191 = vpop.f32.mrf.mxu0
        %v11192 = vadd.f32 %v11143, %v11191
        %11193 = vmatmul.bf16.gmra.mxu0 %v10405
        %v11194 = vpop.f32.mrf.mxu0
        %v11195 = vadd.f32 %v11146, %v11194
        %v11196 = vpop.f32.mrf.mxu0
        %v11197 = vadd.f32 %v11148, %v11196
        %11198 = vmatmul.bf16.gmra.mxu0 %v10408
        %v11199 = vpop.f32.mrf.mxu0
        %v11200 = vadd.f32 %v11151, %v11199
        %v11201 = vpop.f32.mrf.mxu0
        %v11202 = vadd.f32 %v11153, %v11201
        %11203 = vmatmul.bf16.gmra.mxu0 %v10411
        %v11204 = vpop.f32.mrf.mxu0
        %v11205 = vadd.f32 %v11156, %v11204
        %v11206 = vpop.f32.mrf.mxu0
        %v11207 = vadd.f32 %v11158, %v11206
        %11208 = vmatmul.bf16.gmra.mxu0 %v10414
        %v11209 = vpop.f32.mrf.mxu0
        %v11210 = vadd.f32 %v11161, %v11209
        %v11211 = vpop.f32.mrf.mxu0
        %v11212 = vadd.f32 %v11163, %v11211
        %11213 = vmatmul.bf16.gmra.mxu0 %v10417
        %v11214 = vpop.f32.mrf.mxu0
        %v11215 = vadd.f32 %v11166, %v11214
        %v11216 = vpop.f32.mrf.mxu0
        %v11217 = vadd.f32 %v11168, %v11216
        %11218 = vdwg.mxu0
        %11219 = vmatpush.bf16.msra.mxu0 %v10754
        %11220 = vmatpush.bf16.msra.mxu0 %v10751
        %11221 = vmatpush.bf16.msra.mxu0 %v10748
        %11222 = vmatpush.bf16.msra.mxu0 %v10745
        %11223 = vmatpush.bf16.msra.mxu0 %v10742
        %11224 = vmatpush.bf16.msra.mxu0 %v10739
        %11225 = vmatpush.bf16.msra.mxu0 %v10736
        %11226 = vmatpush.bf16.msra.mxu0 %v10733
        %11227 = vmatmul.bf16.gmra.mxu0 %v10397
        %v11228 = vpop.f32.mrf.mxu0
        %v11229 = vadd.f32 %v11180, %v11228
        %v11230 = vpop.f32.mrf.mxu0
        %v11231 = vadd.f32 %v11182, %v11230
        %11232 = vmatmul.bf16.gmra.mxu0 %v10400
        %v11233 = vpop.f32.mrf.mxu0
        %v11234 = vadd.f32 %v11185, %v11233
        %v11235 = vpop.f32.mrf.mxu0
        %v11236 = vadd.f32 %v11187, %v11235
        %11237 = vmatmul.bf16.gmra.mxu0 %v10403
        %v11238 = vpop.f32.mrf.mxu0
        %v11239 = vadd.f32 %v11190, %v11238
        %v11240 = vpop.f32.mrf.mxu0
        %v11241 = vadd.f32 %v11192, %v11240
        %11242 = vmatmul.bf16.gmra.mxu0 %v10406
        %v11243 = vpop.f32.mrf.mxu0
        %v11244 = vadd.f32 %v11195, %v11243
        %v11245 = vpop.f32.mrf.mxu0
        %v11246 = vadd.f32 %v11197, %v11245
        %11247 = vmatmul.bf16.gmra.mxu0 %v10409
        %v11248 = vpop.f32.mrf.mxu0
        %v11249 = vadd.f32 %v11200, %v11248
        %v11250 = vpop.f32.mrf.mxu0
        %v11251 = vadd.f32 %v11202, %v11250
        %11252 = vmatmul.bf16.gmra.mxu0 %v10412
        %v11253 = vpop.f32.mrf.mxu0
        %v11254 = vadd.f32 %v11205, %v11253
        %v11255 = vpop.f32.mrf.mxu0
        %v11256 = vadd.f32 %v11207, %v11255
        %11257 = vmatmul.bf16.gmra.mxu0 %v10415
        %v11258 = vpop.f32.mrf.mxu0
        %v11259 = vadd.f32 %v11210, %v11258
        %v11260 = vpop.f32.mrf.mxu0
        %v11261 = vadd.f32 %v11212, %v11260
        %11262 = vmatmul.bf16.gmra.mxu0 %v10418
        %v11263 = vpop.f32.mrf.mxu0
        %v11264 = vadd.f32 %v11215, %v11263
        %v11265 = vpop.f32.mrf.mxu0
        %v11266 = vadd.f32 %v11217, %v11265
        %11267 = vdwg.mxu0
        %11268 = vst [vmem:[%s231] sm:$0xff] %v10935
        %11269 = vst [vmem:[%s231 + $0x8] sm:$0xff] %v11082
        %11270 = vst [vmem:[%s231 + $0x10] sm:$0xff] %v11229
        %11271 = vst [vmem:[%s231 + $0x18] sm:$0xff] %v10937
        %11272 = vst [vmem:[%s231 + $0x20] sm:$0xff] %v11084
        %11273 = vst [vmem:[%s231 + $0x28] sm:$0xff] %v11231
        %11274 = vst [vmem:[%s231 + $0x30] sm:$0xff] %v10940
        %11275 = vst [vmem:[%s231 + $0x38] sm:$0xff] %v11087
        %11276 = vst [vmem:[%s231 + $0x40] sm:$0xff] %v11234
        %11277 = vst [vmem:[%s231 + $0x48] sm:$0xff] %v10942
        %11278 = vst [vmem:[%s231 + $0x50] sm:$0xff] %v11089
        %11279 = vst [vmem:[%s231 + $0x58] sm:$0xff] %v11236
        %11280 = vst [vmem:[%s231 + $0x60] sm:$0xff] %v10945
        %11281 = vst [vmem:[%s231 + $0x68] sm:$0xff] %v11092
        %11282 = vst [vmem:[%s231 + $0x70] sm:$0xff] %v11239
        %11283 = vst [vmem:[%s231 + $0x78] sm:$0xff] %v10947
        %11284 = vst [vmem:[%s231 + $0x80] sm:$0xff] %v11094
        %11285 = vst [vmem:[%s231 + $0x88] sm:$0xff] %v11241
        %11286 = vst [vmem:[%s231 + $0x90] sm:$0xff] %v10950
        %11287 = vst [vmem:[%s231 + $0x98] sm:$0xff] %v11097
        %11288 = vst [vmem:[%s231 + $0xa0] sm:$0xff] %v11244
        %11289 = vst [vmem:[%s231 + $0xa8] sm:$0xff] %v10952
        %11290 = vst [vmem:[%s231 + $0xb0] sm:$0xff] %v11099
        %11291 = vst [vmem:[%s231 + $0xb8] sm:$0xff] %v11246
        %11292 = vst [vmem:[%s231 + $0xc0] sm:$0xff] %v10955
        %11293 = vst [vmem:[%s231 + $0xc8] sm:$0xff] %v11102
        %11294 = vst [vmem:[%s231 + $0xd0] sm:$0xff] %v11249
        %11295 = vst [vmem:[%s231 + $0xd8] sm:$0xff] %v10957
        %11296 = vst [vmem:[%s231 + $0xe0] sm:$0xff] %v11104
        %11297 = vst [vmem:[%s231 + $0xe8] sm:$0xff] %v11251
        %11298 = vst [vmem:[%s231 + $0xf0] sm:$0xff] %v10960
        %11299 = vst [vmem:[%s231 + $0xf8] sm:$0xff] %v11107
        %11300 = vst [vmem:[%s231 + $0x100] sm:$0xff] %v11254
        %11301 = vst [vmem:[%s231 + $0x108] sm:$0xff] %v10962
        %11302 = vst [vmem:[%s231 + $0x110] sm:$0xff] %v11109
        %11303 = vst [vmem:[%s231 + $0x118] sm:$0xff] %v11256
        %11304 = vst [vmem:[%s231 + $0x120] sm:$0xff] %v10965
        %11305 = vst [vmem:[%s231 + $0x128] sm:$0xff] %v11112
        %11306 = vst [vmem:[%s231 + $0x130] sm:$0xff] %v11259
        %11307 = vst [vmem:[%s231 + $0x138] sm:$0xff] %v10967
        %11308 = vst [vmem:[%s231 + $0x140] sm:$0xff] %v11114
        %11309 = vst [vmem:[%s231 + $0x148] sm:$0xff] %v11261
        %11310 = vst [vmem:[%s231 + $0x150] sm:$0xff] %v10970
        %11311 = vst [vmem:[%s231 + $0x158] sm:$0xff] %v11117
        %11312 = vst [vmem:[%s231 + $0x160] sm:$0xff] %v11264
        %11313 = vst [vmem:[%s231 + $0x168] sm:$0xff] %v10972
        %11314 = vst [vmem:[%s231 + $0x170] sm:$0xff] %v11119
        %11315 = vst [vmem:[%s231 + $0x178] sm:$0xff] %v11266
        %s11316 = sand.u32 %s151, 1
        %s11317 = scalar_lea.sflag [#allocation6], %s11316
        %s11318 = sand.u32 %s151, 1
        %s11319 = smul.addr %s11318, 384
        %s11320 = scalar_lea.vmem [#allocation5], %s11319
        // Predicated region
        $region45: #{multi_head_attention.1} parent=39 // pred_check
          %p11321 = pneg %p161
        $region46: #{multi_head_attention.1} parent=39 // pred_check_branch
          %11323 = sbr.rel (%p11321) target = $region48
        $region47: #{multi_head_attention.1} parent=39 // pred_region
          %s11324 = smul.u32 16, %s24
          %11326 = vsyncadd %s11317, 0
          %s11327 = smul.addr %s11324, 3
          %s11328 = smul.addr %s23, 96
          %s11329 = sadd.s32 %s11327, %s11328
          %s11330 = smul.addr %s11329, 8
          %s11331 = scalar_lea.hbm %s5, %s11330
          %s11332 = sshll.u32 %s11320, 4
          %s11333 = int_to_ptr.vmem [resolvable:$true] %s11332
          %s11334 = sshll.u32 %s11331, 4
          %s11335 = int_to_ptr.hbm [resolvable:$true] %s11334
          %11340 = dma.vmem_to_hbm [thread:$0]  %s11333, 6144, %s11335, %s11317, 384, 384, 24
        $region48: #{multi_head_attention.1} parent=39 // pred_fallthru
          _
      $region40: #{multi_head_attention.1} parent=5 // pred_fallthru
        _
      %p11341 = scmp.le.s32.totalorder 2, %s14
      // Predicated region
      $region49: #{multi_head_attention.1} parent=5 // pred_check
        %p11342 = pneg %p11341
      $region50: #{multi_head_attention.1} parent=5 // pred_check_branch
        %11344 = sbr.rel (%p11342) target = $region52
      $region51: #{multi_head_attention.1} parent=5 // pred_region
        %s11345 = ssub.s32 %s14, 2
        // Predicated region
        $region53: #{multi_head_attention.1} parent=51 // pred_check
          %p11346 = pneg %p167
        $region54: #{multi_head_attention.1} parent=51 // pred_check_branch
          %11348 = sbr.rel (%p11346) target = $region56
        $region55: #{multi_head_attention.1} parent=51 // pred_region
          %s11349 = sand.u32 %s152, 1
          %s11350 = scalar_lea.sflag [#allocation6], %s11349
          %s11351 = sand.u32 %s152, 1
          %s11352 = smul.addr %s11351, 384
          %s11353 = scalar_lea.vmem [#allocation5], %s11352
          %11355 = dma.done %s11350, 6144
        $region56: #{multi_head_attention.1} parent=51 // pred_fallthru
          _
      $region52: #{multi_head_attention.1} parent=5 // pred_fallthru
        _
    $region6: #{multi_head_attention.1} parent=1 // loop_footer
      %s18 = sadd.s32 1, %s14
    $region7: #{multi_head_attention.1} parent=1 // loop_footer_branch
      %13 = sbr.rel target = $region3
    $region8: #{multi_head_attention.1} parent=1 // loop_exit
      _
    %11356 = vsyncpa [#allocation6], 1
    %s11357 = scalar_lea.sflag [#allocation6], 1
    %11358 = vsyncpa %s11357, 1

</llo_original>
